<compile_context>
chip_gen: v7x
topology: tpu7x:2x2x1
jax: 0.10.0
libtpu: 0.0.40
codegen_flags: <defaults>
</compile_context>

<pallas_src>
import functools

import jax
import jax.numpy as jnp
from jax import lax
from jax.experimental import pallas as pl
from jax.experimental.pallas import tpu as pltpu

LANE = 128
_FRONT = 8            # per-sample front halo rows (sublane aligned, >= pad)
_LN_EPS = 1e-5


def _round_up(x, m):
    return (x + m - 1) // m * m


def _cdiv(a, b):
    return (a + b - 1) // b


# ---------------------------------------------------------------------------
# Fused whole-network kernel (B_tile batch elements per grid step).
# ---------------------------------------------------------------------------
def _convnet_kernel(x_ref, w_ref, p_ref, o_ref, act_ref, res_ref, *,
                    layers, K, T, b_tile, seg, eps):
    """Runs every layer on a VMEM-resident, segmented activation buffer.

    x_ref   : (b_tile, T, Cpad)        inputs, channels zero-padded to Cpad
    w_ref   : (L*K, Cpad, Cpad)        conv weights (bf16/f32, zero padded)
    p_ref   : (L, 8, Cpad) f32         row0=bias, row1=gamma, row2=beta
                                       (all zero in padded lanes)
    o_ref   : (b_tile, T, Cpad)
    act_ref : (act_rows, Cpad) f32     sample b's signal at rows
                                       [b*seg+8, b*seg+8+T); all other rows
                                       are zero halos ('same' conv needs no
                                       wrapper-side jnp.pad)
    res_ref : (act_rows, Cpad) f32     residual-block input save
    """
    cpad = o_ref.shape[-1]
    act_rows = act_ref.shape[0]
    pad = (K - 1) // 2
    rq = act_rows - 2 * _FRONT          # conv rows computed: buffer rows [8, 8+rq)

    # --- zero ONLY the halo rows (signal rows are overwritten below) -------
    tail = seg - _FRONT - T
    for b in range(b_tile):
        act_ref[b * seg: b * seg + _FRONT, :] = jnp.zeros((_FRONT, cpad),
                                                          jnp.float32)
        if tail > 0:
            act_ref[b * seg + _FRONT + T: (b + 1) * seg, :] = (
                jnp.zeros((tail, cpad), jnp.float32))
    act_ref[b_tile * seg: act_rows, :] = (
        jnp.zeros((act_rows - b_tile * seg, cpad), jnp.float32))

    # --- stage the input signals at sublane-aligned offsets ----------------
    for b in range(b_tile):
        act_ref[b * seg + _FRONT: b * seg + _FRONT + T, :] = (
            x_ref[b].astype(jnp.float32))

    # --- hoist LayerNorm lane masks (JAX does not CSE broadcast_in_dim) ----
    masks = {}
    lane = None
    for lay in layers:
        c = lay["c_out"]
        if lay["do_ln"] and c < cpad and c not in masks:
            if lane is None:
                lane = lax.broadcasted_iota(jnp.int32, (rq, cpad), 1)
            masks[c] = lane < c

    # --- static layer loop (layer structure known at trace time) -----------
    for lay in layers:
        l = lay["idx"]
        c_out = lay["c_out"]

        if lay["resid_save"]:            # residual taken pre-ReLU (block input)
            res_ref[...] = act_ref[...]

        # 'same' conv as K accumulated MXU dots over all buffer rows [8, 8+rq):
        #   acc[r] = sum_k act[(r+8) - pad + k] @ W[k]     (no im2col temporary)
        acc = None
        for k in range(K):
            s = _FRONT - pad + k
            xk = act_ref[s: s + rq, :]
            if lay["pre_relu"]:
                xk = jnp.maximum(xk, 0.0)        # ReLU(0)==0 -> halos stay 0
            # TODO(synk): Dropout(0.1) treated as identity (inference mode).
            wk = w_ref[l * K + k]
            d = jnp.dot(xk.astype(wk.dtype), wk,
                        preferred_element_type=jnp.float32)
            acc = d if acc is None else acc + d

        prm = p_ref[l]                    # (8, cpad): bias / gamma / beta rows
        acc = acc + prm[0:1, :]

        if lay["do_ln"]:                  # LayerNorm over the real channels
            if c_out == cpad:
                mean = jnp.mean(acc, axis=-1, keepdims=True)
                cen = acc - mean
                var = jnp.mean(cen * cen, axis=-1, keepdims=True)
            else:
                m = masks[c_out]
                inv_n = 1.0 / float(c_out)
                mean = jnp.sum(jnp.where(m, acc, 0.0), axis=-1,
                               keepdims=True) * inv_n
                cen = jnp.where(m, acc - mean, 0.0)
                var = jnp.sum(cen * cen, axis=-1, keepdims=True) * inv_n
            acc = (acc - mean) * lax.rsqrt(var + eps)
            # gamma/beta are zero in padded lanes -> padded lanes stay zero.
            acc = acc * prm[1:2, :] + prm[2:3, :]

        if lay["post_relu"]:
            acc = jnp.maximum(acc, 0.0)

        # store back only the (sublane-aligned) signal rows of each sample
        for b in range(b_tile):
            dst = b * seg + _FRONT
            rows = acc[dst - _FRONT: dst - _FRONT + T, :]
            if lay["resid_add"]:
                rows = rows + res_ref[dst: dst + T, :]
            act_ref[dst: dst + T, :] = rows

    for b in range(b_tile):
        o_ref[b] = act_ref[b * seg + _FRONT: b * seg + _FRONT + T, :].astype(
            o_ref.dtype)


# ---------------------------------------------------------------------------
# Parameter construction mirroring the PyTorch ConvNet (avg_pooling=False).
# Weight layout: (K, Cin, Cout) (PyTorch is (Cout, Cin, K); synthetic init).
# ---------------------------------------------------------------------------
def init_convnet(key, hidden_sizes, kernel_size, stack_size,
                 dtype=jnp.float32):
    assert kernel_size % 2 == 1, "only odd kernel_size matches PyTorch 'same'"
    keys = iter(jax.random.split(key, 256))

    def conv_op(cin, cout, pre_relu=False, do_ln=False, post_relu=False):
        kw, kb = jax.random.split(next(keys))
        bound = float(cin * kernel_size) ** -0.5     # PyTorch default uniform
        w = jax.random.uniform(kw, (kernel_size, cin, cout), dtype,
                               -bound, bound)
        b = jax.random.uniform(kb, (cout,), dtype, -bound, bound)
        return {"kind": "conv", "w": w, "b": b,
                "gamma": jnp.ones((cout,), dtype),
                "beta": jnp.zeros((cout,), dtype),
                "pre_relu": pre_relu, "do_ln": do_ln, "post_relu": post_relu}

    ops = [conv_op(hidden_sizes[0], hidden_sizes[0])]       # initial Conv1d
    for i, h in enumerate(hidden_sizes):
        # ConvBlock = ReLU -> (dropout: identity) -> Conv1d -> LayerNorm
        stack = [conv_op(h, h, pre_relu=True, do_ln=True)
                 for _ in range(stack_size)]
        if i == 0:
            ops.extend(stack)                                # ConvStack
        else:
            ops.append({"kind": "residual", "ops": stack})   # ResidualBlock
        if i != len(hidden_sizes) - 1 and hidden_sizes[i] != hidden_sizes[i + 1]:
            ops.append(conv_op(hidden_sizes[i], hidden_sizes[i + 1],
                               post_relu=True))              # channel change
    ops.append(conv_op(hidden_sizes[-1], hidden_sizes[-1]))  # final Conv1d
    return ops


def _flatten_ops(ops):
    flat = []
    for op in ops:
        if op["kind"] == "conv":
            flat.append(dict(op, resid_save=False, resid_add=False))
        else:
            subs = op["ops"]
            for j, sub in enumerate(subs):
                flat.append(dict(sub, resid_save=(j == 0),
                                 resid_add=(j == len(subs) - 1)))
    return flat


def pack_convnet(ops, kernel_size, param_dtype=jnp.bfloat16):
    """Zero-pad all channel dims to a lane-dense Cpad, store conv weights in
    `param_dtype` (bf16 by default -> bf16 MXU, half the weight VMEM) and pack
    bias/gamma/beta into a single (L, 8, Cpad) f32 operand."""
    flat = _flatten_ops(ops)
    K = kernel_size
    L = len(flat)
    cmax = max(max(int(l["w"].shape[1]), int(l["w"].shape[2])) for l in flat)
    cpad = _round_up(cmax, LANE)

    W = jnp.zeros((L * K, cpad, cpad), param_dtype)
    P = jnp.zeros((L, 8, cpad), jnp.float32)    # rows: 0 bias, 1 gamma, 2 beta
    descs = []
    for l, lay in enumerate(flat):
        w = lay["w"]                                          # (K, cin, cout)
        cin, cout = int(w.shape[1]), int(w.shape[2])
        W = W.at[l * K:(l + 1) * K, :cin, :cout].set(w.astype(param_dtype))
        P = P.at[l, 0, :cout].set(lay["b"].astype(jnp.float32))
        P = P.at[l, 1, :cout].set(lay["gamma"].astype(jnp.float32))
        P = P.at[l, 2, :cout].set(lay["beta"].astype(jnp.float32))
        descs.append(dict(idx=l, c_out=cout,
                          pre_relu=bool(lay["pre_relu"]),
                          post_relu=bool(lay["post_relu"]),
                          do_ln=bool(lay["do_ln"]),
                          resid_save=bool(lay["resid_save"]),
                          resid_add=bool(lay["resid_add"])))
    return {"W": W, "P": P, "layers": tuple(descs), "K": K, "cpad": cpad,
            "c_in": int(flat[0]["w"].shape[1]),
            "c_out": int(flat[-1]["w"].shape[2])}


def _pick_b_tile(B, T, target_rows=256, max_rows=2048):
    """Samples per grid step: fill the MXU M dim (aim for >= target_rows rows)
    while keeping >= 2 grid steps (both v7x TensorCores) and bounded VMEM."""
    bt = max(1, min(B, _cdiv(target_rows, max(T, 1))))
    if B >= 2:
        bt = min(bt, _cdiv(B, 2))                 # keep at least 2 grid steps
    bt = max(1, min(bt, max(1, max_rows // max(T + _FRONT, 1))))
    return bt


def convnet_forward(x_bct, packed, *, b_tile=None):
    """x_bct: (B, C, T) like nn.Conv1d input. Returns (B, C_out, T)."""
    K = packed["K"]
    cpad = packed["cpad"]
    B, C0, T = x_bct.shape
    assert C0 == packed["c_in"]
    pad = (K - 1) // 2
    assert pad <= _FRONT, "kernel_size too large for the fixed 8-row halo"

    if b_tile is None:
        b_tile = _pick_b_tile(B, T)
    Bp = _round_up(B, b_tile)
    grid_b = Bp // b_tile

    seg = _FRONT + _round_up(T, 8)            # per-sample stride (sublane aligned)
    act_rows = b_tile * seg + _FRONT          # + trailing zero halo
    LK = packed["W"].shape[0]
    L = len(packed["layers"])

    x = jnp.transpose(x_bct, (0, 2, 1))                      # (B, T, C)
    x = jnp.pad(x, ((0, Bp - B), (0, 0), (0, cpad - C0)))    # one-time pads

    kernel = functools.partial(_convnet_kernel, layers=packed["layers"],
                               K=K, T=T, b_tile=b_tile, seg=seg, eps=_LN_EPS)

    out = pl.pallas_call(
        kernel,
        out_shape=jax.ShapeDtypeStruct((Bp, T, cpad), x.dtype),
        grid_spec=pltpu.PrefetchScalarGridSpec(
            num_scalar_prefetch=0,
            grid=(grid_b,),
            in_specs=[
                pl.BlockSpec((b_tile, T, cpad), lambda i: (i, 0, 0)),
                # Constant-index operands; at these sizes (<2 MiB bf16) the
                # default double-buffering is harmless.  For large configs on
                # v7x (64 MiB VMEM), stream W from HBM via memory_space=pl.ANY
                # + manual make_async_copy instead.
                pl.BlockSpec((LK, cpad, cpad), lambda i: (0, 0, 0)),
                pl.BlockSpec((L, 8, cpad), lambda i: (0, 0, 0)),
            ],
            out_specs=pl.BlockSpec((b_tile, T, cpad), lambda i: (i, 0, 0)),
            scratch_shapes=[
                pltpu.VMEM((act_rows, cpad), jnp.float32),   # activations+halo
                pltpu.VMEM((act_rows, cpad), jnp.float32),   # residual save
            ],
        ),
        compiler_params=pltpu.CompilerParams(
            dimension_semantics=("parallel",),   # v7x: both TCs share batch
            vmem_limit_bytes=32 * 1024 * 1024,   # v5e scoped default is 16 MiB
        ),
    )(x, packed["W"], packed["P"])

    out = out[:B, :, :packed["c_out"]]
    return jnp.transpose(out, (0, 2, 1))


# ---------------------------------------------------------------------------
# Pure-JAX reference (follows the nested PyTorch structure independently).
# ---------------------------------------------------------------------------
def _ref_conv(x, op, eps=_LN_EPS):
    xf = x.astype(jnp.float32)
    if op["pre_relu"]:
        xf = jnp.maximum(xf, 0.0)
    w = op["w"].astype(jnp.float32)
    K = w.shape[0]
    pad = (K - 1) // 2
    T = x.shape[1]
    xp = jnp.pad(xf, ((0, 0), (pad, K - 1 - pad), (0, 0)))
    y = jnp.zeros((x.shape[0], T, w.shape[2]), jnp.float32)
    for k in range(K):
        y = y + jnp.einsum("bti,io->bto", xp[:, k:k + T, :], w[k])
    y = y + op["b"].astype(jnp.float32)
    if op["do_ln"]:
        mean = jnp.mean(y, -1, keepdims=True)
        var = jnp.mean((y - mean) ** 2, -1, keepdims=True)
        y = (y - mean) * lax.rsqrt(var + eps)
        y = y * op["gamma"].astype(jnp.float32) + op["beta"].astype(jnp.float32)
    if op["post_relu"]:
        y = jnp.maximum(y, 0.0)
    return y


def convnet_reference(x_bct, ops):
    x = jnp.transpose(x_bct, (0, 2, 1)).astype(jnp.float32)
    for op in ops:
        if op["kind"] == "conv":
            x = _ref_conv(x, op)
        else:
            y = x
            for sub in op["ops"]:
                y = _ref_conv(y, sub)
            x = x + y
    return jnp.transpose(x, (0, 2, 1))


def _quantize_ops(ops, dtype):
    """Round conv weights to `dtype` (then back to f32) so the reference uses
    the same quantized parameters as the packed kernel weights."""
    out = []
    for op in ops:
        if op["kind"] == "conv":
            out.append(dict(op, w=op["w"].astype(dtype).astype(jnp.float32)))
        else:
            out.append(dict(op, ops=[dict(s, w=s["w"].astype(dtype)
                                          .astype(jnp.float32))
                                     for s in op["ops"]]))
    return out


if __name__ == "__main__":
    key = jax.random.PRNGKey(0)
    kx, kp = jax.random.split(key)

    # small shapes consistent with the module (ConvNet(hidden_sizes, k=5, stack))
    hidden_sizes = [32, 64, 64]
    kernel_size = 5
    stack_size = 2
    B, T = 4, 32

    x = jax.random.normal(kx, (B, hidden_sizes[0], T), jnp.float32)  # (B, C, T)
    ops = init_convnet(kp, hidden_sizes, kernel_size, stack_size)
    packed = pack_convnet(ops, kernel_size, param_dtype=jnp.bfloat16)

    fwd = jax.jit(functools.partial(convnet_forward, packed=packed))
    out = jax.block_until_ready(fwd(x))

    assert out.shape == (B, hidden_sizes[-1], T), out.shape
    assert bool(jnp.all(jnp.isfinite(out)))

    # Reference uses the same bf16-quantized weights (cast back to f32); the
    # remaining kernel/ref difference is only the bf16 MXU-operand rounding.
    ref = convnet_reference(x, _quantize_ops(ops, jnp.bfloat16))
    err = float(jnp.max(jnp.abs(out - ref)))
    assert bool(jnp.allclose(out, ref, rtol=5e-2, atol=5e-2)), err

    print("KERNEL_OK")
</pallas_src>

<mosaic_0001>
module attributes {stable_mosaic.version = 11 : i64} {
  func.func @_convnet_kernel(%arg0: i32, %arg1: memref<2x32x128xf32, #tpu.memory_space<vmem>>, %arg2: memref<45x128x128xbf16, #tpu.memory_space<vmem>>, %arg3: memref<9x8x128xf32, #tpu.memory_space<vmem>>, %arg4: memref<2x32x128xf32, #tpu.memory_space<vmem>>, %arg5: memref<88x128xf32, #tpu.memory_space<vmem>>, %arg6: memref<88x128xf32, #tpu.memory_space<vmem>>) attributes {dimension_semantics = [#tpu.dimension_semantics<parallel>], iteration_bounds = array<i64: 2>, scalar_prefetch = 0 : i64, scratch_operands = 2 : i64, tpu.core_type = #tpu.core_type<tc>, window_params = [{transform_indices = @transform_0, window_bounds = array<i64: 2, 32, 128>}, {pipeline_mode = #tpu.pipeline_mode<synchronous>, transform_indices = @transform_1, window_bounds = array<i64: 45, 128, 128>}, {pipeline_mode = #tpu.pipeline_mode<synchronous>, transform_indices = @transform_2, window_bounds = array<i64: 9, 8, 128>}, {transform_indices = @transform_3, window_bounds = array<i64: 2, 32, 128>}]} {
    %cst = arith.constant 0.000000e+00 : f32
    %0 = vector.broadcast %cst : f32 to vector<8x128xf32>
    %c0 = arith.constant 0 : index
    %c0_0 = arith.constant 0 : index
    %1 = vector.load %arg5[%c0, %c0_0] : memref<88x128xf32, #tpu.memory_space<vmem>>, vector<8x128xf32>
    tpu.vector_store %arg5[%c0, %c0_0], %0 {strides = array<i32>} : memref<88x128xf32, #tpu.memory_space<vmem>>, vector<8x128xf32>,
    %cst_1 = arith.constant 0.000000e+00 : f32
    %2 = vector.broadcast %cst_1 : f32 to vector<8x128xf32>
    %c40 = arith.constant 40 : index
    %c0_2 = arith.constant 0 : index
    %3 = vector.load %arg5[%c40, %c0_2] : memref<88x128xf32, #tpu.memory_space<vmem>>, vector<8x128xf32>
    tpu.vector_store %arg5[%c40, %c0_2], %2 {strides = array<i32>} : memref<88x128xf32, #tpu.memory_space<vmem>>, vector<8x128xf32>,
    %cst_3 = arith.constant 0.000000e+00 : f32
    %4 = vector.broadcast %cst_3 : f32 to vector<8x128xf32>
    %c80 = arith.constant 80 : index
    %c0_4 = arith.constant 0 : index
    %5 = vector.load %arg5[%c80, %c0_4] : memref<88x128xf32, #tpu.memory_space<vmem>>, vector<8x128xf32>
    tpu.vector_store %arg5[%c80, %c0_4], %4 {strides = array<i32>} : memref<88x128xf32, #tpu.memory_space<vmem>>, vector<8x128xf32>,
    %c0_5 = arith.constant 0 : index
    %c0_6 = arith.constant 0 : index
    %c0_7 = arith.constant 0 : index
    %6 = vector.load %arg1[%c0_5, %c0_6, %c0_7] : memref<2x32x128xf32, #tpu.memory_space<vmem>>, vector<1x32x128xf32>
    %7 = vector.shape_cast %6 : vector<1x32x128xf32> to vector<32x128xf32>
    %c8 = arith.constant 8 : index
    %c0_8 = arith.constant 0 : index
    %8 = vector.load %arg5[%c8, %c0_8] : memref<88x128xf32, #tpu.memory_space<vmem>>, vector<32x128xf32>
    tpu.vector_store %arg5[%c8, %c0_8], %7 {strides = array<i32>} : memref<88x128xf32, #tpu.memory_space<vmem>>, vector<32x128xf32>,
    %c1 = arith.constant 1 : index
    %c0_9 = arith.constant 0 : index
    %c0_10 = arith.constant 0 : index
    %9 = vector.load %arg1[%c1, %c0_9, %c0_10] : memref<2x32x128xf32, #tpu.memory_space<vmem>>, vector<1x32x128xf32>
    %10 = vector.shape_cast %9 : vector<1x32x128xf32> to vector<32x128xf32>
    %c48 = arith.constant 48 : index
    %c0_11 = arith.constant 0 : index
    %11 = vector.load %arg5[%c48, %c0_11] : memref<88x128xf32, #tpu.memory_space<vmem>>, vector<32x128xf32>
    tpu.vector_store %arg5[%c48, %c0_11], %10 {strides = array<i32>} : memref<88x128xf32, #tpu.memory_space<vmem>>, vector<32x128xf32>,
    %12 = tpu.iota {dimensions = array<i32: 1>} : vector<72x128xi32>
    %c32_i32 = arith.constant 32 : i32
    %13 = vector.broadcast %c32_i32 : i32 to vector<72x128xi32>
    %14 = arith.cmpi slt, %12, %13 : vector<72x128xi32>
    %c64_i32 = arith.constant 64 : i32
    %15 = vector.broadcast %c64_i32 : i32 to vector<72x128xi32>
    %16 = arith.cmpi slt, %12, %15 : vector<72x128xi32>
    %c6 = arith.constant 6 : index
    %c0_12 = arith.constant 0 : index
    %17 = vector.load %arg5[%c6, %c0_12] : memref<88x128xf32, #tpu.memory_space<vmem>>, vector<72x128xf32>
    %c0_13 = arith.constant 0 : index
    %c0_14 = arith.constant 0 : index
    %c0_15 = arith.constant 0 : index
    %18 = vector.load %arg2[%c0_13, %c0_14, %c0_15] : memref<45x128x128xbf16, #tpu.memory_space<vmem>>, vector<1x128x128xbf16>
    %19 = vector.shape_cast %18 : vector<1x128x128xbf16> to vector<128x128xbf16>
    %20 = arith.truncf %17 : vector<72x128xf32> to vector<72x128xbf16>
    %cst_16 = arith.constant dense<0.000000e+00> : vector<72x128xf32>
    %21 = tpu.matmul %20, %19, %cst_16 {dimension_numbers = #tpu.dot_dimension_numbers<[1], [0], [0], [1], [0, 0, 1, 1], [], []>} : vector<72x128xbf16>, vector<128x128xbf16>, vector<72x128xf32> -> vector<72x128xf32>
    %c7 = arith.constant 7 : index
    %c0_17 = arith.constant 0 : index
    %22 = vector.load %arg5[%c7, %c0_17] : memref<88x128xf32, #tpu.memory_space<vmem>>, vector<72x128xf32>
    %c1_18 = arith.constant 1 : index
    %c0_19 = arith.constant 0 : index
    %c0_20 = arith.constant 0 : index
    %23 = vector.load %arg2[%c1_18, %c0_19, %c0_20] : memref<45x128x128xbf16, #tpu.memory_space<vmem>>, vector<1x128x128xbf16>
    %24 = vector.shape_cast %23 : vector<1x128x128xbf16> to vector<128x128xbf16>
    %25 = arith.truncf %22 : vector<72x128xf32> to vector<72x128xbf16>
    %cst_21 = arith.constant dense<0.000000e+00> : vector<72x128xf32>
    %26 = tpu.matmul %25, %24, %cst_21 {dimension_numbers = #tpu.dot_dimension_numbers<[1], [0], [0], [1], [0, 0, 1, 1], [], []>} : vector<72x128xbf16>, vector<128x128xbf16>, vector<72x128xf32> -> vector<72x128xf32>
    %27 = arith.addf %21, %26 : vector<72x128xf32>
    %c8_22 = arith.constant 8 : index
    %c0_23 = arith.constant 0 : index
    %28 = vector.load %arg5[%c8_22, %c0_23] : memref<88x128xf32, #tpu.memory_space<vmem>>, vector<72x128xf32>
    %c2 = arith.constant 2 : index
    %c0_24 = arith.constant 0 : index
    %c0_25 = arith.constant 0 : index
    %29 = vector.load %arg2[%c2, %c0_24, %c0_25] : memref<45x128x128xbf16, #tpu.memory_space<vmem>>, vector<1x128x128xbf16>
    %30 = vector.shape_cast %29 : vector<1x128x128xbf16> to vector<128x128xbf16>
    %31 = arith.truncf %28 : vector<72x128xf32> to vector<72x128xbf16>
    %cst_26 = arith.constant dense<0.000000e+00> : vector<72x128xf32>
    %32 = tpu.matmul %31, %30, %cst_26 {dimension_numbers = #tpu.dot_dimension_numbers<[1], [0], [0], [1], [0, 0, 1, 1], [], []>} : vector<72x128xbf16>, vector<128x128xbf16>, vector<72x128xf32> -> vector<72x128xf32>
    %33 = arith.addf %27, %32 : vector<72x128xf32>
    %c9 = arith.constant 9 : index
    %c0_27 = arith.constant 0 : index
    %34 = vector.load %arg5[%c9, %c0_27] : memref<88x128xf32, #tpu.memory_space<vmem>>, vector<72x128xf32>
    %c3 = arith.constant 3 : index
    %c0_28 = arith.constant 0 : index
    %c0_29 = arith.constant 0 : index
    %35 = vector.load %arg2[%c3, %c0_28, %c0_29] : memref<45x128x128xbf16, #tpu.memory_space<vmem>>, vector<1x128x128xbf16>
    %36 = vector.shape_cast %35 : vector<1x128x128xbf16> to vector<128x128xbf16>
    %37 = arith.truncf %34 : vector<72x128xf32> to vector<72x128xbf16>
    %cst_30 = arith.constant dense<0.000000e+00> : vector<72x128xf32>
    %38 = tpu.matmul %37, %36, %cst_30 {dimension_numbers = #tpu.dot_dimension_numbers<[1], [0], [0], [1], [0, 0, 1, 1], [], []>} : vector<72x128xbf16>, vector<128x128xbf16>, vector<72x128xf32> -> vector<72x128xf32>
    %39 = arith.addf %33, %38 : vector<72x128xf32>
    %c10 = arith.constant 10 : index
    %c0_31 = arith.constant 0 : index
    %40 = vector.load %arg5[%c10, %c0_31] : memref<88x128xf32, #tpu.memory_space<vmem>>, vector<72x128xf32>
    %c4 = arith.constant 4 : index
    %c0_32 = arith.constant 0 : index
    %c0_33 = arith.constant 0 : index
    %41 = vector.load %arg2[%c4, %c0_32, %c0_33] : memref<45x128x128xbf16, #tpu.memory_space<vmem>>, vector<1x128x128xbf16>
    %42 = vector.shape_cast %41 : vector<1x128x128xbf16> to vector<128x128xbf16>
    %43 = arith.truncf %40 : vector<72x128xf32> to vector<72x128xbf16>
    %cst_34 = arith.constant dense<0.000000e+00> : vector<72x128xf32>
    %44 = tpu.matmul %43, %42, %cst_34 {dimension_numbers = #tpu.dot_dimension_numbers<[1], [0], [0], [1], [0, 0, 1, 1], [], []>} : vector<72x128xbf16>, vector<128x128xbf16>, vector<72x128xf32> -> vector<72x128xf32>
    %45 = arith.addf %39, %44 : vector<72x128xf32>
    %c0_35 = arith.constant 0 : index
    %c0_36 = arith.constant 0 : index
    %c0_37 = arith.constant 0 : index
    %46 = vector.load %arg3[%c0_35, %c0_36, %c0_37] : memref<9x8x128xf32, #tpu.memory_space<vmem>>, vector<1x8x128xf32>
    %47 = vector.shape_cast %46 : vector<1x8x128xf32> to vector<8x128xf32>
    %48 = vector.extract_strided_slice %47 {offsets = [0, 0], sizes = [1, 128], strides = [1, 1]} : vector<8x128xf32> to vector<1x128xf32>
    %49 = vector.broadcast %48 : vector<1x128xf32> to vector<72x128xf32>
    %50 = arith.addf %45, %49 : vector<72x128xf32>
    %51 = vector.extract_strided_slice %50 {offsets = [0, 0], sizes = [32, 128], strides = [1, 1]} : vector<72x128xf32> to vector<32x128xf32>
    %c8_38 = arith.constant 8 : index
    %c0_39 = arith.constant 0 : index
    %52 = vector.load %arg5[%c8_38, %c0_39] : memref<88x128xf32, #tpu.memory_space<vmem>>, vector<32x128xf32>
    tpu.vector_store %arg5[%c8_38, %c0_39], %51 {strides = array<i32>} : memref<88x128xf32, #tpu.memory_space<vmem>>, vector<32x128xf32>,
    %53 = vector.extract_strided_slice %50 {offsets = [40, 0], sizes = [32, 128], strides = [1, 1]} : vector<72x128xf32> to vector<32x128xf32>
    %c48_40 = arith.constant 48 : index
    %c0_41 = arith.constant 0 : index
    %54 = vector.load %arg5[%c48_40, %c0_41] : memref<88x128xf32, #tpu.memory_space<vmem>>, vector<32x128xf32>
    tpu.vector_store %arg5[%c48_40, %c0_41], %53 {strides = array<i32>} : memref<88x128xf32, #tpu.memory_space<vmem>>, vector<32x128xf32>,
    %c6_42 = arith.constant 6 : index
    %c0_43 = arith.constant 0 : index
    %55 = vector.load %arg5[%c6_42, %c0_43] : memref<88x128xf32, #tpu.memory_space<vmem>>, vector<72x128xf32>
    %cst_44 = arith.constant 0.000000e+00 : f32
    %56 = vector.broadcast %cst_44 : f32 to vector<72x128xf32>
    %57 = arith.maximumf %55, %56 : vector<72x128xf32>
    %c5 = arith.constant 5 : index
    %c0_45 = arith.constant 0 : index
    %c0_46 = arith.constant 0 : index
    %58 = vector.load %arg2[%c5, %c0_45, %c0_46] : memref<45x128x128xbf16, #tpu.memory_space<vmem>>, vector<1x128x128xbf16>
    %59 = vector.shape_cast %58 : vector<1x128x128xbf16> to vector<128x128xbf16>
    %60 = arith.truncf %57 : vector<72x128xf32> to vector<72x128xbf16>
    %cst_47 = arith.constant dense<0.000000e+00> : vector<72x128xf32>
    %61 = tpu.matmul %60, %59, %cst_47 {dimension_numbers = #tpu.dot_dimension_numbers<[1], [0], [0], [1], [0, 0, 1, 1], [], []>} : vector<72x128xbf16>, vector<128x128xbf16>, vector<72x128xf32> -> vector<72x128xf32>
    %c7_48 = arith.constant 7 : index
    %c0_49 = arith.constant 0 : index
    %62 = vector.load %arg5[%c7_48, %c0_49] : memref<88x128xf32, #tpu.memory_space<vmem>>, vector<72x128xf32>
    %cst_50 = arith.constant 0.000000e+00 : f32
    %63 = vector.broadcast %cst_50 : f32 to vector<72x128xf32>
    %64 = arith.maximumf %62, %63 : vector<72x128xf32>
    %c6_51 = arith.constant 6 : index
    %c0_52 = arith.constant 0 : index
    %c0_53 = arith.constant 0 : index
    %65 = vector.load %arg2[%c6_51, %c0_52, %c0_53] : memref<45x128x128xbf16, #tpu.memory_space<vmem>>, vector<1x128x128xbf16>
    %66 = vector.shape_cast %65 : vector<1x128x128xbf16> to vector<128x128xbf16>
    %67 = arith.truncf %64 : vector<72x128xf32> to vector<72x128xbf16>
    %cst_54 = arith.constant dense<0.000000e+00> : vector<72x128xf32>
    %68 = tpu.matmul %67, %66, %cst_54 {dimension_numbers = #tpu.dot_dimension_numbers<[1], [0], [0], [1], [0, 0, 1, 1], [], []>} : vector<72x128xbf16>, vector<128x128xbf16>, vector<72x128xf32> -> vector<72x128xf32>
    %69 = arith.addf %61, %68 : vector<72x128xf32>
    %c8_55 = arith.constant 8 : index
    %c0_56 = arith.constant 0 : index
    %70 = vector.load %arg5[%c8_55, %c0_56] : memref<88x128xf32, #tpu.memory_space<vmem>>, vector<72x128xf32>
    %cst_57 = arith.constant 0.000000e+00 : f32
    %71 = vector.broadcast %cst_57 : f32 to vector<72x128xf32>
    %72 = arith.maximumf %70, %71 : vector<72x128xf32>
    %c7_58 = arith.constant 7 : index
    %c0_59 = arith.constant 0 : index
    %c0_60 = arith.constant 0 : index
    %73 = vector.load %arg2[%c7_58, %c0_59, %c0_60] : memref<45x128x128xbf16, #tpu.memory_space<vmem>>, vector<1x128x128xbf16>
    %74 = vector.shape_cast %73 : vector<1x128x128xbf16> to vector<128x128xbf16>
    %75 = arith.truncf %72 : vector<72x128xf32> to vector<72x128xbf16>
    %cst_61 = arith.constant dense<0.000000e+00> : vector<72x128xf32>
    %76 = tpu.matmul %75, %74, %cst_61 {dimension_numbers = #tpu.dot_dimension_numbers<[1], [0], [0], [1], [0, 0, 1, 1], [], []>} : vector<72x128xbf16>, vector<128x128xbf16>, vector<72x128xf32> -> vector<72x128xf32>
    %77 = arith.addf %69, %76 : vector<72x128xf32>
    %c9_62 = arith.constant 9 : index
    %c0_63 = arith.constant 0 : index
    %78 = vector.load %arg5[%c9_62, %c0_63] : memref<88x128xf32, #tpu.memory_space<vmem>>, vector<72x128xf32>
    %cst_64 = arith.constant 0.000000e+00 : f32
    %79 = vector.broadcast %cst_64 : f32 to vector<72x128xf32>
    %80 = arith.maximumf %78, %79 : vector<72x128xf32>
    %c8_65 = arith.constant 8 : index
    %c0_66 = arith.constant 0 : index
    %c0_67 = arith.constant 0 : index
    %81 = vector.load %arg2[%c8_65, %c0_66, %c0_67] : memref<45x128x128xbf16, #tpu.memory_space<vmem>>, vector<1x128x128xbf16>
    %82 = vector.shape_cast %81 : vector<1x128x128xbf16> to vector<128x128xbf16>
    %83 = arith.truncf %80 : vector<72x128xf32> to vector<72x128xbf16>
    %cst_68 = arith.constant dense<0.000000e+00> : vector<72x128xf32>
    %84 = tpu.matmul %83, %82, %cst_68 {dimension_numbers = #tpu.dot_dimension_numbers<[1], [0], [0], [1], [0, 0, 1, 1], [], []>} : vector<72x128xbf16>, vector<128x128xbf16>, vector<72x128xf32> -> vector<72x128xf32>
    %85 = arith.addf %77, %84 : vector<72x128xf32>
    %c10_69 = arith.constant 10 : index
    %c0_70 = arith.constant 0 : index
    %86 = vector.load %arg5[%c10_69, %c0_70] : memref<88x128xf32, #tpu.memory_space<vmem>>, vector<72x128xf32>
    %cst_71 = arith.constant 0.000000e+00 : f32
    %87 = vector.broadcast %cst_71 : f32 to vector<72x128xf32>
    %88 = arith.maximumf %86, %87 : vector<72x128xf32>
    %c9_72 = arith.constant 9 : index
    %c0_73 = arith.constant 0 : index
    %c0_74 = arith.constant 0 : index
    %89 = vector.load %arg2[%c9_72, %c0_73, %c0_74] : memref<45x128x128xbf16, #tpu.memory_space<vmem>>, vector<1x128x128xbf16>
    %90 = vector.shape_cast %89 : vector<1x128x128xbf16> to vector<128x128xbf16>
    %91 = arith.truncf %88 : vector<72x128xf32> to vector<72x128xbf16>
    %cst_75 = arith.constant dense<0.000000e+00> : vector<72x128xf32>
    %92 = tpu.matmul %91, %90, %cst_75 {dimension_numbers = #tpu.dot_dimension_numbers<[1], [0], [0], [1], [0, 0, 1, 1], [], []>} : vector<72x128xbf16>, vector<128x128xbf16>, vector<72x128xf32> -> vector<72x128xf32>
    %93 = arith.addf %85, %92 : vector<72x128xf32>
    %c1_76 = arith.constant 1 : index
    %c0_77 = arith.constant 0 : index
    %c0_78 = arith.constant 0 : index
    %94 = vector.load %arg3[%c1_76, %c0_77, %c0_78] : memref<9x8x128xf32, #tpu.memory_space<vmem>>, vector<1x8x128xf32>
    %95 = vector.shape_cast %94 : vector<1x8x128xf32> to vector<8x128xf32>
    %96 = vector.extract_strided_slice %95 {offsets = [0, 0], sizes = [1, 128], strides = [1, 1]} : vector<8x128xf32> to vector<1x128xf32>
    %97 = vector.broadcast %96 : vector<1x128xf32> to vector<72x128xf32>
    %98 = arith.addf %93, %97 : vector<72x128xf32>
    %cst_79 = arith.constant 0.000000e+00 : f32
    %99 = vector.broadcast %cst_79 : f32 to vector<72x128xf32>
    %100 = arith.select %14, %98, %99 : vector<72x128xi1>, vector<72x128xf32>
    %cst_80 = arith.constant dense<0.000000e+00> : vector<72xf32>
    %101 = vector.multi_reduction <add>, %100, %cst_80 [1] : vector<72x128xf32> to vector<72xf32>
    %102 = vector.shape_cast %101 : vector<72xf32> to vector<72x1xf32>
    %cst_81 = arith.constant 3.125000e-02 : f32
    %103 = vector.broadcast %cst_81 : f32 to vector<72x1xf32>
    %104 = arith.mulf %102, %103 : vector<72x1xf32>
    %105 = vector.broadcast %104 : vector<72x1xf32> to vector<72x128xf32>
    %106 = arith.subf %98, %105 : vector<72x128xf32>
    %cst_82 = arith.constant 0.000000e+00 : f32
    %107 = vector.broadcast %cst_82 : f32 to vector<72x128xf32>
    %108 = arith.select %14, %106, %107 : vector<72x128xi1>, vector<72x128xf32>
    %109 = arith.mulf %108, %108 : vector<72x128xf32>
    %cst_83 = arith.constant dense<0.000000e+00> : vector<72xf32>
    %110 = vector.multi_reduction <add>, %109, %cst_83 [1] : vector<72x128xf32> to vector<72xf32>
    %111 = vector.shape_cast %110 : vector<72xf32> to vector<72x1xf32>
    %cst_84 = arith.constant 3.125000e-02 : f32
    %112 = vector.broadcast %cst_84 : f32 to vector<72x1xf32>
    %113 = arith.mulf %111, %112 : vector<72x1xf32>
    %114 = vector.broadcast %104 : vector<72x1xf32> to vector<72x128xf32>
    %115 = arith.subf %98, %114 : vector<72x128xf32>
    %cst_85 = arith.constant 9.99999974E-6 : f32
    %116 = vector.broadcast %cst_85 : f32 to vector<72x1xf32>
    %117 = arith.addf %113, %116 : vector<72x1xf32>
    %118 = math.rsqrt %117 : vector<72x1xf32>
    %119 = vector.broadcast %118 : vector<72x1xf32> to vector<72x128xf32>
    %120 = arith.mulf %115, %119 : vector<72x128xf32>
    %121 = vector.extract_strided_slice %95 {offsets = [1, 0], sizes = [1, 128], strides = [1, 1]} : vector<8x128xf32> to vector<1x128xf32>
    %122 = vector.broadcast %121 : vector<1x128xf32> to vector<72x128xf32>
    %123 = arith.mulf %120, %122 : vector<72x128xf32>
    %124 = vector.extract_strided_slice %95 {offsets = [2, 0], sizes = [1, 128], strides = [1, 1]} : vector<8x128xf32> to vector<1x128xf32>
    %125 = vector.broadcast %124 : vector<1x128xf32> to vector<72x128xf32>
    %126 = arith.addf %123, %125 : vector<72x128xf32>
    %127 = vector.extract_strided_slice %126 {offsets = [0, 0], sizes = [32, 128], strides = [1, 1]} : vector<72x128xf32> to vector<32x128xf32>
    %c8_86 = arith.constant 8 : index
    %c0_87 = arith.constant 0 : index
    %128 = vector.load %arg5[%c8_86, %c0_87] : memref<88x128xf32, #tpu.memory_space<vmem>>, vector<32x128xf32>
    tpu.vector_store %arg5[%c8_86, %c0_87], %127 {strides = array<i32>} : memref<88x128xf32, #tpu.memory_space<vmem>>, vector<32x128xf32>,
    %129 = vector.extract_strided_slice %126 {offsets = [40, 0], sizes = [32, 128], strides = [1, 1]} : vector<72x128xf32> to vector<32x128xf32>
    %c48_88 = arith.constant 48 : index
    %c0_89 = arith.constant 0 : index
    %130 = vector.load %arg5[%c48_88, %c0_89] : memref<88x128xf32, #tpu.memory_space<vmem>>, vector<32x128xf32>
    tpu.vector_store %arg5[%c48_88, %c0_89], %129 {strides = array<i32>} : memref<88x128xf32, #tpu.memory_space<vmem>>, vector<32x128xf32>,
    %c6_90 = arith.constant 6 : index
    %c0_91 = arith.constant 0 : index
    %131 = vector.load %arg5[%c6_90, %c0_91] : memref<88x128xf32, #tpu.memory_space<vmem>>, vector<72x128xf32>
    %cst_92 = arith.constant 0.000000e+00 : f32
    %132 = vector.broadcast %cst_92 : f32 to vector<72x128xf32>
    %133 = arith.maximumf %131, %132 : vector<72x128xf32>
    %c10_93 = arith.constant 10 : index
    %c0_94 = arith.constant 0 : index
    %c0_95 = arith.constant 0 : index
    %134 = vector.load %arg2[%c10_93, %c0_94, %c0_95] : memref<45x128x128xbf16, #tpu.memory_space<vmem>>, vector<1x128x128xbf16>
    %135 = vector.shape_cast %134 : vector<1x128x128xbf16> to vector<128x128xbf16>
    %136 = arith.truncf %133 : vector<72x128xf32> to vector<72x128xbf16>
    %cst_96 = arith.constant dense<0.000000e+00> : vector<72x128xf32>
    %137 = tpu.matmul %136, %135, %cst_96 {dimension_numbers = #tpu.dot_dimension_numbers<[1], [0], [0], [1], [0, 0, 1, 1], [], []>} : vector<72x128xbf16>, vector<128x128xbf16>, vector<72x128xf32> -> vector<72x128xf32>
    %c7_97 = arith.constant 7 : index
    %c0_98 = arith.constant 0 : index
    %138 = vector.load %arg5[%c7_97, %c0_98] : memref<88x128xf32, #tpu.memory_space<vmem>>, vector<72x128xf32>
    %cst_99 = arith.constant 0.000000e+00 : f32
    %139 = vector.broadcast %cst_99 : f32 to vector<72x128xf32>
    %140 = arith.maximumf %138, %139 : vector<72x128xf32>
    %c11 = arith.constant 11 : index
    %c0_100 = arith.constant 0 : index
    %c0_101 = arith.constant 0 : index
    %141 = vector.load %arg2[%c11, %c0_100, %c0_101] : memref<45x128x128xbf16, #tpu.memory_space<vmem>>, vector<1x128x128xbf16>
    %142 = vector.shape_cast %141 : vector<1x128x128xbf16> to vector<128x128xbf16>
    %143 = arith.truncf %140 : vector<72x128xf32> to vector<72x128xbf16>
    %cst_102 = arith.constant dense<0.000000e+00> : vector<72x128xf32>
    %144 = tpu.matmul %143, %142, %cst_102 {dimension_numbers = #tpu.dot_dimension_numbers<[1], [0], [0], [1], [0, 0, 1, 1], [], []>} : vector<72x128xbf16>, vector<128x128xbf16>, vector<72x128xf32> -> vector<72x128xf32>
    %145 = arith.addf %137, %144 : vector<72x128xf32>
    %c8_103 = arith.constant 8 : index
    %c0_104 = arith.constant 0 : index
    %146 = vector.load %arg5[%c8_103, %c0_104] : memref<88x128xf32, #tpu.memory_space<vmem>>, vector<72x128xf32>
    %cst_105 = arith.constant 0.000000e+00 : f32
    %147 = vector.broadcast %cst_105 : f32 to vector<72x128xf32>
    %148 = arith.maximumf %146, %147 : vector<72x128xf32>
    %c12 = arith.constant 12 : index
    %c0_106 = arith.constant 0 : index
    %c0_107 = arith.constant 0 : index
    %149 = vector.load %arg2[%c12, %c0_106, %c0_107] : memref<45x128x128xbf16, #tpu.memory_space<vmem>>, vector<1x128x128xbf16>
    %150 = vector.shape_cast %149 : vector<1x128x128xbf16> to vector<128x128xbf16>
    %151 = arith.truncf %148 : vector<72x128xf32> to vector<72x128xbf16>
    %cst_108 = arith.constant dense<0.000000e+00> : vector<72x128xf32>
    %152 = tpu.matmul %151, %150, %cst_108 {dimension_numbers = #tpu.dot_dimension_numbers<[1], [0], [0], [1], [0, 0, 1, 1], [], []>} : vector<72x128xbf16>, vector<128x128xbf16>, vector<72x128xf32> -> vector<72x128xf32>
    %153 = arith.addf %145, %152 : vector<72x128xf32>
    %c9_109 = arith.constant 9 : index
    %c0_110 = arith.constant 0 : index
    %154 = vector.load %arg5[%c9_109, %c0_110] : memref<88x128xf32, #tpu.memory_space<vmem>>, vector<72x128xf32>
    %cst_111 = arith.constant 0.000000e+00 : f32
    %155 = vector.broadcast %cst_111 : f32 to vector<72x128xf32>
    %156 = arith.maximumf %154, %155 : vector<72x128xf32>
    %c13 = arith.constant 13 : index
    %c0_112 = arith.constant 0 : index
    %c0_113 = arith.constant 0 : index
    %157 = vector.load %arg2[%c13, %c0_112, %c0_113] : memref<45x128x128xbf16, #tpu.memory_space<vmem>>, vector<1x128x128xbf16>
    %158 = vector.shape_cast %157 : vector<1x128x128xbf16> to vector<128x128xbf16>
    %159 = arith.truncf %156 : vector<72x128xf32> to vector<72x128xbf16>
    %cst_114 = arith.constant dense<0.000000e+00> : vector<72x128xf32>
    %160 = tpu.matmul %159, %158, %cst_114 {dimension_numbers = #tpu.dot_dimension_numbers<[1], [0], [0], [1], [0, 0, 1, 1], [], []>} : vector<72x128xbf16>, vector<128x128xbf16>, vector<72x128xf32> -> vector<72x128xf32>
    %161 = arith.addf %153, %160 : vector<72x128xf32>
    %c10_115 = arith.constant 10 : index
    %c0_116 = arith.constant 0 : index
    %162 = vector.load %arg5[%c10_115, %c0_116] : memref<88x128xf32, #tpu.memory_space<vmem>>, vector<72x128xf32>
    %cst_117 = arith.constant 0.000000e+00 : f32
    %163 = vector.broadcast %cst_117 : f32 to vector<72x128xf32>
    %164 = arith.maximumf %162, %163 : vector<72x128xf32>
    %c14 = arith.constant 14 : index
    %c0_118 = arith.constant 0 : index
    %c0_119 = arith.constant 0 : index
    %165 = vector.load %arg2[%c14, %c0_118, %c0_119] : memref<45x128x128xbf16, #tpu.memory_space<vmem>>, vector<1x128x128xbf16>
    %166 = vector.shape_cast %165 : vector<1x128x128xbf16> to vector<128x128xbf16>
    %167 = arith.truncf %164 : vector<72x128xf32> to vector<72x128xbf16>
    %cst_120 = arith.constant dense<0.000000e+00> : vector<72x128xf32>
    %168 = tpu.matmul %167, %166, %cst_120 {dimension_numbers = #tpu.dot_dimension_numbers<[1], [0], [0], [1], [0, 0, 1, 1], [], []>} : vector<72x128xbf16>, vector<128x128xbf16>, vector<72x128xf32> -> vector<72x128xf32>
    %169 = arith.addf %161, %168 : vector<72x128xf32>
    %c2_121 = arith.constant 2 : index
    %c0_122 = arith.constant 0 : index
    %c0_123 = arith.constant 0 : index
    %170 = vector.load %arg3[%c2_121, %c0_122, %c0_123] : memref<9x8x128xf32, #tpu.memory_space<vmem>>, vector<1x8x128xf32>
    %171 = vector.shape_cast %170 : vector<1x8x128xf32> to vector<8x128xf32>
    %172 = vector.extract_strided_slice %171 {offsets = [0, 0], sizes = [1, 128], strides = [1, 1]} : vector<8x128xf32> to vector<1x128xf32>
    %173 = vector.broadcast %172 : vector<1x128xf32> to vector<72x128xf32>
    %174 = arith.addf %169, %173 : vector<72x128xf32>
    %cst_124 = arith.constant 0.000000e+00 : f32
    %175 = vector.broadcast %cst_124 : f32 to vector<72x128xf32>
    %176 = arith.select %14, %174, %175 : vector<72x128xi1>, vector<72x128xf32>
    %cst_125 = arith.constant dense<0.000000e+00> : vector<72xf32>
    %177 = vector.multi_reduction <add>, %176, %cst_125 [1] : vector<72x128xf32> to vector<72xf32>
    %178 = vector.shape_cast %177 : vector<72xf32> to vector<72x1xf32>
    %cst_126 = arith.constant 3.125000e-02 : f32
    %179 = vector.broadcast %cst_126 : f32 to vector<72x1xf32>
    %180 = arith.mulf %178, %179 : vector<72x1xf32>
    %181 = vector.broadcast %180 : vector<72x1xf32> to vector<72x128xf32>
    %182 = arith.subf %174, %181 : vector<72x128xf32>
    %cst_127 = arith.constant 0.000000e+00 : f32
    %183 = vector.broadcast %cst_127 : f32 to vector<72x128xf32>
    %184 = arith.select %14, %182, %183 : vector<72x128xi1>, vector<72x128xf32>
    %185 = arith.mulf %184, %184 : vector<72x128xf32>
    %cst_128 = arith.constant dense<0.000000e+00> : vector<72xf32>
    %186 = vector.multi_reduction <add>, %185, %cst_128 [1] : vector<72x128xf32> to vector<72xf32>
    %187 = vector.shape_cast %186 : vector<72xf32> to vector<72x1xf32>
    %cst_129 = arith.constant 3.125000e-02 : f32
    %188 = vector.broadcast %cst_129 : f32 to vector<72x1xf32>
    %189 = arith.mulf %187, %188 : vector<72x1xf32>
    %190 = vector.broadcast %180 : vector<72x1xf32> to vector<72x128xf32>
    %191 = arith.subf %174, %190 : vector<72x128xf32>
    %cst_130 = arith.constant 9.99999974E-6 : f32
    %192 = vector.broadcast %cst_130 : f32 to vector<72x1xf32>
    %193 = arith.addf %189, %192 : vector<72x1xf32>
    %194 = math.rsqrt %193 : vector<72x1xf32>
    %195 = vector.broadcast %194 : vector<72x1xf32> to vector<72x128xf32>
    %196 = arith.mulf %191, %195 : vector<72x128xf32>
    %197 = vector.extract_strided_slice %171 {offsets = [1, 0], sizes = [1, 128], strides = [1, 1]} : vector<8x128xf32> to vector<1x128xf32>
    %198 = vector.broadcast %197 : vector<1x128xf32> to vector<72x128xf32>
    %199 = arith.mulf %196, %198 : vector<72x128xf32>
    %200 = vector.extract_strided_slice %171 {offsets = [2, 0], sizes = [1, 128], strides = [1, 1]} : vector<8x128xf32> to vector<1x128xf32>
    %201 = vector.broadcast %200 : vector<1x128xf32> to vector<72x128xf32>
    %202 = arith.addf %199, %201 : vector<72x128xf32>
    %203 = vector.extract_strided_slice %202 {offsets = [0, 0], sizes = [32, 128], strides = [1, 1]} : vector<72x128xf32> to vector<32x128xf32>
    %c8_131 = arith.constant 8 : index
    %c0_132 = arith.constant 0 : index
    %204 = vector.load %arg5[%c8_131, %c0_132] : memref<88x128xf32, #tpu.memory_space<vmem>>, vector<32x128xf32>
    tpu.vector_store %arg5[%c8_131, %c0_132], %203 {strides = array<i32>} : memref<88x128xf32, #tpu.memory_space<vmem>>, vector<32x128xf32>,
    %205 = vector.extract_strided_slice %202 {offsets = [40, 0], sizes = [32, 128], strides = [1, 1]} : vector<72x128xf32> to vector<32x128xf32>
    %c48_133 = arith.constant 48 : index
    %c0_134 = arith.constant 0 : index
    %206 = vector.load %arg5[%c48_133, %c0_134] : memref<88x128xf32, #tpu.memory_space<vmem>>, vector<32x128xf32>
    tpu.vector_store %arg5[%c48_133, %c0_134], %205 {strides = array<i32>} : memref<88x128xf32, #tpu.memory_space<vmem>>, vector<32x128xf32>,
    %c6_135 = arith.constant 6 : index
    %c0_136 = arith.constant 0 : index
    %207 = vector.load %arg5[%c6_135, %c0_136] : memref<88x128xf32, #tpu.memory_space<vmem>>, vector<72x128xf32>
    %c15 = arith.constant 15 : index
    %c0_137 = arith.constant 0 : index
    %c0_138 = arith.constant 0 : index
    %208 = vector.load %arg2[%c15, %c0_137, %c0_138] : memref<45x128x128xbf16, #tpu.memory_space<vmem>>, vector<1x128x128xbf16>
    %209 = vector.shape_cast %208 : vector<1x128x128xbf16> to vector<128x128xbf16>
    %210 = arith.truncf %207 : vector<72x128xf32> to vector<72x128xbf16>
    %cst_139 = arith.constant dense<0.000000e+00> : vector<72x128xf32>
    %211 = tpu.matmul %210, %209, %cst_139 {dimension_numbers = #tpu.dot_dimension_numbers<[1], [0], [0], [1], [0, 0, 1, 1], [], []>} : vector<72x128xbf16>, vector<128x128xbf16>, vector<72x128xf32> -> vector<72x128xf32>
    %c7_140 = arith.constant 7 : index
    %c0_141 = arith.constant 0 : index
    %212 = vector.load %arg5[%c7_140, %c0_141] : memref<88x128xf32, #tpu.memory_space<vmem>>, vector<72x128xf32>
    %c16 = arith.constant 16 : index
    %c0_142 = arith.constant 0 : index
    %c0_143 = arith.constant 0 : index
    %213 = vector.load %arg2[%c16, %c0_142, %c0_143] : memref<45x128x128xbf16, #tpu.memory_space<vmem>>, vector<1x128x128xbf16>
    %214 = vector.shape_cast %213 : vector<1x128x128xbf16> to vector<128x128xbf16>
    %215 = arith.truncf %212 : vector<72x128xf32> to vector<72x128xbf16>
    %cst_144 = arith.constant dense<0.000000e+00> : vector<72x128xf32>
    %216 = tpu.matmul %215, %214, %cst_144 {dimension_numbers = #tpu.dot_dimension_numbers<[1], [0], [0], [1], [0, 0, 1, 1], [], []>} : vector<72x128xbf16>, vector<128x128xbf16>, vector<72x128xf32> -> vector<72x128xf32>
    %217 = arith.addf %211, %216 : vector<72x128xf32>
    %c8_145 = arith.constant 8 : index
    %c0_146 = arith.constant 0 : index
    %218 = vector.load %arg5[%c8_145, %c0_146] : memref<88x128xf32, #tpu.memory_space<vmem>>, vector<72x128xf32>
    %c17 = arith.constant 17 : index
    %c0_147 = arith.constant 0 : index
    %c0_148 = arith.constant 0 : index
    %219 = vector.load %arg2[%c17, %c0_147, %c0_148] : memref<45x128x128xbf16, #tpu.memory_space<vmem>>, vector<1x128x128xbf16>
    %220 = vector.shape_cast %219 : vector<1x128x128xbf16> to vector<128x128xbf16>
    %221 = arith.truncf %218 : vector<72x128xf32> to vector<72x128xbf16>
    %cst_149 = arith.constant dense<0.000000e+00> : vector<72x128xf32>
    %222 = tpu.matmul %221, %220, %cst_149 {dimension_numbers = #tpu.dot_dimension_numbers<[1], [0], [0], [1], [0, 0, 1, 1], [], []>} : vector<72x128xbf16>, vector<128x128xbf16>, vector<72x128xf32> -> vector<72x128xf32>
    %223 = arith.addf %217, %222 : vector<72x128xf32>
    %c9_150 = arith.constant 9 : index
    %c0_151 = arith.constant 0 : index
    %224 = vector.load %arg5[%c9_150, %c0_151] : memref<88x128xf32, #tpu.memory_space<vmem>>, vector<72x128xf32>
    %c18 = arith.constant 18 : index
    %c0_152 = arith.constant 0 : index
    %c0_153 = arith.constant 0 : index
    %225 = vector.load %arg2[%c18, %c0_152, %c0_153] : memref<45x128x128xbf16, #tpu.memory_space<vmem>>, vector<1x128x128xbf16>
    %226 = vector.shape_cast %225 : vector<1x128x128xbf16> to vector<128x128xbf16>
    %227 = arith.truncf %224 : vector<72x128xf32> to vector<72x128xbf16>
    %cst_154 = arith.constant dense<0.000000e+00> : vector<72x128xf32>
    %228 = tpu.matmul %227, %226, %cst_154 {dimension_numbers = #tpu.dot_dimension_numbers<[1], [0], [0], [1], [0, 0, 1, 1], [], []>} : vector<72x128xbf16>, vector<128x128xbf16>, vector<72x128xf32> -> vector<72x128xf32>
    %229 = arith.addf %223, %228 : vector<72x128xf32>
    %c10_155 = arith.constant 10 : index
    %c0_156 = arith.constant 0 : index
    %230 = vector.load %arg5[%c10_155, %c0_156] : memref<88x128xf32, #tpu.memory_space<vmem>>, vector<72x128xf32>
    %c19 = arith.constant 19 : index
    %c0_157 = arith.constant 0 : index
    %c0_158 = arith.constant 0 : index
    %231 = vector.load %arg2[%c19, %c0_157, %c0_158] : memref<45x128x128xbf16, #tpu.memory_space<vmem>>, vector<1x128x128xbf16>
    %232 = vector.shape_cast %231 : vector<1x128x128xbf16> to vector<128x128xbf16>
    %233 = arith.truncf %230 : vector<72x128xf32> to vector<72x128xbf16>
    %cst_159 = arith.constant dense<0.000000e+00> : vector<72x128xf32>
    %234 = tpu.matmul %233, %232, %cst_159 {dimension_numbers = #tpu.dot_dimension_numbers<[1], [0], [0], [1], [0, 0, 1, 1], [], []>} : vector<72x128xbf16>, vector<128x128xbf16>, vector<72x128xf32> -> vector<72x128xf32>
    %235 = arith.addf %229, %234 : vector<72x128xf32>
    %c3_160 = arith.constant 3 : index
    %c0_161 = arith.constant 0 : index
    %c0_162 = arith.constant 0 : index
    %236 = vector.load %arg3[%c3_160, %c0_161, %c0_162] : memref<9x8x128xf32, #tpu.memory_space<vmem>>, vector<1x8x128xf32>
    %237 = vector.shape_cast %236 : vector<1x8x128xf32> to vector<8x128xf32>
    %238 = vector.extract_strided_slice %237 {offsets = [0, 0], sizes = [1, 128], strides = [1, 1]} : vector<8x128xf32> to vector<1x128xf32>
    %239 = vector.broadcast %238 : vector<1x128xf32> to vector<72x128xf32>
    %240 = arith.addf %235, %239 : vector<72x128xf32>
    %cst_163 = arith.constant 0.000000e+00 : f32
    %241 = vector.broadcast %cst_163 : f32 to vector<72x128xf32>
    %242 = arith.maximumf %240, %241 : vector<72x128xf32>
    %243 = vector.extract_strided_slice %242 {offsets = [0, 0], sizes = [32, 128], strides = [1, 1]} : vector<72x128xf32> to vector<32x128xf32>
    %c8_164 = arith.constant 8 : index
    %c0_165 = arith.constant 0 : index
    %244 = vector.load %arg5[%c8_164, %c0_165] : memref<88x128xf32, #tpu.memory_space<vmem>>, vector<32x128xf32>
    tpu.vector_store %arg5[%c8_164, %c0_165], %243 {strides = array<i32>} : memref<88x128xf32, #tpu.memory_space<vmem>>, vector<32x128xf32>,
    %245 = vector.extract_strided_slice %242 {offsets = [40, 0], sizes = [32, 128], strides = [1, 1]} : vector<72x128xf32> to vector<32x128xf32>
    %c48_166 = arith.constant 48 : index
    %c0_167 = arith.constant 0 : index
    %246 = vector.load %arg5[%c48_166, %c0_167] : memref<88x128xf32, #tpu.memory_space<vmem>>, vector<32x128xf32>
    tpu.vector_store %arg5[%c48_166, %c0_167], %245 {strides = array<i32>} : memref<88x128xf32, #tpu.memory_space<vmem>>, vector<32x128xf32>,
    %c0_168 = arith.constant 0 : index
    %c0_169 = arith.constant 0 : index
    %247 = vector.load %arg5[%c0_168, %c0_169] : memref<88x128xf32, #tpu.memory_space<vmem>>, vector<88x128xf32>
    %c0_170 = arith.constant 0 : index
    %c0_171 = arith.constant 0 : index
    %248 = vector.load %arg6[%c0_170, %c0_171] : memref<88x128xf32, #tpu.memory_space<vmem>>, vector<88x128xf32>
    tpu.vector_store %arg6[%c0_170, %c0_171], %247 {strides = array<i32>} : memref<88x128xf32, #tpu.memory_space<vmem>>, vector<88x128xf32>,
    %c6_172 = arith.constant 6 : index
    %c0_173 = arith.constant 0 : index
    %249 = vector.load %arg5[%c6_172, %c0_173] : memref<88x128xf32, #tpu.memory_space<vmem>>, vector<72x128xf32>
    %cst_174 = arith.constant 0.000000e+00 : f32
    %250 = vector.broadcast %cst_174 : f32 to vector<72x128xf32>
    %251 = arith.maximumf %249, %250 : vector<72x128xf32>
    %c20 = arith.constant 20 : index
    %c0_175 = arith.constant 0 : index
    %c0_176 = arith.constant 0 : index
    %252 = vector.load %arg2[%c20, %c0_175, %c0_176] : memref<45x128x128xbf16, #tpu.memory_space<vmem>>, vector<1x128x128xbf16>
    %253 = vector.shape_cast %252 : vector<1x128x128xbf16> to vector<128x128xbf16>
    %254 = arith.truncf %251 : vector<72x128xf32> to vector<72x128xbf16>
    %cst_177 = arith.constant dense<0.000000e+00> : vector<72x128xf32>
    %255 = tpu.matmul %254, %253, %cst_177 {dimension_numbers = #tpu.dot_dimension_numbers<[1], [0], [0], [1], [0, 0, 1, 1], [], []>} : vector<72x128xbf16>, vector<128x128xbf16>, vector<72x128xf32> -> vector<72x128xf32>
    %c7_178 = arith.constant 7 : index
    %c0_179 = arith.constant 0 : index
    %256 = vector.load %arg5[%c7_178, %c0_179] : memref<88x128xf32, #tpu.memory_space<vmem>>, vector<72x128xf32>
    %cst_180 = arith.constant 0.000000e+00 : f32
    %257 = vector.broadcast %cst_180 : f32 to vector<72x128xf32>
    %258 = arith.maximumf %256, %257 : vector<72x128xf32>
    %c21 = arith.constant 21 : index
    %c0_181 = arith.constant 0 : index
    %c0_182 = arith.constant 0 : index
    %259 = vector.load %arg2[%c21, %c0_181, %c0_182] : memref<45x128x128xbf16, #tpu.memory_space<vmem>>, vector<1x128x128xbf16>
    %260 = vector.shape_cast %259 : vector<1x128x128xbf16> to vector<128x128xbf16>
    %261 = arith.truncf %258 : vector<72x128xf32> to vector<72x128xbf16>
    %cst_183 = arith.constant dense<0.000000e+00> : vector<72x128xf32>
    %262 = tpu.matmul %261, %260, %cst_183 {dimension_numbers = #tpu.dot_dimension_numbers<[1], [0], [0], [1], [0, 0, 1, 1], [], []>} : vector<72x128xbf16>, vector<128x128xbf16>, vector<72x128xf32> -> vector<72x128xf32>
    %263 = arith.addf %255, %262 : vector<72x128xf32>
    %c8_184 = arith.constant 8 : index
    %c0_185 = arith.constant 0 : index
    %264 = vector.load %arg5[%c8_184, %c0_185] : memref<88x128xf32, #tpu.memory_space<vmem>>, vector<72x128xf32>
    %cst_186 = arith.constant 0.000000e+00 : f32
    %265 = vector.broadcast %cst_186 : f32 to vector<72x128xf32>
    %266 = arith.maximumf %264, %265 : vector<72x128xf32>
    %c22 = arith.constant 22 : index
    %c0_187 = arith.constant 0 : index
    %c0_188 = arith.constant 0 : index
    %267 = vector.load %arg2[%c22, %c0_187, %c0_188] : memref<45x128x128xbf16, #tpu.memory_space<vmem>>, vector<1x128x128xbf16>
    %268 = vector.shape_cast %267 : vector<1x128x128xbf16> to vector<128x128xbf16>
    %269 = arith.truncf %266 : vector<72x128xf32> to vector<72x128xbf16>
    %cst_189 = arith.constant dense<0.000000e+00> : vector<72x128xf32>
    %270 = tpu.matmul %269, %268, %cst_189 {dimension_numbers = #tpu.dot_dimension_numbers<[1], [0], [0], [1], [0, 0, 1, 1], [], []>} : vector<72x128xbf16>, vector<128x128xbf16>, vector<72x128xf32> -> vector<72x128xf32>
    %271 = arith.addf %263, %270 : vector<72x128xf32>
    %c9_190 = arith.constant 9 : index
    %c0_191 = arith.constant 0 : index
    %272 = vector.load %arg5[%c9_190, %c0_191] : memref<88x128xf32, #tpu.memory_space<vmem>>, vector<72x128xf32>
    %cst_192 = arith.constant 0.000000e+00 : f32
    %273 = vector.broadcast %cst_192 : f32 to vector<72x128xf32>
    %274 = arith.maximumf %272, %273 : vector<72x128xf32>
    %c23 = arith.constant 23 : index
    %c0_193 = arith.constant 0 : index
    %c0_194 = arith.constant 0 : index
    %275 = vector.load %arg2[%c23, %c0_193, %c0_194] : memref<45x128x128xbf16, #tpu.memory_space<vmem>>, vector<1x128x128xbf16>
    %276 = vector.shape_cast %275 : vector<1x128x128xbf16> to vector<128x128xbf16>
    %277 = arith.truncf %274 : vector<72x128xf32> to vector<72x128xbf16>
    %cst_195 = arith.constant dense<0.000000e+00> : vector<72x128xf32>
    %278 = tpu.matmul %277, %276, %cst_195 {dimension_numbers = #tpu.dot_dimension_numbers<[1], [0], [0], [1], [0, 0, 1, 1], [], []>} : vector<72x128xbf16>, vector<128x128xbf16>, vector<72x128xf32> -> vector<72x128xf32>
    %279 = arith.addf %271, %278 : vector<72x128xf32>
    %c10_196 = arith.constant 10 : index
    %c0_197 = arith.constant 0 : index
    %280 = vector.load %arg5[%c10_196, %c0_197] : memref<88x128xf32, #tpu.memory_space<vmem>>, vector<72x128xf32>
    %cst_198 = arith.constant 0.000000e+00 : f32
    %281 = vector.broadcast %cst_198 : f32 to vector<72x128xf32>
    %282 = arith.maximumf %280, %281 : vector<72x128xf32>
    %c24 = arith.constant 24 : index
    %c0_199 = arith.constant 0 : index
    %c0_200 = arith.constant 0 : index
    %283 = vector.load %arg2[%c24, %c0_199, %c0_200] : memref<45x128x128xbf16, #tpu.memory_space<vmem>>, vector<1x128x128xbf16>
    %284 = vector.shape_cast %283 : vector<1x128x128xbf16> to vector<128x128xbf16>
    %285 = arith.truncf %282 : vector<72x128xf32> to vector<72x128xbf16>
    %cst_201 = arith.constant dense<0.000000e+00> : vector<72x128xf32>
    %286 = tpu.matmul %285, %284, %cst_201 {dimension_numbers = #tpu.dot_dimension_numbers<[1], [0], [0], [1], [0, 0, 1, 1], [], []>} : vector<72x128xbf16>, vector<128x128xbf16>, vector<72x128xf32> -> vector<72x128xf32>
    %287 = arith.addf %279, %286 : vector<72x128xf32>
    %c4_202 = arith.constant 4 : index
    %c0_203 = arith.constant 0 : index
    %c0_204 = arith.constant 0 : index
    %288 = vector.load %arg3[%c4_202, %c0_203, %c0_204] : memref<9x8x128xf32, #tpu.memory_space<vmem>>, vector<1x8x128xf32>
    %289 = vector.shape_cast %288 : vector<1x8x128xf32> to vector<8x128xf32>
    %290 = vector.extract_strided_slice %289 {offsets = [0, 0], sizes = [1, 128], strides = [1, 1]} : vector<8x128xf32> to vector<1x128xf32>
    %291 = vector.broadcast %290 : vector<1x128xf32> to vector<72x128xf32>
    %292 = arith.addf %287, %291 : vector<72x128xf32>
    %cst_205 = arith.constant 0.000000e+00 : f32
    %293 = vector.broadcast %cst_205 : f32 to vector<72x128xf32>
    %294 = arith.select %16, %292, %293 : vector<72x128xi1>, vector<72x128xf32>
    %cst_206 = arith.constant dense<0.000000e+00> : vector<72xf32>
    %295 = vector.multi_reduction <add>, %294, %cst_206 [1] : vector<72x128xf32> to vector<72xf32>
    %296 = vector.shape_cast %295 : vector<72xf32> to vector<72x1xf32>
    %cst_207 = arith.constant 1.562500e-02 : f32
    %297 = vector.broadcast %cst_207 : f32 to vector<72x1xf32>
    %298 = arith.mulf %296, %297 : vector<72x1xf32>
    %299 = vector.broadcast %298 : vector<72x1xf32> to vector<72x128xf32>
    %300 = arith.subf %292, %299 : vector<72x128xf32>
    %cst_208 = arith.constant 0.000000e+00 : f32
    %301 = vector.broadcast %cst_208 : f32 to vector<72x128xf32>
    %302 = arith.select %16, %300, %301 : vector<72x128xi1>, vector<72x128xf32>
    %303 = arith.mulf %302, %302 : vector<72x128xf32>
    %cst_209 = arith.constant dense<0.000000e+00> : vector<72xf32>
    %304 = vector.multi_reduction <add>, %303, %cst_209 [1] : vector<72x128xf32> to vector<72xf32>
    %305 = vector.shape_cast %304 : vector<72xf32> to vector<72x1xf32>
    %cst_210 = arith.constant 1.562500e-02 : f32
    %306 = vector.broadcast %cst_210 : f32 to vector<72x1xf32>
    %307 = arith.mulf %305, %306 : vector<72x1xf32>
    %308 = vector.broadcast %298 : vector<72x1xf32> to vector<72x128xf32>
    %309 = arith.subf %292, %308 : vector<72x128xf32>
    %cst_211 = arith.constant 9.99999974E-6 : f32
    %310 = vector.broadcast %cst_211 : f32 to vector<72x1xf32>
    %311 = arith.addf %307, %310 : vector<72x1xf32>
    %312 = math.rsqrt %311 : vector<72x1xf32>
    %313 = vector.broadcast %312 : vector<72x1xf32> to vector<72x128xf32>
    %314 = arith.mulf %309, %313 : vector<72x128xf32>
    %315 = vector.extract_strided_slice %289 {offsets = [1, 0], sizes = [1, 128], strides = [1, 1]} : vector<8x128xf32> to vector<1x128xf32>
    %316 = vector.broadcast %315 : vector<1x128xf32> to vector<72x128xf32>
    %317 = arith.mulf %314, %316 : vector<72x128xf32>
    %318 = vector.extract_strided_slice %289 {offsets = [2, 0], sizes = [1, 128], strides = [1, 1]} : vector<8x128xf32> to vector<1x128xf32>
    %319 = vector.broadcast %318 : vector<1x128xf32> to vector<72x128xf32>
    %320 = arith.addf %317, %319 : vector<72x128xf32>
    %321 = vector.extract_strided_slice %320 {offsets = [0, 0], sizes = [32, 128], strides = [1, 1]} : vector<72x128xf32> to vector<32x128xf32>
    %c8_212 = arith.constant 8 : index
    %c0_213 = arith.constant 0 : index
    %322 = vector.load %arg5[%c8_212, %c0_213] : memref<88x128xf32, #tpu.memory_space<vmem>>, vector<32x128xf32>
    tpu.vector_store %arg5[%c8_212, %c0_213], %321 {strides = array<i32>} : memref<88x128xf32, #tpu.memory_space<vmem>>, vector<32x128xf32>,
    %323 = vector.extract_strided_slice %320 {offsets = [40, 0], sizes = [32, 128], strides = [1, 1]} : vector<72x128xf32> to vector<32x128xf32>
    %c48_214 = arith.constant 48 : index
    %c0_215 = arith.constant 0 : index
    %324 = vector.load %arg5[%c48_214, %c0_215] : memref<88x128xf32, #tpu.memory_space<vmem>>, vector<32x128xf32>
    tpu.vector_store %arg5[%c48_214, %c0_215], %323 {strides = array<i32>} : memref<88x128xf32, #tpu.memory_space<vmem>>, vector<32x128xf32>,
    %c6_216 = arith.constant 6 : index
    %c0_217 = arith.constant 0 : index
    %325 = vector.load %arg5[%c6_216, %c0_217] : memref<88x128xf32, #tpu.memory_space<vmem>>, vector<72x128xf32>
    %cst_218 = arith.constant 0.000000e+00 : f32
    %326 = vector.broadcast %cst_218 : f32 to vector<72x128xf32>
    %327 = arith.maximumf %325, %326 : vector<72x128xf32>
    %c25 = arith.constant 25 : index
    %c0_219 = arith.constant 0 : index
    %c0_220 = arith.constant 0 : index
    %328 = vector.load %arg2[%c25, %c0_219, %c0_220] : memref<45x128x128xbf16, #tpu.memory_space<vmem>>, vector<1x128x128xbf16>
    %329 = vector.shape_cast %328 : vector<1x128x128xbf16> to vector<128x128xbf16>
    %330 = arith.truncf %327 : vector<72x128xf32> to vector<72x128xbf16>
    %cst_221 = arith.constant dense<0.000000e+00> : vector<72x128xf32>
    %331 = tpu.matmul %330, %329, %cst_221 {dimension_numbers = #tpu.dot_dimension_numbers<[1], [0], [0], [1], [0, 0, 1, 1], [], []>} : vector<72x128xbf16>, vector<128x128xbf16>, vector<72x128xf32> -> vector<72x128xf32>
    %c7_222 = arith.constant 7 : index
    %c0_223 = arith.constant 0 : index
    %332 = vector.load %arg5[%c7_222, %c0_223] : memref<88x128xf32, #tpu.memory_space<vmem>>, vector<72x128xf32>
    %cst_224 = arith.constant 0.000000e+00 : f32
    %333 = vector.broadcast %cst_224 : f32 to vector<72x128xf32>
    %334 = arith.maximumf %332, %333 : vector<72x128xf32>
    %c26 = arith.constant 26 : index
    %c0_225 = arith.constant 0 : index
    %c0_226 = arith.constant 0 : index
    %335 = vector.load %arg2[%c26, %c0_225, %c0_226] : memref<45x128x128xbf16, #tpu.memory_space<vmem>>, vector<1x128x128xbf16>
    %336 = vector.shape_cast %335 : vector<1x128x128xbf16> to vector<128x128xbf16>
    %337 = arith.truncf %334 : vector<72x128xf32> to vector<72x128xbf16>
    %cst_227 = arith.constant dense<0.000000e+00> : vector<72x128xf32>
    %338 = tpu.matmul %337, %336, %cst_227 {dimension_numbers = #tpu.dot_dimension_numbers<[1], [0], [0], [1], [0, 0, 1, 1], [], []>} : vector<72x128xbf16>, vector<128x128xbf16>, vector<72x128xf32> -> vector<72x128xf32>
    %339 = arith.addf %331, %338 : vector<72x128xf32>
    %c8_228 = arith.constant 8 : index
    %c0_229 = arith.constant 0 : index
    %340 = vector.load %arg5[%c8_228, %c0_229] : memref<88x128xf32, #tpu.memory_space<vmem>>, vector<72x128xf32>
    %cst_230 = arith.constant 0.000000e+00 : f32
    %341 = vector.broadcast %cst_230 : f32 to vector<72x128xf32>
    %342 = arith.maximumf %340, %341 : vector<72x128xf32>
    %c27 = arith.constant 27 : index
    %c0_231 = arith.constant 0 : index
    %c0_232 = arith.constant 0 : index
    %343 = vector.load %arg2[%c27, %c0_231, %c0_232] : memref<45x128x128xbf16, #tpu.memory_space<vmem>>, vector<1x128x128xbf16>
    %344 = vector.shape_cast %343 : vector<1x128x128xbf16> to vector<128x128xbf16>
    %345 = arith.truncf %342 : vector<72x128xf32> to vector<72x128xbf16>
    %cst_233 = arith.constant dense<0.000000e+00> : vector<72x128xf32>
    %346 = tpu.matmul %345, %344, %cst_233 {dimension_numbers = #tpu.dot_dimension_numbers<[1], [0], [0], [1], [0, 0, 1, 1], [], []>} : vector<72x128xbf16>, vector<128x128xbf16>, vector<72x128xf32> -> vector<72x128xf32>
    %347 = arith.addf %339, %346 : vector<72x128xf32>
    %c9_234 = arith.constant 9 : index
    %c0_235 = arith.constant 0 : index
    %348 = vector.load %arg5[%c9_234, %c0_235] : memref<88x128xf32, #tpu.memory_space<vmem>>, vector<72x128xf32>
    %cst_236 = arith.constant 0.000000e+00 : f32
    %349 = vector.broadcast %cst_236 : f32 to vector<72x128xf32>
    %350 = arith.maximumf %348, %349 : vector<72x128xf32>
    %c28 = arith.constant 28 : index
    %c0_237 = arith.constant 0 : index
    %c0_238 = arith.constant 0 : index
    %351 = vector.load %arg2[%c28, %c0_237, %c0_238] : memref<45x128x128xbf16, #tpu.memory_space<vmem>>, vector<1x128x128xbf16>
    %352 = vector.shape_cast %351 : vector<1x128x128xbf16> to vector<128x128xbf16>
    %353 = arith.truncf %350 : vector<72x128xf32> to vector<72x128xbf16>
    %cst_239 = arith.constant dense<0.000000e+00> : vector<72x128xf32>
    %354 = tpu.matmul %353, %352, %cst_239 {dimension_numbers = #tpu.dot_dimension_numbers<[1], [0], [0], [1], [0, 0, 1, 1], [], []>} : vector<72x128xbf16>, vector<128x128xbf16>, vector<72x128xf32> -> vector<72x128xf32>
    %355 = arith.addf %347, %354 : vector<72x128xf32>
    %c10_240 = arith.constant 10 : index
    %c0_241 = arith.constant 0 : index
    %356 = vector.load %arg5[%c10_240, %c0_241] : memref<88x128xf32, #tpu.memory_space<vmem>>, vector<72x128xf32>
    %cst_242 = arith.constant 0.000000e+00 : f32
    %357 = vector.broadcast %cst_242 : f32 to vector<72x128xf32>
    %358 = arith.maximumf %356, %357 : vector<72x128xf32>
    %c29 = arith.constant 29 : index
    %c0_243 = arith.constant 0 : index
    %c0_244 = arith.constant 0 : index
    %359 = vector.load %arg2[%c29, %c0_243, %c0_244] : memref<45x128x128xbf16, #tpu.memory_space<vmem>>, vector<1x128x128xbf16>
    %360 = vector.shape_cast %359 : vector<1x128x128xbf16> to vector<128x128xbf16>
    %361 = arith.truncf %358 : vector<72x128xf32> to vector<72x128xbf16>
    %cst_245 = arith.constant dense<0.000000e+00> : vector<72x128xf32>
    %362 = tpu.matmul %361, %360, %cst_245 {dimension_numbers = #tpu.dot_dimension_numbers<[1], [0], [0], [1], [0, 0, 1, 1], [], []>} : vector<72x128xbf16>, vector<128x128xbf16>, vector<72x128xf32> -> vector<72x128xf32>
    %363 = arith.addf %355, %362 : vector<72x128xf32>
    %c5_246 = arith.constant 5 : index
    %c0_247 = arith.constant 0 : index
    %c0_248 = arith.constant 0 : index
    %364 = vector.load %arg3[%c5_246, %c0_247, %c0_248] : memref<9x8x128xf32, #tpu.memory_space<vmem>>, vector<1x8x128xf32>
    %365 = vector.shape_cast %364 : vector<1x8x128xf32> to vector<8x128xf32>
    %366 = vector.extract_strided_slice %365 {offsets = [0, 0], sizes = [1, 128], strides = [1, 1]} : vector<8x128xf32> to vector<1x128xf32>
    %367 = vector.broadcast %366 : vector<1x128xf32> to vector<72x128xf32>
    %368 = arith.addf %363, %367 : vector<72x128xf32>
    %cst_249 = arith.constant 0.000000e+00 : f32
    %369 = vector.broadcast %cst_249 : f32 to vector<72x128xf32>
    %370 = arith.select %16, %368, %369 : vector<72x128xi1>, vector<72x128xf32>
    %cst_250 = arith.constant dense<0.000000e+00> : vector<72xf32>
    %371 = vector.multi_reduction <add>, %370, %cst_250 [1] : vector<72x128xf32> to vector<72xf32>
    %372 = vector.shape_cast %371 : vector<72xf32> to vector<72x1xf32>
    %cst_251 = arith.constant 1.562500e-02 : f32
    %373 = vector.broadcast %cst_251 : f32 to vector<72x1xf32>
    %374 = arith.mulf %372, %373 : vector<72x1xf32>
    %375 = vector.broadcast %374 : vector<72x1xf32> to vector<72x128xf32>
    %376 = arith.subf %368, %375 : vector<72x128xf32>
    %cst_252 = arith.constant 0.000000e+00 : f32
    %377 = vector.broadcast %cst_252 : f32 to vector<72x128xf32>
    %378 = arith.select %16, %376, %377 : vector<72x128xi1>, vector<72x128xf32>
    %379 = arith.mulf %378, %378 : vector<72x128xf32>
    %cst_253 = arith.constant dense<0.000000e+00> : vector<72xf32>
    %380 = vector.multi_reduction <add>, %379, %cst_253 [1] : vector<72x128xf32> to vector<72xf32>
    %381 = vector.shape_cast %380 : vector<72xf32> to vector<72x1xf32>
    %cst_254 = arith.constant 1.562500e-02 : f32
    %382 = vector.broadcast %cst_254 : f32 to vector<72x1xf32>
    %383 = arith.mulf %381, %382 : vector<72x1xf32>
    %384 = vector.broadcast %374 : vector<72x1xf32> to vector<72x128xf32>
    %385 = arith.subf %368, %384 : vector<72x128xf32>
    %cst_255 = arith.constant 9.99999974E-6 : f32
    %386 = vector.broadcast %cst_255 : f32 to vector<72x1xf32>
    %387 = arith.addf %383, %386 : vector<72x1xf32>
    %388 = math.rsqrt %387 : vector<72x1xf32>
    %389 = vector.broadcast %388 : vector<72x1xf32> to vector<72x128xf32>
    %390 = arith.mulf %385, %389 : vector<72x128xf32>
    %391 = vector.extract_strided_slice %365 {offsets = [1, 0], sizes = [1, 128], strides = [1, 1]} : vector<8x128xf32> to vector<1x128xf32>
    %392 = vector.broadcast %391 : vector<1x128xf32> to vector<72x128xf32>
    %393 = arith.mulf %390, %392 : vector<72x128xf32>
    %394 = vector.extract_strided_slice %365 {offsets = [2, 0], sizes = [1, 128], strides = [1, 1]} : vector<8x128xf32> to vector<1x128xf32>
    %395 = vector.broadcast %394 : vector<1x128xf32> to vector<72x128xf32>
    %396 = arith.addf %393, %395 : vector<72x128xf32>
    %397 = vector.extract_strided_slice %396 {offsets = [0, 0], sizes = [32, 128], strides = [1, 1]} : vector<72x128xf32> to vector<32x128xf32>
    %c8_256 = arith.constant 8 : index
    %c0_257 = arith.constant 0 : index
    %398 = vector.load %arg6[%c8_256, %c0_257] : memref<88x128xf32, #tpu.memory_space<vmem>>, vector<32x128xf32>
    %399 = arith.addf %397, %398 : vector<32x128xf32>
    %c8_258 = arith.constant 8 : index
    %c0_259 = arith.constant 0 : index
    %400 = vector.load %arg5[%c8_258, %c0_259] : memref<88x128xf32, #tpu.memory_space<vmem>>, vector<32x128xf32>
    tpu.vector_store %arg5[%c8_258, %c0_259], %399 {strides = array<i32>} : memref<88x128xf32, #tpu.memory_space<vmem>>, vector<32x128xf32>,
    %401 = vector.extract_strided_slice %396 {offsets = [40, 0], sizes = [32, 128], strides = [1, 1]} : vector<72x128xf32> to vector<32x128xf32>
    %c48_260 = arith.constant 48 : index
    %c0_261 = arith.constant 0 : index
    %402 = vector.load %arg6[%c48_260, %c0_261] : memref<88x128xf32, #tpu.memory_space<vmem>>, vector<32x128xf32>
    %403 = arith.addf %401, %402 : vector<32x128xf32>
    %c48_262 = arith.constant 48 : index
    %c0_263 = arith.constant 0 : index
    %404 = vector.load %arg5[%c48_262, %c0_263] : memref<88x128xf32, #tpu.memory_space<vmem>>, vector<32x128xf32>
    tpu.vector_store %arg5[%c48_262, %c0_263], %403 {strides = array<i32>} : memref<88x128xf32, #tpu.memory_space<vmem>>, vector<32x128xf32>,
    %c0_264 = arith.constant 0 : index
    %c0_265 = arith.constant 0 : index
    %405 = vector.load %arg5[%c0_264, %c0_265] : memref<88x128xf32, #tpu.memory_space<vmem>>, vector<88x128xf32>
    %c0_266 = arith.constant 0 : index
    %c0_267 = arith.constant 0 : index
    %406 = vector.load %arg6[%c0_266, %c0_267] : memref<88x128xf32, #tpu.memory_space<vmem>>, vector<88x128xf32>
    tpu.vector_store %arg6[%c0_266, %c0_267], %405 {strides = array<i32>} : memref<88x128xf32, #tpu.memory_space<vmem>>, vector<88x128xf32>,
    %c6_268 = arith.constant 6 : index
    %c0_269 = arith.constant 0 : index
    %407 = vector.load %arg5[%c6_268, %c0_269] : memref<88x128xf32, #tpu.memory_space<vmem>>, vector<72x128xf32>
    %cst_270 = arith.constant 0.000000e+00 : f32
    %408 = vector.broadcast %cst_270 : f32 to vector<72x128xf32>
    %409 = arith.maximumf %407, %408 : vector<72x128xf32>
    %c30 = arith.constant 30 : index
    %c0_271 = arith.constant 0 : index
    %c0_272 = arith.constant 0 : index
    %410 = vector.load %arg2[%c30, %c0_271, %c0_272] : memref<45x128x128xbf16, #tpu.memory_space<vmem>>, vector<1x128x128xbf16>
    %411 = vector.shape_cast %410 : vector<1x128x128xbf16> to vector<128x128xbf16>
    %412 = arith.truncf %409 : vector<72x128xf32> to vector<72x128xbf16>
    %cst_273 = arith.constant dense<0.000000e+00> : vector<72x128xf32>
    %413 = tpu.matmul %412, %411, %cst_273 {dimension_numbers = #tpu.dot_dimension_numbers<[1], [0], [0], [1], [0, 0, 1, 1], [], []>} : vector<72x128xbf16>, vector<128x128xbf16>, vector<72x128xf32> -> vector<72x128xf32>
    %c7_274 = arith.constant 7 : index
    %c0_275 = arith.constant 0 : index
    %414 = vector.load %arg5[%c7_274, %c0_275] : memref<88x128xf32, #tpu.memory_space<vmem>>, vector<72x128xf32>
    %cst_276 = arith.constant 0.000000e+00 : f32
    %415 = vector.broadcast %cst_276 : f32 to vector<72x128xf32>
    %416 = arith.maximumf %414, %415 : vector<72x128xf32>
    %c31 = arith.constant 31 : index
    %c0_277 = arith.constant 0 : index
    %c0_278 = arith.constant 0 : index
    %417 = vector.load %arg2[%c31, %c0_277, %c0_278] : memref<45x128x128xbf16, #tpu.memory_space<vmem>>, vector<1x128x128xbf16>
    %418 = vector.shape_cast %417 : vector<1x128x128xbf16> to vector<128x128xbf16>
    %419 = arith.truncf %416 : vector<72x128xf32> to vector<72x128xbf16>
    %cst_279 = arith.constant dense<0.000000e+00> : vector<72x128xf32>
    %420 = tpu.matmul %419, %418, %cst_279 {dimension_numbers = #tpu.dot_dimension_numbers<[1], [0], [0], [1], [0, 0, 1, 1], [], []>} : vector<72x128xbf16>, vector<128x128xbf16>, vector<72x128xf32> -> vector<72x128xf32>
    %421 = arith.addf %413, %420 : vector<72x128xf32>
    %c8_280 = arith.constant 8 : index
    %c0_281 = arith.constant 0 : index
    %422 = vector.load %arg5[%c8_280, %c0_281] : memref<88x128xf32, #tpu.memory_space<vmem>>, vector<72x128xf32>
    %cst_282 = arith.constant 0.000000e+00 : f32
    %423 = vector.broadcast %cst_282 : f32 to vector<72x128xf32>
    %424 = arith.maximumf %422, %423 : vector<72x128xf32>
    %c32 = arith.constant 32 : index
    %c0_283 = arith.constant 0 : index
    %c0_284 = arith.constant 0 : index
    %425 = vector.load %arg2[%c32, %c0_283, %c0_284] : memref<45x128x128xbf16, #tpu.memory_space<vmem>>, vector<1x128x128xbf16>
    %426 = vector.shape_cast %425 : vector<1x128x128xbf16> to vector<128x128xbf16>
    %427 = arith.truncf %424 : vector<72x128xf32> to vector<72x128xbf16>
    %cst_285 = arith.constant dense<0.000000e+00> : vector<72x128xf32>
    %428 = tpu.matmul %427, %426, %cst_285 {dimension_numbers = #tpu.dot_dimension_numbers<[1], [0], [0], [1], [0, 0, 1, 1], [], []>} : vector<72x128xbf16>, vector<128x128xbf16>, vector<72x128xf32> -> vector<72x128xf32>
    %429 = arith.addf %421, %428 : vector<72x128xf32>
    %c9_286 = arith.constant 9 : index
    %c0_287 = arith.constant 0 : index
    %430 = vector.load %arg5[%c9_286, %c0_287] : memref<88x128xf32, #tpu.memory_space<vmem>>, vector<72x128xf32>
    %cst_288 = arith.constant 0.000000e+00 : f32
    %431 = vector.broadcast %cst_288 : f32 to vector<72x128xf32>
    %432 = arith.maximumf %430, %431 : vector<72x128xf32>
    %c33 = arith.constant 33 : index
    %c0_289 = arith.constant 0 : index
    %c0_290 = arith.constant 0 : index
    %433 = vector.load %arg2[%c33, %c0_289, %c0_290] : memref<45x128x128xbf16, #tpu.memory_space<vmem>>, vector<1x128x128xbf16>
    %434 = vector.shape_cast %433 : vector<1x128x128xbf16> to vector<128x128xbf16>
    %435 = arith.truncf %432 : vector<72x128xf32> to vector<72x128xbf16>
    %cst_291 = arith.constant dense<0.000000e+00> : vector<72x128xf32>
    %436 = tpu.matmul %435, %434, %cst_291 {dimension_numbers = #tpu.dot_dimension_numbers<[1], [0], [0], [1], [0, 0, 1, 1], [], []>} : vector<72x128xbf16>, vector<128x128xbf16>, vector<72x128xf32> -> vector<72x128xf32>
    %437 = arith.addf %429, %436 : vector<72x128xf32>
    %c10_292 = arith.constant 10 : index
    %c0_293 = arith.constant 0 : index
    %438 = vector.load %arg5[%c10_292, %c0_293] : memref<88x128xf32, #tpu.memory_space<vmem>>, vector<72x128xf32>
    %cst_294 = arith.constant 0.000000e+00 : f32
    %439 = vector.broadcast %cst_294 : f32 to vector<72x128xf32>
    %440 = arith.maximumf %438, %439 : vector<72x128xf32>
    %c34 = arith.constant 34 : index
    %c0_295 = arith.constant 0 : index
    %c0_296 = arith.constant 0 : index
    %441 = vector.load %arg2[%c34, %c0_295, %c0_296] : memref<45x128x128xbf16, #tpu.memory_space<vmem>>, vector<1x128x128xbf16>
    %442 = vector.shape_cast %441 : vector<1x128x128xbf16> to vector<128x128xbf16>
    %443 = arith.truncf %440 : vector<72x128xf32> to vector<72x128xbf16>
    %cst_297 = arith.constant dense<0.000000e+00> : vector<72x128xf32>
    %444 = tpu.matmul %443, %442, %cst_297 {dimension_numbers = #tpu.dot_dimension_numbers<[1], [0], [0], [1], [0, 0, 1, 1], [], []>} : vector<72x128xbf16>, vector<128x128xbf16>, vector<72x128xf32> -> vector<72x128xf32>
    %445 = arith.addf %437, %444 : vector<72x128xf32>
    %c6_298 = arith.constant 6 : index
    %c0_299 = arith.constant 0 : index
    %c0_300 = arith.constant 0 : index
    %446 = vector.load %arg3[%c6_298, %c0_299, %c0_300] : memref<9x8x128xf32, #tpu.memory_space<vmem>>, vector<1x8x128xf32>
    %447 = vector.shape_cast %446 : vector<1x8x128xf32> to vector<8x128xf32>
    %448 = vector.extract_strided_slice %447 {offsets = [0, 0], sizes = [1, 128], strides = [1, 1]} : vector<8x128xf32> to vector<1x128xf32>
    %449 = vector.broadcast %448 : vector<1x128xf32> to vector<72x128xf32>
    %450 = arith.addf %445, %449 : vector<72x128xf32>
    %cst_301 = arith.constant 0.000000e+00 : f32
    %451 = vector.broadcast %cst_301 : f32 to vector<72x128xf32>
    %452 = arith.select %16, %450, %451 : vector<72x128xi1>, vector<72x128xf32>
    %cst_302 = arith.constant dense<0.000000e+00> : vector<72xf32>
    %453 = vector.multi_reduction <add>, %452, %cst_302 [1] : vector<72x128xf32> to vector<72xf32>
    %454 = vector.shape_cast %453 : vector<72xf32> to vector<72x1xf32>
    %cst_303 = arith.constant 1.562500e-02 : f32
    %455 = vector.broadcast %cst_303 : f32 to vector<72x1xf32>
    %456 = arith.mulf %454, %455 : vector<72x1xf32>
    %457 = vector.broadcast %456 : vector<72x1xf32> to vector<72x128xf32>
    %458 = arith.subf %450, %457 : vector<72x128xf32>
    %cst_304 = arith.constant 0.000000e+00 : f32
    %459 = vector.broadcast %cst_304 : f32 to vector<72x128xf32>
    %460 = arith.select %16, %458, %459 : vector<72x128xi1>, vector<72x128xf32>
    %461 = arith.mulf %460, %460 : vector<72x128xf32>
    %cst_305 = arith.constant dense<0.000000e+00> : vector<72xf32>
    %462 = vector.multi_reduction <add>, %461, %cst_305 [1] : vector<72x128xf32> to vector<72xf32>
    %463 = vector.shape_cast %462 : vector<72xf32> to vector<72x1xf32>
    %cst_306 = arith.constant 1.562500e-02 : f32
    %464 = vector.broadcast %cst_306 : f32 to vector<72x1xf32>
    %465 = arith.mulf %463, %464 : vector<72x1xf32>
    %466 = vector.broadcast %456 : vector<72x1xf32> to vector<72x128xf32>
    %467 = arith.subf %450, %466 : vector<72x128xf32>
    %cst_307 = arith.constant 9.99999974E-6 : f32
    %468 = vector.broadcast %cst_307 : f32 to vector<72x1xf32>
    %469 = arith.addf %465, %468 : vector<72x1xf32>
    %470 = math.rsqrt %469 : vector<72x1xf32>
    %471 = vector.broadcast %470 : vector<72x1xf32> to vector<72x128xf32>
    %472 = arith.mulf %467, %471 : vector<72x128xf32>
    %473 = vector.extract_strided_slice %447 {offsets = [1, 0], sizes = [1, 128], strides = [1, 1]} : vector<8x128xf32> to vector<1x128xf32>
    %474 = vector.broadcast %473 : vector<1x128xf32> to vector<72x128xf32>
    %475 = arith.mulf %472, %474 : vector<72x128xf32>
    %476 = vector.extract_strided_slice %447 {offsets = [2, 0], sizes = [1, 128], strides = [1, 1]} : vector<8x128xf32> to vector<1x128xf32>
    %477 = vector.broadcast %476 : vector<1x128xf32> to vector<72x128xf32>
    %478 = arith.addf %475, %477 : vector<72x128xf32>
    %479 = vector.extract_strided_slice %478 {offsets = [0, 0], sizes = [32, 128], strides = [1, 1]} : vector<72x128xf32> to vector<32x128xf32>
    %c8_308 = arith.constant 8 : index
    %c0_309 = arith.constant 0 : index
    %480 = vector.load %arg5[%c8_308, %c0_309] : memref<88x128xf32, #tpu.memory_space<vmem>>, vector<32x128xf32>
    tpu.vector_store %arg5[%c8_308, %c0_309], %479 {strides = array<i32>} : memref<88x128xf32, #tpu.memory_space<vmem>>, vector<32x128xf32>,
    %481 = vector.extract_strided_slice %478 {offsets = [40, 0], sizes = [32, 128], strides = [1, 1]} : vector<72x128xf32> to vector<32x128xf32>
    %c48_310 = arith.constant 48 : index
    %c0_311 = arith.constant 0 : index
    %482 = vector.load %arg5[%c48_310, %c0_311] : memref<88x128xf32, #tpu.memory_space<vmem>>, vector<32x128xf32>
    tpu.vector_store %arg5[%c48_310, %c0_311], %481 {strides = array<i32>} : memref<88x128xf32, #tpu.memory_space<vmem>>, vector<32x128xf32>,
    %c6_312 = arith.constant 6 : index
    %c0_313 = arith.constant 0 : index
    %483 = vector.load %arg5[%c6_312, %c0_313] : memref<88x128xf32, #tpu.memory_space<vmem>>, vector<72x128xf32>
    %cst_314 = arith.constant 0.000000e+00 : f32
    %484 = vector.broadcast %cst_314 : f32 to vector<72x128xf32>
    %485 = arith.maximumf %483, %484 : vector<72x128xf32>
    %c35 = arith.constant 35 : index
    %c0_315 = arith.constant 0 : index
    %c0_316 = arith.constant 0 : index
    %486 = vector.load %arg2[%c35, %c0_315, %c0_316] : memref<45x128x128xbf16, #tpu.memory_space<vmem>>, vector<1x128x128xbf16>
    %487 = vector.shape_cast %486 : vector<1x128x128xbf16> to vector<128x128xbf16>
    %488 = arith.truncf %485 : vector<72x128xf32> to vector<72x128xbf16>
    %cst_317 = arith.constant dense<0.000000e+00> : vector<72x128xf32>
    %489 = tpu.matmul %488, %487, %cst_317 {dimension_numbers = #tpu.dot_dimension_numbers<[1], [0], [0], [1], [0, 0, 1, 1], [], []>} : vector<72x128xbf16>, vector<128x128xbf16>, vector<72x128xf32> -> vector<72x128xf32>
    %c7_318 = arith.constant 7 : index
    %c0_319 = arith.constant 0 : index
    %490 = vector.load %arg5[%c7_318, %c0_319] : memref<88x128xf32, #tpu.memory_space<vmem>>, vector<72x128xf32>
    %cst_320 = arith.constant 0.000000e+00 : f32
    %491 = vector.broadcast %cst_320 : f32 to vector<72x128xf32>
    %492 = arith.maximumf %490, %491 : vector<72x128xf32>
    %c36 = arith.constant 36 : index
    %c0_321 = arith.constant 0 : index
    %c0_322 = arith.constant 0 : index
    %493 = vector.load %arg2[%c36, %c0_321, %c0_322] : memref<45x128x128xbf16, #tpu.memory_space<vmem>>, vector<1x128x128xbf16>
    %494 = vector.shape_cast %493 : vector<1x128x128xbf16> to vector<128x128xbf16>
    %495 = arith.truncf %492 : vector<72x128xf32> to vector<72x128xbf16>
    %cst_323 = arith.constant dense<0.000000e+00> : vector<72x128xf32>
    %496 = tpu.matmul %495, %494, %cst_323 {dimension_numbers = #tpu.dot_dimension_numbers<[1], [0], [0], [1], [0, 0, 1, 1], [], []>} : vector<72x128xbf16>, vector<128x128xbf16>, vector<72x128xf32> -> vector<72x128xf32>
    %497 = arith.addf %489, %496 : vector<72x128xf32>
    %c8_324 = arith.constant 8 : index
    %c0_325 = arith.constant 0 : index
    %498 = vector.load %arg5[%c8_324, %c0_325] : memref<88x128xf32, #tpu.memory_space<vmem>>, vector<72x128xf32>
    %cst_326 = arith.constant 0.000000e+00 : f32
    %499 = vector.broadcast %cst_326 : f32 to vector<72x128xf32>
    %500 = arith.maximumf %498, %499 : vector<72x128xf32>
    %c37 = arith.constant 37 : index
    %c0_327 = arith.constant 0 : index
    %c0_328 = arith.constant 0 : index
    %501 = vector.load %arg2[%c37, %c0_327, %c0_328] : memref<45x128x128xbf16, #tpu.memory_space<vmem>>, vector<1x128x128xbf16>
    %502 = vector.shape_cast %501 : vector<1x128x128xbf16> to vector<128x128xbf16>
    %503 = arith.truncf %500 : vector<72x128xf32> to vector<72x128xbf16>
    %cst_329 = arith.constant dense<0.000000e+00> : vector<72x128xf32>
    %504 = tpu.matmul %503, %502, %cst_329 {dimension_numbers = #tpu.dot_dimension_numbers<[1], [0], [0], [1], [0, 0, 1, 1], [], []>} : vector<72x128xbf16>, vector<128x128xbf16>, vector<72x128xf32> -> vector<72x128xf32>
    %505 = arith.addf %497, %504 : vector<72x128xf32>
    %c9_330 = arith.constant 9 : index
    %c0_331 = arith.constant 0 : index
    %506 = vector.load %arg5[%c9_330, %c0_331] : memref<88x128xf32, #tpu.memory_space<vmem>>, vector<72x128xf32>
    %cst_332 = arith.constant 0.000000e+00 : f32
    %507 = vector.broadcast %cst_332 : f32 to vector<72x128xf32>
    %508 = arith.maximumf %506, %507 : vector<72x128xf32>
    %c38 = arith.constant 38 : index
    %c0_333 = arith.constant 0 : index
    %c0_334 = arith.constant 0 : index
    %509 = vector.load %arg2[%c38, %c0_333, %c0_334] : memref<45x128x128xbf16, #tpu.memory_space<vmem>>, vector<1x128x128xbf16>
    %510 = vector.shape_cast %509 : vector<1x128x128xbf16> to vector<128x128xbf16>
    %511 = arith.truncf %508 : vector<72x128xf32> to vector<72x128xbf16>
    %cst_335 = arith.constant dense<0.000000e+00> : vector<72x128xf32>
    %512 = tpu.matmul %511, %510, %cst_335 {dimension_numbers = #tpu.dot_dimension_numbers<[1], [0], [0], [1], [0, 0, 1, 1], [], []>} : vector<72x128xbf16>, vector<128x128xbf16>, vector<72x128xf32> -> vector<72x128xf32>
    %513 = arith.addf %505, %512 : vector<72x128xf32>
    %c10_336 = arith.constant 10 : index
    %c0_337 = arith.constant 0 : index
    %514 = vector.load %arg5[%c10_336, %c0_337] : memref<88x128xf32, #tpu.memory_space<vmem>>, vector<72x128xf32>
    %cst_338 = arith.constant 0.000000e+00 : f32
    %515 = vector.broadcast %cst_338 : f32 to vector<72x128xf32>
    %516 = arith.maximumf %514, %515 : vector<72x128xf32>
    %c39 = arith.constant 39 : index
    %c0_339 = arith.constant 0 : index
    %c0_340 = arith.constant 0 : index
    %517 = vector.load %arg2[%c39, %c0_339, %c0_340] : memref<45x128x128xbf16, #tpu.memory_space<vmem>>, vector<1x128x128xbf16>
    %518 = vector.shape_cast %517 : vector<1x128x128xbf16> to vector<128x128xbf16>
    %519 = arith.truncf %516 : vector<72x128xf32> to vector<72x128xbf16>
    %cst_341 = arith.constant dense<0.000000e+00> : vector<72x128xf32>
    %520 = tpu.matmul %519, %518, %cst_341 {dimension_numbers = #tpu.dot_dimension_numbers<[1], [0], [0], [1], [0, 0, 1, 1], [], []>} : vector<72x128xbf16>, vector<128x128xbf16>, vector<72x128xf32> -> vector<72x128xf32>
    %521 = arith.addf %513, %520 : vector<72x128xf32>
    %c7_342 = arith.constant 7 : index
    %c0_343 = arith.constant 0 : index
    %c0_344 = arith.constant 0 : index
    %522 = vector.load %arg3[%c7_342, %c0_343, %c0_344] : memref<9x8x128xf32, #tpu.memory_space<vmem>>, vector<1x8x128xf32>
    %523 = vector.shape_cast %522 : vector<1x8x128xf32> to vector<8x128xf32>
    %524 = vector.extract_strided_slice %523 {offsets = [0, 0], sizes = [1, 128], strides = [1, 1]} : vector<8x128xf32> to vector<1x128xf32>
    %525 = vector.broadcast %524 : vector<1x128xf32> to vector<72x128xf32>
    %526 = arith.addf %521, %525 : vector<72x128xf32>
    %cst_345 = arith.constant 0.000000e+00 : f32
    %527 = vector.broadcast %cst_345 : f32 to vector<72x128xf32>
    %528 = arith.select %16, %526, %527 : vector<72x128xi1>, vector<72x128xf32>
    %cst_346 = arith.constant dense<0.000000e+00> : vector<72xf32>
    %529 = vector.multi_reduction <add>, %528, %cst_346 [1] : vector<72x128xf32> to vector<72xf32>
    %530 = vector.shape_cast %529 : vector<72xf32> to vector<72x1xf32>
    %cst_347 = arith.constant 1.562500e-02 : f32
    %531 = vector.broadcast %cst_347 : f32 to vector<72x1xf32>
    %532 = arith.mulf %530, %531 : vector<72x1xf32>
    %533 = vector.broadcast %532 : vector<72x1xf32> to vector<72x128xf32>
    %534 = arith.subf %526, %533 : vector<72x128xf32>
    %cst_348 = arith.constant 0.000000e+00 : f32
    %535 = vector.broadcast %cst_348 : f32 to vector<72x128xf32>
    %536 = arith.select %16, %534, %535 : vector<72x128xi1>, vector<72x128xf32>
    %537 = arith.mulf %536, %536 : vector<72x128xf32>
    %cst_349 = arith.constant dense<0.000000e+00> : vector<72xf32>
    %538 = vector.multi_reduction <add>, %537, %cst_349 [1] : vector<72x128xf32> to vector<72xf32>
    %539 = vector.shape_cast %538 : vector<72xf32> to vector<72x1xf32>
    %cst_350 = arith.constant 1.562500e-02 : f32
    %540 = vector.broadcast %cst_350 : f32 to vector<72x1xf32>
    %541 = arith.mulf %539, %540 : vector<72x1xf32>
    %542 = vector.broadcast %532 : vector<72x1xf32> to vector<72x128xf32>
    %543 = arith.subf %526, %542 : vector<72x128xf32>
    %cst_351 = arith.constant 9.99999974E-6 : f32
    %544 = vector.broadcast %cst_351 : f32 to vector<72x1xf32>
    %545 = arith.addf %541, %544 : vector<72x1xf32>
    %546 = math.rsqrt %545 : vector<72x1xf32>
    %547 = vector.broadcast %546 : vector<72x1xf32> to vector<72x128xf32>
    %548 = arith.mulf %543, %547 : vector<72x128xf32>
    %549 = vector.extract_strided_slice %523 {offsets = [1, 0], sizes = [1, 128], strides = [1, 1]} : vector<8x128xf32> to vector<1x128xf32>
    %550 = vector.broadcast %549 : vector<1x128xf32> to vector<72x128xf32>
    %551 = arith.mulf %548, %550 : vector<72x128xf32>
    %552 = vector.extract_strided_slice %523 {offsets = [2, 0], sizes = [1, 128], strides = [1, 1]} : vector<8x128xf32> to vector<1x128xf32>
    %553 = vector.broadcast %552 : vector<1x128xf32> to vector<72x128xf32>
    %554 = arith.addf %551, %553 : vector<72x128xf32>
    %555 = vector.extract_strided_slice %554 {offsets = [0, 0], sizes = [32, 128], strides = [1, 1]} : vector<72x128xf32> to vector<32x128xf32>
    %c8_352 = arith.constant 8 : index
    %c0_353 = arith.constant 0 : index
    %556 = vector.load %arg6[%c8_352, %c0_353] : memref<88x128xf32, #tpu.memory_space<vmem>>, vector<32x128xf32>
    %557 = arith.addf %555, %556 : vector<32x128xf32>
    %c8_354 = arith.constant 8 : index
    %c0_355 = arith.constant 0 : index
    %558 = vector.load %arg5[%c8_354, %c0_355] : memref<88x128xf32, #tpu.memory_space<vmem>>, vector<32x128xf32>
    tpu.vector_store %arg5[%c8_354, %c0_355], %557 {strides = array<i32>} : memref<88x128xf32, #tpu.memory_space<vmem>>, vector<32x128xf32>,
    %559 = vector.extract_strided_slice %554 {offsets = [40, 0], sizes = [32, 128], strides = [1, 1]} : vector<72x128xf32> to vector<32x128xf32>
    %c48_356 = arith.constant 48 : index
    %c0_357 = arith.constant 0 : index
    %560 = vector.load %arg6[%c48_356, %c0_357] : memref<88x128xf32, #tpu.memory_space<vmem>>, vector<32x128xf32>
    %561 = arith.addf %559, %560 : vector<32x128xf32>
    %c48_358 = arith.constant 48 : index
    %c0_359 = arith.constant 0 : index
    %562 = vector.load %arg5[%c48_358, %c0_359] : memref<88x128xf32, #tpu.memory_space<vmem>>, vector<32x128xf32>
    tpu.vector_store %arg5[%c48_358, %c0_359], %561 {strides = array<i32>} : memref<88x128xf32, #tpu.memory_space<vmem>>, vector<32x128xf32>,
    %c6_360 = arith.constant 6 : index
    %c0_361 = arith.constant 0 : index
    %563 = vector.load %arg5[%c6_360, %c0_361] : memref<88x128xf32, #tpu.memory_space<vmem>>, vector<72x128xf32>
    %c40_362 = arith.constant 40 : index
    %c0_363 = arith.constant 0 : index
    %c0_364 = arith.constant 0 : index
    %564 = vector.load %arg2[%c40_362, %c0_363, %c0_364] : memref<45x128x128xbf16, #tpu.memory_space<vmem>>, vector<1x128x128xbf16>
    %565 = vector.shape_cast %564 : vector<1x128x128xbf16> to vector<128x128xbf16>
    %566 = arith.truncf %563 : vector<72x128xf32> to vector<72x128xbf16>
    %cst_365 = arith.constant dense<0.000000e+00> : vector<72x128xf32>
    %567 = tpu.matmul %566, %565, %cst_365 {dimension_numbers = #tpu.dot_dimension_numbers<[1], [0], [0], [1], [0, 0, 1, 1], [], []>} : vector<72x128xbf16>, vector<128x128xbf16>, vector<72x128xf32> -> vector<72x128xf32>
    %c7_366 = arith.constant 7 : index
    %c0_367 = arith.constant 0 : index
    %568 = vector.load %arg5[%c7_366, %c0_367] : memref<88x128xf32, #tpu.memory_space<vmem>>, vector<72x128xf32>
    %c41 = arith.constant 41 : index
    %c0_368 = arith.constant 0 : index
    %c0_369 = arith.constant 0 : index
    %569 = vector.load %arg2[%c41, %c0_368, %c0_369] : memref<45x128x128xbf16, #tpu.memory_space<vmem>>, vector<1x128x128xbf16>
    %570 = vector.shape_cast %569 : vector<1x128x128xbf16> to vector<128x128xbf16>
    %571 = arith.truncf %568 : vector<72x128xf32> to vector<72x128xbf16>
    %cst_370 = arith.constant dense<0.000000e+00> : vector<72x128xf32>
    %572 = tpu.matmul %571, %570, %cst_370 {dimension_numbers = #tpu.dot_dimension_numbers<[1], [0], [0], [1], [0, 0, 1, 1], [], []>} : vector<72x128xbf16>, vector<128x128xbf16>, vector<72x128xf32> -> vector<72x128xf32>
    %573 = arith.addf %567, %572 : vector<72x128xf32>
    %c8_371 = arith.constant 8 : index
    %c0_372 = arith.constant 0 : index
    %574 = vector.load %arg5[%c8_371, %c0_372] : memref<88x128xf32, #tpu.memory_space<vmem>>, vector<72x128xf32>
    %c42 = arith.constant 42 : index
    %c0_373 = arith.constant 0 : index
    %c0_374 = arith.constant 0 : index
    %575 = vector.load %arg2[%c42, %c0_373, %c0_374] : memref<45x128x128xbf16, #tpu.memory_space<vmem>>, vector<1x128x128xbf16>
    %576 = vector.shape_cast %575 : vector<1x128x128xbf16> to vector<128x128xbf16>
    %577 = arith.truncf %574 : vector<72x128xf32> to vector<72x128xbf16>
    %cst_375 = arith.constant dense<0.000000e+00> : vector<72x128xf32>
    %578 = tpu.matmul %577, %576, %cst_375 {dimension_numbers = #tpu.dot_dimension_numbers<[1], [0], [0], [1], [0, 0, 1, 1], [], []>} : vector<72x128xbf16>, vector<128x128xbf16>, vector<72x128xf32> -> vector<72x128xf32>
    %579 = arith.addf %573, %578 : vector<72x128xf32>
    %c9_376 = arith.constant 9 : index
    %c0_377 = arith.constant 0 : index
    %580 = vector.load %arg5[%c9_376, %c0_377] : memref<88x128xf32, #tpu.memory_space<vmem>>, vector<72x128xf32>
    %c43 = arith.constant 43 : index
    %c0_378 = arith.constant 0 : index
    %c0_379 = arith.constant 0 : index
    %581 = vector.load %arg2[%c43, %c0_378, %c0_379] : memref<45x128x128xbf16, #tpu.memory_space<vmem>>, vector<1x128x128xbf16>
    %582 = vector.shape_cast %581 : vector<1x128x128xbf16> to vector<128x128xbf16>
    %583 = arith.truncf %580 : vector<72x128xf32> to vector<72x128xbf16>
    %cst_380 = arith.constant dense<0.000000e+00> : vector<72x128xf32>
    %584 = tpu.matmul %583, %582, %cst_380 {dimension_numbers = #tpu.dot_dimension_numbers<[1], [0], [0], [1], [0, 0, 1, 1], [], []>} : vector<72x128xbf16>, vector<128x128xbf16>, vector<72x128xf32> -> vector<72x128xf32>
    %585 = arith.addf %579, %584 : vector<72x128xf32>
    %c10_381 = arith.constant 10 : index
    %c0_382 = arith.constant 0 : index
    %586 = vector.load %arg5[%c10_381, %c0_382] : memref<88x128xf32, #tpu.memory_space<vmem>>, vector<72x128xf32>
    %c44 = arith.constant 44 : index
    %c0_383 = arith.constant 0 : index
    %c0_384 = arith.constant 0 : index
    %587 = vector.load %arg2[%c44, %c0_383, %c0_384] : memref<45x128x128xbf16, #tpu.memory_space<vmem>>, vector<1x128x128xbf16>
    %588 = vector.shape_cast %587 : vector<1x128x128xbf16> to vector<128x128xbf16>
    %589 = arith.truncf %586 : vector<72x128xf32> to vector<72x128xbf16>
    %cst_385 = arith.constant dense<0.000000e+00> : vector<72x128xf32>
    %590 = tpu.matmul %589, %588, %cst_385 {dimension_numbers = #tpu.dot_dimension_numbers<[1], [0], [0], [1], [0, 0, 1, 1], [], []>} : vector<72x128xbf16>, vector<128x128xbf16>, vector<72x128xf32> -> vector<72x128xf32>
    %591 = arith.addf %585, %590 : vector<72x128xf32>
    %c8_386 = arith.constant 8 : index
    %c0_387 = arith.constant 0 : index
    %c0_388 = arith.constant 0 : index
    %592 = vector.load %arg3[%c8_386, %c0_387, %c0_388] : memref<9x8x128xf32, #tpu.memory_space<vmem>>, vector<1x8x128xf32>
    %593 = vector.shape_cast %592 : vector<1x8x128xf32> to vector<8x128xf32>
    %594 = vector.extract_strided_slice %593 {offsets = [0, 0], sizes = [1, 128], strides = [1, 1]} : vector<8x128xf32> to vector<1x128xf32>
    %595 = vector.broadcast %594 : vector<1x128xf32> to vector<72x128xf32>
    %596 = arith.addf %591, %595 : vector<72x128xf32>
    %597 = vector.extract_strided_slice %596 {offsets = [0, 0], sizes = [32, 128], strides = [1, 1]} : vector<72x128xf32> to vector<32x128xf32>
    %c8_389 = arith.constant 8 : index
    %c0_390 = arith.constant 0 : index
    %598 = vector.load %arg5[%c8_389, %c0_390] : memref<88x128xf32, #tpu.memory_space<vmem>>, vector<32x128xf32>
    tpu.vector_store %arg5[%c8_389, %c0_390], %597 {strides = array<i32>} : memref<88x128xf32, #tpu.memory_space<vmem>>, vector<32x128xf32>,
    %599 = vector.extract_strided_slice %596 {offsets = [40, 0], sizes = [32, 128], strides = [1, 1]} : vector<72x128xf32> to vector<32x128xf32>
    %c48_391 = arith.constant 48 : index
    %c0_392 = arith.constant 0 : index
    %600 = vector.load %arg5[%c48_391, %c0_392] : memref<88x128xf32, #tpu.memory_space<vmem>>, vector<32x128xf32>
    tpu.vector_store %arg5[%c48_391, %c0_392], %599 {strides = array<i32>} : memref<88x128xf32, #tpu.memory_space<vmem>>, vector<32x128xf32>,
    %c8_393 = arith.constant 8 : index
    %c0_394 = arith.constant 0 : index
    %601 = vector.load %arg5[%c8_393, %c0_394] : memref<88x128xf32, #tpu.memory_space<vmem>>, vector<32x128xf32>
    %c0_395 = arith.constant 0 : index
    %c0_396 = arith.constant 0 : index
    %c0_397 = arith.constant 0 : index
    %602 = vector.load %arg4[%c0_395, %c0_396, %c0_397] : memref<2x32x128xf32, #tpu.memory_space<vmem>>, vector<1x32x128xf32>
    %603 = vector.shape_cast %602 : vector<1x32x128xf32> to vector<32x128xf32>
    %604 = vector.shape_cast %601 : vector<32x128xf32> to vector<1x32x128xf32>
    tpu.vector_store %arg4[%c0_395, %c0_396, %c0_397], %604 {strides = array<i32>} : memref<2x32x128xf32, #tpu.memory_space<vmem>>, vector<1x32x128xf32>,
    %c48_398 = arith.constant 48 : index
    %c0_399 = arith.constant 0 : index
    %605 = vector.load %arg5[%c48_398, %c0_399] : memref<88x128xf32, #tpu.memory_space<vmem>>, vector<32x128xf32>
    %c1_400 = arith.constant 1 : index
    %c0_401 = arith.constant 0 : index
    %c0_402 = arith.constant 0 : index
    %606 = vector.load %arg4[%c1_400, %c0_401, %c0_402] : memref<2x32x128xf32, #tpu.memory_space<vmem>>, vector<1x32x128xf32>
    %607 = vector.shape_cast %606 : vector<1x32x128xf32> to vector<32x128xf32>
    %608 = vector.shape_cast %605 : vector<32x128xf32> to vector<1x32x128xf32>
    tpu.vector_store %arg4[%c1_400, %c0_401, %c0_402], %608 {strides = array<i32>} : memref<2x32x128xf32, #tpu.memory_space<vmem>>, vector<1x32x128xf32>,
    return
  }
  func.func @transform_0(%arg0: i32) -> (i32, i32, i32) {
    %c0_i32 = arith.constant 0 : i32
    %c0_i32_0 = arith.constant 0 : i32
    %c0_i32_1 = arith.constant 0 : i32
    return %arg0, %c0_i32, %c0_i32_0 : i32, i32, i32
  }
  func.func @transform_1(%arg0: i32) -> (i32, i32, i32) {
    %c0_i32 = arith.constant 0 : i32
    %c0_i32_0 = arith.constant 0 : i32
    %c0_i32_1 = arith.constant 0 : i32
    %c0_i32_2 = arith.constant 0 : i32
    return %c0_i32, %c0_i32_0, %c0_i32_1 : i32, i32, i32
  }
  func.func @transform_2(%arg0: i32) -> (i32, i32, i32) {
    %c0_i32 = arith.constant 0 : i32
    %c0_i32_0 = arith.constant 0 : i32
    %c0_i32_1 = arith.constant 0 : i32
    %c0_i32_2 = arith.constant 0 : i32
    return %c0_i32, %c0_i32_0, %c0_i32_1 : i32, i32, i32
  }
  func.func @transform_3(%arg0: i32) -> (i32, i32, i32) {
    %c0_i32 = arith.constant 0 : i32
    %c0_i32_0 = arith.constant 0 : i32
    %c0_i32_1 = arith.constant 0 : i32
    return %arg0, %c0_i32, %c0_i32_0 : i32, i32, i32
  }
}

</mosaic_0001>

<llo_original>
// kernel: convnet_forward.1
$region0: #{convnet_forward.1}
  #allocation0 [shape = 'u32[]', space=smem, size = 0x4, offset = 0x4, fixed_abs, tag = 'smem constant byte address 0x4 - core index']
  #allocation1 [shape = 'u32[144,128]{1,0:T(1,128)}', space=vmem, size = 0x12000, scoped, tag = 'internal scratch']
  #allocation2 [shape = 'f32[88,128]{1,0:T(8,128)}', space=vmem, size = 0xb000, scoped, tag = 'scratch operand']
  #allocation3 [shape = 'f32[88,128]{1,0:T(8,128)}', space=vmem, size = 0xb000, scoped, tag = 'scratch operand']
  %s0 = inlined_call_operand.vmem [shape: f32[4,32,128], index: 0, kind: input, shape index: {}]
  %s1 = inlined_call_operand.hbm [shape: bf16[45,128,128], index: 1, kind: input, shape index: {}]
  %s2 = inlined_call_operand.hbm [shape: f32[9,8,128], index: 2, kind: input, shape index: {}]
  %s3 = inlined_call_operand.vmem [shape: f32[4,32,128], index: 3, kind: output, shape index: {}]
  %s4 = sld [smem:[#allocation0]]
  $region53: #{convnet_forward.1} parent=0
    _
  %s6 = ssub.s32 1, %s4
  %s7 = scalar_select 0, %s6, %s4
  $region1: #{convnet_forward.1} parent=0
    #allocation4 [shape = 'u8[1474560]{0}', space=vmem, size = 0x168000, scoped, tag = 'input window, operand 1, single buffered']
    #allocation5 [shape = 's32[2]{0}', space=sflag, size = 0x8, scoped, tag = 'scoped memory for convnet_forward.1']
    #allocation6 [shape = 'u8[36864]{0}', space=vmem, size = 0x9000, scoped, tag = 'input window, operand 2, single buffered']
    #allocation7 [shape = 's32[1]{0}', space=sflag, size = 0x4, scoped, tag = 'scoped memory for convnet_forward.1']
    %8 = vsyncpa [#allocation5], 0
    %9 = vsyncpa [#allocation7], 0
    loop: start=0, step=1, limit=4
    $region2: #{convnet_forward.1} parent=1 // loop_pre_header
      _
    $region3: #{convnet_forward.1} parent=1 // loop_header
      %s11 = sphi 0, %s15
      %p12 = scmp.ge.s32.totalorder %s11, 4
      %s21 = sphi 0, %s23
      %s24 = sphi 0, %s21
      %s25 = sphi 0, %s24
      %s41 = sphi 0, %s25
      %s45 = sphi 0, %s45
      %s47 = sphi 0, %s45
      %s48 = sphi 0, %s47
      %s62 = sphi 0, %s48
      %s66 = sphi 0, %s66
      %s68 = sphi 0, %s66
      %s69 = sphi 0, %s68
      %s83 = sphi 0, %s69
      %s89 = sphi 0, %s91
      %s92 = sphi 0, %s89
      %s93 = sphi 0, %s92
      %s109 = sphi 0, %s93
    $region4: #{convnet_forward.1} parent=1 // loop_header_branch
      %14 = sbr.rel (%p12) target = $region8
    $region5: #{convnet_forward.1} parent=1 // loop_body
      %s16 = ssub.s32 %s11, 1
      %s17 = ssub.s32 %s11, 2
      %s18 = sadd.s32 %s11, 1
      %s19 = ssub.s32 %s11, %s18
      %p20 = scmp.eq.s32.totalorder %s19, 0
      %s22 = sadd.s32 %s21, 1
      %s23 = scalar_select %p20, %s21, %s22
      %p26 = pneg %p20
      %p27 = scmp.eq.s32.totalorder %s11, 1
      %p28 = por %p26, %p27
      %p29 = scmp.ne.s32.totalorder %s21, %s24
      %p30 = scmp.eq.s32.totalorder %s11, 0
      %p31 = por %p29, %p30
      %p32 = scmp.ne.s32.totalorder %s21, %s24
      %p33 = scmp.eq.s32.totalorder %s16, 1
      %p34 = por %p32, %p33
      %p35 = scmp.ne.s32.totalorder %s24, %s25
      %p36 = scmp.eq.s32.totalorder %s16, 0
      %p37 = por %p35, %p36
      %p38 = scmp.ne.s32.totalorder %s24, %s25
      %p39 = scmp.eq.s32.totalorder %s17, 1
      %p40 = por %p38, %p39
      %p42 = scmp.ne.s32.totalorder %s25, %s41
      %p43 = scmp.eq.s32.totalorder %s17, 0
      %p44 = por %p42, %p43
      %s46 = sadd.s32 %s45, 1
      %p49 = scmp.eq.s32.totalorder %s11, 1
      %p50 = scmp.ne.s32.totalorder %s45, %s47
      %p51 = scmp.eq.s32.totalorder %s11, 0
      %p52 = por %p50, %p51
      %p53 = scmp.ne.s32.totalorder %s45, %s47
      %p54 = scmp.eq.s32.totalorder %s16, 1
      %p55 = por %p53, %p54
      %p56 = scmp.ne.s32.totalorder %s47, %s48
      %p57 = scmp.eq.s32.totalorder %s16, 0
      %p58 = por %p56, %p57
      %p59 = scmp.ne.s32.totalorder %s47, %s48
      %p60 = scmp.eq.s32.totalorder %s17, 1
      %p61 = por %p59, %p60
      %p63 = scmp.ne.s32.totalorder %s48, %s62
      %p64 = scmp.eq.s32.totalorder %s17, 0
      %p65 = por %p63, %p64
      %s67 = sadd.s32 %s66, 1
      %p70 = scmp.eq.s32.totalorder %s11, 1
      %p71 = scmp.ne.s32.totalorder %s66, %s68
      %p72 = scmp.eq.s32.totalorder %s11, 0
      %p73 = por %p71, %p72
      %p74 = scmp.ne.s32.totalorder %s66, %s68
      %p75 = scmp.eq.s32.totalorder %s16, 1
      %p76 = por %p74, %p75
      %p77 = scmp.ne.s32.totalorder %s68, %s69
      %p78 = scmp.eq.s32.totalorder %s16, 0
      %p79 = por %p77, %p78
      %p80 = scmp.ne.s32.totalorder %s68, %s69
      %p81 = scmp.eq.s32.totalorder %s17, 1
      %p82 = por %p80, %p81
      %p84 = scmp.ne.s32.totalorder %s69, %s83
      %p85 = scmp.eq.s32.totalorder %s17, 0
      %p86 = por %p84, %p85
      %s87 = ssub.s32 %s11, %s18
      %p88 = scmp.eq.s32.totalorder %s87, 0
      %s90 = sadd.s32 %s89, 1
      %s91 = scalar_select %p88, %s89, %s90
      %p94 = pneg %p88
      %p95 = scmp.eq.s32.totalorder %s11, 1
      %p96 = por %p94, %p95
      %p97 = scmp.ne.s32.totalorder %s89, %s92
      %p98 = scmp.eq.s32.totalorder %s11, 0
      %p99 = por %p97, %p98
      %p100 = scmp.ne.s32.totalorder %s89, %s92
      %p101 = scmp.eq.s32.totalorder %s16, 1
      %p102 = por %p100, %p101
      %p103 = scmp.ne.s32.totalorder %s92, %s93
      %p104 = scmp.eq.s32.totalorder %s16, 0
      %p105 = por %p103, %p104
      %p106 = scmp.ne.s32.totalorder %s92, %s93
      %p107 = scmp.eq.s32.totalorder %s17, 1
      %p108 = por %p106, %p107
      %p110 = scmp.ne.s32.totalorder %s93, %s109
      %p111 = scmp.eq.s32.totalorder %s17, 0
      %p112 = por %p110, %p111
      %p113 = scmp.le.s32.totalorder 1, %s11
      %p114 = scmp.lt.s32.totalorder %s11, 3
      %p115 = pnand %p113, %p114
      %p116 = pneg %p115
      // Predicated region
      $region9: #{convnet_forward.1} parent=5 // pred_check
        _
      $region10: #{convnet_forward.1} parent=5 // pred_check_branch
        %118 = sbr.rel (%p115) target = $region12
      $region11: #{convnet_forward.1} parent=5 // pred_region
        %s119 = ssub.s32 %s11, 1
        // Predicated region
        $region13: #{convnet_forward.1} parent=11 // pred_check
          %p120 = pneg %p58
        $region14: #{convnet_forward.1} parent=11 // pred_check_branch
          %122 = sbr.rel (%p120) target = $region16
        $region15: #{convnet_forward.1} parent=11 // pred_region
          %s124 = ssub.s32 46080, 46080
          %125 = vsyncadd [#allocation5], %s124
          %s126 = sshll.u32 [#allocation4], 4
          %s127 = int_to_ptr.vmem [resolvable:$true] %s126
          %132 = dma.hbm_to_vmem [thread:$0]  %s1, 46080, %s127, [#allocation5], 64, 64, 4
        $region16: #{convnet_forward.1} parent=11 // pred_fallthru
          _
        // Predicated region
        $region17: #{convnet_forward.1} parent=11 // pred_check
          %p133 = pneg %p79
        $region18: #{convnet_forward.1} parent=11 // pred_check_branch
          %135 = sbr.rel (%p133) target = $region20
        $region19: #{convnet_forward.1} parent=11 // pred_region
          %s137 = ssub.s32 1152, 1152
          %138 = vsyncadd [#allocation7], %s137
          %s139 = sshll.u32 [#allocation6], 4
          %s140 = int_to_ptr.vmem [resolvable:$true] %s139
          %145 = dma.hbm_to_vmem [thread:$0]  %s2, 1152, %s140, [#allocation7], 128, 128, 8
        $region20: #{convnet_forward.1} parent=11 // pred_fallthru
          _
      $region12: #{convnet_forward.1} parent=5 // pred_fallthru
        _
      %p146 = scmp.lt.s32.totalorder %s11, 2
      // Predicated region
      $region21: #{convnet_forward.1} parent=5 // pred_check
        %p147 = pneg %p146
      $region22: #{convnet_forward.1} parent=5 // pred_check_branch
        %149 = sbr.rel (%p147) target = $region24
      $region23: #{convnet_forward.1} parent=5 // pred_region
        // Predicated region
        $region25: #{convnet_forward.1} parent=23 // pred_check
          %p150 = pneg %p31
        $region26: #{convnet_forward.1} parent=23 // pred_check_branch
          %152 = sbr.rel (%p150) target = $region28
        $region27: #{convnet_forward.1} parent=23 // pred_region
          %s153 = smul.u32 2, %s11
          %p154 = scmp.lt.s32.totalorder %s153, 3
          %s155 = scalar_select %p154, %s153, 3
          %s156 = smul.addr %s155, 4
          %s157 = smul.addr %s156, 8
          %s158 = scalar_lea.vmem %s0, %s157
          %s159 = smul.u32 2, %s11
        $region28: #{convnet_forward.1} parent=23 // pred_fallthru
          _
      $region24: #{convnet_forward.1} parent=5 // pred_fallthru
        _
      %p160 = scmp.le.s32.totalorder 1, %s11
      %p161 = scmp.lt.s32.totalorder %s11, 3
      %p162 = pnand %p160, %p161
      %p163 = pneg %p162
      // Predicated region
      $region29: #{convnet_forward.1} parent=5 // pred_check
        _
      $region30: #{convnet_forward.1} parent=5 // pred_check_branch
        %165 = sbr.rel (%p162) target = $region32
      $region31: #{convnet_forward.1} parent=5 // pred_region
        %s166 = ssub.s32 %s11, 1
        // Predicated region
        $region33: #{convnet_forward.1} parent=31 // pred_check
          %p167 = pneg %p58
        $region34: #{convnet_forward.1} parent=31 // pred_check_branch
          %169 = sbr.rel (%p167) target = $region36
        $region35: #{convnet_forward.1} parent=31 // pred_region
          %170 = dma.done [#allocation5], 46080
        $region36: #{convnet_forward.1} parent=31 // pred_fallthru
          _
        // Predicated region
        $region37: #{convnet_forward.1} parent=31 // pred_check
          %p171 = pneg %p79
        $region38: #{convnet_forward.1} parent=31 // pred_check_branch
          %173 = sbr.rel (%p171) target = $region40
        $region39: #{convnet_forward.1} parent=31 // pred_region
          %174 = dma.done [#allocation7], 1152
        $region40: #{convnet_forward.1} parent=31 // pred_fallthru
          _
        %s175 = smul.u32 2, %s16
        %p176 = scmp.lt.s32.totalorder %s175, 3
        %s177 = scalar_select %p176, %s175, 3
        %s178 = smul.addr %s177, 4
        %s179 = smul.addr %s178, 8
        %s180 = scalar_lea.vmem %s0, %s179
        %p181 = pneg %p37
        %p182 = pneg %p34
        %p183 = pneg %p58
        %p184 = pneg %p55
        %p185 = pneg %p79
        %p186 = pneg %p76
        %p187 = pneg %p105
        %p188 = pneg %p102
        %s189 = smul.u32 2, %s16
        %p190 = scmp.lt.s32.totalorder %s189, 3
        %s191 = scalar_select %p190, %s189, 3
        %s192 = smul.addr %s191, 4
        %s193 = smul.addr %s192, 8
        %s194 = scalar_lea.vmem %s3, %s193
        %s195 = smul.u32 2, %s16
        %p196 = scmp.lt.s32.totalorder %s195, 3
        %s197 = scalar_select %p196, %s195, 3
        %s198 = smul.addr %s197, 4
        %s199 = smul.addr %s198, 8
        %s200 = scalar_lea.vmem %s0, %s199
        %s201 = smul.u32 2, %s16
        %s202 = smul.u32 2, %s16
        %p203 = scmp.lt.s32.totalorder %s202, 3
        %s204 = scalar_select %p203, %s202, 3
        %s205 = smul.addr %s204, 4
        %s206 = smul.addr %s205, 8
        %s207 = scalar_lea.vmem %s3, %s206
        %s208 = smul.u32 2, %s16
        %210 = vst [vmem:[#allocation2] sm:$0xff] 0.0
        %211 = vst [vmem:[#allocation2 + $0x28] sm:$0xff] 0.0
        %212 = vst [vmem:[#allocation2 + $0x50] sm:$0xff] 0.0
        %v213 = vld [vmem:[%s200] sm:$0xff]
        %v214 = vld [vmem:[%s200 + $0x8] sm:$0xff]
        %v215 = vld [vmem:[%s200 + $0x10] sm:$0xff]
        %v216 = vld [vmem:[%s200 + $0x18] sm:$0xff]
        %217 = vst [vmem:[#allocation2 + $0x8] sm:$0xff] %v213
        %218 = vst [vmem:[#allocation2 + $0x10] sm:$0xff] %v214
        %219 = vst [vmem:[#allocation2 + $0x18] sm:$0xff] %v215
        %220 = vst [vmem:[#allocation2 + $0x20] sm:$0xff] %v216
        %s221 = scalar_lea.vmem %s200, 32
        %v222 = vld [vmem:[%s221] sm:$0xff]
        %v223 = vld [vmem:[%s221 + $0x8] sm:$0xff]
        %v224 = vld [vmem:[%s221 + $0x10] sm:$0xff]
        %v225 = vld [vmem:[%s221 + $0x18] sm:$0xff]
        %226 = vst [vmem:[#allocation2 + $0x30] sm:$0xff] %v222
        %227 = vst [vmem:[#allocation2 + $0x38] sm:$0xff] %v223
        %228 = vst [vmem:[#allocation2 + $0x40] sm:$0xff] %v224
        %229 = vst [vmem:[#allocation2 + $0x48] sm:$0xff] %v225
        %v230 = vlaneseq
        %v231 = vand.u32 %v230, 127
        %vm232 = vcmp.lt.s32.totalorder %v231, 32
        %vm233 = vcmp.lt.s32.totalorder %v231, 64
        %v234 = vld [vmem:[#allocation2 + $0x6] sm:$0xff]
        %v235 = vld [vmem:[#allocation2 + $0xe] sm:$0xff]
        %v236 = vld [vmem:[#allocation2 + $0x16] sm:$0xff]
        %v237 = vld [vmem:[#allocation2 + $0x1e] sm:$0xff]
        %v238 = vld [vmem:[#allocation2 + $0x26] sm:$0xff]
        %v239 = vld [vmem:[#allocation2 + $0x2e] sm:$0xff]
        %v240 = vld [vmem:[#allocation2 + $0x36] sm:$0xff]
        %v241 = vld [vmem:[#allocation2 + $0x3e] sm:$0xff]
        %v242 = vld [vmem:[#allocation2 + $0x46] sm:$0xff]
        %v243 = vld [vmem:[#allocation4] sm:$0xf]
        %v244 = vld [vmem:[#allocation4 + $0x4] sm:$0xf]
        %v245 = vld [vmem:[#allocation4 + $0x8] sm:$0xf]
        %v246 = vld [vmem:[#allocation4 + $0xc] sm:$0xf]
        %v247 = vld [vmem:[#allocation4 + $0x10] sm:$0xf]
        %v248 = vld [vmem:[#allocation4 + $0x14] sm:$0xf]
        %v249 = vld [vmem:[#allocation4 + $0x18] sm:$0xf]
        %v250 = vld [vmem:[#allocation4 + $0x1c] sm:$0xf]
        %v251 = vld [vmem:[#allocation4 + $0x20] sm:$0xf]
        %v252 = vld [vmem:[#allocation4 + $0x24] sm:$0xf]
        %v253 = vld [vmem:[#allocation4 + $0x28] sm:$0xf]
        %v254 = vld [vmem:[#allocation4 + $0x2c] sm:$0xf]
        %v255 = vld [vmem:[#allocation4 + $0x30] sm:$0xf]
        %v256 = vld [vmem:[#allocation4 + $0x34] sm:$0xf]
        %v257 = vld [vmem:[#allocation4 + $0x38] sm:$0xf]
        %v258 = vld [vmem:[#allocation4 + $0x3c] sm:$0xf]
        %v259 = vpack.c.bf16 %v235, %v234
        %v260 = vpack.c.bf16 %v237, %v236
        %v261 = vpack.c.bf16 %v239, %v238
        %v262 = vpack.c.bf16 %v241, %v240
        %v263 = vpack.c.bf16 %v242, %v242
        %v264 = vld [vmem:[#allocation2 + $0x7] sm:$0xff]
        %v265 = vld [vmem:[#allocation2 + $0xf] sm:$0xff]
        %v266 = vld [vmem:[#allocation2 + $0x17] sm:$0xff]
        %v267 = vld [vmem:[#allocation2 + $0x1f] sm:$0xff]
        %v268 = vld [vmem:[#allocation2 + $0x27] sm:$0xff]
        %v269 = vld [vmem:[#allocation2 + $0x2f] sm:$0xff]
        %v270 = vld [vmem:[#allocation2 + $0x37] sm:$0xff]
        %v271 = vld [vmem:[#allocation2 + $0x3f] sm:$0xff]
        %v272 = vld [vmem:[#allocation2 + $0x47] sm:$0xff]
        %s273 = scalar_lea.vmem [#allocation4], 64
        %v274 = vld [vmem:[%s273] sm:$0xf]
        %v275 = vld [vmem:[%s273 + $0x4] sm:$0xf]
        %v276 = vld [vmem:[%s273 + $0x8] sm:$0xf]
        %v277 = vld [vmem:[%s273 + $0xc] sm:$0xf]
        %v278 = vld [vmem:[%s273 + $0x10] sm:$0xf]
        %v279 = vld [vmem:[%s273 + $0x14] sm:$0xf]
        %v280 = vld [vmem:[%s273 + $0x18] sm:$0xf]
        %v281 = vld [vmem:[%s273 + $0x1c] sm:$0xf]
        %v282 = vld [vmem:[%s273 + $0x20] sm:$0xf]
        %v283 = vld [vmem:[%s273 + $0x24] sm:$0xf]
        %v284 = vld [vmem:[%s273 + $0x28] sm:$0xf]
        %v285 = vld [vmem:[%s273 + $0x2c] sm:$0xf]
        %v286 = vld [vmem:[%s273 + $0x30] sm:$0xf]
        %v287 = vld [vmem:[%s273 + $0x34] sm:$0xf]
        %v288 = vld [vmem:[%s273 + $0x38] sm:$0xf]
        %v289 = vld [vmem:[%s273 + $0x3c] sm:$0xf]
        %v290 = vpack.c.bf16 %v265, %v264
        %v291 = vpack.c.bf16 %v267, %v266
        %v292 = vpack.c.bf16 %v269, %v268
        %v293 = vpack.c.bf16 %v271, %v270
        %v294 = vpack.c.bf16 %v272, %v272
        %v311 = vunpack.c.l.b16 %v274
        %v312 = vunpack.c.l.b16 %v275
        %v313 = vunpack.c.l.b16 %v276
        %v314 = vunpack.c.l.b16 %v277
        %v315 = vunpack.c.l.b16 %v278
        %v316 = vunpack.c.l.b16 %v279
        %v317 = vunpack.c.l.b16 %v280
        %v318 = vunpack.c.l.b16 %v281
        %v319 = vunpack.c.l.b16 %v282
        %v320 = vunpack.c.l.b16 %v283
        %v321 = vunpack.c.l.b16 %v284
        %v322 = vunpack.c.l.b16 %v285
        %v323 = vunpack.c.l.b16 %v286
        %v324 = vunpack.c.l.b16 %v287
        %v325 = vunpack.c.l.b16 %v288
        %v326 = vunpack.c.l.b16 %v289
        %v327 = vpack.c.b16 %v312, %v311
        %v328 = vpack.c.b16 %v314, %v313
        %v329 = vpack.c.b16 %v316, %v315
        %v330 = vpack.c.b16 %v318, %v317
        %v331 = vpack.c.b16 %v320, %v319
        %v332 = vpack.c.b16 %v322, %v321
        %v333 = vpack.c.b16 %v324, %v323
        %v334 = vpack.c.b16 %v326, %v325
        %343 = vmatprep.subr.bf16.mxu0 0
        %344 = vmatpush1.bf16.msra.mxu0 %v327
        %345 = vmatprep.subr.bf16.mxu0 0
        %346 = vmatpush1.bf16.msra.mxu0 %v328
        %347 = vmatprep.subr.bf16.mxu0 0
        %348 = vmatpush1.bf16.msra.mxu0 %v329
        %349 = vmatprep.subr.bf16.mxu0 0
        %350 = vmatpush1.bf16.msra.mxu0 %v330
        %351 = vmatprep.subr.bf16.mxu0 0
        %352 = vmatpush1.bf16.msra.mxu0 %v331
        %353 = vmatprep.subr.bf16.mxu0 0
        %354 = vmatpush1.bf16.msra.mxu0 %v332
        %355 = vmatprep.subr.bf16.mxu0 0
        %356 = vmatpush1.bf16.msra.mxu0 %v333
        %357 = vmatprep.subr.bf16.mxu0 0
        %358 = vmatpush1.bf16.msra.mxu0 %v334
        %359 = vmatprep.subr.bf16.mxu0 0
        %360 = vmatpush1.bf16.msra.mxu0 0
        %361 = vmatprep.subr.bf16.mxu0 0
        %362 = vmatpush1.bf16.msra.mxu0 0
        %363 = vmatprep.subr.bf16.mxu0 0
        %364 = vmatpush1.bf16.msra.mxu0 0
        %365 = vmatprep.subr.bf16.mxu0 0
        %366 = vmatpush1.bf16.msra.mxu0 0
        %367 = vmatprep.subr.bf16.mxu0 0
        %368 = vmatpush1.bf16.msra.mxu0 0
        %369 = vmatprep.subr.bf16.mxu0 0
        %370 = vmatpush1.bf16.msra.mxu0 0
        %371 = vmatprep.subr.bf16.mxu0 0
        %372 = vmatpush1.bf16.msra.mxu0 0
        %373 = vmatprep.subr.bf16.mxu0 0
        %374 = vmatpush1.bf16.msra.mxu0 0
        %375 = vmatprep.mubr.bf16.mxu0 0
        %376 = vmatmul.mubr.bf16.gmra.mrb[0].mxu0 %v290
        %v377 = vpop.f32.mrb[0].mxu0
        %v378 = vadd.f32 0.0, %v377
        %v379 = vpop.f32.mrb[0].mxu0
        %v380 = vpop.f32.mrb[0].mxu0
        %v381 = vadd.f32 0.0, %v380
        %v382 = vpop.f32.mrb[0].mxu0
        %383 = vmatprep.mubr.bf16.mxu0 0
        %384 = vmatmul.mubr.bf16.gmra.mrb[0].mxu0 %v291
        %v385 = vpop.f32.mrb[0].mxu0
        %v386 = vadd.f32 0.0, %v385
        %v387 = vpop.f32.mrb[0].mxu0
        %v388 = vpop.f32.mrb[0].mxu0
        %v389 = vadd.f32 0.0, %v388
        %v390 = vpop.f32.mrb[0].mxu0
        %391 = vmatprep.mubr.bf16.mxu0 0
        %392 = vmatmul.mubr.bf16.gmra.mrb[0].mxu0 %v292
        %v393 = vpop.f32.mrb[0].mxu0
        %v394 = vpop.f32.mrb[0].mxu0
        %v395 = vpop.f32.mrb[0].mxu0
        %v396 = vadd.f32 0.0, %v395
        %v397 = vpop.f32.mrb[0].mxu0
        %398 = vmatprep.mubr.bf16.mxu0 0
        %399 = vmatmul.mubr.bf16.gmra.mrb[0].mxu0 %v293
        %v400 = vpop.f32.mrb[0].mxu0
        %v401 = vadd.f32 0.0, %v400
        %v402 = vpop.f32.mrb[0].mxu0
        %v403 = vpop.f32.mrb[0].mxu0
        %v404 = vadd.f32 0.0, %v403
        %v405 = vpop.f32.mrb[0].mxu0
        %406 = vmatprep.mubr.bf16.mxu0 0
        %407 = vmatmul.mubr.bf16.gmra.mrb[0].mxu0 %v294
        %v408 = vpop.f32.mrb[0].mxu0
        %v409 = vadd.f32 0.0, %v408
        %v410 = vpop.f32.mrb[0].mxu0
        %v411 = vpop.f32.mrb[0].mxu0
        %v412 = vpop.f32.mrb[0].mxu0
        %413 = vdwg.mxu0
        %v430 = vunpack.c.l.b16 %v243
        %v431 = vunpack.c.l.b16 %v244
        %v432 = vunpack.c.l.b16 %v245
        %v433 = vunpack.c.l.b16 %v246
        %v434 = vunpack.c.l.b16 %v247
        %v435 = vunpack.c.l.b16 %v248
        %v436 = vunpack.c.l.b16 %v249
        %v437 = vunpack.c.l.b16 %v250
        %v438 = vunpack.c.l.b16 %v251
        %v439 = vunpack.c.l.b16 %v252
        %v440 = vunpack.c.l.b16 %v253
        %v441 = vunpack.c.l.b16 %v254
        %v442 = vunpack.c.l.b16 %v255
        %v443 = vunpack.c.l.b16 %v256
        %v444 = vunpack.c.l.b16 %v257
        %v445 = vunpack.c.l.b16 %v258
        %v446 = vpack.c.b16 %v431, %v430
        %v447 = vpack.c.b16 %v433, %v432
        %v448 = vpack.c.b16 %v435, %v434
        %v449 = vpack.c.b16 %v437, %v436
        %v450 = vpack.c.b16 %v439, %v438
        %v451 = vpack.c.b16 %v441, %v440
        %v452 = vpack.c.b16 %v443, %v442
        %v453 = vpack.c.b16 %v445, %v444
        %462 = vmatprep.subr.bf16.mxu0 0
        %463 = vmatpush1.bf16.msra.mxu0 %v446
        %464 = vmatprep.subr.bf16.mxu0 0
        %465 = vmatpush1.bf16.msra.mxu0 %v447
        %466 = vmatprep.subr.bf16.mxu0 0
        %467 = vmatpush1.bf16.msra.mxu0 %v448
        %468 = vmatprep.subr.bf16.mxu0 0
        %469 = vmatpush1.bf16.msra.mxu0 %v449
        %470 = vmatprep.subr.bf16.mxu0 0
        %471 = vmatpush1.bf16.msra.mxu0 %v450
        %472 = vmatprep.subr.bf16.mxu0 0
        %473 = vmatpush1.bf16.msra.mxu0 %v451
        %474 = vmatprep.subr.bf16.mxu0 0
        %475 = vmatpush1.bf16.msra.mxu0 %v452
        %476 = vmatprep.subr.bf16.mxu0 0
        %477 = vmatpush1.bf16.msra.mxu0 %v453
        %478 = vmatprep.subr.bf16.mxu0 0
        %479 = vmatpush1.bf16.msra.mxu0 0
        %480 = vmatprep.subr.bf16.mxu0 0
        %481 = vmatpush1.bf16.msra.mxu0 0
        %482 = vmatprep.subr.bf16.mxu0 0
        %483 = vmatpush1.bf16.msra.mxu0 0
        %484 = vmatprep.subr.bf16.mxu0 0
        %485 = vmatpush1.bf16.msra.mxu0 0
        %486 = vmatprep.subr.bf16.mxu0 0
        %487 = vmatpush1.bf16.msra.mxu0 0
        %488 = vmatprep.subr.bf16.mxu0 0
        %489 = vmatpush1.bf16.msra.mxu0 0
        %490 = vmatprep.subr.bf16.mxu0 0
        %491 = vmatpush1.bf16.msra.mxu0 0
        %492 = vmatprep.subr.bf16.mxu0 0
        %493 = vmatpush1.bf16.msra.mxu0 0
        %494 = vmatprep.mubr.bf16.mxu0 0
        %495 = vmatmul.mubr.bf16.gmra.mrb[0].mxu0 %v259
        %v496 = vpop.f32.mrb[0].mxu0
        %v497 = vadd.f32 %v378, %v496
        %v498 = vpop.f32.mrb[0].mxu0
        %v499 = vpop.f32.mrb[0].mxu0
        %v500 = vadd.f32 %v381, %v499
        %v501 = vpop.f32.mrb[0].mxu0
        %502 = vmatprep.mubr.bf16.mxu0 0
        %503 = vmatmul.mubr.bf16.gmra.mrb[0].mxu0 %v260
        %v504 = vpop.f32.mrb[0].mxu0
        %v505 = vadd.f32 %v386, %v504
        %v506 = vpop.f32.mrb[0].mxu0
        %v507 = vpop.f32.mrb[0].mxu0
        %v508 = vadd.f32 %v389, %v507
        %v509 = vpop.f32.mrb[0].mxu0
        %510 = vmatprep.mubr.bf16.mxu0 0
        %511 = vmatmul.mubr.bf16.gmra.mrb[0].mxu0 %v261
        %v512 = vpop.f32.mrb[0].mxu0
        %v513 = vpop.f32.mrb[0].mxu0
        %v514 = vpop.f32.mrb[0].mxu0
        %v515 = vadd.f32 %v396, %v514
        %v516 = vpop.f32.mrb[0].mxu0
        %517 = vmatprep.mubr.bf16.mxu0 0
        %518 = vmatmul.mubr.bf16.gmra.mrb[0].mxu0 %v262
        %v519 = vpop.f32.mrb[0].mxu0
        %v520 = vadd.f32 %v401, %v519
        %v521 = vpop.f32.mrb[0].mxu0
        %v522 = vpop.f32.mrb[0].mxu0
        %v523 = vadd.f32 %v404, %v522
        %v524 = vpop.f32.mrb[0].mxu0
        %525 = vmatprep.mubr.bf16.mxu0 0
        %526 = vmatmul.mubr.bf16.gmra.mrb[0].mxu0 %v263
        %v527 = vpop.f32.mrb[0].mxu0
        %v528 = vadd.f32 %v409, %v527
        %v529 = vpop.f32.mrb[0].mxu0
        %v530 = vpop.f32.mrb[0].mxu0
        %v531 = vpop.f32.mrb[0].mxu0
        %532 = vdwg.mxu0
        %v533 = vld [vmem:[#allocation2 + $0x8] sm:$0xff]
        %v534 = vld [vmem:[#allocation2 + $0x10] sm:$0xff]
        %v535 = vld [vmem:[#allocation2 + $0x18] sm:$0xff]
        %v536 = vld [vmem:[#allocation2 + $0x20] sm:$0xff]
        %v537 = vld [vmem:[#allocation2 + $0x28] sm:$0xff]
        %v538 = vld [vmem:[#allocation2 + $0x30] sm:$0xff]
        %v539 = vld [vmem:[#allocation2 + $0x38] sm:$0xff]
        %v540 = vld [vmem:[#allocation2 + $0x40] sm:$0xff]
        %v541 = vld [vmem:[#allocation2 + $0x48] sm:$0xff]
        %s542 = scalar_lea.vmem [#allocation4], 128
        %v543 = vld [vmem:[%s542] sm:$0xf]
        %v544 = vld [vmem:[%s542 + $0x4] sm:$0xf]
        %v545 = vld [vmem:[%s542 + $0x8] sm:$0xf]
        %v546 = vld [vmem:[%s542 + $0xc] sm:$0xf]
        %v547 = vld [vmem:[%s542 + $0x10] sm:$0xf]
        %v548 = vld [vmem:[%s542 + $0x14] sm:$0xf]
        %v549 = vld [vmem:[%s542 + $0x18] sm:$0xf]
        %v550 = vld [vmem:[%s542 + $0x1c] sm:$0xf]
        %v551 = vld [vmem:[%s542 + $0x20] sm:$0xf]
        %v552 = vld [vmem:[%s542 + $0x24] sm:$0xf]
        %v553 = vld [vmem:[%s542 + $0x28] sm:$0xf]
        %v554 = vld [vmem:[%s542 + $0x2c] sm:$0xf]
        %v555 = vld [vmem:[%s542 + $0x30] sm:$0xf]
        %v556 = vld [vmem:[%s542 + $0x34] sm:$0xf]
        %v557 = vld [vmem:[%s542 + $0x38] sm:$0xf]
        %v558 = vld [vmem:[%s542 + $0x3c] sm:$0xf]
        %v559 = vpack.c.bf16 %v534, %v533
        %v560 = vpack.c.bf16 %v536, %v535
        %v561 = vpack.c.bf16 %v538, %v537
        %v562 = vpack.c.bf16 %v540, %v539
        %v563 = vpack.c.bf16 %v541, %v541
        %v580 = vunpack.c.l.b16 %v543
        %v581 = vunpack.c.l.b16 %v544
        %v582 = vunpack.c.l.b16 %v545
        %v583 = vunpack.c.l.b16 %v546
        %v584 = vunpack.c.l.b16 %v547
        %v585 = vunpack.c.l.b16 %v548
        %v586 = vunpack.c.l.b16 %v549
        %v587 = vunpack.c.l.b16 %v550
        %v588 = vunpack.c.l.b16 %v551
        %v589 = vunpack.c.l.b16 %v552
        %v590 = vunpack.c.l.b16 %v553
        %v591 = vunpack.c.l.b16 %v554
        %v592 = vunpack.c.l.b16 %v555
        %v593 = vunpack.c.l.b16 %v556
        %v594 = vunpack.c.l.b16 %v557
        %v595 = vunpack.c.l.b16 %v558
        %v596 = vpack.c.b16 %v581, %v580
        %v597 = vpack.c.b16 %v583, %v582
        %v598 = vpack.c.b16 %v585, %v584
        %v599 = vpack.c.b16 %v587, %v586
        %v600 = vpack.c.b16 %v589, %v588
        %v601 = vpack.c.b16 %v591, %v590
        %v602 = vpack.c.b16 %v593, %v592
        %v603 = vpack.c.b16 %v595, %v594
        %612 = vmatprep.subr.bf16.mxu0 0
        %613 = vmatpush1.bf16.msra.mxu0 %v596
        %614 = vmatprep.subr.bf16.mxu0 0
        %615 = vmatpush1.bf16.msra.mxu0 %v597
        %616 = vmatprep.subr.bf16.mxu0 0
        %617 = vmatpush1.bf16.msra.mxu0 %v598
        %618 = vmatprep.subr.bf16.mxu0 0
        %619 = vmatpush1.bf16.msra.mxu0 %v599
        %620 = vmatprep.subr.bf16.mxu0 0
        %621 = vmatpush1.bf16.msra.mxu0 %v600
        %622 = vmatprep.subr.bf16.mxu0 0
        %623 = vmatpush1.bf16.msra.mxu0 %v601
        %624 = vmatprep.subr.bf16.mxu0 0
        %625 = vmatpush1.bf16.msra.mxu0 %v602
        %626 = vmatprep.subr.bf16.mxu0 0
        %627 = vmatpush1.bf16.msra.mxu0 %v603
        %628 = vmatprep.subr.bf16.mxu0 0
        %629 = vmatpush1.bf16.msra.mxu0 0
        %630 = vmatprep.subr.bf16.mxu0 0
        %631 = vmatpush1.bf16.msra.mxu0 0
        %632 = vmatprep.subr.bf16.mxu0 0
        %633 = vmatpush1.bf16.msra.mxu0 0
        %634 = vmatprep.subr.bf16.mxu0 0
        %635 = vmatpush1.bf16.msra.mxu0 0
        %636 = vmatprep.subr.bf16.mxu0 0
        %637 = vmatpush1.bf16.msra.mxu0 0
        %638 = vmatprep.subr.bf16.mxu0 0
        %639 = vmatpush1.bf16.msra.mxu0 0
        %640 = vmatprep.subr.bf16.mxu0 0
        %641 = vmatpush1.bf16.msra.mxu0 0
        %642 = vmatprep.subr.bf16.mxu0 0
        %643 = vmatpush1.bf16.msra.mxu0 0
        %644 = vmatprep.mubr.bf16.mxu0 0
        %645 = vmatmul.mubr.bf16.gmra.mrb[0].mxu0 %v559
        %v646 = vpop.f32.mrb[0].mxu0
        %v647 = vadd.f32 0.0, %v646
        %v648 = vpop.f32.mrb[0].mxu0
        %v649 = vpop.f32.mrb[0].mxu0
        %v650 = vadd.f32 0.0, %v649
        %v651 = vpop.f32.mrb[0].mxu0
        %652 = vmatprep.mubr.bf16.mxu0 0
        %653 = vmatmul.mubr.bf16.gmra.mrb[0].mxu0 %v560
        %v654 = vpop.f32.mrb[0].mxu0
        %v655 = vadd.f32 0.0, %v654
        %v656 = vpop.f32.mrb[0].mxu0
        %v657 = vpop.f32.mrb[0].mxu0
        %v658 = vadd.f32 0.0, %v657
        %v659 = vpop.f32.mrb[0].mxu0
        %660 = vmatprep.mubr.bf16.mxu0 0
        %661 = vmatmul.mubr.bf16.gmra.mrb[0].mxu0 %v561
        %v662 = vpop.f32.mrb[0].mxu0
        %v663 = vpop.f32.mrb[0].mxu0
        %v664 = vpop.f32.mrb[0].mxu0
        %v665 = vadd.f32 0.0, %v664
        %v666 = vpop.f32.mrb[0].mxu0
        %667 = vmatprep.mubr.bf16.mxu0 0
        %668 = vmatmul.mubr.bf16.gmra.mrb[0].mxu0 %v562
        %v669 = vpop.f32.mrb[0].mxu0
        %v670 = vadd.f32 0.0, %v669
        %v671 = vpop.f32.mrb[0].mxu0
        %v672 = vpop.f32.mrb[0].mxu0
        %v673 = vadd.f32 0.0, %v672
        %v674 = vpop.f32.mrb[0].mxu0
        %675 = vmatprep.mubr.bf16.mxu0 0
        %676 = vmatmul.mubr.bf16.gmra.mrb[0].mxu0 %v563
        %v677 = vpop.f32.mrb[0].mxu0
        %v678 = vadd.f32 0.0, %v677
        %v679 = vpop.f32.mrb[0].mxu0
        %v680 = vpop.f32.mrb[0].mxu0
        %v681 = vpop.f32.mrb[0].mxu0
        %682 = vdwg.mxu0
        %v683 = vadd.f32 %v497, %v647
        %v684 = vadd.f32 %v500, %v650
        %v685 = vadd.f32 %v505, %v655
        %v686 = vadd.f32 %v508, %v658
        %v687 = vadd.f32 %v515, %v665
        %v688 = vadd.f32 %v520, %v670
        %v689 = vadd.f32 %v523, %v673
        %v690 = vadd.f32 %v528, %v678
        %v691 = vld [vmem:[#allocation2 + $0x9] sm:$0xff]
        %v692 = vld [vmem:[#allocation2 + $0x11] sm:$0xff]
        %v693 = vld [vmem:[#allocation2 + $0x19] sm:$0xff]
        %v694 = vld [vmem:[#allocation2 + $0x21] sm:$0xff]
        %v695 = vld [vmem:[#allocation2 + $0x29] sm:$0xff]
        %v696 = vld [vmem:[#allocation2 + $0x31] sm:$0xff]
        %v697 = vld [vmem:[#allocation2 + $0x39] sm:$0xff]
        %v698 = vld [vmem:[#allocation2 + $0x41] sm:$0xff]
        %v699 = vld [vmem:[#allocation2 + $0x49] sm:$0xff]
        %s700 = scalar_lea.vmem [#allocation4], 192
        %v701 = vld [vmem:[%s700] sm:$0xf]
        %v702 = vld [vmem:[%s700 + $0x4] sm:$0xf]
        %v703 = vld [vmem:[%s700 + $0x8] sm:$0xf]
        %v704 = vld [vmem:[%s700 + $0xc] sm:$0xf]
        %v705 = vld [vmem:[%s700 + $0x10] sm:$0xf]
        %v706 = vld [vmem:[%s700 + $0x14] sm:$0xf]
        %v707 = vld [vmem:[%s700 + $0x18] sm:$0xf]
        %v708 = vld [vmem:[%s700 + $0x1c] sm:$0xf]
        %v709 = vld [vmem:[%s700 + $0x20] sm:$0xf]
        %v710 = vld [vmem:[%s700 + $0x24] sm:$0xf]
        %v711 = vld [vmem:[%s700 + $0x28] sm:$0xf]
        %v712 = vld [vmem:[%s700 + $0x2c] sm:$0xf]
        %v713 = vld [vmem:[%s700 + $0x30] sm:$0xf]
        %v714 = vld [vmem:[%s700 + $0x34] sm:$0xf]
        %v715 = vld [vmem:[%s700 + $0x38] sm:$0xf]
        %v716 = vld [vmem:[%s700 + $0x3c] sm:$0xf]
        %v717 = vpack.c.bf16 %v692, %v691
        %v718 = vpack.c.bf16 %v694, %v693
        %v719 = vpack.c.bf16 %v696, %v695
        %v720 = vpack.c.bf16 %v698, %v697
        %v721 = vpack.c.bf16 %v699, %v699
        %v738 = vunpack.c.l.b16 %v701
        %v739 = vunpack.c.l.b16 %v702
        %v740 = vunpack.c.l.b16 %v703
        %v741 = vunpack.c.l.b16 %v704
        %v742 = vunpack.c.l.b16 %v705
        %v743 = vunpack.c.l.b16 %v706
        %v744 = vunpack.c.l.b16 %v707
        %v745 = vunpack.c.l.b16 %v708
        %v746 = vunpack.c.l.b16 %v709
        %v747 = vunpack.c.l.b16 %v710
        %v748 = vunpack.c.l.b16 %v711
        %v749 = vunpack.c.l.b16 %v712
        %v750 = vunpack.c.l.b16 %v713
        %v751 = vunpack.c.l.b16 %v714
        %v752 = vunpack.c.l.b16 %v715
        %v753 = vunpack.c.l.b16 %v716
        %v754 = vpack.c.b16 %v739, %v738
        %v755 = vpack.c.b16 %v741, %v740
        %v756 = vpack.c.b16 %v743, %v742
        %v757 = vpack.c.b16 %v745, %v744
        %v758 = vpack.c.b16 %v747, %v746
        %v759 = vpack.c.b16 %v749, %v748
        %v760 = vpack.c.b16 %v751, %v750
        %v761 = vpack.c.b16 %v753, %v752
        %770 = vmatprep.subr.bf16.mxu0 0
        %771 = vmatpush1.bf16.msra.mxu0 %v754
        %772 = vmatprep.subr.bf16.mxu0 0
        %773 = vmatpush1.bf16.msra.mxu0 %v755
        %774 = vmatprep.subr.bf16.mxu0 0
        %775 = vmatpush1.bf16.msra.mxu0 %v756
        %776 = vmatprep.subr.bf16.mxu0 0
        %777 = vmatpush1.bf16.msra.mxu0 %v757
        %778 = vmatprep.subr.bf16.mxu0 0
        %779 = vmatpush1.bf16.msra.mxu0 %v758
        %780 = vmatprep.subr.bf16.mxu0 0
        %781 = vmatpush1.bf16.msra.mxu0 %v759
        %782 = vmatprep.subr.bf16.mxu0 0
        %783 = vmatpush1.bf16.msra.mxu0 %v760
        %784 = vmatprep.subr.bf16.mxu0 0
        %785 = vmatpush1.bf16.msra.mxu0 %v761
        %786 = vmatprep.subr.bf16.mxu0 0
        %787 = vmatpush1.bf16.msra.mxu0 0
        %788 = vmatprep.subr.bf16.mxu0 0
        %789 = vmatpush1.bf16.msra.mxu0 0
        %790 = vmatprep.subr.bf16.mxu0 0
        %791 = vmatpush1.bf16.msra.mxu0 0
        %792 = vmatprep.subr.bf16.mxu0 0
        %793 = vmatpush1.bf16.msra.mxu0 0
        %794 = vmatprep.subr.bf16.mxu0 0
        %795 = vmatpush1.bf16.msra.mxu0 0
        %796 = vmatprep.subr.bf16.mxu0 0
        %797 = vmatpush1.bf16.msra.mxu0 0
        %798 = vmatprep.subr.bf16.mxu0 0
        %799 = vmatpush1.bf16.msra.mxu0 0
        %800 = vmatprep.subr.bf16.mxu0 0
        %801 = vmatpush1.bf16.msra.mxu0 0
        %802 = vmatprep.mubr.bf16.mxu0 0
        %803 = vmatmul.mubr.bf16.gmra.mrb[0].mxu0 %v717
        %v804 = vpop.f32.mrb[0].mxu0
        %v805 = vadd.f32 0.0, %v804
        %v806 = vpop.f32.mrb[0].mxu0
        %v807 = vpop.f32.mrb[0].mxu0
        %v808 = vadd.f32 0.0, %v807
        %v809 = vpop.f32.mrb[0].mxu0
        %810 = vmatprep.mubr.bf16.mxu0 0
        %811 = vmatmul.mubr.bf16.gmra.mrb[0].mxu0 %v718
        %v812 = vpop.f32.mrb[0].mxu0
        %v813 = vadd.f32 0.0, %v812
        %v814 = vpop.f32.mrb[0].mxu0
        %v815 = vpop.f32.mrb[0].mxu0
        %v816 = vadd.f32 0.0, %v815
        %v817 = vpop.f32.mrb[0].mxu0
        %818 = vmatprep.mubr.bf16.mxu0 0
        %819 = vmatmul.mubr.bf16.gmra.mrb[0].mxu0 %v719
        %v820 = vpop.f32.mrb[0].mxu0
        %v821 = vpop.f32.mrb[0].mxu0
        %v822 = vpop.f32.mrb[0].mxu0
        %v823 = vadd.f32 0.0, %v822
        %v824 = vpop.f32.mrb[0].mxu0
        %825 = vmatprep.mubr.bf16.mxu0 0
        %826 = vmatmul.mubr.bf16.gmra.mrb[0].mxu0 %v720
        %v827 = vpop.f32.mrb[0].mxu0
        %v828 = vadd.f32 0.0, %v827
        %v829 = vpop.f32.mrb[0].mxu0
        %v830 = vpop.f32.mrb[0].mxu0
        %v831 = vadd.f32 0.0, %v830
        %v832 = vpop.f32.mrb[0].mxu0
        %833 = vmatprep.mubr.bf16.mxu0 0
        %834 = vmatmul.mubr.bf16.gmra.mrb[0].mxu0 %v721
        %v835 = vpop.f32.mrb[0].mxu0
        %v836 = vadd.f32 0.0, %v835
        %v837 = vpop.f32.mrb[0].mxu0
        %v838 = vpop.f32.mrb[0].mxu0
        %v839 = vpop.f32.mrb[0].mxu0
        %840 = vdwg.mxu0
        %v841 = vadd.f32 %v683, %v805
        %v842 = vadd.f32 %v684, %v808
        %v843 = vadd.f32 %v685, %v813
        %v844 = vadd.f32 %v686, %v816
        %v845 = vadd.f32 %v687, %v823
        %v846 = vadd.f32 %v688, %v828
        %v847 = vadd.f32 %v689, %v831
        %v848 = vadd.f32 %v690, %v836
        %v849 = vld [vmem:[#allocation2 + $0xa] sm:$0xff]
        %v850 = vld [vmem:[#allocation2 + $0x12] sm:$0xff]
        %v851 = vld [vmem:[#allocation2 + $0x1a] sm:$0xff]
        %v852 = vld [vmem:[#allocation2 + $0x22] sm:$0xff]
        %v853 = vld [vmem:[#allocation2 + $0x2a] sm:$0xff]
        %v854 = vld [vmem:[#allocation2 + $0x32] sm:$0xff]
        %v855 = vld [vmem:[#allocation2 + $0x3a] sm:$0xff]
        %v856 = vld [vmem:[#allocation2 + $0x42] sm:$0xff]
        %v857 = vld [vmem:[#allocation2 + $0x4a] sm:$0xff]
        %s858 = scalar_lea.vmem [#allocation4], 256
        %v859 = vld [vmem:[%s858] sm:$0xf]
        %v860 = vld [vmem:[%s858 + $0x4] sm:$0xf]
        %v861 = vld [vmem:[%s858 + $0x8] sm:$0xf]
        %v862 = vld [vmem:[%s858 + $0xc] sm:$0xf]
        %v863 = vld [vmem:[%s858 + $0x10] sm:$0xf]
        %v864 = vld [vmem:[%s858 + $0x14] sm:$0xf]
        %v865 = vld [vmem:[%s858 + $0x18] sm:$0xf]
        %v866 = vld [vmem:[%s858 + $0x1c] sm:$0xf]
        %v867 = vld [vmem:[%s858 + $0x20] sm:$0xf]
        %v868 = vld [vmem:[%s858 + $0x24] sm:$0xf]
        %v869 = vld [vmem:[%s858 + $0x28] sm:$0xf]
        %v870 = vld [vmem:[%s858 + $0x2c] sm:$0xf]
        %v871 = vld [vmem:[%s858 + $0x30] sm:$0xf]
        %v872 = vld [vmem:[%s858 + $0x34] sm:$0xf]
        %v873 = vld [vmem:[%s858 + $0x38] sm:$0xf]
        %v874 = vld [vmem:[%s858 + $0x3c] sm:$0xf]
        %v875 = vpack.c.bf16 %v850, %v849
        %v876 = vpack.c.bf16 %v852, %v851
        %v877 = vpack.c.bf16 %v854, %v853
        %v878 = vpack.c.bf16 %v856, %v855
        %v879 = vpack.c.bf16 %v857, %v857
        %v896 = vunpack.c.l.b16 %v859
        %v897 = vunpack.c.l.b16 %v860
        %v898 = vunpack.c.l.b16 %v861
        %v899 = vunpack.c.l.b16 %v862
        %v900 = vunpack.c.l.b16 %v863
        %v901 = vunpack.c.l.b16 %v864
        %v902 = vunpack.c.l.b16 %v865
        %v903 = vunpack.c.l.b16 %v866
        %v904 = vunpack.c.l.b16 %v867
        %v905 = vunpack.c.l.b16 %v868
        %v906 = vunpack.c.l.b16 %v869
        %v907 = vunpack.c.l.b16 %v870
        %v908 = vunpack.c.l.b16 %v871
        %v909 = vunpack.c.l.b16 %v872
        %v910 = vunpack.c.l.b16 %v873
        %v911 = vunpack.c.l.b16 %v874
        %v912 = vpack.c.b16 %v897, %v896
        %v913 = vpack.c.b16 %v899, %v898
        %v914 = vpack.c.b16 %v901, %v900
        %v915 = vpack.c.b16 %v903, %v902
        %v916 = vpack.c.b16 %v905, %v904
        %v917 = vpack.c.b16 %v907, %v906
        %v918 = vpack.c.b16 %v909, %v908
        %v919 = vpack.c.b16 %v911, %v910
        %928 = vmatprep.subr.bf16.mxu0 0
        %929 = vmatpush1.bf16.msra.mxu0 %v912
        %930 = vmatprep.subr.bf16.mxu0 0
        %931 = vmatpush1.bf16.msra.mxu0 %v913
        %932 = vmatprep.subr.bf16.mxu0 0
        %933 = vmatpush1.bf16.msra.mxu0 %v914
        %934 = vmatprep.subr.bf16.mxu0 0
        %935 = vmatpush1.bf16.msra.mxu0 %v915
        %936 = vmatprep.subr.bf16.mxu0 0
        %937 = vmatpush1.bf16.msra.mxu0 %v916
        %938 = vmatprep.subr.bf16.mxu0 0
        %939 = vmatpush1.bf16.msra.mxu0 %v917
        %940 = vmatprep.subr.bf16.mxu0 0
        %941 = vmatpush1.bf16.msra.mxu0 %v918
        %942 = vmatprep.subr.bf16.mxu0 0
        %943 = vmatpush1.bf16.msra.mxu0 %v919
        %944 = vmatprep.subr.bf16.mxu0 0
        %945 = vmatpush1.bf16.msra.mxu0 0
        %946 = vmatprep.subr.bf16.mxu0 0
        %947 = vmatpush1.bf16.msra.mxu0 0
        %948 = vmatprep.subr.bf16.mxu0 0
        %949 = vmatpush1.bf16.msra.mxu0 0
        %950 = vmatprep.subr.bf16.mxu0 0
        %951 = vmatpush1.bf16.msra.mxu0 0
        %952 = vmatprep.subr.bf16.mxu0 0
        %953 = vmatpush1.bf16.msra.mxu0 0
        %954 = vmatprep.subr.bf16.mxu0 0
        %955 = vmatpush1.bf16.msra.mxu0 0
        %956 = vmatprep.subr.bf16.mxu0 0
        %957 = vmatpush1.bf16.msra.mxu0 0
        %958 = vmatprep.subr.bf16.mxu0 0
        %959 = vmatpush1.bf16.msra.mxu0 0
        %960 = vmatprep.mubr.bf16.mxu0 0
        %961 = vmatmul.mubr.bf16.gmra.mrb[0].mxu0 %v875
        %v962 = vpop.f32.mrb[0].mxu0
        %v963 = vadd.f32 0.0, %v962
        %v964 = vpop.f32.mrb[0].mxu0
        %v965 = vpop.f32.mrb[0].mxu0
        %v966 = vadd.f32 0.0, %v965
        %v967 = vpop.f32.mrb[0].mxu0
        %968 = vmatprep.mubr.bf16.mxu0 0
        %969 = vmatmul.mubr.bf16.gmra.mrb[0].mxu0 %v876
        %v970 = vpop.f32.mrb[0].mxu0
        %v971 = vadd.f32 0.0, %v970
        %v972 = vpop.f32.mrb[0].mxu0
        %v973 = vpop.f32.mrb[0].mxu0
        %v974 = vadd.f32 0.0, %v973
        %v975 = vpop.f32.mrb[0].mxu0
        %976 = vmatprep.mubr.bf16.mxu0 0
        %977 = vmatmul.mubr.bf16.gmra.mrb[0].mxu0 %v877
        %v978 = vpop.f32.mrb[0].mxu0
        %v979 = vpop.f32.mrb[0].mxu0
        %v980 = vpop.f32.mrb[0].mxu0
        %v981 = vadd.f32 0.0, %v980
        %v982 = vpop.f32.mrb[0].mxu0
        %983 = vmatprep.mubr.bf16.mxu0 0
        %984 = vmatmul.mubr.bf16.gmra.mrb[0].mxu0 %v878
        %v985 = vpop.f32.mrb[0].mxu0
        %v986 = vadd.f32 0.0, %v985
        %v987 = vpop.f32.mrb[0].mxu0
        %v988 = vpop.f32.mrb[0].mxu0
        %v989 = vadd.f32 0.0, %v988
        %v990 = vpop.f32.mrb[0].mxu0
        %991 = vmatprep.mubr.bf16.mxu0 0
        %992 = vmatmul.mubr.bf16.gmra.mrb[0].mxu0 %v879
        %v993 = vpop.f32.mrb[0].mxu0
        %v994 = vadd.f32 0.0, %v993
        %v995 = vpop.f32.mrb[0].mxu0
        %v996 = vpop.f32.mrb[0].mxu0
        %v997 = vpop.f32.mrb[0].mxu0
        %998 = vdwg.mxu0
        %v999 = vadd.f32 %v841, %v963
        %v1000 = vadd.f32 %v842, %v966
        %v1001 = vadd.f32 %v843, %v971
        %v1002 = vadd.f32 %v844, %v974
        %v1003 = vadd.f32 %v845, %v981
        %v1004 = vadd.f32 %v846, %v986
        %v1005 = vadd.f32 %v847, %v989
        %v1006 = vadd.f32 %v848, %v994
        %v1007 = vld [vmem:[#allocation6] sm:$0xff]
        %v1008 = vlaneseq
        %v1009 = vshrl.u32 %v1008, 7
        %v1010 = vsub.s32 0, %v1009
        %v1011 = vrot.slane %v1007, %v1010
        %v1012 = vadd.f32 %v999, %v1011
        %v1013 = vadd.f32 %v1000, %v1011
        %v1014 = vadd.f32 %v1001, %v1011
        %v1015 = vadd.f32 %v1002, %v1011
        %v1016 = vadd.f32 %v1003, %v1011
        %v1017 = vadd.f32 %v1004, %v1011
        %v1018 = vadd.f32 %v1005, %v1011
        %v1019 = vadd.f32 %v1006, %v1011
        %1020 = vst [vmem:[#allocation2 + $0x8] sm:$0xff] %v1012
        %1021 = vst [vmem:[#allocation2 + $0x10] sm:$0xff] %v1013
        %1022 = vst [vmem:[#allocation2 + $0x18] sm:$0xff] %v1014
        %1023 = vst [vmem:[#allocation2 + $0x20] sm:$0xff] %v1015
        %1024 = vst [vmem:[#allocation2 + $0x30] sm:$0xff] %v1016
        %1025 = vst [vmem:[#allocation2 + $0x38] sm:$0xff] %v1017
        %1026 = vst [vmem:[#allocation2 + $0x40] sm:$0xff] %v1018
        %1027 = vst [vmem:[#allocation2 + $0x48] sm:$0xff] %v1019
        %v1028 = vld [vmem:[#allocation2 + $0x6] sm:$0xff]
        %v1029 = vld [vmem:[#allocation2 + $0xe] sm:$0xff]
        %v1030 = vld [vmem:[#allocation2 + $0x16] sm:$0xff]
        %v1031 = vld [vmem:[#allocation2 + $0x1e] sm:$0xff]
        %v1032 = vld [vmem:[#allocation2 + $0x26] sm:$0xff]
        %v1033 = vld [vmem:[#allocation2 + $0x2e] sm:$0xff]
        %v1034 = vld [vmem:[#allocation2 + $0x36] sm:$0xff]
        %v1035 = vld [vmem:[#allocation2 + $0x3e] sm:$0xff]
        %v1036 = vld [vmem:[#allocation2 + $0x46] sm:$0xff]
        %v1037 = vmax.f32 %v1028, 0.0
        %v1038 = vmax.f32 %v1029, 0.0
        %v1039 = vmax.f32 %v1030, 0.0
        %v1040 = vmax.f32 %v1031, 0.0
        %v1041 = vmax.f32 %v1032, 0.0
        %v1042 = vmax.f32 %v1033, 0.0
        %v1043 = vmax.f32 %v1034, 0.0
        %v1044 = vmax.f32 %v1035, 0.0
        %v1045 = vmax.f32 %v1036, 0.0
        %s1046 = scalar_lea.vmem [#allocation4], 320
        %v1047 = vld [vmem:[%s1046] sm:$0xf]
        %v1048 = vld [vmem:[%s1046 + $0x4] sm:$0xf]
        %v1049 = vld [vmem:[%s1046 + $0x8] sm:$0xf]
        %v1050 = vld [vmem:[%s1046 + $0xc] sm:$0xf]
        %v1051 = vld [vmem:[%s1046 + $0x10] sm:$0xf]
        %v1052 = vld [vmem:[%s1046 + $0x14] sm:$0xf]
        %v1053 = vld [vmem:[%s1046 + $0x18] sm:$0xf]
        %v1054 = vld [vmem:[%s1046 + $0x1c] sm:$0xf]
        %v1055 = vld [vmem:[%s1046 + $0x20] sm:$0xf]
        %v1056 = vld [vmem:[%s1046 + $0x24] sm:$0xf]
        %v1057 = vld [vmem:[%s1046 + $0x28] sm:$0xf]
        %v1058 = vld [vmem:[%s1046 + $0x2c] sm:$0xf]
        %v1059 = vld [vmem:[%s1046 + $0x30] sm:$0xf]
        %v1060 = vld [vmem:[%s1046 + $0x34] sm:$0xf]
        %v1061 = vld [vmem:[%s1046 + $0x38] sm:$0xf]
        %v1062 = vld [vmem:[%s1046 + $0x3c] sm:$0xf]
        %v1063 = vpack.c.bf16 %v1038, %v1037
        %v1064 = vpack.c.bf16 %v1040, %v1039
        %v1065 = vpack.c.bf16 %v1042, %v1041
        %v1066 = vpack.c.bf16 %v1044, %v1043
        %v1067 = vpack.c.bf16 %v1045, %v1045
        %v1068 = vld [vmem:[#allocation2 + $0x7] sm:$0xff]
        %v1069 = vld [vmem:[#allocation2 + $0xf] sm:$0xff]
        %v1070 = vld [vmem:[#allocation2 + $0x17] sm:$0xff]
        %v1071 = vld [vmem:[#allocation2 + $0x1f] sm:$0xff]
        %v1072 = vld [vmem:[#allocation2 + $0x27] sm:$0xff]
        %v1073 = vld [vmem:[#allocation2 + $0x2f] sm:$0xff]
        %v1074 = vld [vmem:[#allocation2 + $0x37] sm:$0xff]
        %v1075 = vld [vmem:[#allocation2 + $0x3f] sm:$0xff]
        %v1076 = vld [vmem:[#allocation2 + $0x47] sm:$0xff]
        %v1077 = vmax.f32 %v1068, 0.0
        %v1078 = vmax.f32 %v1069, 0.0
        %v1079 = vmax.f32 %v1070, 0.0
        %v1080 = vmax.f32 %v1071, 0.0
        %v1081 = vmax.f32 %v1072, 0.0
        %v1082 = vmax.f32 %v1073, 0.0
        %v1083 = vmax.f32 %v1074, 0.0
        %v1084 = vmax.f32 %v1075, 0.0
        %v1085 = vmax.f32 %v1076, 0.0
        %s1086 = scalar_lea.vmem [#allocation4], 384
        %v1087 = vld [vmem:[%s1086] sm:$0xf]
        %v1088 = vld [vmem:[%s1086 + $0x4] sm:$0xf]
        %v1089 = vld [vmem:[%s1086 + $0x8] sm:$0xf]
        %v1090 = vld [vmem:[%s1086 + $0xc] sm:$0xf]
        %v1091 = vld [vmem:[%s1086 + $0x10] sm:$0xf]
        %v1092 = vld [vmem:[%s1086 + $0x14] sm:$0xf]
        %v1093 = vld [vmem:[%s1086 + $0x18] sm:$0xf]
        %v1094 = vld [vmem:[%s1086 + $0x1c] sm:$0xf]
        %v1095 = vld [vmem:[%s1086 + $0x20] sm:$0xf]
        %v1096 = vld [vmem:[%s1086 + $0x24] sm:$0xf]
        %v1097 = vld [vmem:[%s1086 + $0x28] sm:$0xf]
        %v1098 = vld [vmem:[%s1086 + $0x2c] sm:$0xf]
        %v1099 = vld [vmem:[%s1086 + $0x30] sm:$0xf]
        %v1100 = vld [vmem:[%s1086 + $0x34] sm:$0xf]
        %v1101 = vld [vmem:[%s1086 + $0x38] sm:$0xf]
        %v1102 = vld [vmem:[%s1086 + $0x3c] sm:$0xf]
        %v1103 = vpack.c.bf16 %v1078, %v1077
        %v1104 = vpack.c.bf16 %v1080, %v1079
        %v1105 = vpack.c.bf16 %v1082, %v1081
        %v1106 = vpack.c.bf16 %v1084, %v1083
        %v1107 = vpack.c.bf16 %v1085, %v1085
        %v1124 = vunpack.c.l.b16 %v1087
        %v1125 = vunpack.c.l.b16 %v1088
        %v1126 = vunpack.c.l.b16 %v1089
        %v1127 = vunpack.c.l.b16 %v1090
        %v1128 = vunpack.c.l.b16 %v1091
        %v1129 = vunpack.c.l.b16 %v1092
        %v1130 = vunpack.c.l.b16 %v1093
        %v1131 = vunpack.c.l.b16 %v1094
        %v1132 = vunpack.c.l.b16 %v1095
        %v1133 = vunpack.c.l.b16 %v1096
        %v1134 = vunpack.c.l.b16 %v1097
        %v1135 = vunpack.c.l.b16 %v1098
        %v1136 = vunpack.c.l.b16 %v1099
        %v1137 = vunpack.c.l.b16 %v1100
        %v1138 = vunpack.c.l.b16 %v1101
        %v1139 = vunpack.c.l.b16 %v1102
        %v1140 = vpack.c.b16 %v1125, %v1124
        %v1141 = vpack.c.b16 %v1127, %v1126
        %v1142 = vpack.c.b16 %v1129, %v1128
        %v1143 = vpack.c.b16 %v1131, %v1130
        %v1144 = vpack.c.b16 %v1133, %v1132
        %v1145 = vpack.c.b16 %v1135, %v1134
        %v1146 = vpack.c.b16 %v1137, %v1136
        %v1147 = vpack.c.b16 %v1139, %v1138
        %1156 = vmatprep.subr.bf16.mxu0 0
        %1157 = vmatpush1.bf16.msra.mxu0 %v1140
        %1158 = vmatprep.subr.bf16.mxu0 0
        %1159 = vmatpush1.bf16.msra.mxu0 %v1141
        %1160 = vmatprep.subr.bf16.mxu0 0
        %1161 = vmatpush1.bf16.msra.mxu0 %v1142
        %1162 = vmatprep.subr.bf16.mxu0 0
        %1163 = vmatpush1.bf16.msra.mxu0 %v1143
        %1164 = vmatprep.subr.bf16.mxu0 0
        %1165 = vmatpush1.bf16.msra.mxu0 %v1144
        %1166 = vmatprep.subr.bf16.mxu0 0
        %1167 = vmatpush1.bf16.msra.mxu0 %v1145
        %1168 = vmatprep.subr.bf16.mxu0 0
        %1169 = vmatpush1.bf16.msra.mxu0 %v1146
        %1170 = vmatprep.subr.bf16.mxu0 0
        %1171 = vmatpush1.bf16.msra.mxu0 %v1147
        %1172 = vmatprep.subr.bf16.mxu0 0
        %1173 = vmatpush1.bf16.msra.mxu0 0
        %1174 = vmatprep.subr.bf16.mxu0 0
        %1175 = vmatpush1.bf16.msra.mxu0 0
        %1176 = vmatprep.subr.bf16.mxu0 0
        %1177 = vmatpush1.bf16.msra.mxu0 0
        %1178 = vmatprep.subr.bf16.mxu0 0
        %1179 = vmatpush1.bf16.msra.mxu0 0
        %1180 = vmatprep.subr.bf16.mxu0 0
        %1181 = vmatpush1.bf16.msra.mxu0 0
        %1182 = vmatprep.subr.bf16.mxu0 0
        %1183 = vmatpush1.bf16.msra.mxu0 0
        %1184 = vmatprep.subr.bf16.mxu0 0
        %1185 = vmatpush1.bf16.msra.mxu0 0
        %1186 = vmatprep.subr.bf16.mxu0 0
        %1187 = vmatpush1.bf16.msra.mxu0 0
        %1188 = vmatprep.mubr.bf16.mxu0 0
        %1189 = vmatmul.mubr.bf16.gmra.mrb[0].mxu0 %v1103
        %v1190 = vpop.f32.mrb[0].mxu0
        %v1191 = vadd.f32 0.0, %v1190
        %v1192 = vpop.f32.mrb[0].mxu0
        %v1193 = vpop.f32.mrb[0].mxu0
        %v1194 = vadd.f32 0.0, %v1193
        %v1195 = vpop.f32.mrb[0].mxu0
        %1196 = vmatprep.mubr.bf16.mxu0 0
        %1197 = vmatmul.mubr.bf16.gmra.mrb[0].mxu0 %v1104
        %v1198 = vpop.f32.mrb[0].mxu0
        %v1199 = vadd.f32 0.0, %v1198
        %v1200 = vpop.f32.mrb[0].mxu0
        %v1201 = vpop.f32.mrb[0].mxu0
        %v1202 = vadd.f32 0.0, %v1201
        %v1203 = vpop.f32.mrb[0].mxu0
        %1204 = vmatprep.mubr.bf16.mxu0 0
        %1205 = vmatmul.mubr.bf16.gmra.mrb[0].mxu0 %v1105
        %v1206 = vpop.f32.mrb[0].mxu0
        %v1207 = vpop.f32.mrb[0].mxu0
        %v1208 = vpop.f32.mrb[0].mxu0
        %v1209 = vadd.f32 0.0, %v1208
        %v1210 = vpop.f32.mrb[0].mxu0
        %1211 = vmatprep.mubr.bf16.mxu0 0
        %1212 = vmatmul.mubr.bf16.gmra.mrb[0].mxu0 %v1106
        %v1213 = vpop.f32.mrb[0].mxu0
        %v1214 = vadd.f32 0.0, %v1213
        %v1215 = vpop.f32.mrb[0].mxu0
        %v1216 = vpop.f32.mrb[0].mxu0
        %v1217 = vadd.f32 0.0, %v1216
        %v1218 = vpop.f32.mrb[0].mxu0
        %1219 = vmatprep.mubr.bf16.mxu0 0
        %1220 = vmatmul.mubr.bf16.gmra.mrb[0].mxu0 %v1107
        %v1221 = vpop.f32.mrb[0].mxu0
        %v1222 = vadd.f32 0.0, %v1221
        %v1223 = vpop.f32.mrb[0].mxu0
        %v1224 = vpop.f32.mrb[0].mxu0
        %v1225 = vpop.f32.mrb[0].mxu0
        %1226 = vdwg.mxu0
        %v1243 = vunpack.c.l.b16 %v1047
        %v1244 = vunpack.c.l.b16 %v1048
        %v1245 = vunpack.c.l.b16 %v1049
        %v1246 = vunpack.c.l.b16 %v1050
        %v1247 = vunpack.c.l.b16 %v1051
        %v1248 = vunpack.c.l.b16 %v1052
        %v1249 = vunpack.c.l.b16 %v1053
        %v1250 = vunpack.c.l.b16 %v1054
        %v1251 = vunpack.c.l.b16 %v1055
        %v1252 = vunpack.c.l.b16 %v1056
        %v1253 = vunpack.c.l.b16 %v1057
        %v1254 = vunpack.c.l.b16 %v1058
        %v1255 = vunpack.c.l.b16 %v1059
        %v1256 = vunpack.c.l.b16 %v1060
        %v1257 = vunpack.c.l.b16 %v1061
        %v1258 = vunpack.c.l.b16 %v1062
        %v1259 = vpack.c.b16 %v1244, %v1243
        %v1260 = vpack.c.b16 %v1246, %v1245
        %v1261 = vpack.c.b16 %v1248, %v1247
        %v1262 = vpack.c.b16 %v1250, %v1249
        %v1263 = vpack.c.b16 %v1252, %v1251
        %v1264 = vpack.c.b16 %v1254, %v1253
        %v1265 = vpack.c.b16 %v1256, %v1255
        %v1266 = vpack.c.b16 %v1258, %v1257
        %1275 = vmatprep.subr.bf16.mxu0 0
        %1276 = vmatpush1.bf16.msra.mxu0 %v1259
        %1277 = vmatprep.subr.bf16.mxu0 0
        %1278 = vmatpush1.bf16.msra.mxu0 %v1260
        %1279 = vmatprep.subr.bf16.mxu0 0
        %1280 = vmatpush1.bf16.msra.mxu0 %v1261
        %1281 = vmatprep.subr.bf16.mxu0 0
        %1282 = vmatpush1.bf16.msra.mxu0 %v1262
        %1283 = vmatprep.subr.bf16.mxu0 0
        %1284 = vmatpush1.bf16.msra.mxu0 %v1263
        %1285 = vmatprep.subr.bf16.mxu0 0
        %1286 = vmatpush1.bf16.msra.mxu0 %v1264
        %1287 = vmatprep.subr.bf16.mxu0 0
        %1288 = vmatpush1.bf16.msra.mxu0 %v1265
        %1289 = vmatprep.subr.bf16.mxu0 0
        %1290 = vmatpush1.bf16.msra.mxu0 %v1266
        %1291 = vmatprep.subr.bf16.mxu0 0
        %1292 = vmatpush1.bf16.msra.mxu0 0
        %1293 = vmatprep.subr.bf16.mxu0 0
        %1294 = vmatpush1.bf16.msra.mxu0 0
        %1295 = vmatprep.subr.bf16.mxu0 0
        %1296 = vmatpush1.bf16.msra.mxu0 0
        %1297 = vmatprep.subr.bf16.mxu0 0
        %1298 = vmatpush1.bf16.msra.mxu0 0
        %1299 = vmatprep.subr.bf16.mxu0 0
        %1300 = vmatpush1.bf16.msra.mxu0 0
        %1301 = vmatprep.subr.bf16.mxu0 0
        %1302 = vmatpush1.bf16.msra.mxu0 0
        %1303 = vmatprep.subr.bf16.mxu0 0
        %1304 = vmatpush1.bf16.msra.mxu0 0
        %1305 = vmatprep.subr.bf16.mxu0 0
        %1306 = vmatpush1.bf16.msra.mxu0 0
        %1307 = vmatprep.mubr.bf16.mxu0 0
        %1308 = vmatmul.mubr.bf16.gmra.mrb[0].mxu0 %v1063
        %v1309 = vpop.f32.mrb[0].mxu0
        %v1310 = vadd.f32 %v1191, %v1309
        %v1311 = vpop.f32.mrb[0].mxu0
        %v1312 = vpop.f32.mrb[0].mxu0
        %v1313 = vadd.f32 %v1194, %v1312
        %v1314 = vpop.f32.mrb[0].mxu0
        %1315 = vmatprep.mubr.bf16.mxu0 0
        %1316 = vmatmul.mubr.bf16.gmra.mrb[0].mxu0 %v1064
        %v1317 = vpop.f32.mrb[0].mxu0
        %v1318 = vadd.f32 %v1199, %v1317
        %v1319 = vpop.f32.mrb[0].mxu0
        %v1320 = vpop.f32.mrb[0].mxu0
        %v1321 = vadd.f32 %v1202, %v1320
        %v1322 = vpop.f32.mrb[0].mxu0
        %1323 = vmatprep.mubr.bf16.mxu0 0
        %1324 = vmatmul.mubr.bf16.gmra.mrb[0].mxu0 %v1065
        %v1325 = vpop.f32.mrb[0].mxu0
        %v1326 = vpop.f32.mrb[0].mxu0
        %v1327 = vpop.f32.mrb[0].mxu0
        %v1328 = vadd.f32 %v1209, %v1327
        %v1329 = vpop.f32.mrb[0].mxu0
        %1330 = vmatprep.mubr.bf16.mxu0 0
        %1331 = vmatmul.mubr.bf16.gmra.mrb[0].mxu0 %v1066
        %v1332 = vpop.f32.mrb[0].mxu0
        %v1333 = vadd.f32 %v1214, %v1332
        %v1334 = vpop.f32.mrb[0].mxu0
        %v1335 = vpop.f32.mrb[0].mxu0
        %v1336 = vadd.f32 %v1217, %v1335
        %v1337 = vpop.f32.mrb[0].mxu0
        %1338 = vmatprep.mubr.bf16.mxu0 0
        %1339 = vmatmul.mubr.bf16.gmra.mrb[0].mxu0 %v1067
        %v1340 = vpop.f32.mrb[0].mxu0
        %v1341 = vadd.f32 %v1222, %v1340
        %v1342 = vpop.f32.mrb[0].mxu0
        %v1343 = vpop.f32.mrb[0].mxu0
        %v1344 = vpop.f32.mrb[0].mxu0
        %1345 = vdwg.mxu0
        %v1346 = vld [vmem:[#allocation2 + $0x8] sm:$0xff]
        %v1347 = vld [vmem:[#allocation2 + $0x10] sm:$0xff]
        %v1348 = vld [vmem:[#allocation2 + $0x18] sm:$0xff]
        %v1349 = vld [vmem:[#allocation2 + $0x20] sm:$0xff]
        %v1350 = vld [vmem:[#allocation2 + $0x28] sm:$0xff]
        %v1351 = vld [vmem:[#allocation2 + $0x30] sm:$0xff]
        %v1352 = vld [vmem:[#allocation2 + $0x38] sm:$0xff]
        %v1353 = vld [vmem:[#allocation2 + $0x40] sm:$0xff]
        %v1354 = vld [vmem:[#allocation2 + $0x48] sm:$0xff]
        %v1355 = vmax.f32 %v1346, 0.0
        %v1356 = vmax.f32 %v1347, 0.0
        %v1357 = vmax.f32 %v1348, 0.0
        %v1358 = vmax.f32 %v1349, 0.0
        %v1359 = vmax.f32 %v1350, 0.0
        %v1360 = vmax.f32 %v1351, 0.0
        %v1361 = vmax.f32 %v1352, 0.0
        %v1362 = vmax.f32 %v1353, 0.0
        %v1363 = vmax.f32 %v1354, 0.0
        %s1364 = scalar_lea.vmem [#allocation4], 448
        %v1365 = vld [vmem:[%s1364] sm:$0xf]
        %v1366 = vld [vmem:[%s1364 + $0x4] sm:$0xf]
        %v1367 = vld [vmem:[%s1364 + $0x8] sm:$0xf]
        %v1368 = vld [vmem:[%s1364 + $0xc] sm:$0xf]
        %v1369 = vld [vmem:[%s1364 + $0x10] sm:$0xf]
        %v1370 = vld [vmem:[%s1364 + $0x14] sm:$0xf]
        %v1371 = vld [vmem:[%s1364 + $0x18] sm:$0xf]
        %v1372 = vld [vmem:[%s1364 + $0x1c] sm:$0xf]
        %v1373 = vld [vmem:[%s1364 + $0x20] sm:$0xf]
        %v1374 = vld [vmem:[%s1364 + $0x24] sm:$0xf]
        %v1375 = vld [vmem:[%s1364 + $0x28] sm:$0xf]
        %v1376 = vld [vmem:[%s1364 + $0x2c] sm:$0xf]
        %v1377 = vld [vmem:[%s1364 + $0x30] sm:$0xf]
        %v1378 = vld [vmem:[%s1364 + $0x34] sm:$0xf]
        %v1379 = vld [vmem:[%s1364 + $0x38] sm:$0xf]
        %v1380 = vld [vmem:[%s1364 + $0x3c] sm:$0xf]
        %v1381 = vpack.c.bf16 %v1356, %v1355
        %v1382 = vpack.c.bf16 %v1358, %v1357
        %v1383 = vpack.c.bf16 %v1360, %v1359
        %v1384 = vpack.c.bf16 %v1362, %v1361
        %v1385 = vpack.c.bf16 %v1363, %v1363
        %v1402 = vunpack.c.l.b16 %v1365
        %v1403 = vunpack.c.l.b16 %v1366
        %v1404 = vunpack.c.l.b16 %v1367
        %v1405 = vunpack.c.l.b16 %v1368
        %v1406 = vunpack.c.l.b16 %v1369
        %v1407 = vunpack.c.l.b16 %v1370
        %v1408 = vunpack.c.l.b16 %v1371
        %v1409 = vunpack.c.l.b16 %v1372
        %v1410 = vunpack.c.l.b16 %v1373
        %v1411 = vunpack.c.l.b16 %v1374
        %v1412 = vunpack.c.l.b16 %v1375
        %v1413 = vunpack.c.l.b16 %v1376
        %v1414 = vunpack.c.l.b16 %v1377
        %v1415 = vunpack.c.l.b16 %v1378
        %v1416 = vunpack.c.l.b16 %v1379
        %v1417 = vunpack.c.l.b16 %v1380
        %v1418 = vpack.c.b16 %v1403, %v1402
        %v1419 = vpack.c.b16 %v1405, %v1404
        %v1420 = vpack.c.b16 %v1407, %v1406
        %v1421 = vpack.c.b16 %v1409, %v1408
        %v1422 = vpack.c.b16 %v1411, %v1410
        %v1423 = vpack.c.b16 %v1413, %v1412
        %v1424 = vpack.c.b16 %v1415, %v1414
        %v1425 = vpack.c.b16 %v1417, %v1416
        %1434 = vmatprep.subr.bf16.mxu0 0
        %1435 = vmatpush1.bf16.msra.mxu0 %v1418
        %1436 = vmatprep.subr.bf16.mxu0 0
        %1437 = vmatpush1.bf16.msra.mxu0 %v1419
        %1438 = vmatprep.subr.bf16.mxu0 0
        %1439 = vmatpush1.bf16.msra.mxu0 %v1420
        %1440 = vmatprep.subr.bf16.mxu0 0
        %1441 = vmatpush1.bf16.msra.mxu0 %v1421
        %1442 = vmatprep.subr.bf16.mxu0 0
        %1443 = vmatpush1.bf16.msra.mxu0 %v1422
        %1444 = vmatprep.subr.bf16.mxu0 0
        %1445 = vmatpush1.bf16.msra.mxu0 %v1423
        %1446 = vmatprep.subr.bf16.mxu0 0
        %1447 = vmatpush1.bf16.msra.mxu0 %v1424
        %1448 = vmatprep.subr.bf16.mxu0 0
        %1449 = vmatpush1.bf16.msra.mxu0 %v1425
        %1450 = vmatprep.subr.bf16.mxu0 0
        %1451 = vmatpush1.bf16.msra.mxu0 0
        %1452 = vmatprep.subr.bf16.mxu0 0
        %1453 = vmatpush1.bf16.msra.mxu0 0
        %1454 = vmatprep.subr.bf16.mxu0 0
        %1455 = vmatpush1.bf16.msra.mxu0 0
        %1456 = vmatprep.subr.bf16.mxu0 0
        %1457 = vmatpush1.bf16.msra.mxu0 0
        %1458 = vmatprep.subr.bf16.mxu0 0
        %1459 = vmatpush1.bf16.msra.mxu0 0
        %1460 = vmatprep.subr.bf16.mxu0 0
        %1461 = vmatpush1.bf16.msra.mxu0 0
        %1462 = vmatprep.subr.bf16.mxu0 0
        %1463 = vmatpush1.bf16.msra.mxu0 0
        %1464 = vmatprep.subr.bf16.mxu0 0
        %1465 = vmatpush1.bf16.msra.mxu0 0
        %1466 = vmatprep.mubr.bf16.mxu0 0
        %1467 = vmatmul.mubr.bf16.gmra.mrb[0].mxu0 %v1381
        %v1468 = vpop.f32.mrb[0].mxu0
        %v1469 = vadd.f32 0.0, %v1468
        %v1470 = vpop.f32.mrb[0].mxu0
        %v1471 = vpop.f32.mrb[0].mxu0
        %v1472 = vadd.f32 0.0, %v1471
        %v1473 = vpop.f32.mrb[0].mxu0
        %1474 = vmatprep.mubr.bf16.mxu0 0
        %1475 = vmatmul.mubr.bf16.gmra.mrb[0].mxu0 %v1382
        %v1476 = vpop.f32.mrb[0].mxu0
        %v1477 = vadd.f32 0.0, %v1476
        %v1478 = vpop.f32.mrb[0].mxu0
        %v1479 = vpop.f32.mrb[0].mxu0
        %v1480 = vadd.f32 0.0, %v1479
        %v1481 = vpop.f32.mrb[0].mxu0
        %1482 = vmatprep.mubr.bf16.mxu0 0
        %1483 = vmatmul.mubr.bf16.gmra.mrb[0].mxu0 %v1383
        %v1484 = vpop.f32.mrb[0].mxu0
        %v1485 = vpop.f32.mrb[0].mxu0
        %v1486 = vpop.f32.mrb[0].mxu0
        %v1487 = vadd.f32 0.0, %v1486
        %v1488 = vpop.f32.mrb[0].mxu0
        %1489 = vmatprep.mubr.bf16.mxu0 0
        %1490 = vmatmul.mubr.bf16.gmra.mrb[0].mxu0 %v1384
        %v1491 = vpop.f32.mrb[0].mxu0
        %v1492 = vadd.f32 0.0, %v1491
        %v1493 = vpop.f32.mrb[0].mxu0
        %v1494 = vpop.f32.mrb[0].mxu0
        %v1495 = vadd.f32 0.0, %v1494
        %v1496 = vpop.f32.mrb[0].mxu0
        %1497 = vmatprep.mubr.bf16.mxu0 0
        %1498 = vmatmul.mubr.bf16.gmra.mrb[0].mxu0 %v1385
        %v1499 = vpop.f32.mrb[0].mxu0
        %v1500 = vadd.f32 0.0, %v1499
        %v1501 = vpop.f32.mrb[0].mxu0
        %v1502 = vpop.f32.mrb[0].mxu0
        %v1503 = vpop.f32.mrb[0].mxu0
        %1504 = vdwg.mxu0
        %v1505 = vadd.f32 %v1310, %v1469
        %v1506 = vadd.f32 %v1313, %v1472
        %v1507 = vadd.f32 %v1318, %v1477
        %v1508 = vadd.f32 %v1321, %v1480
        %v1509 = vadd.f32 %v1328, %v1487
        %v1510 = vadd.f32 %v1333, %v1492
        %v1511 = vadd.f32 %v1336, %v1495
        %v1512 = vadd.f32 %v1341, %v1500
        %v1513 = vld [vmem:[#allocation2 + $0x9] sm:$0xff]
        %v1514 = vld [vmem:[#allocation2 + $0x11] sm:$0xff]
        %v1515 = vld [vmem:[#allocation2 + $0x19] sm:$0xff]
        %v1516 = vld [vmem:[#allocation2 + $0x21] sm:$0xff]
        %v1517 = vld [vmem:[#allocation2 + $0x29] sm:$0xff]
        %v1518 = vld [vmem:[#allocation2 + $0x31] sm:$0xff]
        %v1519 = vld [vmem:[#allocation2 + $0x39] sm:$0xff]
        %v1520 = vld [vmem:[#allocation2 + $0x41] sm:$0xff]
        %v1521 = vld [vmem:[#allocation2 + $0x49] sm:$0xff]
        %v1522 = vmax.f32 %v1513, 0.0
        %v1523 = vmax.f32 %v1514, 0.0
        %v1524 = vmax.f32 %v1515, 0.0
        %v1525 = vmax.f32 %v1516, 0.0
        %v1526 = vmax.f32 %v1517, 0.0
        %v1527 = vmax.f32 %v1518, 0.0
        %v1528 = vmax.f32 %v1519, 0.0
        %v1529 = vmax.f32 %v1520, 0.0
        %v1530 = vmax.f32 %v1521, 0.0
        %s1531 = scalar_lea.vmem [#allocation4], 512
        %v1532 = vld [vmem:[%s1531] sm:$0xf]
        %v1533 = vld [vmem:[%s1531 + $0x4] sm:$0xf]
        %v1534 = vld [vmem:[%s1531 + $0x8] sm:$0xf]
        %v1535 = vld [vmem:[%s1531 + $0xc] sm:$0xf]
        %v1536 = vld [vmem:[%s1531 + $0x10] sm:$0xf]
        %v1537 = vld [vmem:[%s1531 + $0x14] sm:$0xf]
        %v1538 = vld [vmem:[%s1531 + $0x18] sm:$0xf]
        %v1539 = vld [vmem:[%s1531 + $0x1c] sm:$0xf]
        %v1540 = vld [vmem:[%s1531 + $0x20] sm:$0xf]
        %v1541 = vld [vmem:[%s1531 + $0x24] sm:$0xf]
        %v1542 = vld [vmem:[%s1531 + $0x28] sm:$0xf]
        %v1543 = vld [vmem:[%s1531 + $0x2c] sm:$0xf]
        %v1544 = vld [vmem:[%s1531 + $0x30] sm:$0xf]
        %v1545 = vld [vmem:[%s1531 + $0x34] sm:$0xf]
        %v1546 = vld [vmem:[%s1531 + $0x38] sm:$0xf]
        %v1547 = vld [vmem:[%s1531 + $0x3c] sm:$0xf]
        %v1548 = vpack.c.bf16 %v1523, %v1522
        %v1549 = vpack.c.bf16 %v1525, %v1524
        %v1550 = vpack.c.bf16 %v1527, %v1526
        %v1551 = vpack.c.bf16 %v1529, %v1528
        %v1552 = vpack.c.bf16 %v1530, %v1530
        %v1569 = vunpack.c.l.b16 %v1532
        %v1570 = vunpack.c.l.b16 %v1533
        %v1571 = vunpack.c.l.b16 %v1534
        %v1572 = vunpack.c.l.b16 %v1535
        %v1573 = vunpack.c.l.b16 %v1536
        %v1574 = vunpack.c.l.b16 %v1537
        %v1575 = vunpack.c.l.b16 %v1538
        %v1576 = vunpack.c.l.b16 %v1539
        %v1577 = vunpack.c.l.b16 %v1540
        %v1578 = vunpack.c.l.b16 %v1541
        %v1579 = vunpack.c.l.b16 %v1542
        %v1580 = vunpack.c.l.b16 %v1543
        %v1581 = vunpack.c.l.b16 %v1544
        %v1582 = vunpack.c.l.b16 %v1545
        %v1583 = vunpack.c.l.b16 %v1546
        %v1584 = vunpack.c.l.b16 %v1547
        %v1585 = vpack.c.b16 %v1570, %v1569
        %v1586 = vpack.c.b16 %v1572, %v1571
        %v1587 = vpack.c.b16 %v1574, %v1573
        %v1588 = vpack.c.b16 %v1576, %v1575
        %v1589 = vpack.c.b16 %v1578, %v1577
        %v1590 = vpack.c.b16 %v1580, %v1579
        %v1591 = vpack.c.b16 %v1582, %v1581
        %v1592 = vpack.c.b16 %v1584, %v1583
        %1601 = vmatprep.subr.bf16.mxu0 0
        %1602 = vmatpush1.bf16.msra.mxu0 %v1585
        %1603 = vmatprep.subr.bf16.mxu0 0
        %1604 = vmatpush1.bf16.msra.mxu0 %v1586
        %1605 = vmatprep.subr.bf16.mxu0 0
        %1606 = vmatpush1.bf16.msra.mxu0 %v1587
        %1607 = vmatprep.subr.bf16.mxu0 0
        %1608 = vmatpush1.bf16.msra.mxu0 %v1588
        %1609 = vmatprep.subr.bf16.mxu0 0
        %1610 = vmatpush1.bf16.msra.mxu0 %v1589
        %1611 = vmatprep.subr.bf16.mxu0 0
        %1612 = vmatpush1.bf16.msra.mxu0 %v1590
        %1613 = vmatprep.subr.bf16.mxu0 0
        %1614 = vmatpush1.bf16.msra.mxu0 %v1591
        %1615 = vmatprep.subr.bf16.mxu0 0
        %1616 = vmatpush1.bf16.msra.mxu0 %v1592
        %1617 = vmatprep.subr.bf16.mxu0 0
        %1618 = vmatpush1.bf16.msra.mxu0 0
        %1619 = vmatprep.subr.bf16.mxu0 0
        %1620 = vmatpush1.bf16.msra.mxu0 0
        %1621 = vmatprep.subr.bf16.mxu0 0
        %1622 = vmatpush1.bf16.msra.mxu0 0
        %1623 = vmatprep.subr.bf16.mxu0 0
        %1624 = vmatpush1.bf16.msra.mxu0 0
        %1625 = vmatprep.subr.bf16.mxu0 0
        %1626 = vmatpush1.bf16.msra.mxu0 0
        %1627 = vmatprep.subr.bf16.mxu0 0
        %1628 = vmatpush1.bf16.msra.mxu0 0
        %1629 = vmatprep.subr.bf16.mxu0 0
        %1630 = vmatpush1.bf16.msra.mxu0 0
        %1631 = vmatprep.subr.bf16.mxu0 0
        %1632 = vmatpush1.bf16.msra.mxu0 0
        %1633 = vmatprep.mubr.bf16.mxu0 0
        %1634 = vmatmul.mubr.bf16.gmra.mrb[0].mxu0 %v1548
        %v1635 = vpop.f32.mrb[0].mxu0
        %v1636 = vadd.f32 0.0, %v1635
        %v1637 = vpop.f32.mrb[0].mxu0
        %v1638 = vpop.f32.mrb[0].mxu0
        %v1639 = vadd.f32 0.0, %v1638
        %v1640 = vpop.f32.mrb[0].mxu0
        %1641 = vmatprep.mubr.bf16.mxu0 0
        %1642 = vmatmul.mubr.bf16.gmra.mrb[0].mxu0 %v1549
        %v1643 = vpop.f32.mrb[0].mxu0
        %v1644 = vadd.f32 0.0, %v1643
        %v1645 = vpop.f32.mrb[0].mxu0
        %v1646 = vpop.f32.mrb[0].mxu0
        %v1647 = vadd.f32 0.0, %v1646
        %v1648 = vpop.f32.mrb[0].mxu0
        %1649 = vmatprep.mubr.bf16.mxu0 0
        %1650 = vmatmul.mubr.bf16.gmra.mrb[0].mxu0 %v1550
        %v1651 = vpop.f32.mrb[0].mxu0
        %v1652 = vpop.f32.mrb[0].mxu0
        %v1653 = vpop.f32.mrb[0].mxu0
        %v1654 = vadd.f32 0.0, %v1653
        %v1655 = vpop.f32.mrb[0].mxu0
        %1656 = vmatprep.mubr.bf16.mxu0 0
        %1657 = vmatmul.mubr.bf16.gmra.mrb[0].mxu0 %v1551
        %v1658 = vpop.f32.mrb[0].mxu0
        %v1659 = vadd.f32 0.0, %v1658
        %v1660 = vpop.f32.mrb[0].mxu0
        %v1661 = vpop.f32.mrb[0].mxu0
        %v1662 = vadd.f32 0.0, %v1661
        %v1663 = vpop.f32.mrb[0].mxu0
        %1664 = vmatprep.mubr.bf16.mxu0 0
        %1665 = vmatmul.mubr.bf16.gmra.mrb[0].mxu0 %v1552
        %v1666 = vpop.f32.mrb[0].mxu0
        %v1667 = vadd.f32 0.0, %v1666
        %v1668 = vpop.f32.mrb[0].mxu0
        %v1669 = vpop.f32.mrb[0].mxu0
        %v1670 = vpop.f32.mrb[0].mxu0
        %1671 = vdwg.mxu0
        %v1672 = vadd.f32 %v1505, %v1636
        %v1673 = vadd.f32 %v1506, %v1639
        %v1674 = vadd.f32 %v1507, %v1644
        %v1675 = vadd.f32 %v1508, %v1647
        %v1676 = vadd.f32 %v1509, %v1654
        %v1677 = vadd.f32 %v1510, %v1659
        %v1678 = vadd.f32 %v1511, %v1662
        %v1679 = vadd.f32 %v1512, %v1667
        %v1680 = vld [vmem:[#allocation2 + $0xa] sm:$0xff]
        %v1681 = vld [vmem:[#allocation2 + $0x12] sm:$0xff]
        %v1682 = vld [vmem:[#allocation2 + $0x1a] sm:$0xff]
        %v1683 = vld [vmem:[#allocation2 + $0x22] sm:$0xff]
        %v1684 = vld [vmem:[#allocation2 + $0x2a] sm:$0xff]
        %v1685 = vld [vmem:[#allocation2 + $0x32] sm:$0xff]
        %v1686 = vld [vmem:[#allocation2 + $0x3a] sm:$0xff]
        %v1687 = vld [vmem:[#allocation2 + $0x42] sm:$0xff]
        %v1688 = vld [vmem:[#allocation2 + $0x4a] sm:$0xff]
        %v1689 = vmax.f32 %v1680, 0.0
        %v1690 = vmax.f32 %v1681, 0.0
        %v1691 = vmax.f32 %v1682, 0.0
        %v1692 = vmax.f32 %v1683, 0.0
        %v1693 = vmax.f32 %v1684, 0.0
        %v1694 = vmax.f32 %v1685, 0.0
        %v1695 = vmax.f32 %v1686, 0.0
        %v1696 = vmax.f32 %v1687, 0.0
        %v1697 = vmax.f32 %v1688, 0.0
        %s1698 = scalar_lea.vmem [#allocation4], 576
        %v1699 = vld [vmem:[%s1698] sm:$0xf]
        %v1700 = vld [vmem:[%s1698 + $0x4] sm:$0xf]
        %v1701 = vld [vmem:[%s1698 + $0x8] sm:$0xf]
        %v1702 = vld [vmem:[%s1698 + $0xc] sm:$0xf]
        %v1703 = vld [vmem:[%s1698 + $0x10] sm:$0xf]
        %v1704 = vld [vmem:[%s1698 + $0x14] sm:$0xf]
        %v1705 = vld [vmem:[%s1698 + $0x18] sm:$0xf]
        %v1706 = vld [vmem:[%s1698 + $0x1c] sm:$0xf]
        %v1707 = vld [vmem:[%s1698 + $0x20] sm:$0xf]
        %v1708 = vld [vmem:[%s1698 + $0x24] sm:$0xf]
        %v1709 = vld [vmem:[%s1698 + $0x28] sm:$0xf]
        %v1710 = vld [vmem:[%s1698 + $0x2c] sm:$0xf]
        %v1711 = vld [vmem:[%s1698 + $0x30] sm:$0xf]
        %v1712 = vld [vmem:[%s1698 + $0x34] sm:$0xf]
        %v1713 = vld [vmem:[%s1698 + $0x38] sm:$0xf]
        %v1714 = vld [vmem:[%s1698 + $0x3c] sm:$0xf]
        %v1715 = vpack.c.bf16 %v1690, %v1689
        %v1716 = vpack.c.bf16 %v1692, %v1691
        %v1717 = vpack.c.bf16 %v1694, %v1693
        %v1718 = vpack.c.bf16 %v1696, %v1695
        %v1719 = vpack.c.bf16 %v1697, %v1697
        %v1736 = vunpack.c.l.b16 %v1699
        %v1737 = vunpack.c.l.b16 %v1700
        %v1738 = vunpack.c.l.b16 %v1701
        %v1739 = vunpack.c.l.b16 %v1702
        %v1740 = vunpack.c.l.b16 %v1703
        %v1741 = vunpack.c.l.b16 %v1704
        %v1742 = vunpack.c.l.b16 %v1705
        %v1743 = vunpack.c.l.b16 %v1706
        %v1744 = vunpack.c.l.b16 %v1707
        %v1745 = vunpack.c.l.b16 %v1708
        %v1746 = vunpack.c.l.b16 %v1709
        %v1747 = vunpack.c.l.b16 %v1710
        %v1748 = vunpack.c.l.b16 %v1711
        %v1749 = vunpack.c.l.b16 %v1712
        %v1750 = vunpack.c.l.b16 %v1713
        %v1751 = vunpack.c.l.b16 %v1714
        %v1752 = vpack.c.b16 %v1737, %v1736
        %v1753 = vpack.c.b16 %v1739, %v1738
        %v1754 = vpack.c.b16 %v1741, %v1740
        %v1755 = vpack.c.b16 %v1743, %v1742
        %v1756 = vpack.c.b16 %v1745, %v1744
        %v1757 = vpack.c.b16 %v1747, %v1746
        %v1758 = vpack.c.b16 %v1749, %v1748
        %v1759 = vpack.c.b16 %v1751, %v1750
        %1768 = vmatprep.subr.bf16.mxu0 0
        %1769 = vmatpush1.bf16.msra.mxu0 %v1752
        %1770 = vmatprep.subr.bf16.mxu0 0
        %1771 = vmatpush1.bf16.msra.mxu0 %v1753
        %1772 = vmatprep.subr.bf16.mxu0 0
        %1773 = vmatpush1.bf16.msra.mxu0 %v1754
        %1774 = vmatprep.subr.bf16.mxu0 0
        %1775 = vmatpush1.bf16.msra.mxu0 %v1755
        %1776 = vmatprep.subr.bf16.mxu0 0
        %1777 = vmatpush1.bf16.msra.mxu0 %v1756
        %1778 = vmatprep.subr.bf16.mxu0 0
        %1779 = vmatpush1.bf16.msra.mxu0 %v1757
        %1780 = vmatprep.subr.bf16.mxu0 0
        %1781 = vmatpush1.bf16.msra.mxu0 %v1758
        %1782 = vmatprep.subr.bf16.mxu0 0
        %1783 = vmatpush1.bf16.msra.mxu0 %v1759
        %1784 = vmatprep.subr.bf16.mxu0 0
        %1785 = vmatpush1.bf16.msra.mxu0 0
        %1786 = vmatprep.subr.bf16.mxu0 0
        %1787 = vmatpush1.bf16.msra.mxu0 0
        %1788 = vmatprep.subr.bf16.mxu0 0
        %1789 = vmatpush1.bf16.msra.mxu0 0
        %1790 = vmatprep.subr.bf16.mxu0 0
        %1791 = vmatpush1.bf16.msra.mxu0 0
        %1792 = vmatprep.subr.bf16.mxu0 0
        %1793 = vmatpush1.bf16.msra.mxu0 0
        %1794 = vmatprep.subr.bf16.mxu0 0
        %1795 = vmatpush1.bf16.msra.mxu0 0
        %1796 = vmatprep.subr.bf16.mxu0 0
        %1797 = vmatpush1.bf16.msra.mxu0 0
        %1798 = vmatprep.subr.bf16.mxu0 0
        %1799 = vmatpush1.bf16.msra.mxu0 0
        %1800 = vmatprep.mubr.bf16.mxu0 0
        %1801 = vmatmul.mubr.bf16.gmra.mrb[0].mxu0 %v1715
        %v1802 = vpop.f32.mrb[0].mxu0
        %v1803 = vadd.f32 0.0, %v1802
        %v1804 = vpop.f32.mrb[0].mxu0
        %v1805 = vpop.f32.mrb[0].mxu0
        %v1806 = vadd.f32 0.0, %v1805
        %v1807 = vpop.f32.mrb[0].mxu0
        %1808 = vmatprep.mubr.bf16.mxu0 0
        %1809 = vmatmul.mubr.bf16.gmra.mrb[0].mxu0 %v1716
        %v1810 = vpop.f32.mrb[0].mxu0
        %v1811 = vadd.f32 0.0, %v1810
        %v1812 = vpop.f32.mrb[0].mxu0
        %v1813 = vpop.f32.mrb[0].mxu0
        %v1814 = vadd.f32 0.0, %v1813
        %v1815 = vpop.f32.mrb[0].mxu0
        %1816 = vmatprep.mubr.bf16.mxu0 0
        %1817 = vmatmul.mubr.bf16.gmra.mrb[0].mxu0 %v1717
        %v1818 = vpop.f32.mrb[0].mxu0
        %v1819 = vpop.f32.mrb[0].mxu0
        %v1820 = vpop.f32.mrb[0].mxu0
        %v1821 = vadd.f32 0.0, %v1820
        %v1822 = vpop.f32.mrb[0].mxu0
        %1823 = vmatprep.mubr.bf16.mxu0 0
        %1824 = vmatmul.mubr.bf16.gmra.mrb[0].mxu0 %v1718
        %v1825 = vpop.f32.mrb[0].mxu0
        %v1826 = vadd.f32 0.0, %v1825
        %v1827 = vpop.f32.mrb[0].mxu0
        %v1828 = vpop.f32.mrb[0].mxu0
        %v1829 = vadd.f32 0.0, %v1828
        %v1830 = vpop.f32.mrb[0].mxu0
        %1831 = vmatprep.mubr.bf16.mxu0 0
        %1832 = vmatmul.mubr.bf16.gmra.mrb[0].mxu0 %v1719
        %v1833 = vpop.f32.mrb[0].mxu0
        %v1834 = vadd.f32 0.0, %v1833
        %v1835 = vpop.f32.mrb[0].mxu0
        %v1836 = vpop.f32.mrb[0].mxu0
        %v1837 = vpop.f32.mrb[0].mxu0
        %1838 = vdwg.mxu0
        %v1839 = vadd.f32 %v1672, %v1803
        %v1840 = vadd.f32 %v1673, %v1806
        %v1841 = vadd.f32 %v1674, %v1811
        %v1842 = vadd.f32 %v1675, %v1814
        %v1843 = vadd.f32 %v1676, %v1821
        %v1844 = vadd.f32 %v1677, %v1826
        %v1845 = vadd.f32 %v1678, %v1829
        %v1846 = vadd.f32 %v1679, %v1834
        %s1847 = scalar_lea.vmem [#allocation6], 8
        %v1848 = vld [vmem:[%s1847] sm:$0xff]
        %v1849 = vlaneseq
        %v1850 = vshrl.u32 %v1849, 7
        %v1851 = vsub.s32 0, %v1850
        %v1852 = vrot.slane %v1848, %v1851
        %v1853 = vadd.f32 %v1839, %v1852
        %v1854 = vadd.f32 %v1840, %v1852
        %v1855 = vadd.f32 %v1841, %v1852
        %v1856 = vadd.f32 %v1842, %v1852
        %v1857 = vadd.f32 %v1843, %v1852
        %v1858 = vadd.f32 %v1844, %v1852
        %v1859 = vadd.f32 %v1845, %v1852
        %v1860 = vadd.f32 %v1846, %v1852
        %v1861 = vsel %vm232, %v1853, 0.0
        %v1862 = vsel %vm232, %v1854, 0.0
        %v1863 = vsel %vm232, %v1855, 0.0
        %v1864 = vsel %vm232, %v1856, 0.0
        %v1865 = vsel %vm232, %v1857, 0.0
        %v1866 = vsel %vm232, %v1858, 0.0
        %v1867 = vsel %vm232, %v1859, 0.0
        %v1868 = vsel %vm232, %v1860, 0.0
        %1869 = vadd.xlane.f32.xlu0 %v1861
        %v1870 = vpop.xlane.xlu0 %1869
        %1871 = vadd.xlane.f32.xlu0 %v1862
        %v1872 = vpop.xlane.xlu0 %1871
        %1873 = vadd.xlane.f32.xlu0 %v1863
        %v1874 = vpop.xlane.xlu0 %1873
        %1875 = vadd.xlane.f32.xlu0 %v1864
        %v1876 = vpop.xlane.xlu0 %1875
        %1877 = vadd.xlane.f32.xlu0 %v1865
        %v1878 = vpop.xlane.xlu0 %1877
        %1879 = vadd.xlane.f32.xlu0 %v1866
        %v1880 = vpop.xlane.xlu0 %1879
        %1881 = vadd.xlane.f32.xlu0 %v1867
        %v1882 = vpop.xlane.xlu0 %1881
        %1883 = vadd.xlane.f32.xlu0 %v1868
        %v1884 = vpop.xlane.xlu0 %1883
        %v1885 = vmul.f32 %v1870, 0.03125
        %v1886 = vmul.f32 %v1872, 0.03125
        %v1887 = vmul.f32 %v1874, 0.03125
        %v1888 = vmul.f32 %v1876, 0.03125
        %v1889 = vmul.f32 %v1878, 0.03125
        %v1890 = vmul.f32 %v1880, 0.03125
        %v1891 = vmul.f32 %v1882, 0.03125
        %v1892 = vmul.f32 %v1884, 0.03125
        %v1893 = vsub.f32 %v1853, %v1885
        %v1894 = vsub.f32 %v1854, %v1886
        %v1895 = vsub.f32 %v1855, %v1887
        %v1896 = vsub.f32 %v1856, %v1888
        %v1897 = vsub.f32 %v1857, %v1889
        %v1898 = vsub.f32 %v1858, %v1890
        %v1899 = vsub.f32 %v1859, %v1891
        %v1900 = vsub.f32 %v1860, %v1892
        %v1901 = vsel %vm232, %v1893, 0.0
        %v1902 = vsel %vm232, %v1894, 0.0
        %v1903 = vsel %vm232, %v1895, 0.0
        %v1904 = vsel %vm232, %v1896, 0.0
        %v1905 = vsel %vm232, %v1897, 0.0
        %v1906 = vsel %vm232, %v1898, 0.0
        %v1907 = vsel %vm232, %v1899, 0.0
        %v1908 = vsel %vm232, %v1900, 0.0
        %v1909 = vmul.f32 %v1901, %v1901
        %v1910 = vmul.f32 %v1902, %v1902
        %v1911 = vmul.f32 %v1903, %v1903
        %v1912 = vmul.f32 %v1904, %v1904
        %v1913 = vmul.f32 %v1905, %v1905
        %v1914 = vmul.f32 %v1906, %v1906
        %v1915 = vmul.f32 %v1907, %v1907
        %v1916 = vmul.f32 %v1908, %v1908
        %1917 = vadd.xlane.f32.xlu0 %v1909
        %v1918 = vpop.xlane.xlu0 %1917
        %1919 = vadd.xlane.f32.xlu0 %v1910
        %v1920 = vpop.xlane.xlu0 %1919
        %1921 = vadd.xlane.f32.xlu0 %v1911
        %v1922 = vpop.xlane.xlu0 %1921
        %1923 = vadd.xlane.f32.xlu0 %v1912
        %v1924 = vpop.xlane.xlu0 %1923
        %1925 = vadd.xlane.f32.xlu0 %v1913
        %v1926 = vpop.xlane.xlu0 %1925
        %1927 = vadd.xlane.f32.xlu0 %v1914
        %v1928 = vpop.xlane.xlu0 %1927
        %1929 = vadd.xlane.f32.xlu0 %v1915
        %v1930 = vpop.xlane.xlu0 %1929
        %1931 = vadd.xlane.f32.xlu0 %v1916
        %v1932 = vpop.xlane.xlu0 %1931
        %v1933 = vmul.f32 %v1918, 0.03125
        %v1934 = vmul.f32 %v1920, 0.03125
        %v1935 = vmul.f32 %v1922, 0.03125
        %v1936 = vmul.f32 %v1924, 0.03125
        %v1937 = vmul.f32 %v1926, 0.03125
        %v1938 = vmul.f32 %v1928, 0.03125
        %v1939 = vmul.f32 %v1930, 0.03125
        %v1940 = vmul.f32 %v1932, 0.03125
        %v1941 = vadd.f32 %v1933, 1e-05
        %v1942 = vadd.f32 %v1934, 1e-05
        %v1943 = vadd.f32 %v1935, 1e-05
        %v1944 = vadd.f32 %v1936, 1e-05
        %v1945 = vadd.f32 %v1937, 1e-05
        %v1946 = vadd.f32 %v1938, 1e-05
        %v1947 = vadd.f32 %v1939, 1e-05
        %v1948 = vadd.f32 %v1940, 1e-05
        %v1949 = vrsqrt.pop %v1941
        %v1950 = vrsqrt.pop %v1942
        %v1951 = vrsqrt.pop %v1943
        %v1952 = vrsqrt.pop %v1944
        %v1953 = vrsqrt.pop %v1945
        %v1954 = vrsqrt.pop %v1946
        %v1955 = vrsqrt.pop %v1947
        %v1956 = vrsqrt.pop %v1948
        %v1957 = vmul.f32 %v1893, %v1949
        %v1958 = vmul.f32 %v1894, %v1950
        %v1959 = vmul.f32 %v1895, %v1951
        %v1960 = vmul.f32 %v1896, %v1952
        %v1961 = vmul.f32 %v1897, %v1953
        %v1962 = vmul.f32 %v1898, %v1954
        %v1963 = vmul.f32 %v1899, %v1955
        %v1964 = vmul.f32 %v1900, %v1956
        %v1965 = vlaneseq
        %v1966 = vshrl.u32 %v1965, 7
        %v1967 = vsub.s32 1, %v1966
        %v1968 = vrot.slane %v1848, %v1967
        %v1969 = vmul.f32 %v1957, %v1968
        %v1970 = vmul.f32 %v1958, %v1968
        %v1971 = vmul.f32 %v1959, %v1968
        %v1972 = vmul.f32 %v1960, %v1968
        %v1973 = vmul.f32 %v1961, %v1968
        %v1974 = vmul.f32 %v1962, %v1968
        %v1975 = vmul.f32 %v1963, %v1968
        %v1976 = vmul.f32 %v1964, %v1968
        %v1977 = vlaneseq
        %v1978 = vshrl.u32 %v1977, 7
        %v1979 = vsub.s32 2, %v1978
        %v1980 = vrot.slane %v1848, %v1979
        %v1981 = vadd.f32 %v1969, %v1980
        %v1982 = vadd.f32 %v1970, %v1980
        %v1983 = vadd.f32 %v1971, %v1980
        %v1984 = vadd.f32 %v1972, %v1980
        %v1985 = vadd.f32 %v1973, %v1980
        %v1986 = vadd.f32 %v1974, %v1980
        %v1987 = vadd.f32 %v1975, %v1980
        %v1988 = vadd.f32 %v1976, %v1980
        %1989 = vst [vmem:[#allocation2 + $0x8] sm:$0xff] %v1981
        %1990 = vst [vmem:[#allocation2 + $0x10] sm:$0xff] %v1982
        %1991 = vst [vmem:[#allocation2 + $0x18] sm:$0xff] %v1983
        %1992 = vst [vmem:[#allocation2 + $0x20] sm:$0xff] %v1984
        %1993 = vst [vmem:[#allocation2 + $0x30] sm:$0xff] %v1985
        %1994 = vst [vmem:[#allocation2 + $0x38] sm:$0xff] %v1986
        %1995 = vst [vmem:[#allocation2 + $0x40] sm:$0xff] %v1987
        %1996 = vst [vmem:[#allocation2 + $0x48] sm:$0xff] %v1988
        %v1997 = vld [vmem:[#allocation2 + $0x6] sm:$0xff]
        %v1998 = vld [vmem:[#allocation2 + $0xe] sm:$0xff]
        %v1999 = vld [vmem:[#allocation2 + $0x16] sm:$0xff]
        %v2000 = vld [vmem:[#allocation2 + $0x1e] sm:$0xff]
        %v2001 = vld [vmem:[#allocation2 + $0x26] sm:$0xff]
        %v2002 = vld [vmem:[#allocation2 + $0x2e] sm:$0xff]
        %v2003 = vld [vmem:[#allocation2 + $0x36] sm:$0xff]
        %v2004 = vld [vmem:[#allocation2 + $0x3e] sm:$0xff]
        %v2005 = vld [vmem:[#allocation2 + $0x46] sm:$0xff]
        %v2006 = vmax.f32 %v1997, 0.0
        %v2007 = vmax.f32 %v1998, 0.0
        %v2008 = vmax.f32 %v1999, 0.0
        %v2009 = vmax.f32 %v2000, 0.0
        %v2010 = vmax.f32 %v2001, 0.0
        %v2011 = vmax.f32 %v2002, 0.0
        %v2012 = vmax.f32 %v2003, 0.0
        %v2013 = vmax.f32 %v2004, 0.0
        %v2014 = vmax.f32 %v2005, 0.0
        %s2015 = scalar_lea.vmem [#allocation4], 640
        %v2016 = vld [vmem:[%s2015] sm:$0xf]
        %v2017 = vld [vmem:[%s2015 + $0x4] sm:$0xf]
        %v2018 = vld [vmem:[%s2015 + $0x8] sm:$0xf]
        %v2019 = vld [vmem:[%s2015 + $0xc] sm:$0xf]
        %v2020 = vld [vmem:[%s2015 + $0x10] sm:$0xf]
        %v2021 = vld [vmem:[%s2015 + $0x14] sm:$0xf]
        %v2022 = vld [vmem:[%s2015 + $0x18] sm:$0xf]
        %v2023 = vld [vmem:[%s2015 + $0x1c] sm:$0xf]
        %v2024 = vld [vmem:[%s2015 + $0x20] sm:$0xf]
        %v2025 = vld [vmem:[%s2015 + $0x24] sm:$0xf]
        %v2026 = vld [vmem:[%s2015 + $0x28] sm:$0xf]
        %v2027 = vld [vmem:[%s2015 + $0x2c] sm:$0xf]
        %v2028 = vld [vmem:[%s2015 + $0x30] sm:$0xf]
        %v2029 = vld [vmem:[%s2015 + $0x34] sm:$0xf]
        %v2030 = vld [vmem:[%s2015 + $0x38] sm:$0xf]
        %v2031 = vld [vmem:[%s2015 + $0x3c] sm:$0xf]
        %v2032 = vpack.c.bf16 %v2007, %v2006
        %v2033 = vpack.c.bf16 %v2009, %v2008
        %v2034 = vpack.c.bf16 %v2011, %v2010
        %v2035 = vpack.c.bf16 %v2013, %v2012
        %v2036 = vpack.c.bf16 %v2014, %v2014
        %v2037 = vld [vmem:[#allocation2 + $0x7] sm:$0xff]
        %v2038 = vld [vmem:[#allocation2 + $0xf] sm:$0xff]
        %v2039 = vld [vmem:[#allocation2 + $0x17] sm:$0xff]
        %v2040 = vld [vmem:[#allocation2 + $0x1f] sm:$0xff]
        %v2041 = vld [vmem:[#allocation2 + $0x27] sm:$0xff]
        %v2042 = vld [vmem:[#allocation2 + $0x2f] sm:$0xff]
        %v2043 = vld [vmem:[#allocation2 + $0x37] sm:$0xff]
        %v2044 = vld [vmem:[#allocation2 + $0x3f] sm:$0xff]
        %v2045 = vld [vmem:[#allocation2 + $0x47] sm:$0xff]
        %v2046 = vmax.f32 %v2037, 0.0
        %v2047 = vmax.f32 %v2038, 0.0
        %v2048 = vmax.f32 %v2039, 0.0
        %v2049 = vmax.f32 %v2040, 0.0
        %v2050 = vmax.f32 %v2041, 0.0
        %v2051 = vmax.f32 %v2042, 0.0
        %v2052 = vmax.f32 %v2043, 0.0
        %v2053 = vmax.f32 %v2044, 0.0
        %v2054 = vmax.f32 %v2045, 0.0
        %s2055 = scalar_lea.vmem [#allocation4], 704
        %v2056 = vld [vmem:[%s2055] sm:$0xf]
        %v2057 = vld [vmem:[%s2055 + $0x4] sm:$0xf]
        %v2058 = vld [vmem:[%s2055 + $0x8] sm:$0xf]
        %v2059 = vld [vmem:[%s2055 + $0xc] sm:$0xf]
        %v2060 = vld [vmem:[%s2055 + $0x10] sm:$0xf]
        %v2061 = vld [vmem:[%s2055 + $0x14] sm:$0xf]
        %v2062 = vld [vmem:[%s2055 + $0x18] sm:$0xf]
        %v2063 = vld [vmem:[%s2055 + $0x1c] sm:$0xf]
        %v2064 = vld [vmem:[%s2055 + $0x20] sm:$0xf]
        %v2065 = vld [vmem:[%s2055 + $0x24] sm:$0xf]
        %v2066 = vld [vmem:[%s2055 + $0x28] sm:$0xf]
        %v2067 = vld [vmem:[%s2055 + $0x2c] sm:$0xf]
        %v2068 = vld [vmem:[%s2055 + $0x30] sm:$0xf]
        %v2069 = vld [vmem:[%s2055 + $0x34] sm:$0xf]
        %v2070 = vld [vmem:[%s2055 + $0x38] sm:$0xf]
        %v2071 = vld [vmem:[%s2055 + $0x3c] sm:$0xf]
        %v2072 = vpack.c.bf16 %v2047, %v2046
        %v2073 = vpack.c.bf16 %v2049, %v2048
        %v2074 = vpack.c.bf16 %v2051, %v2050
        %v2075 = vpack.c.bf16 %v2053, %v2052
        %v2076 = vpack.c.bf16 %v2054, %v2054
        %v2093 = vunpack.c.l.b16 %v2056
        %v2094 = vunpack.c.l.b16 %v2057
        %v2095 = vunpack.c.l.b16 %v2058
        %v2096 = vunpack.c.l.b16 %v2059
        %v2097 = vunpack.c.l.b16 %v2060
        %v2098 = vunpack.c.l.b16 %v2061
        %v2099 = vunpack.c.l.b16 %v2062
        %v2100 = vunpack.c.l.b16 %v2063
        %v2101 = vunpack.c.l.b16 %v2064
        %v2102 = vunpack.c.l.b16 %v2065
        %v2103 = vunpack.c.l.b16 %v2066
        %v2104 = vunpack.c.l.b16 %v2067
        %v2105 = vunpack.c.l.b16 %v2068
        %v2106 = vunpack.c.l.b16 %v2069
        %v2107 = vunpack.c.l.b16 %v2070
        %v2108 = vunpack.c.l.b16 %v2071
        %v2109 = vpack.c.b16 %v2094, %v2093
        %v2110 = vpack.c.b16 %v2096, %v2095
        %v2111 = vpack.c.b16 %v2098, %v2097
        %v2112 = vpack.c.b16 %v2100, %v2099
        %v2113 = vpack.c.b16 %v2102, %v2101
        %v2114 = vpack.c.b16 %v2104, %v2103
        %v2115 = vpack.c.b16 %v2106, %v2105
        %v2116 = vpack.c.b16 %v2108, %v2107
        %2125 = vmatprep.subr.bf16.mxu0 0
        %2126 = vmatpush1.bf16.msra.mxu0 %v2109
        %2127 = vmatprep.subr.bf16.mxu0 0
        %2128 = vmatpush1.bf16.msra.mxu0 %v2110
        %2129 = vmatprep.subr.bf16.mxu0 0
        %2130 = vmatpush1.bf16.msra.mxu0 %v2111
        %2131 = vmatprep.subr.bf16.mxu0 0
        %2132 = vmatpush1.bf16.msra.mxu0 %v2112
        %2133 = vmatprep.subr.bf16.mxu0 0
        %2134 = vmatpush1.bf16.msra.mxu0 %v2113
        %2135 = vmatprep.subr.bf16.mxu0 0
        %2136 = vmatpush1.bf16.msra.mxu0 %v2114
        %2137 = vmatprep.subr.bf16.mxu0 0
        %2138 = vmatpush1.bf16.msra.mxu0 %v2115
        %2139 = vmatprep.subr.bf16.mxu0 0
        %2140 = vmatpush1.bf16.msra.mxu0 %v2116
        %2141 = vmatprep.subr.bf16.mxu0 0
        %2142 = vmatpush1.bf16.msra.mxu0 0
        %2143 = vmatprep.subr.bf16.mxu0 0
        %2144 = vmatpush1.bf16.msra.mxu0 0
        %2145 = vmatprep.subr.bf16.mxu0 0
        %2146 = vmatpush1.bf16.msra.mxu0 0
        %2147 = vmatprep.subr.bf16.mxu0 0
        %2148 = vmatpush1.bf16.msra.mxu0 0
        %2149 = vmatprep.subr.bf16.mxu0 0
        %2150 = vmatpush1.bf16.msra.mxu0 0
        %2151 = vmatprep.subr.bf16.mxu0 0
        %2152 = vmatpush1.bf16.msra.mxu0 0
        %2153 = vmatprep.subr.bf16.mxu0 0
        %2154 = vmatpush1.bf16.msra.mxu0 0
        %2155 = vmatprep.subr.bf16.mxu0 0
        %2156 = vmatpush1.bf16.msra.mxu0 0
        %2157 = vmatprep.mubr.bf16.mxu0 0
        %2158 = vmatmul.mubr.bf16.gmra.mrb[0].mxu0 %v2072
        %v2159 = vpop.f32.mrb[0].mxu0
        %v2160 = vadd.f32 0.0, %v2159
        %v2161 = vpop.f32.mrb[0].mxu0
        %v2162 = vpop.f32.mrb[0].mxu0
        %v2163 = vadd.f32 0.0, %v2162
        %v2164 = vpop.f32.mrb[0].mxu0
        %2165 = vmatprep.mubr.bf16.mxu0 0
        %2166 = vmatmul.mubr.bf16.gmra.mrb[0].mxu0 %v2073
        %v2167 = vpop.f32.mrb[0].mxu0
        %v2168 = vadd.f32 0.0, %v2167
        %v2169 = vpop.f32.mrb[0].mxu0
        %v2170 = vpop.f32.mrb[0].mxu0
        %v2171 = vadd.f32 0.0, %v2170
        %v2172 = vpop.f32.mrb[0].mxu0
        %2173 = vmatprep.mubr.bf16.mxu0 0
        %2174 = vmatmul.mubr.bf16.gmra.mrb[0].mxu0 %v2074
        %v2175 = vpop.f32.mrb[0].mxu0
        %v2176 = vpop.f32.mrb[0].mxu0
        %v2177 = vpop.f32.mrb[0].mxu0
        %v2178 = vadd.f32 0.0, %v2177
        %v2179 = vpop.f32.mrb[0].mxu0
        %2180 = vmatprep.mubr.bf16.mxu0 0
        %2181 = vmatmul.mubr.bf16.gmra.mrb[0].mxu0 %v2075
        %v2182 = vpop.f32.mrb[0].mxu0
        %v2183 = vadd.f32 0.0, %v2182
        %v2184 = vpop.f32.mrb[0].mxu0
        %v2185 = vpop.f32.mrb[0].mxu0
        %v2186 = vadd.f32 0.0, %v2185
        %v2187 = vpop.f32.mrb[0].mxu0
        %2188 = vmatprep.mubr.bf16.mxu0 0
        %2189 = vmatmul.mubr.bf16.gmra.mrb[0].mxu0 %v2076
        %v2190 = vpop.f32.mrb[0].mxu0
        %v2191 = vadd.f32 0.0, %v2190
        %v2192 = vpop.f32.mrb[0].mxu0
        %v2193 = vpop.f32.mrb[0].mxu0
        %v2194 = vpop.f32.mrb[0].mxu0
        %2195 = vdwg.mxu0
        %v2212 = vunpack.c.l.b16 %v2016
        %v2213 = vunpack.c.l.b16 %v2017
        %v2214 = vunpack.c.l.b16 %v2018
        %v2215 = vunpack.c.l.b16 %v2019
        %v2216 = vunpack.c.l.b16 %v2020
        %v2217 = vunpack.c.l.b16 %v2021
        %v2218 = vunpack.c.l.b16 %v2022
        %v2219 = vunpack.c.l.b16 %v2023
        %v2220 = vunpack.c.l.b16 %v2024
        %v2221 = vunpack.c.l.b16 %v2025
        %v2222 = vunpack.c.l.b16 %v2026
        %v2223 = vunpack.c.l.b16 %v2027
        %v2224 = vunpack.c.l.b16 %v2028
        %v2225 = vunpack.c.l.b16 %v2029
        %v2226 = vunpack.c.l.b16 %v2030
        %v2227 = vunpack.c.l.b16 %v2031
        %v2228 = vpack.c.b16 %v2213, %v2212
        %v2229 = vpack.c.b16 %v2215, %v2214
        %v2230 = vpack.c.b16 %v2217, %v2216
        %v2231 = vpack.c.b16 %v2219, %v2218
        %v2232 = vpack.c.b16 %v2221, %v2220
        %v2233 = vpack.c.b16 %v2223, %v2222
        %v2234 = vpack.c.b16 %v2225, %v2224
        %v2235 = vpack.c.b16 %v2227, %v2226
        %2244 = vmatprep.subr.bf16.mxu0 0
        %2245 = vmatpush1.bf16.msra.mxu0 %v2228
        %2246 = vmatprep.subr.bf16.mxu0 0
        %2247 = vmatpush1.bf16.msra.mxu0 %v2229
        %2248 = vmatprep.subr.bf16.mxu0 0
        %2249 = vmatpush1.bf16.msra.mxu0 %v2230
        %2250 = vmatprep.subr.bf16.mxu0 0
        %2251 = vmatpush1.bf16.msra.mxu0 %v2231
        %2252 = vmatprep.subr.bf16.mxu0 0
        %2253 = vmatpush1.bf16.msra.mxu0 %v2232
        %2254 = vmatprep.subr.bf16.mxu0 0
        %2255 = vmatpush1.bf16.msra.mxu0 %v2233
        %2256 = vmatprep.subr.bf16.mxu0 0
        %2257 = vmatpush1.bf16.msra.mxu0 %v2234
        %2258 = vmatprep.subr.bf16.mxu0 0
        %2259 = vmatpush1.bf16.msra.mxu0 %v2235
        %2260 = vmatprep.subr.bf16.mxu0 0
        %2261 = vmatpush1.bf16.msra.mxu0 0
        %2262 = vmatprep.subr.bf16.mxu0 0
        %2263 = vmatpush1.bf16.msra.mxu0 0
        %2264 = vmatprep.subr.bf16.mxu0 0
        %2265 = vmatpush1.bf16.msra.mxu0 0
        %2266 = vmatprep.subr.bf16.mxu0 0
        %2267 = vmatpush1.bf16.msra.mxu0 0
        %2268 = vmatprep.subr.bf16.mxu0 0
        %2269 = vmatpush1.bf16.msra.mxu0 0
        %2270 = vmatprep.subr.bf16.mxu0 0
        %2271 = vmatpush1.bf16.msra.mxu0 0
        %2272 = vmatprep.subr.bf16.mxu0 0
        %2273 = vmatpush1.bf16.msra.mxu0 0
        %2274 = vmatprep.subr.bf16.mxu0 0
        %2275 = vmatpush1.bf16.msra.mxu0 0
        %2276 = vmatprep.mubr.bf16.mxu0 0
        %2277 = vmatmul.mubr.bf16.gmra.mrb[0].mxu0 %v2032
        %v2278 = vpop.f32.mrb[0].mxu0
        %v2279 = vadd.f32 %v2160, %v2278
        %v2280 = vpop.f32.mrb[0].mxu0
        %v2281 = vpop.f32.mrb[0].mxu0
        %v2282 = vadd.f32 %v2163, %v2281
        %v2283 = vpop.f32.mrb[0].mxu0
        %2284 = vmatprep.mubr.bf16.mxu0 0
        %2285 = vmatmul.mubr.bf16.gmra.mrb[0].mxu0 %v2033
        %v2286 = vpop.f32.mrb[0].mxu0
        %v2287 = vadd.f32 %v2168, %v2286
        %v2288 = vpop.f32.mrb[0].mxu0
        %v2289 = vpop.f32.mrb[0].mxu0
        %v2290 = vadd.f32 %v2171, %v2289
        %v2291 = vpop.f32.mrb[0].mxu0
        %2292 = vmatprep.mubr.bf16.mxu0 0
        %2293 = vmatmul.mubr.bf16.gmra.mrb[0].mxu0 %v2034
        %v2294 = vpop.f32.mrb[0].mxu0
        %v2295 = vpop.f32.mrb[0].mxu0
        %v2296 = vpop.f32.mrb[0].mxu0
        %v2297 = vadd.f32 %v2178, %v2296
        %v2298 = vpop.f32.mrb[0].mxu0
        %2299 = vmatprep.mubr.bf16.mxu0 0
        %2300 = vmatmul.mubr.bf16.gmra.mrb[0].mxu0 %v2035
        %v2301 = vpop.f32.mrb[0].mxu0
        %v2302 = vadd.f32 %v2183, %v2301
        %v2303 = vpop.f32.mrb[0].mxu0
        %v2304 = vpop.f32.mrb[0].mxu0
        %v2305 = vadd.f32 %v2186, %v2304
        %v2306 = vpop.f32.mrb[0].mxu0
        %2307 = vmatprep.mubr.bf16.mxu0 0
        %2308 = vmatmul.mubr.bf16.gmra.mrb[0].mxu0 %v2036
        %v2309 = vpop.f32.mrb[0].mxu0
        %v2310 = vadd.f32 %v2191, %v2309
        %v2311 = vpop.f32.mrb[0].mxu0
        %v2312 = vpop.f32.mrb[0].mxu0
        %v2313 = vpop.f32.mrb[0].mxu0
        %2314 = vdwg.mxu0
        %v2315 = vld [vmem:[#allocation2 + $0x8] sm:$0xff]
        %v2316 = vld [vmem:[#allocation2 + $0x10] sm:$0xff]
        %v2317 = vld [vmem:[#allocation2 + $0x18] sm:$0xff]
        %v2318 = vld [vmem:[#allocation2 + $0x20] sm:$0xff]
        %v2319 = vld [vmem:[#allocation2 + $0x28] sm:$0xff]
        %v2320 = vld [vmem:[#allocation2 + $0x30] sm:$0xff]
        %v2321 = vld [vmem:[#allocation2 + $0x38] sm:$0xff]
        %v2322 = vld [vmem:[#allocation2 + $0x40] sm:$0xff]
        %v2323 = vld [vmem:[#allocation2 + $0x48] sm:$0xff]
        %v2324 = vmax.f32 %v2315, 0.0
        %v2325 = vmax.f32 %v2316, 0.0
        %v2326 = vmax.f32 %v2317, 0.0
        %v2327 = vmax.f32 %v2318, 0.0
        %v2328 = vmax.f32 %v2319, 0.0
        %v2329 = vmax.f32 %v2320, 0.0
        %v2330 = vmax.f32 %v2321, 0.0
        %v2331 = vmax.f32 %v2322, 0.0
        %v2332 = vmax.f32 %v2323, 0.0
        %s2333 = scalar_lea.vmem [#allocation4], 768
        %v2334 = vld [vmem:[%s2333] sm:$0xf]
        %v2335 = vld [vmem:[%s2333 + $0x4] sm:$0xf]
        %v2336 = vld [vmem:[%s2333 + $0x8] sm:$0xf]
        %v2337 = vld [vmem:[%s2333 + $0xc] sm:$0xf]
        %v2338 = vld [vmem:[%s2333 + $0x10] sm:$0xf]
        %v2339 = vld [vmem:[%s2333 + $0x14] sm:$0xf]
        %v2340 = vld [vmem:[%s2333 + $0x18] sm:$0xf]
        %v2341 = vld [vmem:[%s2333 + $0x1c] sm:$0xf]
        %v2342 = vld [vmem:[%s2333 + $0x20] sm:$0xf]
        %v2343 = vld [vmem:[%s2333 + $0x24] sm:$0xf]
        %v2344 = vld [vmem:[%s2333 + $0x28] sm:$0xf]
        %v2345 = vld [vmem:[%s2333 + $0x2c] sm:$0xf]
        %v2346 = vld [vmem:[%s2333 + $0x30] sm:$0xf]
        %v2347 = vld [vmem:[%s2333 + $0x34] sm:$0xf]
        %v2348 = vld [vmem:[%s2333 + $0x38] sm:$0xf]
        %v2349 = vld [vmem:[%s2333 + $0x3c] sm:$0xf]
        %v2350 = vpack.c.bf16 %v2325, %v2324
        %v2351 = vpack.c.bf16 %v2327, %v2326
        %v2352 = vpack.c.bf16 %v2329, %v2328
        %v2353 = vpack.c.bf16 %v2331, %v2330
        %v2354 = vpack.c.bf16 %v2332, %v2332
        %v2371 = vunpack.c.l.b16 %v2334
        %v2372 = vunpack.c.l.b16 %v2335
        %v2373 = vunpack.c.l.b16 %v2336
        %v2374 = vunpack.c.l.b16 %v2337
        %v2375 = vunpack.c.l.b16 %v2338
        %v2376 = vunpack.c.l.b16 %v2339
        %v2377 = vunpack.c.l.b16 %v2340
        %v2378 = vunpack.c.l.b16 %v2341
        %v2379 = vunpack.c.l.b16 %v2342
        %v2380 = vunpack.c.l.b16 %v2343
        %v2381 = vunpack.c.l.b16 %v2344
        %v2382 = vunpack.c.l.b16 %v2345
        %v2383 = vunpack.c.l.b16 %v2346
        %v2384 = vunpack.c.l.b16 %v2347
        %v2385 = vunpack.c.l.b16 %v2348
        %v2386 = vunpack.c.l.b16 %v2349
        %v2387 = vpack.c.b16 %v2372, %v2371
        %v2388 = vpack.c.b16 %v2374, %v2373
        %v2389 = vpack.c.b16 %v2376, %v2375
        %v2390 = vpack.c.b16 %v2378, %v2377
        %v2391 = vpack.c.b16 %v2380, %v2379
        %v2392 = vpack.c.b16 %v2382, %v2381
        %v2393 = vpack.c.b16 %v2384, %v2383
        %v2394 = vpack.c.b16 %v2386, %v2385
        %2403 = vmatprep.subr.bf16.mxu0 0
        %2404 = vmatpush1.bf16.msra.mxu0 %v2387
        %2405 = vmatprep.subr.bf16.mxu0 0
        %2406 = vmatpush1.bf16.msra.mxu0 %v2388
        %2407 = vmatprep.subr.bf16.mxu0 0
        %2408 = vmatpush1.bf16.msra.mxu0 %v2389
        %2409 = vmatprep.subr.bf16.mxu0 0
        %2410 = vmatpush1.bf16.msra.mxu0 %v2390
        %2411 = vmatprep.subr.bf16.mxu0 0
        %2412 = vmatpush1.bf16.msra.mxu0 %v2391
        %2413 = vmatprep.subr.bf16.mxu0 0
        %2414 = vmatpush1.bf16.msra.mxu0 %v2392
        %2415 = vmatprep.subr.bf16.mxu0 0
        %2416 = vmatpush1.bf16.msra.mxu0 %v2393
        %2417 = vmatprep.subr.bf16.mxu0 0
        %2418 = vmatpush1.bf16.msra.mxu0 %v2394
        %2419 = vmatprep.subr.bf16.mxu0 0
        %2420 = vmatpush1.bf16.msra.mxu0 0
        %2421 = vmatprep.subr.bf16.mxu0 0
        %2422 = vmatpush1.bf16.msra.mxu0 0
        %2423 = vmatprep.subr.bf16.mxu0 0
        %2424 = vmatpush1.bf16.msra.mxu0 0
        %2425 = vmatprep.subr.bf16.mxu0 0
        %2426 = vmatpush1.bf16.msra.mxu0 0
        %2427 = vmatprep.subr.bf16.mxu0 0
        %2428 = vmatpush1.bf16.msra.mxu0 0
        %2429 = vmatprep.subr.bf16.mxu0 0
        %2430 = vmatpush1.bf16.msra.mxu0 0
        %2431 = vmatprep.subr.bf16.mxu0 0
        %2432 = vmatpush1.bf16.msra.mxu0 0
        %2433 = vmatprep.subr.bf16.mxu0 0
        %2434 = vmatpush1.bf16.msra.mxu0 0
        %2435 = vmatprep.mubr.bf16.mxu0 0
        %2436 = vmatmul.mubr.bf16.gmra.mrb[0].mxu0 %v2350
        %v2437 = vpop.f32.mrb[0].mxu0
        %v2438 = vadd.f32 0.0, %v2437
        %v2439 = vpop.f32.mrb[0].mxu0
        %v2440 = vpop.f32.mrb[0].mxu0
        %v2441 = vadd.f32 0.0, %v2440
        %v2442 = vpop.f32.mrb[0].mxu0
        %2443 = vmatprep.mubr.bf16.mxu0 0
        %2444 = vmatmul.mubr.bf16.gmra.mrb[0].mxu0 %v2351
        %v2445 = vpop.f32.mrb[0].mxu0
        %v2446 = vadd.f32 0.0, %v2445
        %v2447 = vpop.f32.mrb[0].mxu0
        %v2448 = vpop.f32.mrb[0].mxu0
        %v2449 = vadd.f32 0.0, %v2448
        %v2450 = vpop.f32.mrb[0].mxu0
        %2451 = vmatprep.mubr.bf16.mxu0 0
        %2452 = vmatmul.mubr.bf16.gmra.mrb[0].mxu0 %v2352
        %v2453 = vpop.f32.mrb[0].mxu0
        %v2454 = vpop.f32.mrb[0].mxu0
        %v2455 = vpop.f32.mrb[0].mxu0
        %v2456 = vadd.f32 0.0, %v2455
        %v2457 = vpop.f32.mrb[0].mxu0
        %2458 = vmatprep.mubr.bf16.mxu0 0
        %2459 = vmatmul.mubr.bf16.gmra.mrb[0].mxu0 %v2353
        %v2460 = vpop.f32.mrb[0].mxu0
        %v2461 = vadd.f32 0.0, %v2460
        %v2462 = vpop.f32.mrb[0].mxu0
        %v2463 = vpop.f32.mrb[0].mxu0
        %v2464 = vadd.f32 0.0, %v2463
        %v2465 = vpop.f32.mrb[0].mxu0
        %2466 = vmatprep.mubr.bf16.mxu0 0
        %2467 = vmatmul.mubr.bf16.gmra.mrb[0].mxu0 %v2354
        %v2468 = vpop.f32.mrb[0].mxu0
        %v2469 = vadd.f32 0.0, %v2468
        %v2470 = vpop.f32.mrb[0].mxu0
        %v2471 = vpop.f32.mrb[0].mxu0
        %v2472 = vpop.f32.mrb[0].mxu0
        %2473 = vdwg.mxu0
        %v2474 = vadd.f32 %v2279, %v2438
        %v2475 = vadd.f32 %v2282, %v2441
        %v2476 = vadd.f32 %v2287, %v2446
        %v2477 = vadd.f32 %v2290, %v2449
        %v2478 = vadd.f32 %v2297, %v2456
        %v2479 = vadd.f32 %v2302, %v2461
        %v2480 = vadd.f32 %v2305, %v2464
        %v2481 = vadd.f32 %v2310, %v2469
        %v2482 = vld [vmem:[#allocation2 + $0x9] sm:$0xff]
        %v2483 = vld [vmem:[#allocation2 + $0x11] sm:$0xff]
        %v2484 = vld [vmem:[#allocation2 + $0x19] sm:$0xff]
        %v2485 = vld [vmem:[#allocation2 + $0x21] sm:$0xff]
        %v2486 = vld [vmem:[#allocation2 + $0x29] sm:$0xff]
        %v2487 = vld [vmem:[#allocation2 + $0x31] sm:$0xff]
        %v2488 = vld [vmem:[#allocation2 + $0x39] sm:$0xff]
        %v2489 = vld [vmem:[#allocation2 + $0x41] sm:$0xff]
        %v2490 = vld [vmem:[#allocation2 + $0x49] sm:$0xff]
        %v2491 = vmax.f32 %v2482, 0.0
        %v2492 = vmax.f32 %v2483, 0.0
        %v2493 = vmax.f32 %v2484, 0.0
        %v2494 = vmax.f32 %v2485, 0.0
        %v2495 = vmax.f32 %v2486, 0.0
        %v2496 = vmax.f32 %v2487, 0.0
        %v2497 = vmax.f32 %v2488, 0.0
        %v2498 = vmax.f32 %v2489, 0.0
        %v2499 = vmax.f32 %v2490, 0.0
        %s2500 = scalar_lea.vmem [#allocation4], 832
        %v2501 = vld [vmem:[%s2500] sm:$0xf]
        %v2502 = vld [vmem:[%s2500 + $0x4] sm:$0xf]
        %v2503 = vld [vmem:[%s2500 + $0x8] sm:$0xf]
        %v2504 = vld [vmem:[%s2500 + $0xc] sm:$0xf]
        %v2505 = vld [vmem:[%s2500 + $0x10] sm:$0xf]
        %v2506 = vld [vmem:[%s2500 + $0x14] sm:$0xf]
        %v2507 = vld [vmem:[%s2500 + $0x18] sm:$0xf]
        %v2508 = vld [vmem:[%s2500 + $0x1c] sm:$0xf]
        %v2509 = vld [vmem:[%s2500 + $0x20] sm:$0xf]
        %v2510 = vld [vmem:[%s2500 + $0x24] sm:$0xf]
        %v2511 = vld [vmem:[%s2500 + $0x28] sm:$0xf]
        %v2512 = vld [vmem:[%s2500 + $0x2c] sm:$0xf]
        %v2513 = vld [vmem:[%s2500 + $0x30] sm:$0xf]
        %v2514 = vld [vmem:[%s2500 + $0x34] sm:$0xf]
        %v2515 = vld [vmem:[%s2500 + $0x38] sm:$0xf]
        %v2516 = vld [vmem:[%s2500 + $0x3c] sm:$0xf]
        %v2517 = vpack.c.bf16 %v2492, %v2491
        %v2518 = vpack.c.bf16 %v2494, %v2493
        %v2519 = vpack.c.bf16 %v2496, %v2495
        %v2520 = vpack.c.bf16 %v2498, %v2497
        %v2521 = vpack.c.bf16 %v2499, %v2499
        %v2538 = vunpack.c.l.b16 %v2501
        %v2539 = vunpack.c.l.b16 %v2502
        %v2540 = vunpack.c.l.b16 %v2503
        %v2541 = vunpack.c.l.b16 %v2504
        %v2542 = vunpack.c.l.b16 %v2505
        %v2543 = vunpack.c.l.b16 %v2506
        %v2544 = vunpack.c.l.b16 %v2507
        %v2545 = vunpack.c.l.b16 %v2508
        %v2546 = vunpack.c.l.b16 %v2509
        %v2547 = vunpack.c.l.b16 %v2510
        %v2548 = vunpack.c.l.b16 %v2511
        %v2549 = vunpack.c.l.b16 %v2512
        %v2550 = vunpack.c.l.b16 %v2513
        %v2551 = vunpack.c.l.b16 %v2514
        %v2552 = vunpack.c.l.b16 %v2515
        %v2553 = vunpack.c.l.b16 %v2516
        %v2554 = vpack.c.b16 %v2539, %v2538
        %v2555 = vpack.c.b16 %v2541, %v2540
        %v2556 = vpack.c.b16 %v2543, %v2542
        %v2557 = vpack.c.b16 %v2545, %v2544
        %v2558 = vpack.c.b16 %v2547, %v2546
        %v2559 = vpack.c.b16 %v2549, %v2548
        %v2560 = vpack.c.b16 %v2551, %v2550
        %v2561 = vpack.c.b16 %v2553, %v2552
        %2570 = vmatprep.subr.bf16.mxu0 0
        %2571 = vmatpush1.bf16.msra.mxu0 %v2554
        %2572 = vmatprep.subr.bf16.mxu0 0
        %2573 = vmatpush1.bf16.msra.mxu0 %v2555
        %2574 = vmatprep.subr.bf16.mxu0 0
        %2575 = vmatpush1.bf16.msra.mxu0 %v2556
        %2576 = vmatprep.subr.bf16.mxu0 0
        %2577 = vmatpush1.bf16.msra.mxu0 %v2557
        %2578 = vmatprep.subr.bf16.mxu0 0
        %2579 = vmatpush1.bf16.msra.mxu0 %v2558
        %2580 = vmatprep.subr.bf16.mxu0 0
        %2581 = vmatpush1.bf16.msra.mxu0 %v2559
        %2582 = vmatprep.subr.bf16.mxu0 0
        %2583 = vmatpush1.bf16.msra.mxu0 %v2560
        %2584 = vmatprep.subr.bf16.mxu0 0
        %2585 = vmatpush1.bf16.msra.mxu0 %v2561
        %2586 = vmatprep.subr.bf16.mxu0 0
        %2587 = vmatpush1.bf16.msra.mxu0 0
        %2588 = vmatprep.subr.bf16.mxu0 0
        %2589 = vmatpush1.bf16.msra.mxu0 0
        %2590 = vmatprep.subr.bf16.mxu0 0
        %2591 = vmatpush1.bf16.msra.mxu0 0
        %2592 = vmatprep.subr.bf16.mxu0 0
        %2593 = vmatpush1.bf16.msra.mxu0 0
        %2594 = vmatprep.subr.bf16.mxu0 0
        %2595 = vmatpush1.bf16.msra.mxu0 0
        %2596 = vmatprep.subr.bf16.mxu0 0
        %2597 = vmatpush1.bf16.msra.mxu0 0
        %2598 = vmatprep.subr.bf16.mxu0 0
        %2599 = vmatpush1.bf16.msra.mxu0 0
        %2600 = vmatprep.subr.bf16.mxu0 0
        %2601 = vmatpush1.bf16.msra.mxu0 0
        %2602 = vmatprep.mubr.bf16.mxu0 0
        %2603 = vmatmul.mubr.bf16.gmra.mrb[0].mxu0 %v2517
        %v2604 = vpop.f32.mrb[0].mxu0
        %v2605 = vadd.f32 0.0, %v2604
        %v2606 = vpop.f32.mrb[0].mxu0
        %v2607 = vpop.f32.mrb[0].mxu0
        %v2608 = vadd.f32 0.0, %v2607
        %v2609 = vpop.f32.mrb[0].mxu0
        %2610 = vmatprep.mubr.bf16.mxu0 0
        %2611 = vmatmul.mubr.bf16.gmra.mrb[0].mxu0 %v2518
        %v2612 = vpop.f32.mrb[0].mxu0
        %v2613 = vadd.f32 0.0, %v2612
        %v2614 = vpop.f32.mrb[0].mxu0
        %v2615 = vpop.f32.mrb[0].mxu0
        %v2616 = vadd.f32 0.0, %v2615
        %v2617 = vpop.f32.mrb[0].mxu0
        %2618 = vmatprep.mubr.bf16.mxu0 0
        %2619 = vmatmul.mubr.bf16.gmra.mrb[0].mxu0 %v2519
        %v2620 = vpop.f32.mrb[0].mxu0
        %v2621 = vpop.f32.mrb[0].mxu0
        %v2622 = vpop.f32.mrb[0].mxu0
        %v2623 = vadd.f32 0.0, %v2622
        %v2624 = vpop.f32.mrb[0].mxu0
        %2625 = vmatprep.mubr.bf16.mxu0 0
        %2626 = vmatmul.mubr.bf16.gmra.mrb[0].mxu0 %v2520
        %v2627 = vpop.f32.mrb[0].mxu0
        %v2628 = vadd.f32 0.0, %v2627
        %v2629 = vpop.f32.mrb[0].mxu0
        %v2630 = vpop.f32.mrb[0].mxu0
        %v2631 = vadd.f32 0.0, %v2630
        %v2632 = vpop.f32.mrb[0].mxu0
        %2633 = vmatprep.mubr.bf16.mxu0 0
        %2634 = vmatmul.mubr.bf16.gmra.mrb[0].mxu0 %v2521
        %v2635 = vpop.f32.mrb[0].mxu0
        %v2636 = vadd.f32 0.0, %v2635
        %v2637 = vpop.f32.mrb[0].mxu0
        %v2638 = vpop.f32.mrb[0].mxu0
        %v2639 = vpop.f32.mrb[0].mxu0
        %2640 = vdwg.mxu0
        %v2641 = vadd.f32 %v2474, %v2605
        %v2642 = vadd.f32 %v2475, %v2608
        %v2643 = vadd.f32 %v2476, %v2613
        %v2644 = vadd.f32 %v2477, %v2616
        %v2645 = vadd.f32 %v2478, %v2623
        %v2646 = vadd.f32 %v2479, %v2628
        %v2647 = vadd.f32 %v2480, %v2631
        %v2648 = vadd.f32 %v2481, %v2636
        %v2649 = vld [vmem:[#allocation2 + $0xa] sm:$0xff]
        %v2650 = vld [vmem:[#allocation2 + $0x12] sm:$0xff]
        %v2651 = vld [vmem:[#allocation2 + $0x1a] sm:$0xff]
        %v2652 = vld [vmem:[#allocation2 + $0x22] sm:$0xff]
        %v2653 = vld [vmem:[#allocation2 + $0x2a] sm:$0xff]
        %v2654 = vld [vmem:[#allocation2 + $0x32] sm:$0xff]
        %v2655 = vld [vmem:[#allocation2 + $0x3a] sm:$0xff]
        %v2656 = vld [vmem:[#allocation2 + $0x42] sm:$0xff]
        %v2657 = vld [vmem:[#allocation2 + $0x4a] sm:$0xff]
        %v2658 = vmax.f32 %v2649, 0.0
        %v2659 = vmax.f32 %v2650, 0.0
        %v2660 = vmax.f32 %v2651, 0.0
        %v2661 = vmax.f32 %v2652, 0.0
        %v2662 = vmax.f32 %v2653, 0.0
        %v2663 = vmax.f32 %v2654, 0.0
        %v2664 = vmax.f32 %v2655, 0.0
        %v2665 = vmax.f32 %v2656, 0.0
        %v2666 = vmax.f32 %v2657, 0.0
        %s2667 = scalar_lea.vmem [#allocation4], 896
        %v2668 = vld [vmem:[%s2667] sm:$0xf]
        %v2669 = vld [vmem:[%s2667 + $0x4] sm:$0xf]
        %v2670 = vld [vmem:[%s2667 + $0x8] sm:$0xf]
        %v2671 = vld [vmem:[%s2667 + $0xc] sm:$0xf]
        %v2672 = vld [vmem:[%s2667 + $0x10] sm:$0xf]
        %v2673 = vld [vmem:[%s2667 + $0x14] sm:$0xf]
        %v2674 = vld [vmem:[%s2667 + $0x18] sm:$0xf]
        %v2675 = vld [vmem:[%s2667 + $0x1c] sm:$0xf]
        %v2676 = vld [vmem:[%s2667 + $0x20] sm:$0xf]
        %v2677 = vld [vmem:[%s2667 + $0x24] sm:$0xf]
        %v2678 = vld [vmem:[%s2667 + $0x28] sm:$0xf]
        %v2679 = vld [vmem:[%s2667 + $0x2c] sm:$0xf]
        %v2680 = vld [vmem:[%s2667 + $0x30] sm:$0xf]
        %v2681 = vld [vmem:[%s2667 + $0x34] sm:$0xf]
        %v2682 = vld [vmem:[%s2667 + $0x38] sm:$0xf]
        %v2683 = vld [vmem:[%s2667 + $0x3c] sm:$0xf]
        %v2684 = vpack.c.bf16 %v2659, %v2658
        %v2685 = vpack.c.bf16 %v2661, %v2660
        %v2686 = vpack.c.bf16 %v2663, %v2662
        %v2687 = vpack.c.bf16 %v2665, %v2664
        %v2688 = vpack.c.bf16 %v2666, %v2666
        %v2705 = vunpack.c.l.b16 %v2668
        %v2706 = vunpack.c.l.b16 %v2669
        %v2707 = vunpack.c.l.b16 %v2670
        %v2708 = vunpack.c.l.b16 %v2671
        %v2709 = vunpack.c.l.b16 %v2672
        %v2710 = vunpack.c.l.b16 %v2673
        %v2711 = vunpack.c.l.b16 %v2674
        %v2712 = vunpack.c.l.b16 %v2675
        %v2713 = vunpack.c.l.b16 %v2676
        %v2714 = vunpack.c.l.b16 %v2677
        %v2715 = vunpack.c.l.b16 %v2678
        %v2716 = vunpack.c.l.b16 %v2679
        %v2717 = vunpack.c.l.b16 %v2680
        %v2718 = vunpack.c.l.b16 %v2681
        %v2719 = vunpack.c.l.b16 %v2682
        %v2720 = vunpack.c.l.b16 %v2683
        %v2721 = vpack.c.b16 %v2706, %v2705
        %v2722 = vpack.c.b16 %v2708, %v2707
        %v2723 = vpack.c.b16 %v2710, %v2709
        %v2724 = vpack.c.b16 %v2712, %v2711
        %v2725 = vpack.c.b16 %v2714, %v2713
        %v2726 = vpack.c.b16 %v2716, %v2715
        %v2727 = vpack.c.b16 %v2718, %v2717
        %v2728 = vpack.c.b16 %v2720, %v2719
        %2737 = vmatprep.subr.bf16.mxu0 0
        %2738 = vmatpush1.bf16.msra.mxu0 %v2721
        %2739 = vmatprep.subr.bf16.mxu0 0
        %2740 = vmatpush1.bf16.msra.mxu0 %v2722
        %2741 = vmatprep.subr.bf16.mxu0 0
        %2742 = vmatpush1.bf16.msra.mxu0 %v2723
        %2743 = vmatprep.subr.bf16.mxu0 0
        %2744 = vmatpush1.bf16.msra.mxu0 %v2724
        %2745 = vmatprep.subr.bf16.mxu0 0
        %2746 = vmatpush1.bf16.msra.mxu0 %v2725
        %2747 = vmatprep.subr.bf16.mxu0 0
        %2748 = vmatpush1.bf16.msra.mxu0 %v2726
        %2749 = vmatprep.subr.bf16.mxu0 0
        %2750 = vmatpush1.bf16.msra.mxu0 %v2727
        %2751 = vmatprep.subr.bf16.mxu0 0
        %2752 = vmatpush1.bf16.msra.mxu0 %v2728
        %2753 = vmatprep.subr.bf16.mxu0 0
        %2754 = vmatpush1.bf16.msra.mxu0 0
        %2755 = vmatprep.subr.bf16.mxu0 0
        %2756 = vmatpush1.bf16.msra.mxu0 0
        %2757 = vmatprep.subr.bf16.mxu0 0
        %2758 = vmatpush1.bf16.msra.mxu0 0
        %2759 = vmatprep.subr.bf16.mxu0 0
        %2760 = vmatpush1.bf16.msra.mxu0 0
        %2761 = vmatprep.subr.bf16.mxu0 0
        %2762 = vmatpush1.bf16.msra.mxu0 0
        %2763 = vmatprep.subr.bf16.mxu0 0
        %2764 = vmatpush1.bf16.msra.mxu0 0
        %2765 = vmatprep.subr.bf16.mxu0 0
        %2766 = vmatpush1.bf16.msra.mxu0 0
        %2767 = vmatprep.subr.bf16.mxu0 0
        %2768 = vmatpush1.bf16.msra.mxu0 0
        %2769 = vmatprep.mubr.bf16.mxu0 0
        %2770 = vmatmul.mubr.bf16.gmra.mrb[0].mxu0 %v2684
        %v2771 = vpop.f32.mrb[0].mxu0
        %v2772 = vadd.f32 0.0, %v2771
        %v2773 = vpop.f32.mrb[0].mxu0
        %v2774 = vpop.f32.mrb[0].mxu0
        %v2775 = vadd.f32 0.0, %v2774
        %v2776 = vpop.f32.mrb[0].mxu0
        %2777 = vmatprep.mubr.bf16.mxu0 0
        %2778 = vmatmul.mubr.bf16.gmra.mrb[0].mxu0 %v2685
        %v2779 = vpop.f32.mrb[0].mxu0
        %v2780 = vadd.f32 0.0, %v2779
        %v2781 = vpop.f32.mrb[0].mxu0
        %v2782 = vpop.f32.mrb[0].mxu0
        %v2783 = vadd.f32 0.0, %v2782
        %v2784 = vpop.f32.mrb[0].mxu0
        %2785 = vmatprep.mubr.bf16.mxu0 0
        %2786 = vmatmul.mubr.bf16.gmra.mrb[0].mxu0 %v2686
        %v2787 = vpop.f32.mrb[0].mxu0
        %v2788 = vpop.f32.mrb[0].mxu0
        %v2789 = vpop.f32.mrb[0].mxu0
        %v2790 = vadd.f32 0.0, %v2789
        %v2791 = vpop.f32.mrb[0].mxu0
        %2792 = vmatprep.mubr.bf16.mxu0 0
        %2793 = vmatmul.mubr.bf16.gmra.mrb[0].mxu0 %v2687
        %v2794 = vpop.f32.mrb[0].mxu0
        %v2795 = vadd.f32 0.0, %v2794
        %v2796 = vpop.f32.mrb[0].mxu0
        %v2797 = vpop.f32.mrb[0].mxu0
        %v2798 = vadd.f32 0.0, %v2797
        %v2799 = vpop.f32.mrb[0].mxu0
        %2800 = vmatprep.mubr.bf16.mxu0 0
        %2801 = vmatmul.mubr.bf16.gmra.mrb[0].mxu0 %v2688
        %v2802 = vpop.f32.mrb[0].mxu0
        %v2803 = vadd.f32 0.0, %v2802
        %v2804 = vpop.f32.mrb[0].mxu0
        %v2805 = vpop.f32.mrb[0].mxu0
        %v2806 = vpop.f32.mrb[0].mxu0
        %2807 = vdwg.mxu0
        %v2808 = vadd.f32 %v2641, %v2772
        %v2809 = vadd.f32 %v2642, %v2775
        %v2810 = vadd.f32 %v2643, %v2780
        %v2811 = vadd.f32 %v2644, %v2783
        %v2812 = vadd.f32 %v2645, %v2790
        %v2813 = vadd.f32 %v2646, %v2795
        %v2814 = vadd.f32 %v2647, %v2798
        %v2815 = vadd.f32 %v2648, %v2803
        %s2816 = scalar_lea.vmem [#allocation6], 16
        %v2817 = vld [vmem:[%s2816] sm:$0xff]
        %v2818 = vlaneseq
        %v2819 = vshrl.u32 %v2818, 7
        %v2820 = vsub.s32 0, %v2819
        %v2821 = vrot.slane %v2817, %v2820
        %v2822 = vadd.f32 %v2808, %v2821
        %v2823 = vadd.f32 %v2809, %v2821
        %v2824 = vadd.f32 %v2810, %v2821
        %v2825 = vadd.f32 %v2811, %v2821
        %v2826 = vadd.f32 %v2812, %v2821
        %v2827 = vadd.f32 %v2813, %v2821
        %v2828 = vadd.f32 %v2814, %v2821
        %v2829 = vadd.f32 %v2815, %v2821
        %v2830 = vsel %vm232, %v2822, 0.0
        %v2831 = vsel %vm232, %v2823, 0.0
        %v2832 = vsel %vm232, %v2824, 0.0
        %v2833 = vsel %vm232, %v2825, 0.0
        %v2834 = vsel %vm232, %v2826, 0.0
        %v2835 = vsel %vm232, %v2827, 0.0
        %v2836 = vsel %vm232, %v2828, 0.0
        %v2837 = vsel %vm232, %v2829, 0.0
        %2838 = vadd.xlane.f32.xlu0 %v2830
        %v2839 = vpop.xlane.xlu0 %2838
        %2840 = vadd.xlane.f32.xlu0 %v2831
        %v2841 = vpop.xlane.xlu0 %2840
        %2842 = vadd.xlane.f32.xlu0 %v2832
        %v2843 = vpop.xlane.xlu0 %2842
        %2844 = vadd.xlane.f32.xlu0 %v2833
        %v2845 = vpop.xlane.xlu0 %2844
        %2846 = vadd.xlane.f32.xlu0 %v2834
        %v2847 = vpop.xlane.xlu0 %2846
        %2848 = vadd.xlane.f32.xlu0 %v2835
        %v2849 = vpop.xlane.xlu0 %2848
        %2850 = vadd.xlane.f32.xlu0 %v2836
        %v2851 = vpop.xlane.xlu0 %2850
        %2852 = vadd.xlane.f32.xlu0 %v2837
        %v2853 = vpop.xlane.xlu0 %2852
        %v2854 = vmul.f32 %v2839, 0.03125
        %v2855 = vmul.f32 %v2841, 0.03125
        %v2856 = vmul.f32 %v2843, 0.03125
        %v2857 = vmul.f32 %v2845, 0.03125
        %v2858 = vmul.f32 %v2847, 0.03125
        %v2859 = vmul.f32 %v2849, 0.03125
        %v2860 = vmul.f32 %v2851, 0.03125
        %v2861 = vmul.f32 %v2853, 0.03125
        %v2862 = vsub.f32 %v2822, %v2854
        %v2863 = vsub.f32 %v2823, %v2855
        %v2864 = vsub.f32 %v2824, %v2856
        %v2865 = vsub.f32 %v2825, %v2857
        %v2866 = vsub.f32 %v2826, %v2858
        %v2867 = vsub.f32 %v2827, %v2859
        %v2868 = vsub.f32 %v2828, %v2860
        %v2869 = vsub.f32 %v2829, %v2861
        %v2870 = vsel %vm232, %v2862, 0.0
        %v2871 = vsel %vm232, %v2863, 0.0
        %v2872 = vsel %vm232, %v2864, 0.0
        %v2873 = vsel %vm232, %v2865, 0.0
        %v2874 = vsel %vm232, %v2866, 0.0
        %v2875 = vsel %vm232, %v2867, 0.0
        %v2876 = vsel %vm232, %v2868, 0.0
        %v2877 = vsel %vm232, %v2869, 0.0
        %v2878 = vmul.f32 %v2870, %v2870
        %v2879 = vmul.f32 %v2871, %v2871
        %v2880 = vmul.f32 %v2872, %v2872
        %v2881 = vmul.f32 %v2873, %v2873
        %v2882 = vmul.f32 %v2874, %v2874
        %v2883 = vmul.f32 %v2875, %v2875
        %v2884 = vmul.f32 %v2876, %v2876
        %v2885 = vmul.f32 %v2877, %v2877
        %2886 = vadd.xlane.f32.xlu0 %v2878
        %v2887 = vpop.xlane.xlu0 %2886
        %2888 = vadd.xlane.f32.xlu0 %v2879
        %v2889 = vpop.xlane.xlu0 %2888
        %2890 = vadd.xlane.f32.xlu0 %v2880
        %v2891 = vpop.xlane.xlu0 %2890
        %2892 = vadd.xlane.f32.xlu0 %v2881
        %v2893 = vpop.xlane.xlu0 %2892
        %2894 = vadd.xlane.f32.xlu0 %v2882
        %v2895 = vpop.xlane.xlu0 %2894
        %2896 = vadd.xlane.f32.xlu0 %v2883
        %v2897 = vpop.xlane.xlu0 %2896
        %2898 = vadd.xlane.f32.xlu0 %v2884
        %v2899 = vpop.xlane.xlu0 %2898
        %2900 = vadd.xlane.f32.xlu0 %v2885
        %v2901 = vpop.xlane.xlu0 %2900
        %v2902 = vmul.f32 %v2887, 0.03125
        %v2903 = vmul.f32 %v2889, 0.03125
        %v2904 = vmul.f32 %v2891, 0.03125
        %v2905 = vmul.f32 %v2893, 0.03125
        %v2906 = vmul.f32 %v2895, 0.03125
        %v2907 = vmul.f32 %v2897, 0.03125
        %v2908 = vmul.f32 %v2899, 0.03125
        %v2909 = vmul.f32 %v2901, 0.03125
        %v2910 = vadd.f32 %v2902, 1e-05
        %v2911 = vadd.f32 %v2903, 1e-05
        %v2912 = vadd.f32 %v2904, 1e-05
        %v2913 = vadd.f32 %v2905, 1e-05
        %v2914 = vadd.f32 %v2906, 1e-05
        %v2915 = vadd.f32 %v2907, 1e-05
        %v2916 = vadd.f32 %v2908, 1e-05
        %v2917 = vadd.f32 %v2909, 1e-05
        %v2918 = vrsqrt.pop %v2910
        %v2919 = vrsqrt.pop %v2911
        %v2920 = vrsqrt.pop %v2912
        %v2921 = vrsqrt.pop %v2913
        %v2922 = vrsqrt.pop %v2914
        %v2923 = vrsqrt.pop %v2915
        %v2924 = vrsqrt.pop %v2916
        %v2925 = vrsqrt.pop %v2917
        %v2926 = vmul.f32 %v2862, %v2918
        %v2927 = vmul.f32 %v2863, %v2919
        %v2928 = vmul.f32 %v2864, %v2920
        %v2929 = vmul.f32 %v2865, %v2921
        %v2930 = vmul.f32 %v2866, %v2922
        %v2931 = vmul.f32 %v2867, %v2923
        %v2932 = vmul.f32 %v2868, %v2924
        %v2933 = vmul.f32 %v2869, %v2925
        %v2934 = vlaneseq
        %v2935 = vshrl.u32 %v2934, 7
        %v2936 = vsub.s32 1, %v2935
        %v2937 = vrot.slane %v2817, %v2936
        %v2938 = vmul.f32 %v2926, %v2937
        %v2939 = vmul.f32 %v2927, %v2937
        %v2940 = vmul.f32 %v2928, %v2937
        %v2941 = vmul.f32 %v2929, %v2937
        %v2942 = vmul.f32 %v2930, %v2937
        %v2943 = vmul.f32 %v2931, %v2937
        %v2944 = vmul.f32 %v2932, %v2937
        %v2945 = vmul.f32 %v2933, %v2937
        %v2946 = vlaneseq
        %v2947 = vshrl.u32 %v2946, 7
        %v2948 = vsub.s32 2, %v2947
        %v2949 = vrot.slane %v2817, %v2948
        %v2950 = vadd.f32 %v2938, %v2949
        %v2951 = vadd.f32 %v2939, %v2949
        %v2952 = vadd.f32 %v2940, %v2949
        %v2953 = vadd.f32 %v2941, %v2949
        %v2954 = vadd.f32 %v2942, %v2949
        %v2955 = vadd.f32 %v2943, %v2949
        %v2956 = vadd.f32 %v2944, %v2949
        %v2957 = vadd.f32 %v2945, %v2949
        %2958 = vst [vmem:[#allocation2 + $0x8] sm:$0xff] %v2950
        %2959 = vst [vmem:[#allocation2 + $0x10] sm:$0xff] %v2951
        %2960 = vst [vmem:[#allocation2 + $0x18] sm:$0xff] %v2952
        %2961 = vst [vmem:[#allocation2 + $0x20] sm:$0xff] %v2953
        %2962 = vst [vmem:[#allocation2 + $0x30] sm:$0xff] %v2954
        %2963 = vst [vmem:[#allocation2 + $0x38] sm:$0xff] %v2955
        %2964 = vst [vmem:[#allocation2 + $0x40] sm:$0xff] %v2956
        %2965 = vst [vmem:[#allocation2 + $0x48] sm:$0xff] %v2957
        %v2966 = vld [vmem:[#allocation2 + $0x6] sm:$0xff]
        %v2967 = vld [vmem:[#allocation2 + $0xe] sm:$0xff]
        %v2968 = vld [vmem:[#allocation2 + $0x16] sm:$0xff]
        %v2969 = vld [vmem:[#allocation2 + $0x1e] sm:$0xff]
        %v2970 = vld [vmem:[#allocation2 + $0x26] sm:$0xff]
        %v2971 = vld [vmem:[#allocation2 + $0x2e] sm:$0xff]
        %v2972 = vld [vmem:[#allocation2 + $0x36] sm:$0xff]
        %v2973 = vld [vmem:[#allocation2 + $0x3e] sm:$0xff]
        %v2974 = vld [vmem:[#allocation2 + $0x46] sm:$0xff]
        %s2975 = scalar_lea.vmem [#allocation4], 960
        %v2976 = vld [vmem:[%s2975] sm:$0xf]
        %v2977 = vld [vmem:[%s2975 + $0x4] sm:$0xf]
        %v2978 = vld [vmem:[%s2975 + $0x8] sm:$0xf]
        %v2979 = vld [vmem:[%s2975 + $0xc] sm:$0xf]
        %v2980 = vld [vmem:[%s2975 + $0x10] sm:$0xf]
        %v2981 = vld [vmem:[%s2975 + $0x14] sm:$0xf]
        %v2982 = vld [vmem:[%s2975 + $0x18] sm:$0xf]
        %v2983 = vld [vmem:[%s2975 + $0x1c] sm:$0xf]
        %v2984 = vld [vmem:[%s2975 + $0x20] sm:$0xf]
        %v2985 = vld [vmem:[%s2975 + $0x24] sm:$0xf]
        %v2986 = vld [vmem:[%s2975 + $0x28] sm:$0xf]
        %v2987 = vld [vmem:[%s2975 + $0x2c] sm:$0xf]
        %v2988 = vld [vmem:[%s2975 + $0x30] sm:$0xf]
        %v2989 = vld [vmem:[%s2975 + $0x34] sm:$0xf]
        %v2990 = vld [vmem:[%s2975 + $0x38] sm:$0xf]
        %v2991 = vld [vmem:[%s2975 + $0x3c] sm:$0xf]
        %v2992 = vpack.c.bf16 %v2967, %v2966
        %v2993 = vpack.c.bf16 %v2969, %v2968
        %v2994 = vpack.c.bf16 %v2971, %v2970
        %v2995 = vpack.c.bf16 %v2973, %v2972
        %v2996 = vpack.c.bf16 %v2974, %v2974
        %v2997 = vld [vmem:[#allocation2 + $0x7] sm:$0xff]
        %v2998 = vld [vmem:[#allocation2 + $0xf] sm:$0xff]
        %v2999 = vld [vmem:[#allocation2 + $0x17] sm:$0xff]
        %v3000 = vld [vmem:[#allocation2 + $0x1f] sm:$0xff]
        %v3001 = vld [vmem:[#allocation2 + $0x27] sm:$0xff]
        %v3002 = vld [vmem:[#allocation2 + $0x2f] sm:$0xff]
        %v3003 = vld [vmem:[#allocation2 + $0x37] sm:$0xff]
        %v3004 = vld [vmem:[#allocation2 + $0x3f] sm:$0xff]
        %v3005 = vld [vmem:[#allocation2 + $0x47] sm:$0xff]
        %s3006 = scalar_lea.vmem [#allocation4], 1024
        %v3007 = vld [vmem:[%s3006] sm:$0xf]
        %v3008 = vld [vmem:[%s3006 + $0x4] sm:$0xf]
        %v3009 = vld [vmem:[%s3006 + $0x8] sm:$0xf]
        %v3010 = vld [vmem:[%s3006 + $0xc] sm:$0xf]
        %v3011 = vld [vmem:[%s3006 + $0x10] sm:$0xf]
        %v3012 = vld [vmem:[%s3006 + $0x14] sm:$0xf]
        %v3013 = vld [vmem:[%s3006 + $0x18] sm:$0xf]
        %v3014 = vld [vmem:[%s3006 + $0x1c] sm:$0xf]
        %v3015 = vld [vmem:[%s3006 + $0x20] sm:$0xf]
        %v3016 = vld [vmem:[%s3006 + $0x24] sm:$0xf]
        %v3017 = vld [vmem:[%s3006 + $0x28] sm:$0xf]
        %v3018 = vld [vmem:[%s3006 + $0x2c] sm:$0xf]
        %v3019 = vld [vmem:[%s3006 + $0x30] sm:$0xf]
        %v3020 = vld [vmem:[%s3006 + $0x34] sm:$0xf]
        %v3021 = vld [vmem:[%s3006 + $0x38] sm:$0xf]
        %v3022 = vld [vmem:[%s3006 + $0x3c] sm:$0xf]
        %v3023 = vpack.c.bf16 %v2998, %v2997
        %v3024 = vpack.c.bf16 %v3000, %v2999
        %v3025 = vpack.c.bf16 %v3002, %v3001
        %v3026 = vpack.c.bf16 %v3004, %v3003
        %v3027 = vpack.c.bf16 %v3005, %v3005
        %v3044 = vunpack.c.l.b16 %v3007
        %v3045 = vunpack.c.l.b16 %v3008
        %v3046 = vunpack.c.l.b16 %v3009
        %v3047 = vunpack.c.l.b16 %v3010
        %v3048 = vunpack.c.l.b16 %v3011
        %v3049 = vunpack.c.l.b16 %v3012
        %v3050 = vunpack.c.l.b16 %v3013
        %v3051 = vunpack.c.l.b16 %v3014
        %v3052 = vunpack.c.l.b16 %v3015
        %v3053 = vunpack.c.l.b16 %v3016
        %v3054 = vunpack.c.l.b16 %v3017
        %v3055 = vunpack.c.l.b16 %v3018
        %v3056 = vunpack.c.l.b16 %v3019
        %v3057 = vunpack.c.l.b16 %v3020
        %v3058 = vunpack.c.l.b16 %v3021
        %v3059 = vunpack.c.l.b16 %v3022
        %v3060 = vpack.c.b16 %v3045, %v3044
        %v3061 = vpack.c.b16 %v3047, %v3046
        %v3062 = vpack.c.b16 %v3049, %v3048
        %v3063 = vpack.c.b16 %v3051, %v3050
        %v3064 = vpack.c.b16 %v3053, %v3052
        %v3065 = vpack.c.b16 %v3055, %v3054
        %v3066 = vpack.c.b16 %v3057, %v3056
        %v3067 = vpack.c.b16 %v3059, %v3058
        %3076 = vmatprep.subr.bf16.mxu0 0
        %3077 = vmatpush1.bf16.msra.mxu0 %v3060
        %3078 = vmatprep.subr.bf16.mxu0 0
        %3079 = vmatpush1.bf16.msra.mxu0 %v3061
        %3080 = vmatprep.subr.bf16.mxu0 0
        %3081 = vmatpush1.bf16.msra.mxu0 %v3062
        %3082 = vmatprep.subr.bf16.mxu0 0
        %3083 = vmatpush1.bf16.msra.mxu0 %v3063
        %3084 = vmatprep.subr.bf16.mxu0 0
        %3085 = vmatpush1.bf16.msra.mxu0 %v3064
        %3086 = vmatprep.subr.bf16.mxu0 0
        %3087 = vmatpush1.bf16.msra.mxu0 %v3065
        %3088 = vmatprep.subr.bf16.mxu0 0
        %3089 = vmatpush1.bf16.msra.mxu0 %v3066
        %3090 = vmatprep.subr.bf16.mxu0 0
        %3091 = vmatpush1.bf16.msra.mxu0 %v3067
        %3092 = vmatprep.subr.bf16.mxu0 0
        %3093 = vmatpush1.bf16.msra.mxu0 0
        %3094 = vmatprep.subr.bf16.mxu0 0
        %3095 = vmatpush1.bf16.msra.mxu0 0
        %3096 = vmatprep.subr.bf16.mxu0 0
        %3097 = vmatpush1.bf16.msra.mxu0 0
        %3098 = vmatprep.subr.bf16.mxu0 0
        %3099 = vmatpush1.bf16.msra.mxu0 0
        %3100 = vmatprep.subr.bf16.mxu0 0
        %3101 = vmatpush1.bf16.msra.mxu0 0
        %3102 = vmatprep.subr.bf16.mxu0 0
        %3103 = vmatpush1.bf16.msra.mxu0 0
        %3104 = vmatprep.subr.bf16.mxu0 0
        %3105 = vmatpush1.bf16.msra.mxu0 0
        %3106 = vmatprep.subr.bf16.mxu0 0
        %3107 = vmatpush1.bf16.msra.mxu0 0
        %3108 = vmatprep.mubr.bf16.mxu0 0
        %3109 = vmatmul.mubr.bf16.gmra.mrb[0].mxu0 %v3023
        %v3110 = vpop.f32.mrb[0].mxu0
        %v3111 = vadd.f32 0.0, %v3110
        %v3112 = vpop.f32.mrb[0].mxu0
        %v3113 = vpop.f32.mrb[0].mxu0
        %v3114 = vadd.f32 0.0, %v3113
        %v3115 = vpop.f32.mrb[0].mxu0
        %3116 = vmatprep.mubr.bf16.mxu0 0
        %3117 = vmatmul.mubr.bf16.gmra.mrb[0].mxu0 %v3024
        %v3118 = vpop.f32.mrb[0].mxu0
        %v3119 = vadd.f32 0.0, %v3118
        %v3120 = vpop.f32.mrb[0].mxu0
        %v3121 = vpop.f32.mrb[0].mxu0
        %v3122 = vadd.f32 0.0, %v3121
        %v3123 = vpop.f32.mrb[0].mxu0
        %3124 = vmatprep.mubr.bf16.mxu0 0
        %3125 = vmatmul.mubr.bf16.gmra.mrb[0].mxu0 %v3025
        %v3126 = vpop.f32.mrb[0].mxu0
        %v3127 = vpop.f32.mrb[0].mxu0
        %v3128 = vpop.f32.mrb[0].mxu0
        %v3129 = vadd.f32 0.0, %v3128
        %v3130 = vpop.f32.mrb[0].mxu0
        %3131 = vmatprep.mubr.bf16.mxu0 0
        %3132 = vmatmul.mubr.bf16.gmra.mrb[0].mxu0 %v3026
        %v3133 = vpop.f32.mrb[0].mxu0
        %v3134 = vadd.f32 0.0, %v3133
        %v3135 = vpop.f32.mrb[0].mxu0
        %v3136 = vpop.f32.mrb[0].mxu0
        %v3137 = vadd.f32 0.0, %v3136
        %v3138 = vpop.f32.mrb[0].mxu0
        %3139 = vmatprep.mubr.bf16.mxu0 0
        %3140 = vmatmul.mubr.bf16.gmra.mrb[0].mxu0 %v3027
        %v3141 = vpop.f32.mrb[0].mxu0
        %v3142 = vadd.f32 0.0, %v3141
        %v3143 = vpop.f32.mrb[0].mxu0
        %v3144 = vpop.f32.mrb[0].mxu0
        %v3145 = vpop.f32.mrb[0].mxu0
        %3146 = vdwg.mxu0
        %v3163 = vunpack.c.l.b16 %v2976
        %v3164 = vunpack.c.l.b16 %v2977
        %v3165 = vunpack.c.l.b16 %v2978
        %v3166 = vunpack.c.l.b16 %v2979
        %v3167 = vunpack.c.l.b16 %v2980
        %v3168 = vunpack.c.l.b16 %v2981
        %v3169 = vunpack.c.l.b16 %v2982
        %v3170 = vunpack.c.l.b16 %v2983
        %v3171 = vunpack.c.l.b16 %v2984
        %v3172 = vunpack.c.l.b16 %v2985
        %v3173 = vunpack.c.l.b16 %v2986
        %v3174 = vunpack.c.l.b16 %v2987
        %v3175 = vunpack.c.l.b16 %v2988
        %v3176 = vunpack.c.l.b16 %v2989
        %v3177 = vunpack.c.l.b16 %v2990
        %v3178 = vunpack.c.l.b16 %v2991
        %v3179 = vpack.c.b16 %v3164, %v3163
        %v3180 = vpack.c.b16 %v3166, %v3165
        %v3181 = vpack.c.b16 %v3168, %v3167
        %v3182 = vpack.c.b16 %v3170, %v3169
        %v3183 = vpack.c.b16 %v3172, %v3171
        %v3184 = vpack.c.b16 %v3174, %v3173
        %v3185 = vpack.c.b16 %v3176, %v3175
        %v3186 = vpack.c.b16 %v3178, %v3177
        %3195 = vmatprep.subr.bf16.mxu0 0
        %3196 = vmatpush1.bf16.msra.mxu0 %v3179
        %3197 = vmatprep.subr.bf16.mxu0 0
        %3198 = vmatpush1.bf16.msra.mxu0 %v3180
        %3199 = vmatprep.subr.bf16.mxu0 0
        %3200 = vmatpush1.bf16.msra.mxu0 %v3181
        %3201 = vmatprep.subr.bf16.mxu0 0
        %3202 = vmatpush1.bf16.msra.mxu0 %v3182
        %3203 = vmatprep.subr.bf16.mxu0 0
        %3204 = vmatpush1.bf16.msra.mxu0 %v3183
        %3205 = vmatprep.subr.bf16.mxu0 0
        %3206 = vmatpush1.bf16.msra.mxu0 %v3184
        %3207 = vmatprep.subr.bf16.mxu0 0
        %3208 = vmatpush1.bf16.msra.mxu0 %v3185
        %3209 = vmatprep.subr.bf16.mxu0 0
        %3210 = vmatpush1.bf16.msra.mxu0 %v3186
        %3211 = vmatprep.subr.bf16.mxu0 0
        %3212 = vmatpush1.bf16.msra.mxu0 0
        %3213 = vmatprep.subr.bf16.mxu0 0
        %3214 = vmatpush1.bf16.msra.mxu0 0
        %3215 = vmatprep.subr.bf16.mxu0 0
        %3216 = vmatpush1.bf16.msra.mxu0 0
        %3217 = vmatprep.subr.bf16.mxu0 0
        %3218 = vmatpush1.bf16.msra.mxu0 0
        %3219 = vmatprep.subr.bf16.mxu0 0
        %3220 = vmatpush1.bf16.msra.mxu0 0
        %3221 = vmatprep.subr.bf16.mxu0 0
        %3222 = vmatpush1.bf16.msra.mxu0 0
        %3223 = vmatprep.subr.bf16.mxu0 0
        %3224 = vmatpush1.bf16.msra.mxu0 0
        %3225 = vmatprep.subr.bf16.mxu0 0
        %3226 = vmatpush1.bf16.msra.mxu0 0
        %3227 = vmatprep.mubr.bf16.mxu0 0
        %3228 = vmatmul.mubr.bf16.gmra.mrb[0].mxu0 %v2992
        %v3229 = vpop.f32.mrb[0].mxu0
        %v3230 = vadd.f32 %v3111, %v3229
        %v3231 = vpop.f32.mrb[0].mxu0
        %v3232 = vpop.f32.mrb[0].mxu0
        %v3233 = vadd.f32 %v3114, %v3232
        %v3234 = vpop.f32.mrb[0].mxu0
        %3235 = vmatprep.mubr.bf16.mxu0 0
        %3236 = vmatmul.mubr.bf16.gmra.mrb[0].mxu0 %v2993
        %v3237 = vpop.f32.mrb[0].mxu0
        %v3238 = vadd.f32 %v3119, %v3237
        %v3239 = vpop.f32.mrb[0].mxu0
        %v3240 = vpop.f32.mrb[0].mxu0
        %v3241 = vadd.f32 %v3122, %v3240
        %v3242 = vpop.f32.mrb[0].mxu0
        %3243 = vmatprep.mubr.bf16.mxu0 0
        %3244 = vmatmul.mubr.bf16.gmra.mrb[0].mxu0 %v2994
        %v3245 = vpop.f32.mrb[0].mxu0
        %v3246 = vpop.f32.mrb[0].mxu0
        %v3247 = vpop.f32.mrb[0].mxu0
        %v3248 = vadd.f32 %v3129, %v3247
        %v3249 = vpop.f32.mrb[0].mxu0
        %3250 = vmatprep.mubr.bf16.mxu0 0
        %3251 = vmatmul.mubr.bf16.gmra.mrb[0].mxu0 %v2995
        %v3252 = vpop.f32.mrb[0].mxu0
        %v3253 = vadd.f32 %v3134, %v3252
        %v3254 = vpop.f32.mrb[0].mxu0
        %v3255 = vpop.f32.mrb[0].mxu0
        %v3256 = vadd.f32 %v3137, %v3255
        %v3257 = vpop.f32.mrb[0].mxu0
        %3258 = vmatprep.mubr.bf16.mxu0 0
        %3259 = vmatmul.mubr.bf16.gmra.mrb[0].mxu0 %v2996
        %v3260 = vpop.f32.mrb[0].mxu0
        %v3261 = vadd.f32 %v3142, %v3260
        %v3262 = vpop.f32.mrb[0].mxu0
        %v3263 = vpop.f32.mrb[0].mxu0
        %v3264 = vpop.f32.mrb[0].mxu0
        %3265 = vdwg.mxu0
        %v3266 = vld [vmem:[#allocation2 + $0x8] sm:$0xff]
        %v3267 = vld [vmem:[#allocation2 + $0x10] sm:$0xff]
        %v3268 = vld [vmem:[#allocation2 + $0x18] sm:$0xff]
        %v3269 = vld [vmem:[#allocation2 + $0x20] sm:$0xff]
        %v3270 = vld [vmem:[#allocation2 + $0x28] sm:$0xff]
        %v3271 = vld [vmem:[#allocation2 + $0x30] sm:$0xff]
        %v3272 = vld [vmem:[#allocation2 + $0x38] sm:$0xff]
        %v3273 = vld [vmem:[#allocation2 + $0x40] sm:$0xff]
        %v3274 = vld [vmem:[#allocation2 + $0x48] sm:$0xff]
        %s3275 = scalar_lea.vmem [#allocation4], 1088
        %v3276 = vld [vmem:[%s3275] sm:$0xf]
        %v3277 = vld [vmem:[%s3275 + $0x4] sm:$0xf]
        %v3278 = vld [vmem:[%s3275 + $0x8] sm:$0xf]
        %v3279 = vld [vmem:[%s3275 + $0xc] sm:$0xf]
        %v3280 = vld [vmem:[%s3275 + $0x10] sm:$0xf]
        %v3281 = vld [vmem:[%s3275 + $0x14] sm:$0xf]
        %v3282 = vld [vmem:[%s3275 + $0x18] sm:$0xf]
        %v3283 = vld [vmem:[%s3275 + $0x1c] sm:$0xf]
        %v3284 = vld [vmem:[%s3275 + $0x20] sm:$0xf]
        %v3285 = vld [vmem:[%s3275 + $0x24] sm:$0xf]
        %v3286 = vld [vmem:[%s3275 + $0x28] sm:$0xf]
        %v3287 = vld [vmem:[%s3275 + $0x2c] sm:$0xf]
        %v3288 = vld [vmem:[%s3275 + $0x30] sm:$0xf]
        %v3289 = vld [vmem:[%s3275 + $0x34] sm:$0xf]
        %v3290 = vld [vmem:[%s3275 + $0x38] sm:$0xf]
        %v3291 = vld [vmem:[%s3275 + $0x3c] sm:$0xf]
        %v3292 = vpack.c.bf16 %v3267, %v3266
        %v3293 = vpack.c.bf16 %v3269, %v3268
        %v3294 = vpack.c.bf16 %v3271, %v3270
        %v3295 = vpack.c.bf16 %v3273, %v3272
        %v3296 = vpack.c.bf16 %v3274, %v3274
        %v3313 = vunpack.c.l.b16 %v3276
        %v3314 = vunpack.c.l.b16 %v3277
        %v3315 = vunpack.c.l.b16 %v3278
        %v3316 = vunpack.c.l.b16 %v3279
        %v3317 = vunpack.c.l.b16 %v3280
        %v3318 = vunpack.c.l.b16 %v3281
        %v3319 = vunpack.c.l.b16 %v3282
        %v3320 = vunpack.c.l.b16 %v3283
        %v3321 = vunpack.c.l.b16 %v3284
        %v3322 = vunpack.c.l.b16 %v3285
        %v3323 = vunpack.c.l.b16 %v3286
        %v3324 = vunpack.c.l.b16 %v3287
        %v3325 = vunpack.c.l.b16 %v3288
        %v3326 = vunpack.c.l.b16 %v3289
        %v3327 = vunpack.c.l.b16 %v3290
        %v3328 = vunpack.c.l.b16 %v3291
        %v3329 = vpack.c.b16 %v3314, %v3313
        %v3330 = vpack.c.b16 %v3316, %v3315
        %v3331 = vpack.c.b16 %v3318, %v3317
        %v3332 = vpack.c.b16 %v3320, %v3319
        %v3333 = vpack.c.b16 %v3322, %v3321
        %v3334 = vpack.c.b16 %v3324, %v3323
        %v3335 = vpack.c.b16 %v3326, %v3325
        %v3336 = vpack.c.b16 %v3328, %v3327
        %3345 = vmatprep.subr.bf16.mxu0 0
        %3346 = vmatpush1.bf16.msra.mxu0 %v3329
        %3347 = vmatprep.subr.bf16.mxu0 0
        %3348 = vmatpush1.bf16.msra.mxu0 %v3330
        %3349 = vmatprep.subr.bf16.mxu0 0
        %3350 = vmatpush1.bf16.msra.mxu0 %v3331
        %3351 = vmatprep.subr.bf16.mxu0 0
        %3352 = vmatpush1.bf16.msra.mxu0 %v3332
        %3353 = vmatprep.subr.bf16.mxu0 0
        %3354 = vmatpush1.bf16.msra.mxu0 %v3333
        %3355 = vmatprep.subr.bf16.mxu0 0
        %3356 = vmatpush1.bf16.msra.mxu0 %v3334
        %3357 = vmatprep.subr.bf16.mxu0 0
        %3358 = vmatpush1.bf16.msra.mxu0 %v3335
        %3359 = vmatprep.subr.bf16.mxu0 0
        %3360 = vmatpush1.bf16.msra.mxu0 %v3336
        %3361 = vmatprep.subr.bf16.mxu0 0
        %3362 = vmatpush1.bf16.msra.mxu0 0
        %3363 = vmatprep.subr.bf16.mxu0 0
        %3364 = vmatpush1.bf16.msra.mxu0 0
        %3365 = vmatprep.subr.bf16.mxu0 0
        %3366 = vmatpush1.bf16.msra.mxu0 0
        %3367 = vmatprep.subr.bf16.mxu0 0
        %3368 = vmatpush1.bf16.msra.mxu0 0
        %3369 = vmatprep.subr.bf16.mxu0 0
        %3370 = vmatpush1.bf16.msra.mxu0 0
        %3371 = vmatprep.subr.bf16.mxu0 0
        %3372 = vmatpush1.bf16.msra.mxu0 0
        %3373 = vmatprep.subr.bf16.mxu0 0
        %3374 = vmatpush1.bf16.msra.mxu0 0
        %3375 = vmatprep.subr.bf16.mxu0 0
        %3376 = vmatpush1.bf16.msra.mxu0 0
        %3377 = vmatprep.mubr.bf16.mxu0 0
        %3378 = vmatmul.mubr.bf16.gmra.mrb[0].mxu0 %v3292
        %v3379 = vpop.f32.mrb[0].mxu0
        %v3380 = vadd.f32 0.0, %v3379
        %v3381 = vpop.f32.mrb[0].mxu0
        %v3382 = vpop.f32.mrb[0].mxu0
        %v3383 = vadd.f32 0.0, %v3382
        %v3384 = vpop.f32.mrb[0].mxu0
        %3385 = vmatprep.mubr.bf16.mxu0 0
        %3386 = vmatmul.mubr.bf16.gmra.mrb[0].mxu0 %v3293
        %v3387 = vpop.f32.mrb[0].mxu0
        %v3388 = vadd.f32 0.0, %v3387
        %v3389 = vpop.f32.mrb[0].mxu0
        %v3390 = vpop.f32.mrb[0].mxu0
        %v3391 = vadd.f32 0.0, %v3390
        %v3392 = vpop.f32.mrb[0].mxu0
        %3393 = vmatprep.mubr.bf16.mxu0 0
        %3394 = vmatmul.mubr.bf16.gmra.mrb[0].mxu0 %v3294
        %v3395 = vpop.f32.mrb[0].mxu0
        %v3396 = vpop.f32.mrb[0].mxu0
        %v3397 = vpop.f32.mrb[0].mxu0
        %v3398 = vadd.f32 0.0, %v3397
        %v3399 = vpop.f32.mrb[0].mxu0
        %3400 = vmatprep.mubr.bf16.mxu0 0
        %3401 = vmatmul.mubr.bf16.gmra.mrb[0].mxu0 %v3295
        %v3402 = vpop.f32.mrb[0].mxu0
        %v3403 = vadd.f32 0.0, %v3402
        %v3404 = vpop.f32.mrb[0].mxu0
        %v3405 = vpop.f32.mrb[0].mxu0
        %v3406 = vadd.f32 0.0, %v3405
        %v3407 = vpop.f32.mrb[0].mxu0
        %3408 = vmatprep.mubr.bf16.mxu0 0
        %3409 = vmatmul.mubr.bf16.gmra.mrb[0].mxu0 %v3296
        %v3410 = vpop.f32.mrb[0].mxu0
        %v3411 = vadd.f32 0.0, %v3410
        %v3412 = vpop.f32.mrb[0].mxu0
        %v3413 = vpop.f32.mrb[0].mxu0
        %v3414 = vpop.f32.mrb[0].mxu0
        %3415 = vdwg.mxu0
        %v3416 = vadd.f32 %v3230, %v3380
        %v3417 = vadd.f32 %v3233, %v3383
        %v3418 = vadd.f32 %v3238, %v3388
        %v3419 = vadd.f32 %v3241, %v3391
        %v3420 = vadd.f32 %v3248, %v3398
        %v3421 = vadd.f32 %v3253, %v3403
        %v3422 = vadd.f32 %v3256, %v3406
        %v3423 = vadd.f32 %v3261, %v3411
        %v3424 = vld [vmem:[#allocation2 + $0x9] sm:$0xff]
        %v3425 = vld [vmem:[#allocation2 + $0x11] sm:$0xff]
        %v3426 = vld [vmem:[#allocation2 + $0x19] sm:$0xff]
        %v3427 = vld [vmem:[#allocation2 + $0x21] sm:$0xff]
        %v3428 = vld [vmem:[#allocation2 + $0x29] sm:$0xff]
        %v3429 = vld [vmem:[#allocation2 + $0x31] sm:$0xff]
        %v3430 = vld [vmem:[#allocation2 + $0x39] sm:$0xff]
        %v3431 = vld [vmem:[#allocation2 + $0x41] sm:$0xff]
        %v3432 = vld [vmem:[#allocation2 + $0x49] sm:$0xff]
        %s3433 = scalar_lea.vmem [#allocation4], 1152
        %v3434 = vld [vmem:[%s3433] sm:$0xf]
        %v3435 = vld [vmem:[%s3433 + $0x4] sm:$0xf]
        %v3436 = vld [vmem:[%s3433 + $0x8] sm:$0xf]
        %v3437 = vld [vmem:[%s3433 + $0xc] sm:$0xf]
        %v3438 = vld [vmem:[%s3433 + $0x10] sm:$0xf]
        %v3439 = vld [vmem:[%s3433 + $0x14] sm:$0xf]
        %v3440 = vld [vmem:[%s3433 + $0x18] sm:$0xf]
        %v3441 = vld [vmem:[%s3433 + $0x1c] sm:$0xf]
        %v3442 = vld [vmem:[%s3433 + $0x20] sm:$0xf]
        %v3443 = vld [vmem:[%s3433 + $0x24] sm:$0xf]
        %v3444 = vld [vmem:[%s3433 + $0x28] sm:$0xf]
        %v3445 = vld [vmem:[%s3433 + $0x2c] sm:$0xf]
        %v3446 = vld [vmem:[%s3433 + $0x30] sm:$0xf]
        %v3447 = vld [vmem:[%s3433 + $0x34] sm:$0xf]
        %v3448 = vld [vmem:[%s3433 + $0x38] sm:$0xf]
        %v3449 = vld [vmem:[%s3433 + $0x3c] sm:$0xf]
        %v3450 = vpack.c.bf16 %v3425, %v3424
        %v3451 = vpack.c.bf16 %v3427, %v3426
        %v3452 = vpack.c.bf16 %v3429, %v3428
        %v3453 = vpack.c.bf16 %v3431, %v3430
        %v3454 = vpack.c.bf16 %v3432, %v3432
        %v3471 = vunpack.c.l.b16 %v3434
        %v3472 = vunpack.c.l.b16 %v3435
        %v3473 = vunpack.c.l.b16 %v3436
        %v3474 = vunpack.c.l.b16 %v3437
        %v3475 = vunpack.c.l.b16 %v3438
        %v3476 = vunpack.c.l.b16 %v3439
        %v3477 = vunpack.c.l.b16 %v3440
        %v3478 = vunpack.c.l.b16 %v3441
        %v3479 = vunpack.c.l.b16 %v3442
        %v3480 = vunpack.c.l.b16 %v3443
        %v3481 = vunpack.c.l.b16 %v3444
        %v3482 = vunpack.c.l.b16 %v3445
        %v3483 = vunpack.c.l.b16 %v3446
        %v3484 = vunpack.c.l.b16 %v3447
        %v3485 = vunpack.c.l.b16 %v3448
        %v3486 = vunpack.c.l.b16 %v3449
        %v3487 = vpack.c.b16 %v3472, %v3471
        %v3488 = vpack.c.b16 %v3474, %v3473
        %v3489 = vpack.c.b16 %v3476, %v3475
        %v3490 = vpack.c.b16 %v3478, %v3477
        %v3491 = vpack.c.b16 %v3480, %v3479
        %v3492 = vpack.c.b16 %v3482, %v3481
        %v3493 = vpack.c.b16 %v3484, %v3483
        %v3494 = vpack.c.b16 %v3486, %v3485
        %3503 = vmatprep.subr.bf16.mxu0 0
        %3504 = vmatpush1.bf16.msra.mxu0 %v3487
        %3505 = vmatprep.subr.bf16.mxu0 0
        %3506 = vmatpush1.bf16.msra.mxu0 %v3488
        %3507 = vmatprep.subr.bf16.mxu0 0
        %3508 = vmatpush1.bf16.msra.mxu0 %v3489
        %3509 = vmatprep.subr.bf16.mxu0 0
        %3510 = vmatpush1.bf16.msra.mxu0 %v3490
        %3511 = vmatprep.subr.bf16.mxu0 0
        %3512 = vmatpush1.bf16.msra.mxu0 %v3491
        %3513 = vmatprep.subr.bf16.mxu0 0
        %3514 = vmatpush1.bf16.msra.mxu0 %v3492
        %3515 = vmatprep.subr.bf16.mxu0 0
        %3516 = vmatpush1.bf16.msra.mxu0 %v3493
        %3517 = vmatprep.subr.bf16.mxu0 0
        %3518 = vmatpush1.bf16.msra.mxu0 %v3494
        %3519 = vmatprep.subr.bf16.mxu0 0
        %3520 = vmatpush1.bf16.msra.mxu0 0
        %3521 = vmatprep.subr.bf16.mxu0 0
        %3522 = vmatpush1.bf16.msra.mxu0 0
        %3523 = vmatprep.subr.bf16.mxu0 0
        %3524 = vmatpush1.bf16.msra.mxu0 0
        %3525 = vmatprep.subr.bf16.mxu0 0
        %3526 = vmatpush1.bf16.msra.mxu0 0
        %3527 = vmatprep.subr.bf16.mxu0 0
        %3528 = vmatpush1.bf16.msra.mxu0 0
        %3529 = vmatprep.subr.bf16.mxu0 0
        %3530 = vmatpush1.bf16.msra.mxu0 0
        %3531 = vmatprep.subr.bf16.mxu0 0
        %3532 = vmatpush1.bf16.msra.mxu0 0
        %3533 = vmatprep.subr.bf16.mxu0 0
        %3534 = vmatpush1.bf16.msra.mxu0 0
        %3535 = vmatprep.mubr.bf16.mxu0 0
        %3536 = vmatmul.mubr.bf16.gmra.mrb[0].mxu0 %v3450
        %v3537 = vpop.f32.mrb[0].mxu0
        %v3538 = vadd.f32 0.0, %v3537
        %v3539 = vpop.f32.mrb[0].mxu0
        %v3540 = vpop.f32.mrb[0].mxu0
        %v3541 = vadd.f32 0.0, %v3540
        %v3542 = vpop.f32.mrb[0].mxu0
        %3543 = vmatprep.mubr.bf16.mxu0 0
        %3544 = vmatmul.mubr.bf16.gmra.mrb[0].mxu0 %v3451
        %v3545 = vpop.f32.mrb[0].mxu0
        %v3546 = vadd.f32 0.0, %v3545
        %v3547 = vpop.f32.mrb[0].mxu0
        %v3548 = vpop.f32.mrb[0].mxu0
        %v3549 = vadd.f32 0.0, %v3548
        %v3550 = vpop.f32.mrb[0].mxu0
        %3551 = vmatprep.mubr.bf16.mxu0 0
        %3552 = vmatmul.mubr.bf16.gmra.mrb[0].mxu0 %v3452
        %v3553 = vpop.f32.mrb[0].mxu0
        %v3554 = vpop.f32.mrb[0].mxu0
        %v3555 = vpop.f32.mrb[0].mxu0
        %v3556 = vadd.f32 0.0, %v3555
        %v3557 = vpop.f32.mrb[0].mxu0
        %3558 = vmatprep.mubr.bf16.mxu0 0
        %3559 = vmatmul.mubr.bf16.gmra.mrb[0].mxu0 %v3453
        %v3560 = vpop.f32.mrb[0].mxu0
        %v3561 = vadd.f32 0.0, %v3560
        %v3562 = vpop.f32.mrb[0].mxu0
        %v3563 = vpop.f32.mrb[0].mxu0
        %v3564 = vadd.f32 0.0, %v3563
        %v3565 = vpop.f32.mrb[0].mxu0
        %3566 = vmatprep.mubr.bf16.mxu0 0
        %3567 = vmatmul.mubr.bf16.gmra.mrb[0].mxu0 %v3454
        %v3568 = vpop.f32.mrb[0].mxu0
        %v3569 = vadd.f32 0.0, %v3568
        %v3570 = vpop.f32.mrb[0].mxu0
        %v3571 = vpop.f32.mrb[0].mxu0
        %v3572 = vpop.f32.mrb[0].mxu0
        %3573 = vdwg.mxu0
        %v3574 = vadd.f32 %v3416, %v3538
        %v3575 = vadd.f32 %v3417, %v3541
        %v3576 = vadd.f32 %v3418, %v3546
        %v3577 = vadd.f32 %v3419, %v3549
        %v3578 = vadd.f32 %v3420, %v3556
        %v3579 = vadd.f32 %v3421, %v3561
        %v3580 = vadd.f32 %v3422, %v3564
        %v3581 = vadd.f32 %v3423, %v3569
        %v3582 = vld [vmem:[#allocation2 + $0xa] sm:$0xff]
        %v3583 = vld [vmem:[#allocation2 + $0x12] sm:$0xff]
        %v3584 = vld [vmem:[#allocation2 + $0x1a] sm:$0xff]
        %v3585 = vld [vmem:[#allocation2 + $0x22] sm:$0xff]
        %v3586 = vld [vmem:[#allocation2 + $0x2a] sm:$0xff]
        %v3587 = vld [vmem:[#allocation2 + $0x32] sm:$0xff]
        %v3588 = vld [vmem:[#allocation2 + $0x3a] sm:$0xff]
        %v3589 = vld [vmem:[#allocation2 + $0x42] sm:$0xff]
        %v3590 = vld [vmem:[#allocation2 + $0x4a] sm:$0xff]
        %s3591 = scalar_lea.vmem [#allocation4], 1216
        %v3592 = vld [vmem:[%s3591] sm:$0xf]
        %v3593 = vld [vmem:[%s3591 + $0x4] sm:$0xf]
        %v3594 = vld [vmem:[%s3591 + $0x8] sm:$0xf]
        %v3595 = vld [vmem:[%s3591 + $0xc] sm:$0xf]
        %v3596 = vld [vmem:[%s3591 + $0x10] sm:$0xf]
        %v3597 = vld [vmem:[%s3591 + $0x14] sm:$0xf]
        %v3598 = vld [vmem:[%s3591 + $0x18] sm:$0xf]
        %v3599 = vld [vmem:[%s3591 + $0x1c] sm:$0xf]
        %v3600 = vld [vmem:[%s3591 + $0x20] sm:$0xf]
        %v3601 = vld [vmem:[%s3591 + $0x24] sm:$0xf]
        %v3602 = vld [vmem:[%s3591 + $0x28] sm:$0xf]
        %v3603 = vld [vmem:[%s3591 + $0x2c] sm:$0xf]
        %v3604 = vld [vmem:[%s3591 + $0x30] sm:$0xf]
        %v3605 = vld [vmem:[%s3591 + $0x34] sm:$0xf]
        %v3606 = vld [vmem:[%s3591 + $0x38] sm:$0xf]
        %v3607 = vld [vmem:[%s3591 + $0x3c] sm:$0xf]
        %v3608 = vpack.c.bf16 %v3583, %v3582
        %v3609 = vpack.c.bf16 %v3585, %v3584
        %v3610 = vpack.c.bf16 %v3587, %v3586
        %v3611 = vpack.c.bf16 %v3589, %v3588
        %v3612 = vpack.c.bf16 %v3590, %v3590
        %v3629 = vunpack.c.l.b16 %v3592
        %v3630 = vunpack.c.l.b16 %v3593
        %v3631 = vunpack.c.l.b16 %v3594
        %v3632 = vunpack.c.l.b16 %v3595
        %v3633 = vunpack.c.l.b16 %v3596
        %v3634 = vunpack.c.l.b16 %v3597
        %v3635 = vunpack.c.l.b16 %v3598
        %v3636 = vunpack.c.l.b16 %v3599
        %v3637 = vunpack.c.l.b16 %v3600
        %v3638 = vunpack.c.l.b16 %v3601
        %v3639 = vunpack.c.l.b16 %v3602
        %v3640 = vunpack.c.l.b16 %v3603
        %v3641 = vunpack.c.l.b16 %v3604
        %v3642 = vunpack.c.l.b16 %v3605
        %v3643 = vunpack.c.l.b16 %v3606
        %v3644 = vunpack.c.l.b16 %v3607
        %v3645 = vpack.c.b16 %v3630, %v3629
        %v3646 = vpack.c.b16 %v3632, %v3631
        %v3647 = vpack.c.b16 %v3634, %v3633
        %v3648 = vpack.c.b16 %v3636, %v3635
        %v3649 = vpack.c.b16 %v3638, %v3637
        %v3650 = vpack.c.b16 %v3640, %v3639
        %v3651 = vpack.c.b16 %v3642, %v3641
        %v3652 = vpack.c.b16 %v3644, %v3643
        %3661 = vmatprep.subr.bf16.mxu0 0
        %3662 = vmatpush1.bf16.msra.mxu0 %v3645
        %3663 = vmatprep.subr.bf16.mxu0 0
        %3664 = vmatpush1.bf16.msra.mxu0 %v3646
        %3665 = vmatprep.subr.bf16.mxu0 0
        %3666 = vmatpush1.bf16.msra.mxu0 %v3647
        %3667 = vmatprep.subr.bf16.mxu0 0
        %3668 = vmatpush1.bf16.msra.mxu0 %v3648
        %3669 = vmatprep.subr.bf16.mxu0 0
        %3670 = vmatpush1.bf16.msra.mxu0 %v3649
        %3671 = vmatprep.subr.bf16.mxu0 0
        %3672 = vmatpush1.bf16.msra.mxu0 %v3650
        %3673 = vmatprep.subr.bf16.mxu0 0
        %3674 = vmatpush1.bf16.msra.mxu0 %v3651
        %3675 = vmatprep.subr.bf16.mxu0 0
        %3676 = vmatpush1.bf16.msra.mxu0 %v3652
        %3677 = vmatprep.subr.bf16.mxu0 0
        %3678 = vmatpush1.bf16.msra.mxu0 0
        %3679 = vmatprep.subr.bf16.mxu0 0
        %3680 = vmatpush1.bf16.msra.mxu0 0
        %3681 = vmatprep.subr.bf16.mxu0 0
        %3682 = vmatpush1.bf16.msra.mxu0 0
        %3683 = vmatprep.subr.bf16.mxu0 0
        %3684 = vmatpush1.bf16.msra.mxu0 0
        %3685 = vmatprep.subr.bf16.mxu0 0
        %3686 = vmatpush1.bf16.msra.mxu0 0
        %3687 = vmatprep.subr.bf16.mxu0 0
        %3688 = vmatpush1.bf16.msra.mxu0 0
        %3689 = vmatprep.subr.bf16.mxu0 0
        %3690 = vmatpush1.bf16.msra.mxu0 0
        %3691 = vmatprep.subr.bf16.mxu0 0
        %3692 = vmatpush1.bf16.msra.mxu0 0
        %3693 = vmatprep.mubr.bf16.mxu0 0
        %3694 = vmatmul.mubr.bf16.gmra.mrb[0].mxu0 %v3608
        %v3695 = vpop.f32.mrb[0].mxu0
        %v3696 = vadd.f32 0.0, %v3695
        %v3697 = vpop.f32.mrb[0].mxu0
        %v3698 = vpop.f32.mrb[0].mxu0
        %v3699 = vadd.f32 0.0, %v3698
        %v3700 = vpop.f32.mrb[0].mxu0
        %3701 = vmatprep.mubr.bf16.mxu0 0
        %3702 = vmatmul.mubr.bf16.gmra.mrb[0].mxu0 %v3609
        %v3703 = vpop.f32.mrb[0].mxu0
        %v3704 = vadd.f32 0.0, %v3703
        %v3705 = vpop.f32.mrb[0].mxu0
        %v3706 = vpop.f32.mrb[0].mxu0
        %v3707 = vadd.f32 0.0, %v3706
        %v3708 = vpop.f32.mrb[0].mxu0
        %3709 = vmatprep.mubr.bf16.mxu0 0
        %3710 = vmatmul.mubr.bf16.gmra.mrb[0].mxu0 %v3610
        %v3711 = vpop.f32.mrb[0].mxu0
        %v3712 = vpop.f32.mrb[0].mxu0
        %v3713 = vpop.f32.mrb[0].mxu0
        %v3714 = vadd.f32 0.0, %v3713
        %v3715 = vpop.f32.mrb[0].mxu0
        %3716 = vmatprep.mubr.bf16.mxu0 0
        %3717 = vmatmul.mubr.bf16.gmra.mrb[0].mxu0 %v3611
        %v3718 = vpop.f32.mrb[0].mxu0
        %v3719 = vadd.f32 0.0, %v3718
        %v3720 = vpop.f32.mrb[0].mxu0
        %v3721 = vpop.f32.mrb[0].mxu0
        %v3722 = vadd.f32 0.0, %v3721
        %v3723 = vpop.f32.mrb[0].mxu0
        %3724 = vmatprep.mubr.bf16.mxu0 0
        %3725 = vmatmul.mubr.bf16.gmra.mrb[0].mxu0 %v3612
        %v3726 = vpop.f32.mrb[0].mxu0
        %v3727 = vadd.f32 0.0, %v3726
        %v3728 = vpop.f32.mrb[0].mxu0
        %v3729 = vpop.f32.mrb[0].mxu0
        %v3730 = vpop.f32.mrb[0].mxu0
        %3731 = vdwg.mxu0
        %v3732 = vadd.f32 %v3574, %v3696
        %v3733 = vadd.f32 %v3575, %v3699
        %v3734 = vadd.f32 %v3576, %v3704
        %v3735 = vadd.f32 %v3577, %v3707
        %v3736 = vadd.f32 %v3578, %v3714
        %v3737 = vadd.f32 %v3579, %v3719
        %v3738 = vadd.f32 %v3580, %v3722
        %v3739 = vadd.f32 %v3581, %v3727
        %s3740 = scalar_lea.vmem [#allocation6], 24
        %v3741 = vld [vmem:[%s3740] sm:$0xff]
        %v3742 = vlaneseq
        %v3743 = vshrl.u32 %v3742, 7
        %v3744 = vsub.s32 0, %v3743
        %v3745 = vrot.slane %v3741, %v3744
        %v3746 = vadd.f32 %v3732, %v3745
        %v3747 = vadd.f32 %v3733, %v3745
        %v3748 = vadd.f32 %v3734, %v3745
        %v3749 = vadd.f32 %v3735, %v3745
        %v3750 = vadd.f32 %v3736, %v3745
        %v3751 = vadd.f32 %v3737, %v3745
        %v3752 = vadd.f32 %v3738, %v3745
        %v3753 = vadd.f32 %v3739, %v3745
        %v3754 = vmax.f32 %v3746, 0.0
        %v3755 = vmax.f32 %v3747, 0.0
        %v3756 = vmax.f32 %v3748, 0.0
        %v3757 = vmax.f32 %v3749, 0.0
        %v3758 = vmax.f32 %v3750, 0.0
        %v3759 = vmax.f32 %v3751, 0.0
        %v3760 = vmax.f32 %v3752, 0.0
        %v3761 = vmax.f32 %v3753, 0.0
        %3762 = vst [vmem:[#allocation2 + $0x8] sm:$0xff] %v3754
        %3763 = vst [vmem:[#allocation2 + $0x10] sm:$0xff] %v3755
        %3764 = vst [vmem:[#allocation2 + $0x18] sm:$0xff] %v3756
        %3765 = vst [vmem:[#allocation2 + $0x20] sm:$0xff] %v3757
        %3766 = vst [vmem:[#allocation2 + $0x30] sm:$0xff] %v3758
        %3767 = vst [vmem:[#allocation2 + $0x38] sm:$0xff] %v3759
        %3768 = vst [vmem:[#allocation2 + $0x40] sm:$0xff] %v3760
        %3769 = vst [vmem:[#allocation2 + $0x48] sm:$0xff] %v3761
        %v3770 = vld [vmem:[#allocation2] sm:$0xff]
        %v3771 = vld [vmem:[#allocation2 + $0x8] sm:$0xff]
        %v3772 = vld [vmem:[#allocation2 + $0x10] sm:$0xff]
        %v3773 = vld [vmem:[#allocation2 + $0x18] sm:$0xff]
        %v3774 = vld [vmem:[#allocation2 + $0x20] sm:$0xff]
        %v3775 = vld [vmem:[#allocation2 + $0x28] sm:$0xff]
        %v3776 = vld [vmem:[#allocation2 + $0x30] sm:$0xff]
        %v3777 = vld [vmem:[#allocation2 + $0x38] sm:$0xff]
        %v3778 = vld [vmem:[#allocation2 + $0x40] sm:$0xff]
        %v3779 = vld [vmem:[#allocation2 + $0x48] sm:$0xff]
        %v3780 = vld [vmem:[#allocation2 + $0x50] sm:$0xff]
        %3781 = vst [vmem:[#allocation3] sm:$0xff] %v3770
        %3782 = vst [vmem:[#allocation3 + $0x8] sm:$0xff] %v3771
        %3783 = vst [vmem:[#allocation3 + $0x10] sm:$0xff] %v3772
        %3784 = vst [vmem:[#allocation3 + $0x18] sm:$0xff] %v3773
        %3785 = vst [vmem:[#allocation3 + $0x20] sm:$0xff] %v3774
        %3786 = vst [vmem:[#allocation3 + $0x28] sm:$0xff] %v3775
        %3787 = vst [vmem:[#allocation3 + $0x30] sm:$0xff] %v3776
        %3788 = vst [vmem:[#allocation3 + $0x38] sm:$0xff] %v3777
        %3789 = vst [vmem:[#allocation3 + $0x40] sm:$0xff] %v3778
        %3790 = vst [vmem:[#allocation3 + $0x48] sm:$0xff] %v3779
        %3791 = vst [vmem:[#allocation3 + $0x50] sm:$0xff] %v3780
        %v3792 = vld [vmem:[#allocation2 + $0x6] sm:$0xff]
        %v3793 = vld [vmem:[#allocation2 + $0xe] sm:$0xff]
        %v3794 = vld [vmem:[#allocation2 + $0x16] sm:$0xff]
        %v3795 = vld [vmem:[#allocation2 + $0x1e] sm:$0xff]
        %v3796 = vld [vmem:[#allocation2 + $0x26] sm:$0xff]
        %v3797 = vld [vmem:[#allocation2 + $0x2e] sm:$0xff]
        %v3798 = vld [vmem:[#allocation2 + $0x36] sm:$0xff]
        %v3799 = vld [vmem:[#allocation2 + $0x3e] sm:$0xff]
        %v3800 = vld [vmem:[#allocation2 + $0x46] sm:$0xff]
        %v3801 = vmax.f32 %v3792, 0.0
        %v3802 = vmax.f32 %v3793, 0.0
        %v3803 = vmax.f32 %v3794, 0.0
        %v3804 = vmax.f32 %v3795, 0.0
        %v3805 = vmax.f32 %v3796, 0.0
        %v3806 = vmax.f32 %v3797, 0.0
        %v3807 = vmax.f32 %v3798, 0.0
        %v3808 = vmax.f32 %v3799, 0.0
        %v3809 = vmax.f32 %v3800, 0.0
        %s3810 = scalar_lea.vmem [#allocation4], 1280
        %v3811 = vld [vmem:[%s3810] sm:$0xf]
        %v3812 = vld [vmem:[%s3810 + $0x4] sm:$0xf]
        %v3813 = vld [vmem:[%s3810 + $0x8] sm:$0xf]
        %v3814 = vld [vmem:[%s3810 + $0xc] sm:$0xf]
        %v3815 = vld [vmem:[%s3810 + $0x10] sm:$0xf]
        %v3816 = vld [vmem:[%s3810 + $0x14] sm:$0xf]
        %v3817 = vld [vmem:[%s3810 + $0x18] sm:$0xf]
        %v3818 = vld [vmem:[%s3810 + $0x1c] sm:$0xf]
        %v3819 = vld [vmem:[%s3810 + $0x20] sm:$0xf]
        %v3820 = vld [vmem:[%s3810 + $0x24] sm:$0xf]
        %v3821 = vld [vmem:[%s3810 + $0x28] sm:$0xf]
        %v3822 = vld [vmem:[%s3810 + $0x2c] sm:$0xf]
        %v3823 = vld [vmem:[%s3810 + $0x30] sm:$0xf]
        %v3824 = vld [vmem:[%s3810 + $0x34] sm:$0xf]
        %v3825 = vld [vmem:[%s3810 + $0x38] sm:$0xf]
        %v3826 = vld [vmem:[%s3810 + $0x3c] sm:$0xf]
        %v3827 = vpack.c.bf16 %v3802, %v3801
        %v3828 = vpack.c.bf16 %v3804, %v3803
        %v3829 = vpack.c.bf16 %v3806, %v3805
        %v3830 = vpack.c.bf16 %v3808, %v3807
        %v3831 = vpack.c.bf16 %v3809, %v3809
        %v3832 = vld [vmem:[#allocation2 + $0x7] sm:$0xff]
        %v3833 = vld [vmem:[#allocation2 + $0xf] sm:$0xff]
        %v3834 = vld [vmem:[#allocation2 + $0x17] sm:$0xff]
        %v3835 = vld [vmem:[#allocation2 + $0x1f] sm:$0xff]
        %v3836 = vld [vmem:[#allocation2 + $0x27] sm:$0xff]
        %v3837 = vld [vmem:[#allocation2 + $0x2f] sm:$0xff]
        %v3838 = vld [vmem:[#allocation2 + $0x37] sm:$0xff]
        %v3839 = vld [vmem:[#allocation2 + $0x3f] sm:$0xff]
        %v3840 = vld [vmem:[#allocation2 + $0x47] sm:$0xff]
        %v3841 = vmax.f32 %v3832, 0.0
        %v3842 = vmax.f32 %v3833, 0.0
        %v3843 = vmax.f32 %v3834, 0.0
        %v3844 = vmax.f32 %v3835, 0.0
        %v3845 = vmax.f32 %v3836, 0.0
        %v3846 = vmax.f32 %v3837, 0.0
        %v3847 = vmax.f32 %v3838, 0.0
        %v3848 = vmax.f32 %v3839, 0.0
        %v3849 = vmax.f32 %v3840, 0.0
        %s3850 = scalar_lea.vmem [#allocation4], 1344
        %v3851 = vld [vmem:[%s3850] sm:$0xf]
        %v3852 = vld [vmem:[%s3850 + $0x4] sm:$0xf]
        %v3853 = vld [vmem:[%s3850 + $0x8] sm:$0xf]
        %v3854 = vld [vmem:[%s3850 + $0xc] sm:$0xf]
        %v3855 = vld [vmem:[%s3850 + $0x10] sm:$0xf]
        %v3856 = vld [vmem:[%s3850 + $0x14] sm:$0xf]
        %v3857 = vld [vmem:[%s3850 + $0x18] sm:$0xf]
        %v3858 = vld [vmem:[%s3850 + $0x1c] sm:$0xf]
        %v3859 = vld [vmem:[%s3850 + $0x20] sm:$0xf]
        %v3860 = vld [vmem:[%s3850 + $0x24] sm:$0xf]
        %v3861 = vld [vmem:[%s3850 + $0x28] sm:$0xf]
        %v3862 = vld [vmem:[%s3850 + $0x2c] sm:$0xf]
        %v3863 = vld [vmem:[%s3850 + $0x30] sm:$0xf]
        %v3864 = vld [vmem:[%s3850 + $0x34] sm:$0xf]
        %v3865 = vld [vmem:[%s3850 + $0x38] sm:$0xf]
        %v3866 = vld [vmem:[%s3850 + $0x3c] sm:$0xf]
        %v3867 = vpack.c.bf16 %v3842, %v3841
        %v3868 = vpack.c.bf16 %v3844, %v3843
        %v3869 = vpack.c.bf16 %v3846, %v3845
        %v3870 = vpack.c.bf16 %v3848, %v3847
        %v3871 = vpack.c.bf16 %v3849, %v3849
        %v3888 = vunpack.c.l.b16 %v3851
        %v3889 = vunpack.c.l.b16 %v3852
        %v3890 = vunpack.c.l.b16 %v3853
        %v3891 = vunpack.c.l.b16 %v3854
        %v3892 = vunpack.c.l.b16 %v3855
        %v3893 = vunpack.c.l.b16 %v3856
        %v3894 = vunpack.c.l.b16 %v3857
        %v3895 = vunpack.c.l.b16 %v3858
        %v3896 = vunpack.c.l.b16 %v3859
        %v3897 = vunpack.c.l.b16 %v3860
        %v3898 = vunpack.c.l.b16 %v3861
        %v3899 = vunpack.c.l.b16 %v3862
        %v3900 = vunpack.c.l.b16 %v3863
        %v3901 = vunpack.c.l.b16 %v3864
        %v3902 = vunpack.c.l.b16 %v3865
        %v3903 = vunpack.c.l.b16 %v3866
        %v3904 = vpack.c.b16 %v3889, %v3888
        %v3905 = vpack.c.b16 %v3891, %v3890
        %v3906 = vpack.c.b16 %v3893, %v3892
        %v3907 = vpack.c.b16 %v3895, %v3894
        %v3908 = vpack.c.b16 %v3897, %v3896
        %v3909 = vpack.c.b16 %v3899, %v3898
        %v3910 = vpack.c.b16 %v3901, %v3900
        %v3911 = vpack.c.b16 %v3903, %v3902
        %3920 = vmatprep.subr.bf16.mxu0 0
        %3921 = vmatpush1.bf16.msra.mxu0 %v3904
        %3922 = vmatprep.subr.bf16.mxu0 0
        %3923 = vmatpush1.bf16.msra.mxu0 %v3905
        %3924 = vmatprep.subr.bf16.mxu0 0
        %3925 = vmatpush1.bf16.msra.mxu0 %v3906
        %3926 = vmatprep.subr.bf16.mxu0 0
        %3927 = vmatpush1.bf16.msra.mxu0 %v3907
        %3928 = vmatprep.subr.bf16.mxu0 0
        %3929 = vmatpush1.bf16.msra.mxu0 %v3908
        %3930 = vmatprep.subr.bf16.mxu0 0
        %3931 = vmatpush1.bf16.msra.mxu0 %v3909
        %3932 = vmatprep.subr.bf16.mxu0 0
        %3933 = vmatpush1.bf16.msra.mxu0 %v3910
        %3934 = vmatprep.subr.bf16.mxu0 0
        %3935 = vmatpush1.bf16.msra.mxu0 %v3911
        %3936 = vmatprep.subr.bf16.mxu0 0
        %3937 = vmatpush1.bf16.msra.mxu0 0
        %3938 = vmatprep.subr.bf16.mxu0 0
        %3939 = vmatpush1.bf16.msra.mxu0 0
        %3940 = vmatprep.subr.bf16.mxu0 0
        %3941 = vmatpush1.bf16.msra.mxu0 0
        %3942 = vmatprep.subr.bf16.mxu0 0
        %3943 = vmatpush1.bf16.msra.mxu0 0
        %3944 = vmatprep.subr.bf16.mxu0 0
        %3945 = vmatpush1.bf16.msra.mxu0 0
        %3946 = vmatprep.subr.bf16.mxu0 0
        %3947 = vmatpush1.bf16.msra.mxu0 0
        %3948 = vmatprep.subr.bf16.mxu0 0
        %3949 = vmatpush1.bf16.msra.mxu0 0
        %3950 = vmatprep.subr.bf16.mxu0 0
        %3951 = vmatpush1.bf16.msra.mxu0 0
        %3952 = vmatprep.mubr.bf16.mxu0 0
        %3953 = vmatmul.mubr.bf16.gmra.mrb[0].mxu0 %v3867
        %v3954 = vpop.f32.mrb[0].mxu0
        %v3955 = vadd.f32 0.0, %v3954
        %v3956 = vpop.f32.mrb[0].mxu0
        %v3957 = vpop.f32.mrb[0].mxu0
        %v3958 = vadd.f32 0.0, %v3957
        %v3959 = vpop.f32.mrb[0].mxu0
        %3960 = vmatprep.mubr.bf16.mxu0 0
        %3961 = vmatmul.mubr.bf16.gmra.mrb[0].mxu0 %v3868
        %v3962 = vpop.f32.mrb[0].mxu0
        %v3963 = vadd.f32 0.0, %v3962
        %v3964 = vpop.f32.mrb[0].mxu0
        %v3965 = vpop.f32.mrb[0].mxu0
        %v3966 = vadd.f32 0.0, %v3965
        %v3967 = vpop.f32.mrb[0].mxu0
        %3968 = vmatprep.mubr.bf16.mxu0 0
        %3969 = vmatmul.mubr.bf16.gmra.mrb[0].mxu0 %v3869
        %v3970 = vpop.f32.mrb[0].mxu0
        %v3971 = vpop.f32.mrb[0].mxu0
        %v3972 = vpop.f32.mrb[0].mxu0
        %v3973 = vadd.f32 0.0, %v3972
        %v3974 = vpop.f32.mrb[0].mxu0
        %3975 = vmatprep.mubr.bf16.mxu0 0
        %3976 = vmatmul.mubr.bf16.gmra.mrb[0].mxu0 %v3870
        %v3977 = vpop.f32.mrb[0].mxu0
        %v3978 = vadd.f32 0.0, %v3977
        %v3979 = vpop.f32.mrb[0].mxu0
        %v3980 = vpop.f32.mrb[0].mxu0
        %v3981 = vadd.f32 0.0, %v3980
        %v3982 = vpop.f32.mrb[0].mxu0
        %3983 = vmatprep.mubr.bf16.mxu0 0
        %3984 = vmatmul.mubr.bf16.gmra.mrb[0].mxu0 %v3871
        %v3985 = vpop.f32.mrb[0].mxu0
        %v3986 = vadd.f32 0.0, %v3985
        %v3987 = vpop.f32.mrb[0].mxu0
        %v3988 = vpop.f32.mrb[0].mxu0
        %v3989 = vpop.f32.mrb[0].mxu0
        %3990 = vdwg.mxu0
        %v4007 = vunpack.c.l.b16 %v3811
        %v4008 = vunpack.c.l.b16 %v3812
        %v4009 = vunpack.c.l.b16 %v3813
        %v4010 = vunpack.c.l.b16 %v3814
        %v4011 = vunpack.c.l.b16 %v3815
        %v4012 = vunpack.c.l.b16 %v3816
        %v4013 = vunpack.c.l.b16 %v3817
        %v4014 = vunpack.c.l.b16 %v3818
        %v4015 = vunpack.c.l.b16 %v3819
        %v4016 = vunpack.c.l.b16 %v3820
        %v4017 = vunpack.c.l.b16 %v3821
        %v4018 = vunpack.c.l.b16 %v3822
        %v4019 = vunpack.c.l.b16 %v3823
        %v4020 = vunpack.c.l.b16 %v3824
        %v4021 = vunpack.c.l.b16 %v3825
        %v4022 = vunpack.c.l.b16 %v3826
        %v4023 = vpack.c.b16 %v4008, %v4007
        %v4024 = vpack.c.b16 %v4010, %v4009
        %v4025 = vpack.c.b16 %v4012, %v4011
        %v4026 = vpack.c.b16 %v4014, %v4013
        %v4027 = vpack.c.b16 %v4016, %v4015
        %v4028 = vpack.c.b16 %v4018, %v4017
        %v4029 = vpack.c.b16 %v4020, %v4019
        %v4030 = vpack.c.b16 %v4022, %v4021
        %4039 = vmatprep.subr.bf16.mxu0 0
        %4040 = vmatpush1.bf16.msra.mxu0 %v4023
        %4041 = vmatprep.subr.bf16.mxu0 0
        %4042 = vmatpush1.bf16.msra.mxu0 %v4024
        %4043 = vmatprep.subr.bf16.mxu0 0
        %4044 = vmatpush1.bf16.msra.mxu0 %v4025
        %4045 = vmatprep.subr.bf16.mxu0 0
        %4046 = vmatpush1.bf16.msra.mxu0 %v4026
        %4047 = vmatprep.subr.bf16.mxu0 0
        %4048 = vmatpush1.bf16.msra.mxu0 %v4027
        %4049 = vmatprep.subr.bf16.mxu0 0
        %4050 = vmatpush1.bf16.msra.mxu0 %v4028
        %4051 = vmatprep.subr.bf16.mxu0 0
        %4052 = vmatpush1.bf16.msra.mxu0 %v4029
        %4053 = vmatprep.subr.bf16.mxu0 0
        %4054 = vmatpush1.bf16.msra.mxu0 %v4030
        %4055 = vmatprep.subr.bf16.mxu0 0
        %4056 = vmatpush1.bf16.msra.mxu0 0
        %4057 = vmatprep.subr.bf16.mxu0 0
        %4058 = vmatpush1.bf16.msra.mxu0 0
        %4059 = vmatprep.subr.bf16.mxu0 0
        %4060 = vmatpush1.bf16.msra.mxu0 0
        %4061 = vmatprep.subr.bf16.mxu0 0
        %4062 = vmatpush1.bf16.msra.mxu0 0
        %4063 = vmatprep.subr.bf16.mxu0 0
        %4064 = vmatpush1.bf16.msra.mxu0 0
        %4065 = vmatprep.subr.bf16.mxu0 0
        %4066 = vmatpush1.bf16.msra.mxu0 0
        %4067 = vmatprep.subr.bf16.mxu0 0
        %4068 = vmatpush1.bf16.msra.mxu0 0
        %4069 = vmatprep.subr.bf16.mxu0 0
        %4070 = vmatpush1.bf16.msra.mxu0 0
        %4071 = vmatprep.mubr.bf16.mxu0 0
        %4072 = vmatmul.mubr.bf16.gmra.mrb[0].mxu0 %v3827
        %v4073 = vpop.f32.mrb[0].mxu0
        %v4074 = vadd.f32 %v3955, %v4073
        %v4075 = vpop.f32.mrb[0].mxu0
        %v4076 = vpop.f32.mrb[0].mxu0
        %v4077 = vadd.f32 %v3958, %v4076
        %v4078 = vpop.f32.mrb[0].mxu0
        %4079 = vmatprep.mubr.bf16.mxu0 0
        %4080 = vmatmul.mubr.bf16.gmra.mrb[0].mxu0 %v3828
        %v4081 = vpop.f32.mrb[0].mxu0
        %v4082 = vadd.f32 %v3963, %v4081
        %v4083 = vpop.f32.mrb[0].mxu0
        %v4084 = vpop.f32.mrb[0].mxu0
        %v4085 = vadd.f32 %v3966, %v4084
        %v4086 = vpop.f32.mrb[0].mxu0
        %4087 = vmatprep.mubr.bf16.mxu0 0
        %4088 = vmatmul.mubr.bf16.gmra.mrb[0].mxu0 %v3829
        %v4089 = vpop.f32.mrb[0].mxu0
        %v4090 = vpop.f32.mrb[0].mxu0
        %v4091 = vpop.f32.mrb[0].mxu0
        %v4092 = vadd.f32 %v3973, %v4091
        %v4093 = vpop.f32.mrb[0].mxu0
        %4094 = vmatprep.mubr.bf16.mxu0 0
        %4095 = vmatmul.mubr.bf16.gmra.mrb[0].mxu0 %v3830
        %v4096 = vpop.f32.mrb[0].mxu0
        %v4097 = vadd.f32 %v3978, %v4096
        %v4098 = vpop.f32.mrb[0].mxu0
        %v4099 = vpop.f32.mrb[0].mxu0
        %v4100 = vadd.f32 %v3981, %v4099
        %v4101 = vpop.f32.mrb[0].mxu0
        %4102 = vmatprep.mubr.bf16.mxu0 0
        %4103 = vmatmul.mubr.bf16.gmra.mrb[0].mxu0 %v3831
        %v4104 = vpop.f32.mrb[0].mxu0
        %v4105 = vadd.f32 %v3986, %v4104
        %v4106 = vpop.f32.mrb[0].mxu0
        %v4107 = vpop.f32.mrb[0].mxu0
        %v4108 = vpop.f32.mrb[0].mxu0
        %4109 = vdwg.mxu0
        %v4110 = vld [vmem:[#allocation2 + $0x8] sm:$0xff]
        %v4111 = vld [vmem:[#allocation2 + $0x10] sm:$0xff]
        %v4112 = vld [vmem:[#allocation2 + $0x18] sm:$0xff]
        %v4113 = vld [vmem:[#allocation2 + $0x20] sm:$0xff]
        %v4114 = vld [vmem:[#allocation2 + $0x28] sm:$0xff]
        %v4115 = vld [vmem:[#allocation2 + $0x30] sm:$0xff]
        %v4116 = vld [vmem:[#allocation2 + $0x38] sm:$0xff]
        %v4117 = vld [vmem:[#allocation2 + $0x40] sm:$0xff]
        %v4118 = vld [vmem:[#allocation2 + $0x48] sm:$0xff]
        %v4119 = vmax.f32 %v4110, 0.0
        %v4120 = vmax.f32 %v4111, 0.0
        %v4121 = vmax.f32 %v4112, 0.0
        %v4122 = vmax.f32 %v4113, 0.0
        %v4123 = vmax.f32 %v4114, 0.0
        %v4124 = vmax.f32 %v4115, 0.0
        %v4125 = vmax.f32 %v4116, 0.0
        %v4126 = vmax.f32 %v4117, 0.0
        %v4127 = vmax.f32 %v4118, 0.0
        %s4128 = scalar_lea.vmem [#allocation4], 1408
        %v4129 = vld [vmem:[%s4128] sm:$0xf]
        %v4130 = vld [vmem:[%s4128 + $0x4] sm:$0xf]
        %v4131 = vld [vmem:[%s4128 + $0x8] sm:$0xf]
        %v4132 = vld [vmem:[%s4128 + $0xc] sm:$0xf]
        %v4133 = vld [vmem:[%s4128 + $0x10] sm:$0xf]
        %v4134 = vld [vmem:[%s4128 + $0x14] sm:$0xf]
        %v4135 = vld [vmem:[%s4128 + $0x18] sm:$0xf]
        %v4136 = vld [vmem:[%s4128 + $0x1c] sm:$0xf]
        %v4137 = vld [vmem:[%s4128 + $0x20] sm:$0xf]
        %v4138 = vld [vmem:[%s4128 + $0x24] sm:$0xf]
        %v4139 = vld [vmem:[%s4128 + $0x28] sm:$0xf]
        %v4140 = vld [vmem:[%s4128 + $0x2c] sm:$0xf]
        %v4141 = vld [vmem:[%s4128 + $0x30] sm:$0xf]
        %v4142 = vld [vmem:[%s4128 + $0x34] sm:$0xf]
        %v4143 = vld [vmem:[%s4128 + $0x38] sm:$0xf]
        %v4144 = vld [vmem:[%s4128 + $0x3c] sm:$0xf]
        %v4145 = vpack.c.bf16 %v4120, %v4119
        %v4146 = vpack.c.bf16 %v4122, %v4121
        %v4147 = vpack.c.bf16 %v4124, %v4123
        %v4148 = vpack.c.bf16 %v4126, %v4125
        %v4149 = vpack.c.bf16 %v4127, %v4127
        %v4166 = vunpack.c.l.b16 %v4129
        %v4167 = vunpack.c.l.b16 %v4130
        %v4168 = vunpack.c.l.b16 %v4131
        %v4169 = vunpack.c.l.b16 %v4132
        %v4170 = vunpack.c.l.b16 %v4133
        %v4171 = vunpack.c.l.b16 %v4134
        %v4172 = vunpack.c.l.b16 %v4135
        %v4173 = vunpack.c.l.b16 %v4136
        %v4174 = vunpack.c.l.b16 %v4137
        %v4175 = vunpack.c.l.b16 %v4138
        %v4176 = vunpack.c.l.b16 %v4139
        %v4177 = vunpack.c.l.b16 %v4140
        %v4178 = vunpack.c.l.b16 %v4141
        %v4179 = vunpack.c.l.b16 %v4142
        %v4180 = vunpack.c.l.b16 %v4143
        %v4181 = vunpack.c.l.b16 %v4144
        %v4182 = vpack.c.b16 %v4167, %v4166
        %v4183 = vpack.c.b16 %v4169, %v4168
        %v4184 = vpack.c.b16 %v4171, %v4170
        %v4185 = vpack.c.b16 %v4173, %v4172
        %v4186 = vpack.c.b16 %v4175, %v4174
        %v4187 = vpack.c.b16 %v4177, %v4176
        %v4188 = vpack.c.b16 %v4179, %v4178
        %v4189 = vpack.c.b16 %v4181, %v4180
        %4198 = vmatprep.subr.bf16.mxu0 0
        %4199 = vmatpush1.bf16.msra.mxu0 %v4182
        %4200 = vmatprep.subr.bf16.mxu0 0
        %4201 = vmatpush1.bf16.msra.mxu0 %v4183
        %4202 = vmatprep.subr.bf16.mxu0 0
        %4203 = vmatpush1.bf16.msra.mxu0 %v4184
        %4204 = vmatprep.subr.bf16.mxu0 0
        %4205 = vmatpush1.bf16.msra.mxu0 %v4185
        %4206 = vmatprep.subr.bf16.mxu0 0
        %4207 = vmatpush1.bf16.msra.mxu0 %v4186
        %4208 = vmatprep.subr.bf16.mxu0 0
        %4209 = vmatpush1.bf16.msra.mxu0 %v4187
        %4210 = vmatprep.subr.bf16.mxu0 0
        %4211 = vmatpush1.bf16.msra.mxu0 %v4188
        %4212 = vmatprep.subr.bf16.mxu0 0
        %4213 = vmatpush1.bf16.msra.mxu0 %v4189
        %4214 = vmatprep.subr.bf16.mxu0 0
        %4215 = vmatpush1.bf16.msra.mxu0 0
        %4216 = vmatprep.subr.bf16.mxu0 0
        %4217 = vmatpush1.bf16.msra.mxu0 0
        %4218 = vmatprep.subr.bf16.mxu0 0
        %4219 = vmatpush1.bf16.msra.mxu0 0
        %4220 = vmatprep.subr.bf16.mxu0 0
        %4221 = vmatpush1.bf16.msra.mxu0 0
        %4222 = vmatprep.subr.bf16.mxu0 0
        %4223 = vmatpush1.bf16.msra.mxu0 0
        %4224 = vmatprep.subr.bf16.mxu0 0
        %4225 = vmatpush1.bf16.msra.mxu0 0
        %4226 = vmatprep.subr.bf16.mxu0 0
        %4227 = vmatpush1.bf16.msra.mxu0 0
        %4228 = vmatprep.subr.bf16.mxu0 0
        %4229 = vmatpush1.bf16.msra.mxu0 0
        %4230 = vmatprep.mubr.bf16.mxu0 0
        %4231 = vmatmul.mubr.bf16.gmra.mrb[0].mxu0 %v4145
        %v4232 = vpop.f32.mrb[0].mxu0
        %v4233 = vadd.f32 0.0, %v4232
        %v4234 = vpop.f32.mrb[0].mxu0
        %v4235 = vpop.f32.mrb[0].mxu0
        %v4236 = vadd.f32 0.0, %v4235
        %v4237 = vpop.f32.mrb[0].mxu0
        %4238 = vmatprep.mubr.bf16.mxu0 0
        %4239 = vmatmul.mubr.bf16.gmra.mrb[0].mxu0 %v4146
        %v4240 = vpop.f32.mrb[0].mxu0
        %v4241 = vadd.f32 0.0, %v4240
        %v4242 = vpop.f32.mrb[0].mxu0
        %v4243 = vpop.f32.mrb[0].mxu0
        %v4244 = vadd.f32 0.0, %v4243
        %v4245 = vpop.f32.mrb[0].mxu0
        %4246 = vmatprep.mubr.bf16.mxu0 0
        %4247 = vmatmul.mubr.bf16.gmra.mrb[0].mxu0 %v4147
        %v4248 = vpop.f32.mrb[0].mxu0
        %v4249 = vpop.f32.mrb[0].mxu0
        %v4250 = vpop.f32.mrb[0].mxu0
        %v4251 = vadd.f32 0.0, %v4250
        %v4252 = vpop.f32.mrb[0].mxu0
        %4253 = vmatprep.mubr.bf16.mxu0 0
        %4254 = vmatmul.mubr.bf16.gmra.mrb[0].mxu0 %v4148
        %v4255 = vpop.f32.mrb[0].mxu0
        %v4256 = vadd.f32 0.0, %v4255
        %v4257 = vpop.f32.mrb[0].mxu0
        %v4258 = vpop.f32.mrb[0].mxu0
        %v4259 = vadd.f32 0.0, %v4258
        %v4260 = vpop.f32.mrb[0].mxu0
        %4261 = vmatprep.mubr.bf16.mxu0 0
        %4262 = vmatmul.mubr.bf16.gmra.mrb[0].mxu0 %v4149
        %v4263 = vpop.f32.mrb[0].mxu0
        %v4264 = vadd.f32 0.0, %v4263
        %v4265 = vpop.f32.mrb[0].mxu0
        %v4266 = vpop.f32.mrb[0].mxu0
        %v4267 = vpop.f32.mrb[0].mxu0
        %4268 = vdwg.mxu0
        %v4269 = vadd.f32 %v4074, %v4233
        %v4270 = vadd.f32 %v4077, %v4236
        %v4271 = vadd.f32 %v4082, %v4241
        %v4272 = vadd.f32 %v4085, %v4244
        %v4273 = vadd.f32 %v4092, %v4251
        %v4274 = vadd.f32 %v4097, %v4256
        %v4275 = vadd.f32 %v4100, %v4259
        %v4276 = vadd.f32 %v4105, %v4264
        %v4277 = vld [vmem:[#allocation2 + $0x9] sm:$0xff]
        %v4278 = vld [vmem:[#allocation2 + $0x11] sm:$0xff]
        %v4279 = vld [vmem:[#allocation2 + $0x19] sm:$0xff]
        %v4280 = vld [vmem:[#allocation2 + $0x21] sm:$0xff]
        %v4281 = vld [vmem:[#allocation2 + $0x29] sm:$0xff]
        %v4282 = vld [vmem:[#allocation2 + $0x31] sm:$0xff]
        %v4283 = vld [vmem:[#allocation2 + $0x39] sm:$0xff]
        %v4284 = vld [vmem:[#allocation2 + $0x41] sm:$0xff]
        %v4285 = vld [vmem:[#allocation2 + $0x49] sm:$0xff]
        %v4286 = vmax.f32 %v4277, 0.0
        %v4287 = vmax.f32 %v4278, 0.0
        %v4288 = vmax.f32 %v4279, 0.0
        %v4289 = vmax.f32 %v4280, 0.0
        %v4290 = vmax.f32 %v4281, 0.0
        %v4291 = vmax.f32 %v4282, 0.0
        %v4292 = vmax.f32 %v4283, 0.0
        %v4293 = vmax.f32 %v4284, 0.0
        %v4294 = vmax.f32 %v4285, 0.0
        %s4295 = scalar_lea.vmem [#allocation4], 1472
        %v4296 = vld [vmem:[%s4295] sm:$0xf]
        %v4297 = vld [vmem:[%s4295 + $0x4] sm:$0xf]
        %v4298 = vld [vmem:[%s4295 + $0x8] sm:$0xf]
        %v4299 = vld [vmem:[%s4295 + $0xc] sm:$0xf]
        %v4300 = vld [vmem:[%s4295 + $0x10] sm:$0xf]
        %v4301 = vld [vmem:[%s4295 + $0x14] sm:$0xf]
        %v4302 = vld [vmem:[%s4295 + $0x18] sm:$0xf]
        %v4303 = vld [vmem:[%s4295 + $0x1c] sm:$0xf]
        %v4304 = vld [vmem:[%s4295 + $0x20] sm:$0xf]
        %v4305 = vld [vmem:[%s4295 + $0x24] sm:$0xf]
        %v4306 = vld [vmem:[%s4295 + $0x28] sm:$0xf]
        %v4307 = vld [vmem:[%s4295 + $0x2c] sm:$0xf]
        %v4308 = vld [vmem:[%s4295 + $0x30] sm:$0xf]
        %v4309 = vld [vmem:[%s4295 + $0x34] sm:$0xf]
        %v4310 = vld [vmem:[%s4295 + $0x38] sm:$0xf]
        %v4311 = vld [vmem:[%s4295 + $0x3c] sm:$0xf]
        %v4312 = vpack.c.bf16 %v4287, %v4286
        %v4313 = vpack.c.bf16 %v4289, %v4288
        %v4314 = vpack.c.bf16 %v4291, %v4290
        %v4315 = vpack.c.bf16 %v4293, %v4292
        %v4316 = vpack.c.bf16 %v4294, %v4294
        %v4333 = vunpack.c.l.b16 %v4296
        %v4334 = vunpack.c.l.b16 %v4297
        %v4335 = vunpack.c.l.b16 %v4298
        %v4336 = vunpack.c.l.b16 %v4299
        %v4337 = vunpack.c.l.b16 %v4300
        %v4338 = vunpack.c.l.b16 %v4301
        %v4339 = vunpack.c.l.b16 %v4302
        %v4340 = vunpack.c.l.b16 %v4303
        %v4341 = vunpack.c.l.b16 %v4304
        %v4342 = vunpack.c.l.b16 %v4305
        %v4343 = vunpack.c.l.b16 %v4306
        %v4344 = vunpack.c.l.b16 %v4307
        %v4345 = vunpack.c.l.b16 %v4308
        %v4346 = vunpack.c.l.b16 %v4309
        %v4347 = vunpack.c.l.b16 %v4310
        %v4348 = vunpack.c.l.b16 %v4311
        %v4349 = vpack.c.b16 %v4334, %v4333
        %v4350 = vpack.c.b16 %v4336, %v4335
        %v4351 = vpack.c.b16 %v4338, %v4337
        %v4352 = vpack.c.b16 %v4340, %v4339
        %v4353 = vpack.c.b16 %v4342, %v4341
        %v4354 = vpack.c.b16 %v4344, %v4343
        %v4355 = vpack.c.b16 %v4346, %v4345
        %v4356 = vpack.c.b16 %v4348, %v4347
        %4365 = vmatprep.subr.bf16.mxu0 0
        %4366 = vmatpush1.bf16.msra.mxu0 %v4349
        %4367 = vmatprep.subr.bf16.mxu0 0
        %4368 = vmatpush1.bf16.msra.mxu0 %v4350
        %4369 = vmatprep.subr.bf16.mxu0 0
        %4370 = vmatpush1.bf16.msra.mxu0 %v4351
        %4371 = vmatprep.subr.bf16.mxu0 0
        %4372 = vmatpush1.bf16.msra.mxu0 %v4352
        %4373 = vmatprep.subr.bf16.mxu0 0
        %4374 = vmatpush1.bf16.msra.mxu0 %v4353
        %4375 = vmatprep.subr.bf16.mxu0 0
        %4376 = vmatpush1.bf16.msra.mxu0 %v4354
        %4377 = vmatprep.subr.bf16.mxu0 0
        %4378 = vmatpush1.bf16.msra.mxu0 %v4355
        %4379 = vmatprep.subr.bf16.mxu0 0
        %4380 = vmatpush1.bf16.msra.mxu0 %v4356
        %4381 = vmatprep.subr.bf16.mxu0 0
        %4382 = vmatpush1.bf16.msra.mxu0 0
        %4383 = vmatprep.subr.bf16.mxu0 0
        %4384 = vmatpush1.bf16.msra.mxu0 0
        %4385 = vmatprep.subr.bf16.mxu0 0
        %4386 = vmatpush1.bf16.msra.mxu0 0
        %4387 = vmatprep.subr.bf16.mxu0 0
        %4388 = vmatpush1.bf16.msra.mxu0 0
        %4389 = vmatprep.subr.bf16.mxu0 0
        %4390 = vmatpush1.bf16.msra.mxu0 0
        %4391 = vmatprep.subr.bf16.mxu0 0
        %4392 = vmatpush1.bf16.msra.mxu0 0
        %4393 = vmatprep.subr.bf16.mxu0 0
        %4394 = vmatpush1.bf16.msra.mxu0 0
        %4395 = vmatprep.subr.bf16.mxu0 0
        %4396 = vmatpush1.bf16.msra.mxu0 0
        %4397 = vmatprep.mubr.bf16.mxu0 0
        %4398 = vmatmul.mubr.bf16.gmra.mrb[0].mxu0 %v4312
        %v4399 = vpop.f32.mrb[0].mxu0
        %v4400 = vadd.f32 0.0, %v4399
        %v4401 = vpop.f32.mrb[0].mxu0
        %v4402 = vpop.f32.mrb[0].mxu0
        %v4403 = vadd.f32 0.0, %v4402
        %v4404 = vpop.f32.mrb[0].mxu0
        %4405 = vmatprep.mubr.bf16.mxu0 0
        %4406 = vmatmul.mubr.bf16.gmra.mrb[0].mxu0 %v4313
        %v4407 = vpop.f32.mrb[0].mxu0
        %v4408 = vadd.f32 0.0, %v4407
        %v4409 = vpop.f32.mrb[0].mxu0
        %v4410 = vpop.f32.mrb[0].mxu0
        %v4411 = vadd.f32 0.0, %v4410
        %v4412 = vpop.f32.mrb[0].mxu0
        %4413 = vmatprep.mubr.bf16.mxu0 0
        %4414 = vmatmul.mubr.bf16.gmra.mrb[0].mxu0 %v4314
        %v4415 = vpop.f32.mrb[0].mxu0
        %v4416 = vpop.f32.mrb[0].mxu0
        %v4417 = vpop.f32.mrb[0].mxu0
        %v4418 = vadd.f32 0.0, %v4417
        %v4419 = vpop.f32.mrb[0].mxu0
        %4420 = vmatprep.mubr.bf16.mxu0 0
        %4421 = vmatmul.mubr.bf16.gmra.mrb[0].mxu0 %v4315
        %v4422 = vpop.f32.mrb[0].mxu0
        %v4423 = vadd.f32 0.0, %v4422
        %v4424 = vpop.f32.mrb[0].mxu0
        %v4425 = vpop.f32.mrb[0].mxu0
        %v4426 = vadd.f32 0.0, %v4425
        %v4427 = vpop.f32.mrb[0].mxu0
        %4428 = vmatprep.mubr.bf16.mxu0 0
        %4429 = vmatmul.mubr.bf16.gmra.mrb[0].mxu0 %v4316
        %v4430 = vpop.f32.mrb[0].mxu0
        %v4431 = vadd.f32 0.0, %v4430
        %v4432 = vpop.f32.mrb[0].mxu0
        %v4433 = vpop.f32.mrb[0].mxu0
        %v4434 = vpop.f32.mrb[0].mxu0
        %4435 = vdwg.mxu0
        %v4436 = vadd.f32 %v4269, %v4400
        %v4437 = vadd.f32 %v4270, %v4403
        %v4438 = vadd.f32 %v4271, %v4408
        %v4439 = vadd.f32 %v4272, %v4411
        %v4440 = vadd.f32 %v4273, %v4418
        %v4441 = vadd.f32 %v4274, %v4423
        %v4442 = vadd.f32 %v4275, %v4426
        %v4443 = vadd.f32 %v4276, %v4431
        %v4444 = vld [vmem:[#allocation2 + $0xa] sm:$0xff]
        %v4445 = vld [vmem:[#allocation2 + $0x12] sm:$0xff]
        %v4446 = vld [vmem:[#allocation2 + $0x1a] sm:$0xff]
        %v4447 = vld [vmem:[#allocation2 + $0x22] sm:$0xff]
        %v4448 = vld [vmem:[#allocation2 + $0x2a] sm:$0xff]
        %v4449 = vld [vmem:[#allocation2 + $0x32] sm:$0xff]
        %v4450 = vld [vmem:[#allocation2 + $0x3a] sm:$0xff]
        %v4451 = vld [vmem:[#allocation2 + $0x42] sm:$0xff]
        %v4452 = vld [vmem:[#allocation2 + $0x4a] sm:$0xff]
        %v4453 = vmax.f32 %v4444, 0.0
        %v4454 = vmax.f32 %v4445, 0.0
        %v4455 = vmax.f32 %v4446, 0.0
        %v4456 = vmax.f32 %v4447, 0.0
        %v4457 = vmax.f32 %v4448, 0.0
        %v4458 = vmax.f32 %v4449, 0.0
        %v4459 = vmax.f32 %v4450, 0.0
        %v4460 = vmax.f32 %v4451, 0.0
        %v4461 = vmax.f32 %v4452, 0.0
        %s4462 = scalar_lea.vmem [#allocation4], 1536
        %v4463 = vld [vmem:[%s4462] sm:$0xf]
        %v4464 = vld [vmem:[%s4462 + $0x4] sm:$0xf]
        %v4465 = vld [vmem:[%s4462 + $0x8] sm:$0xf]
        %v4466 = vld [vmem:[%s4462 + $0xc] sm:$0xf]
        %v4467 = vld [vmem:[%s4462 + $0x10] sm:$0xf]
        %v4468 = vld [vmem:[%s4462 + $0x14] sm:$0xf]
        %v4469 = vld [vmem:[%s4462 + $0x18] sm:$0xf]
        %v4470 = vld [vmem:[%s4462 + $0x1c] sm:$0xf]
        %v4471 = vld [vmem:[%s4462 + $0x20] sm:$0xf]
        %v4472 = vld [vmem:[%s4462 + $0x24] sm:$0xf]
        %v4473 = vld [vmem:[%s4462 + $0x28] sm:$0xf]
        %v4474 = vld [vmem:[%s4462 + $0x2c] sm:$0xf]
        %v4475 = vld [vmem:[%s4462 + $0x30] sm:$0xf]
        %v4476 = vld [vmem:[%s4462 + $0x34] sm:$0xf]
        %v4477 = vld [vmem:[%s4462 + $0x38] sm:$0xf]
        %v4478 = vld [vmem:[%s4462 + $0x3c] sm:$0xf]
        %v4479 = vpack.c.bf16 %v4454, %v4453
        %v4480 = vpack.c.bf16 %v4456, %v4455
        %v4481 = vpack.c.bf16 %v4458, %v4457
        %v4482 = vpack.c.bf16 %v4460, %v4459
        %v4483 = vpack.c.bf16 %v4461, %v4461
        %v4500 = vunpack.c.l.b16 %v4463
        %v4501 = vunpack.c.l.b16 %v4464
        %v4502 = vunpack.c.l.b16 %v4465
        %v4503 = vunpack.c.l.b16 %v4466
        %v4504 = vunpack.c.l.b16 %v4467
        %v4505 = vunpack.c.l.b16 %v4468
        %v4506 = vunpack.c.l.b16 %v4469
        %v4507 = vunpack.c.l.b16 %v4470
        %v4508 = vunpack.c.l.b16 %v4471
        %v4509 = vunpack.c.l.b16 %v4472
        %v4510 = vunpack.c.l.b16 %v4473
        %v4511 = vunpack.c.l.b16 %v4474
        %v4512 = vunpack.c.l.b16 %v4475
        %v4513 = vunpack.c.l.b16 %v4476
        %v4514 = vunpack.c.l.b16 %v4477
        %v4515 = vunpack.c.l.b16 %v4478
        %v4516 = vpack.c.b16 %v4501, %v4500
        %v4517 = vpack.c.b16 %v4503, %v4502
        %v4518 = vpack.c.b16 %v4505, %v4504
        %v4519 = vpack.c.b16 %v4507, %v4506
        %v4520 = vpack.c.b16 %v4509, %v4508
        %v4521 = vpack.c.b16 %v4511, %v4510
        %v4522 = vpack.c.b16 %v4513, %v4512
        %v4523 = vpack.c.b16 %v4515, %v4514
        %4532 = vmatprep.subr.bf16.mxu0 0
        %4533 = vmatpush1.bf16.msra.mxu0 %v4516
        %4534 = vmatprep.subr.bf16.mxu0 0
        %4535 = vmatpush1.bf16.msra.mxu0 %v4517
        %4536 = vmatprep.subr.bf16.mxu0 0
        %4537 = vmatpush1.bf16.msra.mxu0 %v4518
        %4538 = vmatprep.subr.bf16.mxu0 0
        %4539 = vmatpush1.bf16.msra.mxu0 %v4519
        %4540 = vmatprep.subr.bf16.mxu0 0
        %4541 = vmatpush1.bf16.msra.mxu0 %v4520
        %4542 = vmatprep.subr.bf16.mxu0 0
        %4543 = vmatpush1.bf16.msra.mxu0 %v4521
        %4544 = vmatprep.subr.bf16.mxu0 0
        %4545 = vmatpush1.bf16.msra.mxu0 %v4522
        %4546 = vmatprep.subr.bf16.mxu0 0
        %4547 = vmatpush1.bf16.msra.mxu0 %v4523
        %4548 = vmatprep.subr.bf16.mxu0 0
        %4549 = vmatpush1.bf16.msra.mxu0 0
        %4550 = vmatprep.subr.bf16.mxu0 0
        %4551 = vmatpush1.bf16.msra.mxu0 0
        %4552 = vmatprep.subr.bf16.mxu0 0
        %4553 = vmatpush1.bf16.msra.mxu0 0
        %4554 = vmatprep.subr.bf16.mxu0 0
        %4555 = vmatpush1.bf16.msra.mxu0 0
        %4556 = vmatprep.subr.bf16.mxu0 0
        %4557 = vmatpush1.bf16.msra.mxu0 0
        %4558 = vmatprep.subr.bf16.mxu0 0
        %4559 = vmatpush1.bf16.msra.mxu0 0
        %4560 = vmatprep.subr.bf16.mxu0 0
        %4561 = vmatpush1.bf16.msra.mxu0 0
        %4562 = vmatprep.subr.bf16.mxu0 0
        %4563 = vmatpush1.bf16.msra.mxu0 0
        %4564 = vmatprep.mubr.bf16.mxu0 0
        %4565 = vmatmul.mubr.bf16.gmra.mrb[0].mxu0 %v4479
        %v4566 = vpop.f32.mrb[0].mxu0
        %v4567 = vadd.f32 0.0, %v4566
        %v4568 = vpop.f32.mrb[0].mxu0
        %v4569 = vpop.f32.mrb[0].mxu0
        %v4570 = vadd.f32 0.0, %v4569
        %v4571 = vpop.f32.mrb[0].mxu0
        %4572 = vmatprep.mubr.bf16.mxu0 0
        %4573 = vmatmul.mubr.bf16.gmra.mrb[0].mxu0 %v4480
        %v4574 = vpop.f32.mrb[0].mxu0
        %v4575 = vadd.f32 0.0, %v4574
        %v4576 = vpop.f32.mrb[0].mxu0
        %v4577 = vpop.f32.mrb[0].mxu0
        %v4578 = vadd.f32 0.0, %v4577
        %v4579 = vpop.f32.mrb[0].mxu0
        %4580 = vmatprep.mubr.bf16.mxu0 0
        %4581 = vmatmul.mubr.bf16.gmra.mrb[0].mxu0 %v4481
        %v4582 = vpop.f32.mrb[0].mxu0
        %v4583 = vpop.f32.mrb[0].mxu0
        %v4584 = vpop.f32.mrb[0].mxu0
        %v4585 = vadd.f32 0.0, %v4584
        %v4586 = vpop.f32.mrb[0].mxu0
        %4587 = vmatprep.mubr.bf16.mxu0 0
        %4588 = vmatmul.mubr.bf16.gmra.mrb[0].mxu0 %v4482
        %v4589 = vpop.f32.mrb[0].mxu0
        %v4590 = vadd.f32 0.0, %v4589
        %v4591 = vpop.f32.mrb[0].mxu0
        %v4592 = vpop.f32.mrb[0].mxu0
        %v4593 = vadd.f32 0.0, %v4592
        %v4594 = vpop.f32.mrb[0].mxu0
        %4595 = vmatprep.mubr.bf16.mxu0 0
        %4596 = vmatmul.mubr.bf16.gmra.mrb[0].mxu0 %v4483
        %v4597 = vpop.f32.mrb[0].mxu0
        %v4598 = vadd.f32 0.0, %v4597
        %v4599 = vpop.f32.mrb[0].mxu0
        %v4600 = vpop.f32.mrb[0].mxu0
        %v4601 = vpop.f32.mrb[0].mxu0
        %4602 = vdwg.mxu0
        %v4603 = vadd.f32 %v4436, %v4567
        %v4604 = vadd.f32 %v4437, %v4570
        %v4605 = vadd.f32 %v4438, %v4575
        %v4606 = vadd.f32 %v4439, %v4578
        %v4607 = vadd.f32 %v4440, %v4585
        %v4608 = vadd.f32 %v4441, %v4590
        %v4609 = vadd.f32 %v4442, %v4593
        %v4610 = vadd.f32 %v4443, %v4598
        %s4611 = scalar_lea.vmem [#allocation6], 32
        %v4612 = vld [vmem:[%s4611] sm:$0xff]
        %v4613 = vlaneseq
        %v4614 = vshrl.u32 %v4613, 7
        %v4615 = vsub.s32 0, %v4614
        %v4616 = vrot.slane %v4612, %v4615
        %v4617 = vadd.f32 %v4603, %v4616
        %v4618 = vadd.f32 %v4604, %v4616
        %v4619 = vadd.f32 %v4605, %v4616
        %v4620 = vadd.f32 %v4606, %v4616
        %v4621 = vadd.f32 %v4607, %v4616
        %v4622 = vadd.f32 %v4608, %v4616
        %v4623 = vadd.f32 %v4609, %v4616
        %v4624 = vadd.f32 %v4610, %v4616
        %v4625 = vsel %vm233, %v4617, 0.0
        %v4626 = vsel %vm233, %v4618, 0.0
        %v4627 = vsel %vm233, %v4619, 0.0
        %v4628 = vsel %vm233, %v4620, 0.0
        %v4629 = vsel %vm233, %v4621, 0.0
        %v4630 = vsel %vm233, %v4622, 0.0
        %v4631 = vsel %vm233, %v4623, 0.0
        %v4632 = vsel %vm233, %v4624, 0.0
        %4633 = vadd.xlane.f32.xlu0 %v4625
        %v4634 = vpop.xlane.xlu0 %4633
        %4635 = vadd.xlane.f32.xlu0 %v4626
        %v4636 = vpop.xlane.xlu0 %4635
        %4637 = vadd.xlane.f32.xlu0 %v4627
        %v4638 = vpop.xlane.xlu0 %4637
        %4639 = vadd.xlane.f32.xlu0 %v4628
        %v4640 = vpop.xlane.xlu0 %4639
        %4641 = vadd.xlane.f32.xlu0 %v4629
        %v4642 = vpop.xlane.xlu0 %4641
        %4643 = vadd.xlane.f32.xlu0 %v4630
        %v4644 = vpop.xlane.xlu0 %4643
        %4645 = vadd.xlane.f32.xlu0 %v4631
        %v4646 = vpop.xlane.xlu0 %4645
        %4647 = vadd.xlane.f32.xlu0 %v4632
        %v4648 = vpop.xlane.xlu0 %4647
        %v4649 = vmul.f32 %v4634, 0.015625
        %v4650 = vmul.f32 %v4636, 0.015625
        %v4651 = vmul.f32 %v4638, 0.015625
        %v4652 = vmul.f32 %v4640, 0.015625
        %v4653 = vmul.f32 %v4642, 0.015625
        %v4654 = vmul.f32 %v4644, 0.015625
        %v4655 = vmul.f32 %v4646, 0.015625
        %v4656 = vmul.f32 %v4648, 0.015625
        %v4657 = vsub.f32 %v4617, %v4649
        %v4658 = vsub.f32 %v4618, %v4650
        %v4659 = vsub.f32 %v4619, %v4651
        %v4660 = vsub.f32 %v4620, %v4652
        %v4661 = vsub.f32 %v4621, %v4653
        %v4662 = vsub.f32 %v4622, %v4654
        %v4663 = vsub.f32 %v4623, %v4655
        %v4664 = vsub.f32 %v4624, %v4656
        %v4665 = vsel %vm233, %v4657, 0.0
        %v4666 = vsel %vm233, %v4658, 0.0
        %v4667 = vsel %vm233, %v4659, 0.0
        %v4668 = vsel %vm233, %v4660, 0.0
        %v4669 = vsel %vm233, %v4661, 0.0
        %v4670 = vsel %vm233, %v4662, 0.0
        %v4671 = vsel %vm233, %v4663, 0.0
        %v4672 = vsel %vm233, %v4664, 0.0
        %v4673 = vmul.f32 %v4665, %v4665
        %v4674 = vmul.f32 %v4666, %v4666
        %v4675 = vmul.f32 %v4667, %v4667
        %v4676 = vmul.f32 %v4668, %v4668
        %v4677 = vmul.f32 %v4669, %v4669
        %v4678 = vmul.f32 %v4670, %v4670
        %v4679 = vmul.f32 %v4671, %v4671
        %v4680 = vmul.f32 %v4672, %v4672
        %4681 = vadd.xlane.f32.xlu0 %v4673
        %v4682 = vpop.xlane.xlu0 %4681
        %4683 = vadd.xlane.f32.xlu0 %v4674
        %v4684 = vpop.xlane.xlu0 %4683
        %4685 = vadd.xlane.f32.xlu0 %v4675
        %v4686 = vpop.xlane.xlu0 %4685
        %4687 = vadd.xlane.f32.xlu0 %v4676
        %v4688 = vpop.xlane.xlu0 %4687
        %4689 = vadd.xlane.f32.xlu0 %v4677
        %v4690 = vpop.xlane.xlu0 %4689
        %4691 = vadd.xlane.f32.xlu0 %v4678
        %v4692 = vpop.xlane.xlu0 %4691
        %4693 = vadd.xlane.f32.xlu0 %v4679
        %v4694 = vpop.xlane.xlu0 %4693
        %4695 = vadd.xlane.f32.xlu0 %v4680
        %v4696 = vpop.xlane.xlu0 %4695
        %v4697 = vmul.f32 %v4682, 0.015625
        %v4698 = vmul.f32 %v4684, 0.015625
        %v4699 = vmul.f32 %v4686, 0.015625
        %v4700 = vmul.f32 %v4688, 0.015625
        %v4701 = vmul.f32 %v4690, 0.015625
        %v4702 = vmul.f32 %v4692, 0.015625
        %v4703 = vmul.f32 %v4694, 0.015625
        %v4704 = vmul.f32 %v4696, 0.015625
        %v4705 = vadd.f32 %v4697, 1e-05
        %v4706 = vadd.f32 %v4698, 1e-05
        %v4707 = vadd.f32 %v4699, 1e-05
        %v4708 = vadd.f32 %v4700, 1e-05
        %v4709 = vadd.f32 %v4701, 1e-05
        %v4710 = vadd.f32 %v4702, 1e-05
        %v4711 = vadd.f32 %v4703, 1e-05
        %v4712 = vadd.f32 %v4704, 1e-05
        %v4713 = vrsqrt.pop %v4705
        %v4714 = vrsqrt.pop %v4706
        %v4715 = vrsqrt.pop %v4707
        %v4716 = vrsqrt.pop %v4708
        %v4717 = vrsqrt.pop %v4709
        %v4718 = vrsqrt.pop %v4710
        %v4719 = vrsqrt.pop %v4711
        %v4720 = vrsqrt.pop %v4712
        %v4721 = vmul.f32 %v4657, %v4713
        %v4722 = vmul.f32 %v4658, %v4714
        %v4723 = vmul.f32 %v4659, %v4715
        %v4724 = vmul.f32 %v4660, %v4716
        %v4725 = vmul.f32 %v4661, %v4717
        %v4726 = vmul.f32 %v4662, %v4718
        %v4727 = vmul.f32 %v4663, %v4719
        %v4728 = vmul.f32 %v4664, %v4720
        %v4729 = vlaneseq
        %v4730 = vshrl.u32 %v4729, 7
        %v4731 = vsub.s32 1, %v4730
        %v4732 = vrot.slane %v4612, %v4731
        %v4733 = vmul.f32 %v4721, %v4732
        %v4734 = vmul.f32 %v4722, %v4732
        %v4735 = vmul.f32 %v4723, %v4732
        %v4736 = vmul.f32 %v4724, %v4732
        %v4737 = vmul.f32 %v4725, %v4732
        %v4738 = vmul.f32 %v4726, %v4732
        %v4739 = vmul.f32 %v4727, %v4732
        %v4740 = vmul.f32 %v4728, %v4732
        %v4741 = vlaneseq
        %v4742 = vshrl.u32 %v4741, 7
        %v4743 = vsub.s32 2, %v4742
        %v4744 = vrot.slane %v4612, %v4743
        %v4745 = vadd.f32 %v4733, %v4744
        %v4746 = vadd.f32 %v4734, %v4744
        %v4747 = vadd.f32 %v4735, %v4744
        %v4748 = vadd.f32 %v4736, %v4744
        %v4749 = vadd.f32 %v4737, %v4744
        %v4750 = vadd.f32 %v4738, %v4744
        %v4751 = vadd.f32 %v4739, %v4744
        %v4752 = vadd.f32 %v4740, %v4744
        %4753 = vst [vmem:[#allocation2 + $0x8] sm:$0xff] %v4745
        %4754 = vst [vmem:[#allocation2 + $0x10] sm:$0xff] %v4746
        %4755 = vst [vmem:[#allocation2 + $0x18] sm:$0xff] %v4747
        %4756 = vst [vmem:[#allocation2 + $0x20] sm:$0xff] %v4748
        %4757 = vst [vmem:[#allocation2 + $0x30] sm:$0xff] %v4749
        %4758 = vst [vmem:[#allocation2 + $0x38] sm:$0xff] %v4750
        %4759 = vst [vmem:[#allocation2 + $0x40] sm:$0xff] %v4751
        %4760 = vst [vmem:[#allocation2 + $0x48] sm:$0xff] %v4752
        %v4761 = vld [vmem:[#allocation2 + $0x6] sm:$0xff]
        %v4762 = vld [vmem:[#allocation2 + $0xe] sm:$0xff]
        %v4763 = vld [vmem:[#allocation2 + $0x16] sm:$0xff]
        %v4764 = vld [vmem:[#allocation2 + $0x1e] sm:$0xff]
        %v4765 = vld [vmem:[#allocation2 + $0x26] sm:$0xff]
        %v4766 = vld [vmem:[#allocation2 + $0x2e] sm:$0xff]
        %v4767 = vld [vmem:[#allocation2 + $0x36] sm:$0xff]
        %v4768 = vld [vmem:[#allocation2 + $0x3e] sm:$0xff]
        %v4769 = vld [vmem:[#allocation2 + $0x46] sm:$0xff]
        %v4770 = vmax.f32 %v4761, 0.0
        %v4771 = vmax.f32 %v4762, 0.0
        %v4772 = vmax.f32 %v4763, 0.0
        %v4773 = vmax.f32 %v4764, 0.0
        %v4774 = vmax.f32 %v4765, 0.0
        %v4775 = vmax.f32 %v4766, 0.0
        %v4776 = vmax.f32 %v4767, 0.0
        %v4777 = vmax.f32 %v4768, 0.0
        %v4778 = vmax.f32 %v4769, 0.0
        %s4779 = scalar_lea.vmem [#allocation4], 1600
        %v4780 = vld [vmem:[%s4779] sm:$0xf]
        %v4781 = vld [vmem:[%s4779 + $0x4] sm:$0xf]
        %v4782 = vld [vmem:[%s4779 + $0x8] sm:$0xf]
        %v4783 = vld [vmem:[%s4779 + $0xc] sm:$0xf]
        %v4784 = vld [vmem:[%s4779 + $0x10] sm:$0xf]
        %v4785 = vld [vmem:[%s4779 + $0x14] sm:$0xf]
        %v4786 = vld [vmem:[%s4779 + $0x18] sm:$0xf]
        %v4787 = vld [vmem:[%s4779 + $0x1c] sm:$0xf]
        %v4788 = vld [vmem:[%s4779 + $0x20] sm:$0xf]
        %v4789 = vld [vmem:[%s4779 + $0x24] sm:$0xf]
        %v4790 = vld [vmem:[%s4779 + $0x28] sm:$0xf]
        %v4791 = vld [vmem:[%s4779 + $0x2c] sm:$0xf]
        %v4792 = vld [vmem:[%s4779 + $0x30] sm:$0xf]
        %v4793 = vld [vmem:[%s4779 + $0x34] sm:$0xf]
        %v4794 = vld [vmem:[%s4779 + $0x38] sm:$0xf]
        %v4795 = vld [vmem:[%s4779 + $0x3c] sm:$0xf]
        %v4796 = vpack.c.bf16 %v4771, %v4770
        %v4797 = vpack.c.bf16 %v4773, %v4772
        %v4798 = vpack.c.bf16 %v4775, %v4774
        %v4799 = vpack.c.bf16 %v4777, %v4776
        %v4800 = vpack.c.bf16 %v4778, %v4778
        %v4801 = vld [vmem:[#allocation2 + $0x7] sm:$0xff]
        %v4802 = vld [vmem:[#allocation2 + $0xf] sm:$0xff]
        %v4803 = vld [vmem:[#allocation2 + $0x17] sm:$0xff]
        %v4804 = vld [vmem:[#allocation2 + $0x1f] sm:$0xff]
        %v4805 = vld [vmem:[#allocation2 + $0x27] sm:$0xff]
        %v4806 = vld [vmem:[#allocation2 + $0x2f] sm:$0xff]
        %v4807 = vld [vmem:[#allocation2 + $0x37] sm:$0xff]
        %v4808 = vld [vmem:[#allocation2 + $0x3f] sm:$0xff]
        %v4809 = vld [vmem:[#allocation2 + $0x47] sm:$0xff]
        %v4810 = vmax.f32 %v4801, 0.0
        %v4811 = vmax.f32 %v4802, 0.0
        %v4812 = vmax.f32 %v4803, 0.0
        %v4813 = vmax.f32 %v4804, 0.0
        %v4814 = vmax.f32 %v4805, 0.0
        %v4815 = vmax.f32 %v4806, 0.0
        %v4816 = vmax.f32 %v4807, 0.0
        %v4817 = vmax.f32 %v4808, 0.0
        %v4818 = vmax.f32 %v4809, 0.0
        %s4819 = scalar_lea.vmem [#allocation4], 1664
        %v4820 = vld [vmem:[%s4819] sm:$0xf]
        %v4821 = vld [vmem:[%s4819 + $0x4] sm:$0xf]
        %v4822 = vld [vmem:[%s4819 + $0x8] sm:$0xf]
        %v4823 = vld [vmem:[%s4819 + $0xc] sm:$0xf]
        %v4824 = vld [vmem:[%s4819 + $0x10] sm:$0xf]
        %v4825 = vld [vmem:[%s4819 + $0x14] sm:$0xf]
        %v4826 = vld [vmem:[%s4819 + $0x18] sm:$0xf]
        %v4827 = vld [vmem:[%s4819 + $0x1c] sm:$0xf]
        %v4828 = vld [vmem:[%s4819 + $0x20] sm:$0xf]
        %v4829 = vld [vmem:[%s4819 + $0x24] sm:$0xf]
        %v4830 = vld [vmem:[%s4819 + $0x28] sm:$0xf]
        %v4831 = vld [vmem:[%s4819 + $0x2c] sm:$0xf]
        %v4832 = vld [vmem:[%s4819 + $0x30] sm:$0xf]
        %v4833 = vld [vmem:[%s4819 + $0x34] sm:$0xf]
        %v4834 = vld [vmem:[%s4819 + $0x38] sm:$0xf]
        %v4835 = vld [vmem:[%s4819 + $0x3c] sm:$0xf]
        %v4836 = vpack.c.bf16 %v4811, %v4810
        %v4837 = vpack.c.bf16 %v4813, %v4812
        %v4838 = vpack.c.bf16 %v4815, %v4814
        %v4839 = vpack.c.bf16 %v4817, %v4816
        %v4840 = vpack.c.bf16 %v4818, %v4818
        %v4857 = vunpack.c.l.b16 %v4820
        %v4858 = vunpack.c.l.b16 %v4821
        %v4859 = vunpack.c.l.b16 %v4822
        %v4860 = vunpack.c.l.b16 %v4823
        %v4861 = vunpack.c.l.b16 %v4824
        %v4862 = vunpack.c.l.b16 %v4825
        %v4863 = vunpack.c.l.b16 %v4826
        %v4864 = vunpack.c.l.b16 %v4827
        %v4865 = vunpack.c.l.b16 %v4828
        %v4866 = vunpack.c.l.b16 %v4829
        %v4867 = vunpack.c.l.b16 %v4830
        %v4868 = vunpack.c.l.b16 %v4831
        %v4869 = vunpack.c.l.b16 %v4832
        %v4870 = vunpack.c.l.b16 %v4833
        %v4871 = vunpack.c.l.b16 %v4834
        %v4872 = vunpack.c.l.b16 %v4835
        %v4873 = vpack.c.b16 %v4858, %v4857
        %v4874 = vpack.c.b16 %v4860, %v4859
        %v4875 = vpack.c.b16 %v4862, %v4861
        %v4876 = vpack.c.b16 %v4864, %v4863
        %v4877 = vpack.c.b16 %v4866, %v4865
        %v4878 = vpack.c.b16 %v4868, %v4867
        %v4879 = vpack.c.b16 %v4870, %v4869
        %v4880 = vpack.c.b16 %v4872, %v4871
        %4889 = vmatprep.subr.bf16.mxu0 0
        %4890 = vmatpush1.bf16.msra.mxu0 %v4873
        %4891 = vmatprep.subr.bf16.mxu0 0
        %4892 = vmatpush1.bf16.msra.mxu0 %v4874
        %4893 = vmatprep.subr.bf16.mxu0 0
        %4894 = vmatpush1.bf16.msra.mxu0 %v4875
        %4895 = vmatprep.subr.bf16.mxu0 0
        %4896 = vmatpush1.bf16.msra.mxu0 %v4876
        %4897 = vmatprep.subr.bf16.mxu0 0
        %4898 = vmatpush1.bf16.msra.mxu0 %v4877
        %4899 = vmatprep.subr.bf16.mxu0 0
        %4900 = vmatpush1.bf16.msra.mxu0 %v4878
        %4901 = vmatprep.subr.bf16.mxu0 0
        %4902 = vmatpush1.bf16.msra.mxu0 %v4879
        %4903 = vmatprep.subr.bf16.mxu0 0
        %4904 = vmatpush1.bf16.msra.mxu0 %v4880
        %4905 = vmatprep.subr.bf16.mxu0 0
        %4906 = vmatpush1.bf16.msra.mxu0 0
        %4907 = vmatprep.subr.bf16.mxu0 0
        %4908 = vmatpush1.bf16.msra.mxu0 0
        %4909 = vmatprep.subr.bf16.mxu0 0
        %4910 = vmatpush1.bf16.msra.mxu0 0
        %4911 = vmatprep.subr.bf16.mxu0 0
        %4912 = vmatpush1.bf16.msra.mxu0 0
        %4913 = vmatprep.subr.bf16.mxu0 0
        %4914 = vmatpush1.bf16.msra.mxu0 0
        %4915 = vmatprep.subr.bf16.mxu0 0
        %4916 = vmatpush1.bf16.msra.mxu0 0
        %4917 = vmatprep.subr.bf16.mxu0 0
        %4918 = vmatpush1.bf16.msra.mxu0 0
        %4919 = vmatprep.subr.bf16.mxu0 0
        %4920 = vmatpush1.bf16.msra.mxu0 0
        %4921 = vmatprep.mubr.bf16.mxu0 0
        %4922 = vmatmul.mubr.bf16.gmra.mrb[0].mxu0 %v4836
        %v4923 = vpop.f32.mrb[0].mxu0
        %v4924 = vadd.f32 0.0, %v4923
        %v4925 = vpop.f32.mrb[0].mxu0
        %v4926 = vpop.f32.mrb[0].mxu0
        %v4927 = vadd.f32 0.0, %v4926
        %v4928 = vpop.f32.mrb[0].mxu0
        %4929 = vmatprep.mubr.bf16.mxu0 0
        %4930 = vmatmul.mubr.bf16.gmra.mrb[0].mxu0 %v4837
        %v4931 = vpop.f32.mrb[0].mxu0
        %v4932 = vadd.f32 0.0, %v4931
        %v4933 = vpop.f32.mrb[0].mxu0
        %v4934 = vpop.f32.mrb[0].mxu0
        %v4935 = vadd.f32 0.0, %v4934
        %v4936 = vpop.f32.mrb[0].mxu0
        %4937 = vmatprep.mubr.bf16.mxu0 0
        %4938 = vmatmul.mubr.bf16.gmra.mrb[0].mxu0 %v4838
        %v4939 = vpop.f32.mrb[0].mxu0
        %v4940 = vpop.f32.mrb[0].mxu0
        %v4941 = vpop.f32.mrb[0].mxu0
        %v4942 = vadd.f32 0.0, %v4941
        %v4943 = vpop.f32.mrb[0].mxu0
        %4944 = vmatprep.mubr.bf16.mxu0 0
        %4945 = vmatmul.mubr.bf16.gmra.mrb[0].mxu0 %v4839
        %v4946 = vpop.f32.mrb[0].mxu0
        %v4947 = vadd.f32 0.0, %v4946
        %v4948 = vpop.f32.mrb[0].mxu0
        %v4949 = vpop.f32.mrb[0].mxu0
        %v4950 = vadd.f32 0.0, %v4949
        %v4951 = vpop.f32.mrb[0].mxu0
        %4952 = vmatprep.mubr.bf16.mxu0 0
        %4953 = vmatmul.mubr.bf16.gmra.mrb[0].mxu0 %v4840
        %v4954 = vpop.f32.mrb[0].mxu0
        %v4955 = vadd.f32 0.0, %v4954
        %v4956 = vpop.f32.mrb[0].mxu0
        %v4957 = vpop.f32.mrb[0].mxu0
        %v4958 = vpop.f32.mrb[0].mxu0
        %4959 = vdwg.mxu0
        %v4976 = vunpack.c.l.b16 %v4780
        %v4977 = vunpack.c.l.b16 %v4781
        %v4978 = vunpack.c.l.b16 %v4782
        %v4979 = vunpack.c.l.b16 %v4783
        %v4980 = vunpack.c.l.b16 %v4784
        %v4981 = vunpack.c.l.b16 %v4785
        %v4982 = vunpack.c.l.b16 %v4786
        %v4983 = vunpack.c.l.b16 %v4787
        %v4984 = vunpack.c.l.b16 %v4788
        %v4985 = vunpack.c.l.b16 %v4789
        %v4986 = vunpack.c.l.b16 %v4790
        %v4987 = vunpack.c.l.b16 %v4791
        %v4988 = vunpack.c.l.b16 %v4792
        %v4989 = vunpack.c.l.b16 %v4793
        %v4990 = vunpack.c.l.b16 %v4794
        %v4991 = vunpack.c.l.b16 %v4795
        %v4992 = vpack.c.b16 %v4977, %v4976
        %v4993 = vpack.c.b16 %v4979, %v4978
        %v4994 = vpack.c.b16 %v4981, %v4980
        %v4995 = vpack.c.b16 %v4983, %v4982
        %v4996 = vpack.c.b16 %v4985, %v4984
        %v4997 = vpack.c.b16 %v4987, %v4986
        %v4998 = vpack.c.b16 %v4989, %v4988
        %v4999 = vpack.c.b16 %v4991, %v4990
        %5008 = vmatprep.subr.bf16.mxu0 0
        %5009 = vmatpush1.bf16.msra.mxu0 %v4992
        %5010 = vmatprep.subr.bf16.mxu0 0
        %5011 = vmatpush1.bf16.msra.mxu0 %v4993
        %5012 = vmatprep.subr.bf16.mxu0 0
        %5013 = vmatpush1.bf16.msra.mxu0 %v4994
        %5014 = vmatprep.subr.bf16.mxu0 0
        %5015 = vmatpush1.bf16.msra.mxu0 %v4995
        %5016 = vmatprep.subr.bf16.mxu0 0
        %5017 = vmatpush1.bf16.msra.mxu0 %v4996
        %5018 = vmatprep.subr.bf16.mxu0 0
        %5019 = vmatpush1.bf16.msra.mxu0 %v4997
        %5020 = vmatprep.subr.bf16.mxu0 0
        %5021 = vmatpush1.bf16.msra.mxu0 %v4998
        %5022 = vmatprep.subr.bf16.mxu0 0
        %5023 = vmatpush1.bf16.msra.mxu0 %v4999
        %5024 = vmatprep.subr.bf16.mxu0 0
        %5025 = vmatpush1.bf16.msra.mxu0 0
        %5026 = vmatprep.subr.bf16.mxu0 0
        %5027 = vmatpush1.bf16.msra.mxu0 0
        %5028 = vmatprep.subr.bf16.mxu0 0
        %5029 = vmatpush1.bf16.msra.mxu0 0
        %5030 = vmatprep.subr.bf16.mxu0 0
        %5031 = vmatpush1.bf16.msra.mxu0 0
        %5032 = vmatprep.subr.bf16.mxu0 0
        %5033 = vmatpush1.bf16.msra.mxu0 0
        %5034 = vmatprep.subr.bf16.mxu0 0
        %5035 = vmatpush1.bf16.msra.mxu0 0
        %5036 = vmatprep.subr.bf16.mxu0 0
        %5037 = vmatpush1.bf16.msra.mxu0 0
        %5038 = vmatprep.subr.bf16.mxu0 0
        %5039 = vmatpush1.bf16.msra.mxu0 0
        %5040 = vmatprep.mubr.bf16.mxu0 0
        %5041 = vmatmul.mubr.bf16.gmra.mrb[0].mxu0 %v4796
        %v5042 = vpop.f32.mrb[0].mxu0
        %v5043 = vadd.f32 %v4924, %v5042
        %v5044 = vpop.f32.mrb[0].mxu0
        %v5045 = vpop.f32.mrb[0].mxu0
        %v5046 = vadd.f32 %v4927, %v5045
        %v5047 = vpop.f32.mrb[0].mxu0
        %5048 = vmatprep.mubr.bf16.mxu0 0
        %5049 = vmatmul.mubr.bf16.gmra.mrb[0].mxu0 %v4797
        %v5050 = vpop.f32.mrb[0].mxu0
        %v5051 = vadd.f32 %v4932, %v5050
        %v5052 = vpop.f32.mrb[0].mxu0
        %v5053 = vpop.f32.mrb[0].mxu0
        %v5054 = vadd.f32 %v4935, %v5053
        %v5055 = vpop.f32.mrb[0].mxu0
        %5056 = vmatprep.mubr.bf16.mxu0 0
        %5057 = vmatmul.mubr.bf16.gmra.mrb[0].mxu0 %v4798
        %v5058 = vpop.f32.mrb[0].mxu0
        %v5059 = vpop.f32.mrb[0].mxu0
        %v5060 = vpop.f32.mrb[0].mxu0
        %v5061 = vadd.f32 %v4942, %v5060
        %v5062 = vpop.f32.mrb[0].mxu0
        %5063 = vmatprep.mubr.bf16.mxu0 0
        %5064 = vmatmul.mubr.bf16.gmra.mrb[0].mxu0 %v4799
        %v5065 = vpop.f32.mrb[0].mxu0
        %v5066 = vadd.f32 %v4947, %v5065
        %v5067 = vpop.f32.mrb[0].mxu0
        %v5068 = vpop.f32.mrb[0].mxu0
        %v5069 = vadd.f32 %v4950, %v5068
        %v5070 = vpop.f32.mrb[0].mxu0
        %5071 = vmatprep.mubr.bf16.mxu0 0
        %5072 = vmatmul.mubr.bf16.gmra.mrb[0].mxu0 %v4800
        %v5073 = vpop.f32.mrb[0].mxu0
        %v5074 = vadd.f32 %v4955, %v5073
        %v5075 = vpop.f32.mrb[0].mxu0
        %v5076 = vpop.f32.mrb[0].mxu0
        %v5077 = vpop.f32.mrb[0].mxu0
        %5078 = vdwg.mxu0
        %v5079 = vld [vmem:[#allocation2 + $0x8] sm:$0xff]
        %v5080 = vld [vmem:[#allocation2 + $0x10] sm:$0xff]
        %v5081 = vld [vmem:[#allocation2 + $0x18] sm:$0xff]
        %v5082 = vld [vmem:[#allocation2 + $0x20] sm:$0xff]
        %v5083 = vld [vmem:[#allocation2 + $0x28] sm:$0xff]
        %v5084 = vld [vmem:[#allocation2 + $0x30] sm:$0xff]
        %v5085 = vld [vmem:[#allocation2 + $0x38] sm:$0xff]
        %v5086 = vld [vmem:[#allocation2 + $0x40] sm:$0xff]
        %v5087 = vld [vmem:[#allocation2 + $0x48] sm:$0xff]
        %v5088 = vmax.f32 %v5079, 0.0
        %v5089 = vmax.f32 %v5080, 0.0
        %v5090 = vmax.f32 %v5081, 0.0
        %v5091 = vmax.f32 %v5082, 0.0
        %v5092 = vmax.f32 %v5083, 0.0
        %v5093 = vmax.f32 %v5084, 0.0
        %v5094 = vmax.f32 %v5085, 0.0
        %v5095 = vmax.f32 %v5086, 0.0
        %v5096 = vmax.f32 %v5087, 0.0
        %s5097 = scalar_lea.vmem [#allocation4], 1728
        %v5098 = vld [vmem:[%s5097] sm:$0xf]
        %v5099 = vld [vmem:[%s5097 + $0x4] sm:$0xf]
        %v5100 = vld [vmem:[%s5097 + $0x8] sm:$0xf]
        %v5101 = vld [vmem:[%s5097 + $0xc] sm:$0xf]
        %v5102 = vld [vmem:[%s5097 + $0x10] sm:$0xf]
        %v5103 = vld [vmem:[%s5097 + $0x14] sm:$0xf]
        %v5104 = vld [vmem:[%s5097 + $0x18] sm:$0xf]
        %v5105 = vld [vmem:[%s5097 + $0x1c] sm:$0xf]
        %v5106 = vld [vmem:[%s5097 + $0x20] sm:$0xf]
        %v5107 = vld [vmem:[%s5097 + $0x24] sm:$0xf]
        %v5108 = vld [vmem:[%s5097 + $0x28] sm:$0xf]
        %v5109 = vld [vmem:[%s5097 + $0x2c] sm:$0xf]
        %v5110 = vld [vmem:[%s5097 + $0x30] sm:$0xf]
        %v5111 = vld [vmem:[%s5097 + $0x34] sm:$0xf]
        %v5112 = vld [vmem:[%s5097 + $0x38] sm:$0xf]
        %v5113 = vld [vmem:[%s5097 + $0x3c] sm:$0xf]
        %v5114 = vpack.c.bf16 %v5089, %v5088
        %v5115 = vpack.c.bf16 %v5091, %v5090
        %v5116 = vpack.c.bf16 %v5093, %v5092
        %v5117 = vpack.c.bf16 %v5095, %v5094
        %v5118 = vpack.c.bf16 %v5096, %v5096
        %v5135 = vunpack.c.l.b16 %v5098
        %v5136 = vunpack.c.l.b16 %v5099
        %v5137 = vunpack.c.l.b16 %v5100
        %v5138 = vunpack.c.l.b16 %v5101
        %v5139 = vunpack.c.l.b16 %v5102
        %v5140 = vunpack.c.l.b16 %v5103
        %v5141 = vunpack.c.l.b16 %v5104
        %v5142 = vunpack.c.l.b16 %v5105
        %v5143 = vunpack.c.l.b16 %v5106
        %v5144 = vunpack.c.l.b16 %v5107
        %v5145 = vunpack.c.l.b16 %v5108
        %v5146 = vunpack.c.l.b16 %v5109
        %v5147 = vunpack.c.l.b16 %v5110
        %v5148 = vunpack.c.l.b16 %v5111
        %v5149 = vunpack.c.l.b16 %v5112
        %v5150 = vunpack.c.l.b16 %v5113
        %v5151 = vpack.c.b16 %v5136, %v5135
        %v5152 = vpack.c.b16 %v5138, %v5137
        %v5153 = vpack.c.b16 %v5140, %v5139
        %v5154 = vpack.c.b16 %v5142, %v5141
        %v5155 = vpack.c.b16 %v5144, %v5143
        %v5156 = vpack.c.b16 %v5146, %v5145
        %v5157 = vpack.c.b16 %v5148, %v5147
        %v5158 = vpack.c.b16 %v5150, %v5149
        %5167 = vmatprep.subr.bf16.mxu0 0
        %5168 = vmatpush1.bf16.msra.mxu0 %v5151
        %5169 = vmatprep.subr.bf16.mxu0 0
        %5170 = vmatpush1.bf16.msra.mxu0 %v5152
        %5171 = vmatprep.subr.bf16.mxu0 0
        %5172 = vmatpush1.bf16.msra.mxu0 %v5153
        %5173 = vmatprep.subr.bf16.mxu0 0
        %5174 = vmatpush1.bf16.msra.mxu0 %v5154
        %5175 = vmatprep.subr.bf16.mxu0 0
        %5176 = vmatpush1.bf16.msra.mxu0 %v5155
        %5177 = vmatprep.subr.bf16.mxu0 0
        %5178 = vmatpush1.bf16.msra.mxu0 %v5156
        %5179 = vmatprep.subr.bf16.mxu0 0
        %5180 = vmatpush1.bf16.msra.mxu0 %v5157
        %5181 = vmatprep.subr.bf16.mxu0 0
        %5182 = vmatpush1.bf16.msra.mxu0 %v5158
        %5183 = vmatprep.subr.bf16.mxu0 0
        %5184 = vmatpush1.bf16.msra.mxu0 0
        %5185 = vmatprep.subr.bf16.mxu0 0
        %5186 = vmatpush1.bf16.msra.mxu0 0
        %5187 = vmatprep.subr.bf16.mxu0 0
        %5188 = vmatpush1.bf16.msra.mxu0 0
        %5189 = vmatprep.subr.bf16.mxu0 0
        %5190 = vmatpush1.bf16.msra.mxu0 0
        %5191 = vmatprep.subr.bf16.mxu0 0
        %5192 = vmatpush1.bf16.msra.mxu0 0
        %5193 = vmatprep.subr.bf16.mxu0 0
        %5194 = vmatpush1.bf16.msra.mxu0 0
        %5195 = vmatprep.subr.bf16.mxu0 0
        %5196 = vmatpush1.bf16.msra.mxu0 0
        %5197 = vmatprep.subr.bf16.mxu0 0
        %5198 = vmatpush1.bf16.msra.mxu0 0
        %5199 = vmatprep.mubr.bf16.mxu0 0
        %5200 = vmatmul.mubr.bf16.gmra.mrb[0].mxu0 %v5114
        %v5201 = vpop.f32.mrb[0].mxu0
        %v5202 = vadd.f32 0.0, %v5201
        %v5203 = vpop.f32.mrb[0].mxu0
        %v5204 = vpop.f32.mrb[0].mxu0
        %v5205 = vadd.f32 0.0, %v5204
        %v5206 = vpop.f32.mrb[0].mxu0
        %5207 = vmatprep.mubr.bf16.mxu0 0
        %5208 = vmatmul.mubr.bf16.gmra.mrb[0].mxu0 %v5115
        %v5209 = vpop.f32.mrb[0].mxu0
        %v5210 = vadd.f32 0.0, %v5209
        %v5211 = vpop.f32.mrb[0].mxu0
        %v5212 = vpop.f32.mrb[0].mxu0
        %v5213 = vadd.f32 0.0, %v5212
        %v5214 = vpop.f32.mrb[0].mxu0
        %5215 = vmatprep.mubr.bf16.mxu0 0
        %5216 = vmatmul.mubr.bf16.gmra.mrb[0].mxu0 %v5116
        %v5217 = vpop.f32.mrb[0].mxu0
        %v5218 = vpop.f32.mrb[0].mxu0
        %v5219 = vpop.f32.mrb[0].mxu0
        %v5220 = vadd.f32 0.0, %v5219
        %v5221 = vpop.f32.mrb[0].mxu0
        %5222 = vmatprep.mubr.bf16.mxu0 0
        %5223 = vmatmul.mubr.bf16.gmra.mrb[0].mxu0 %v5117
        %v5224 = vpop.f32.mrb[0].mxu0
        %v5225 = vadd.f32 0.0, %v5224
        %v5226 = vpop.f32.mrb[0].mxu0
        %v5227 = vpop.f32.mrb[0].mxu0
        %v5228 = vadd.f32 0.0, %v5227
        %v5229 = vpop.f32.mrb[0].mxu0
        %5230 = vmatprep.mubr.bf16.mxu0 0
        %5231 = vmatmul.mubr.bf16.gmra.mrb[0].mxu0 %v5118
        %v5232 = vpop.f32.mrb[0].mxu0
        %v5233 = vadd.f32 0.0, %v5232
        %v5234 = vpop.f32.mrb[0].mxu0
        %v5235 = vpop.f32.mrb[0].mxu0
        %v5236 = vpop.f32.mrb[0].mxu0
        %5237 = vdwg.mxu0
        %v5238 = vadd.f32 %v5043, %v5202
        %v5239 = vadd.f32 %v5046, %v5205
        %v5240 = vadd.f32 %v5051, %v5210
        %v5241 = vadd.f32 %v5054, %v5213
        %v5242 = vadd.f32 %v5061, %v5220
        %v5243 = vadd.f32 %v5066, %v5225
        %v5244 = vadd.f32 %v5069, %v5228
        %v5245 = vadd.f32 %v5074, %v5233
        %v5246 = vld [vmem:[#allocation2 + $0x9] sm:$0xff]
        %v5247 = vld [vmem:[#allocation2 + $0x11] sm:$0xff]
        %v5248 = vld [vmem:[#allocation2 + $0x19] sm:$0xff]
        %v5249 = vld [vmem:[#allocation2 + $0x21] sm:$0xff]
        %v5250 = vld [vmem:[#allocation2 + $0x29] sm:$0xff]
        %v5251 = vld [vmem:[#allocation2 + $0x31] sm:$0xff]
        %v5252 = vld [vmem:[#allocation2 + $0x39] sm:$0xff]
        %v5253 = vld [vmem:[#allocation2 + $0x41] sm:$0xff]
        %v5254 = vld [vmem:[#allocation2 + $0x49] sm:$0xff]
        %v5255 = vmax.f32 %v5246, 0.0
        %v5256 = vmax.f32 %v5247, 0.0
        %v5257 = vmax.f32 %v5248, 0.0
        %v5258 = vmax.f32 %v5249, 0.0
        %v5259 = vmax.f32 %v5250, 0.0
        %v5260 = vmax.f32 %v5251, 0.0
        %v5261 = vmax.f32 %v5252, 0.0
        %v5262 = vmax.f32 %v5253, 0.0
        %v5263 = vmax.f32 %v5254, 0.0
        %s5264 = scalar_lea.vmem [#allocation4], 1792
        %v5265 = vld [vmem:[%s5264] sm:$0xf]
        %v5266 = vld [vmem:[%s5264 + $0x4] sm:$0xf]
        %v5267 = vld [vmem:[%s5264 + $0x8] sm:$0xf]
        %v5268 = vld [vmem:[%s5264 + $0xc] sm:$0xf]
        %v5269 = vld [vmem:[%s5264 + $0x10] sm:$0xf]
        %v5270 = vld [vmem:[%s5264 + $0x14] sm:$0xf]
        %v5271 = vld [vmem:[%s5264 + $0x18] sm:$0xf]
        %v5272 = vld [vmem:[%s5264 + $0x1c] sm:$0xf]
        %v5273 = vld [vmem:[%s5264 + $0x20] sm:$0xf]
        %v5274 = vld [vmem:[%s5264 + $0x24] sm:$0xf]
        %v5275 = vld [vmem:[%s5264 + $0x28] sm:$0xf]
        %v5276 = vld [vmem:[%s5264 + $0x2c] sm:$0xf]
        %v5277 = vld [vmem:[%s5264 + $0x30] sm:$0xf]
        %v5278 = vld [vmem:[%s5264 + $0x34] sm:$0xf]
        %v5279 = vld [vmem:[%s5264 + $0x38] sm:$0xf]
        %v5280 = vld [vmem:[%s5264 + $0x3c] sm:$0xf]
        %v5281 = vpack.c.bf16 %v5256, %v5255
        %v5282 = vpack.c.bf16 %v5258, %v5257
        %v5283 = vpack.c.bf16 %v5260, %v5259
        %v5284 = vpack.c.bf16 %v5262, %v5261
        %v5285 = vpack.c.bf16 %v5263, %v5263
        %v5302 = vunpack.c.l.b16 %v5265
        %v5303 = vunpack.c.l.b16 %v5266
        %v5304 = vunpack.c.l.b16 %v5267
        %v5305 = vunpack.c.l.b16 %v5268
        %v5306 = vunpack.c.l.b16 %v5269
        %v5307 = vunpack.c.l.b16 %v5270
        %v5308 = vunpack.c.l.b16 %v5271
        %v5309 = vunpack.c.l.b16 %v5272
        %v5310 = vunpack.c.l.b16 %v5273
        %v5311 = vunpack.c.l.b16 %v5274
        %v5312 = vunpack.c.l.b16 %v5275
        %v5313 = vunpack.c.l.b16 %v5276
        %v5314 = vunpack.c.l.b16 %v5277
        %v5315 = vunpack.c.l.b16 %v5278
        %v5316 = vunpack.c.l.b16 %v5279
        %v5317 = vunpack.c.l.b16 %v5280
        %v5318 = vpack.c.b16 %v5303, %v5302
        %v5319 = vpack.c.b16 %v5305, %v5304
        %v5320 = vpack.c.b16 %v5307, %v5306
        %v5321 = vpack.c.b16 %v5309, %v5308
        %v5322 = vpack.c.b16 %v5311, %v5310
        %v5323 = vpack.c.b16 %v5313, %v5312
        %v5324 = vpack.c.b16 %v5315, %v5314
        %v5325 = vpack.c.b16 %v5317, %v5316
        %5334 = vmatprep.subr.bf16.mxu0 0
        %5335 = vmatpush1.bf16.msra.mxu0 %v5318
        %5336 = vmatprep.subr.bf16.mxu0 0
        %5337 = vmatpush1.bf16.msra.mxu0 %v5319
        %5338 = vmatprep.subr.bf16.mxu0 0
        %5339 = vmatpush1.bf16.msra.mxu0 %v5320
        %5340 = vmatprep.subr.bf16.mxu0 0
        %5341 = vmatpush1.bf16.msra.mxu0 %v5321
        %5342 = vmatprep.subr.bf16.mxu0 0
        %5343 = vmatpush1.bf16.msra.mxu0 %v5322
        %5344 = vmatprep.subr.bf16.mxu0 0
        %5345 = vmatpush1.bf16.msra.mxu0 %v5323
        %5346 = vmatprep.subr.bf16.mxu0 0
        %5347 = vmatpush1.bf16.msra.mxu0 %v5324
        %5348 = vmatprep.subr.bf16.mxu0 0
        %5349 = vmatpush1.bf16.msra.mxu0 %v5325
        %5350 = vmatprep.subr.bf16.mxu0 0
        %5351 = vmatpush1.bf16.msra.mxu0 0
        %5352 = vmatprep.subr.bf16.mxu0 0
        %5353 = vmatpush1.bf16.msra.mxu0 0
        %5354 = vmatprep.subr.bf16.mxu0 0
        %5355 = vmatpush1.bf16.msra.mxu0 0
        %5356 = vmatprep.subr.bf16.mxu0 0
        %5357 = vmatpush1.bf16.msra.mxu0 0
        %5358 = vmatprep.subr.bf16.mxu0 0
        %5359 = vmatpush1.bf16.msra.mxu0 0
        %5360 = vmatprep.subr.bf16.mxu0 0
        %5361 = vmatpush1.bf16.msra.mxu0 0
        %5362 = vmatprep.subr.bf16.mxu0 0
        %5363 = vmatpush1.bf16.msra.mxu0 0
        %5364 = vmatprep.subr.bf16.mxu0 0
        %5365 = vmatpush1.bf16.msra.mxu0 0
        %5366 = vmatprep.mubr.bf16.mxu0 0
        %5367 = vmatmul.mubr.bf16.gmra.mrb[0].mxu0 %v5281
        %v5368 = vpop.f32.mrb[0].mxu0
        %v5369 = vadd.f32 0.0, %v5368
        %v5370 = vpop.f32.mrb[0].mxu0
        %v5371 = vpop.f32.mrb[0].mxu0
        %v5372 = vadd.f32 0.0, %v5371
        %v5373 = vpop.f32.mrb[0].mxu0
        %5374 = vmatprep.mubr.bf16.mxu0 0
        %5375 = vmatmul.mubr.bf16.gmra.mrb[0].mxu0 %v5282
        %v5376 = vpop.f32.mrb[0].mxu0
        %v5377 = vadd.f32 0.0, %v5376
        %v5378 = vpop.f32.mrb[0].mxu0
        %v5379 = vpop.f32.mrb[0].mxu0
        %v5380 = vadd.f32 0.0, %v5379
        %v5381 = vpop.f32.mrb[0].mxu0
        %5382 = vmatprep.mubr.bf16.mxu0 0
        %5383 = vmatmul.mubr.bf16.gmra.mrb[0].mxu0 %v5283
        %v5384 = vpop.f32.mrb[0].mxu0
        %v5385 = vpop.f32.mrb[0].mxu0
        %v5386 = vpop.f32.mrb[0].mxu0
        %v5387 = vadd.f32 0.0, %v5386
        %v5388 = vpop.f32.mrb[0].mxu0
        %5389 = vmatprep.mubr.bf16.mxu0 0
        %5390 = vmatmul.mubr.bf16.gmra.mrb[0].mxu0 %v5284
        %v5391 = vpop.f32.mrb[0].mxu0
        %v5392 = vadd.f32 0.0, %v5391
        %v5393 = vpop.f32.mrb[0].mxu0
        %v5394 = vpop.f32.mrb[0].mxu0
        %v5395 = vadd.f32 0.0, %v5394
        %v5396 = vpop.f32.mrb[0].mxu0
        %5397 = vmatprep.mubr.bf16.mxu0 0
        %5398 = vmatmul.mubr.bf16.gmra.mrb[0].mxu0 %v5285
        %v5399 = vpop.f32.mrb[0].mxu0
        %v5400 = vadd.f32 0.0, %v5399
        %v5401 = vpop.f32.mrb[0].mxu0
        %v5402 = vpop.f32.mrb[0].mxu0
        %v5403 = vpop.f32.mrb[0].mxu0
        %5404 = vdwg.mxu0
        %v5405 = vadd.f32 %v5238, %v5369
        %v5406 = vadd.f32 %v5239, %v5372
        %v5407 = vadd.f32 %v5240, %v5377
        %v5408 = vadd.f32 %v5241, %v5380
        %v5409 = vadd.f32 %v5242, %v5387
        %v5410 = vadd.f32 %v5243, %v5392
        %v5411 = vadd.f32 %v5244, %v5395
        %v5412 = vadd.f32 %v5245, %v5400
        %v5413 = vld [vmem:[#allocation2 + $0xa] sm:$0xff]
        %v5414 = vld [vmem:[#allocation2 + $0x12] sm:$0xff]
        %v5415 = vld [vmem:[#allocation2 + $0x1a] sm:$0xff]
        %v5416 = vld [vmem:[#allocation2 + $0x22] sm:$0xff]
        %v5417 = vld [vmem:[#allocation2 + $0x2a] sm:$0xff]
        %v5418 = vld [vmem:[#allocation2 + $0x32] sm:$0xff]
        %v5419 = vld [vmem:[#allocation2 + $0x3a] sm:$0xff]
        %v5420 = vld [vmem:[#allocation2 + $0x42] sm:$0xff]
        %v5421 = vld [vmem:[#allocation2 + $0x4a] sm:$0xff]
        %v5422 = vmax.f32 %v5413, 0.0
        %v5423 = vmax.f32 %v5414, 0.0
        %v5424 = vmax.f32 %v5415, 0.0
        %v5425 = vmax.f32 %v5416, 0.0
        %v5426 = vmax.f32 %v5417, 0.0
        %v5427 = vmax.f32 %v5418, 0.0
        %v5428 = vmax.f32 %v5419, 0.0
        %v5429 = vmax.f32 %v5420, 0.0
        %v5430 = vmax.f32 %v5421, 0.0
        %s5431 = scalar_lea.vmem [#allocation4], 1856
        %v5432 = vld [vmem:[%s5431] sm:$0xf]
        %v5433 = vld [vmem:[%s5431 + $0x4] sm:$0xf]
        %v5434 = vld [vmem:[%s5431 + $0x8] sm:$0xf]
        %v5435 = vld [vmem:[%s5431 + $0xc] sm:$0xf]
        %v5436 = vld [vmem:[%s5431 + $0x10] sm:$0xf]
        %v5437 = vld [vmem:[%s5431 + $0x14] sm:$0xf]
        %v5438 = vld [vmem:[%s5431 + $0x18] sm:$0xf]
        %v5439 = vld [vmem:[%s5431 + $0x1c] sm:$0xf]
        %v5440 = vld [vmem:[%s5431 + $0x20] sm:$0xf]
        %v5441 = vld [vmem:[%s5431 + $0x24] sm:$0xf]
        %v5442 = vld [vmem:[%s5431 + $0x28] sm:$0xf]
        %v5443 = vld [vmem:[%s5431 + $0x2c] sm:$0xf]
        %v5444 = vld [vmem:[%s5431 + $0x30] sm:$0xf]
        %v5445 = vld [vmem:[%s5431 + $0x34] sm:$0xf]
        %v5446 = vld [vmem:[%s5431 + $0x38] sm:$0xf]
        %v5447 = vld [vmem:[%s5431 + $0x3c] sm:$0xf]
        %v5448 = vpack.c.bf16 %v5423, %v5422
        %v5449 = vpack.c.bf16 %v5425, %v5424
        %v5450 = vpack.c.bf16 %v5427, %v5426
        %v5451 = vpack.c.bf16 %v5429, %v5428
        %v5452 = vpack.c.bf16 %v5430, %v5430
        %v5469 = vunpack.c.l.b16 %v5432
        %v5470 = vunpack.c.l.b16 %v5433
        %v5471 = vunpack.c.l.b16 %v5434
        %v5472 = vunpack.c.l.b16 %v5435
        %v5473 = vunpack.c.l.b16 %v5436
        %v5474 = vunpack.c.l.b16 %v5437
        %v5475 = vunpack.c.l.b16 %v5438
        %v5476 = vunpack.c.l.b16 %v5439
        %v5477 = vunpack.c.l.b16 %v5440
        %v5478 = vunpack.c.l.b16 %v5441
        %v5479 = vunpack.c.l.b16 %v5442
        %v5480 = vunpack.c.l.b16 %v5443
        %v5481 = vunpack.c.l.b16 %v5444
        %v5482 = vunpack.c.l.b16 %v5445
        %v5483 = vunpack.c.l.b16 %v5446
        %v5484 = vunpack.c.l.b16 %v5447
        %v5485 = vpack.c.b16 %v5470, %v5469
        %v5486 = vpack.c.b16 %v5472, %v5471
        %v5487 = vpack.c.b16 %v5474, %v5473
        %v5488 = vpack.c.b16 %v5476, %v5475
        %v5489 = vpack.c.b16 %v5478, %v5477
        %v5490 = vpack.c.b16 %v5480, %v5479
        %v5491 = vpack.c.b16 %v5482, %v5481
        %v5492 = vpack.c.b16 %v5484, %v5483
        %5501 = vmatprep.subr.bf16.mxu0 0
        %5502 = vmatpush1.bf16.msra.mxu0 %v5485
        %5503 = vmatprep.subr.bf16.mxu0 0
        %5504 = vmatpush1.bf16.msra.mxu0 %v5486
        %5505 = vmatprep.subr.bf16.mxu0 0
        %5506 = vmatpush1.bf16.msra.mxu0 %v5487
        %5507 = vmatprep.subr.bf16.mxu0 0
        %5508 = vmatpush1.bf16.msra.mxu0 %v5488
        %5509 = vmatprep.subr.bf16.mxu0 0
        %5510 = vmatpush1.bf16.msra.mxu0 %v5489
        %5511 = vmatprep.subr.bf16.mxu0 0
        %5512 = vmatpush1.bf16.msra.mxu0 %v5490
        %5513 = vmatprep.subr.bf16.mxu0 0
        %5514 = vmatpush1.bf16.msra.mxu0 %v5491
        %5515 = vmatprep.subr.bf16.mxu0 0
        %5516 = vmatpush1.bf16.msra.mxu0 %v5492
        %5517 = vmatprep.subr.bf16.mxu0 0
        %5518 = vmatpush1.bf16.msra.mxu0 0
        %5519 = vmatprep.subr.bf16.mxu0 0
        %5520 = vmatpush1.bf16.msra.mxu0 0
        %5521 = vmatprep.subr.bf16.mxu0 0
        %5522 = vmatpush1.bf16.msra.mxu0 0
        %5523 = vmatprep.subr.bf16.mxu0 0
        %5524 = vmatpush1.bf16.msra.mxu0 0
        %5525 = vmatprep.subr.bf16.mxu0 0
        %5526 = vmatpush1.bf16.msra.mxu0 0
        %5527 = vmatprep.subr.bf16.mxu0 0
        %5528 = vmatpush1.bf16.msra.mxu0 0
        %5529 = vmatprep.subr.bf16.mxu0 0
        %5530 = vmatpush1.bf16.msra.mxu0 0
        %5531 = vmatprep.subr.bf16.mxu0 0
        %5532 = vmatpush1.bf16.msra.mxu0 0
        %5533 = vmatprep.mubr.bf16.mxu0 0
        %5534 = vmatmul.mubr.bf16.gmra.mrb[0].mxu0 %v5448
        %v5535 = vpop.f32.mrb[0].mxu0
        %v5536 = vadd.f32 0.0, %v5535
        %v5537 = vpop.f32.mrb[0].mxu0
        %v5538 = vpop.f32.mrb[0].mxu0
        %v5539 = vadd.f32 0.0, %v5538
        %v5540 = vpop.f32.mrb[0].mxu0
        %5541 = vmatprep.mubr.bf16.mxu0 0
        %5542 = vmatmul.mubr.bf16.gmra.mrb[0].mxu0 %v5449
        %v5543 = vpop.f32.mrb[0].mxu0
        %v5544 = vadd.f32 0.0, %v5543
        %v5545 = vpop.f32.mrb[0].mxu0
        %v5546 = vpop.f32.mrb[0].mxu0
        %v5547 = vadd.f32 0.0, %v5546
        %v5548 = vpop.f32.mrb[0].mxu0
        %5549 = vmatprep.mubr.bf16.mxu0 0
        %5550 = vmatmul.mubr.bf16.gmra.mrb[0].mxu0 %v5450
        %v5551 = vpop.f32.mrb[0].mxu0
        %v5552 = vpop.f32.mrb[0].mxu0
        %v5553 = vpop.f32.mrb[0].mxu0
        %v5554 = vadd.f32 0.0, %v5553
        %v5555 = vpop.f32.mrb[0].mxu0
        %5556 = vmatprep.mubr.bf16.mxu0 0
        %5557 = vmatmul.mubr.bf16.gmra.mrb[0].mxu0 %v5451
        %v5558 = vpop.f32.mrb[0].mxu0
        %v5559 = vadd.f32 0.0, %v5558
        %v5560 = vpop.f32.mrb[0].mxu0
        %v5561 = vpop.f32.mrb[0].mxu0
        %v5562 = vadd.f32 0.0, %v5561
        %v5563 = vpop.f32.mrb[0].mxu0
        %5564 = vmatprep.mubr.bf16.mxu0 0
        %5565 = vmatmul.mubr.bf16.gmra.mrb[0].mxu0 %v5452
        %v5566 = vpop.f32.mrb[0].mxu0
        %v5567 = vadd.f32 0.0, %v5566
        %v5568 = vpop.f32.mrb[0].mxu0
        %v5569 = vpop.f32.mrb[0].mxu0
        %v5570 = vpop.f32.mrb[0].mxu0
        %5571 = vdwg.mxu0
        %v5572 = vadd.f32 %v5405, %v5536
        %v5573 = vadd.f32 %v5406, %v5539
        %v5574 = vadd.f32 %v5407, %v5544
        %v5575 = vadd.f32 %v5408, %v5547
        %v5576 = vadd.f32 %v5409, %v5554
        %v5577 = vadd.f32 %v5410, %v5559
        %v5578 = vadd.f32 %v5411, %v5562
        %v5579 = vadd.f32 %v5412, %v5567
        %s5580 = scalar_lea.vmem [#allocation6], 40
        %v5581 = vld [vmem:[%s5580] sm:$0xff]
        %v5582 = vlaneseq
        %v5583 = vshrl.u32 %v5582, 7
        %v5584 = vsub.s32 0, %v5583
        %v5585 = vrot.slane %v5581, %v5584
        %v5586 = vadd.f32 %v5572, %v5585
        %v5587 = vadd.f32 %v5573, %v5585
        %v5588 = vadd.f32 %v5574, %v5585
        %v5589 = vadd.f32 %v5575, %v5585
        %v5590 = vadd.f32 %v5576, %v5585
        %v5591 = vadd.f32 %v5577, %v5585
        %v5592 = vadd.f32 %v5578, %v5585
        %v5593 = vadd.f32 %v5579, %v5585
        %v5594 = vsel %vm233, %v5586, 0.0
        %v5595 = vsel %vm233, %v5587, 0.0
        %v5596 = vsel %vm233, %v5588, 0.0
        %v5597 = vsel %vm233, %v5589, 0.0
        %v5598 = vsel %vm233, %v5590, 0.0
        %v5599 = vsel %vm233, %v5591, 0.0
        %v5600 = vsel %vm233, %v5592, 0.0
        %v5601 = vsel %vm233, %v5593, 0.0
        %5602 = vadd.xlane.f32.xlu0 %v5594
        %v5603 = vpop.xlane.xlu0 %5602
        %5604 = vadd.xlane.f32.xlu0 %v5595
        %v5605 = vpop.xlane.xlu0 %5604
        %5606 = vadd.xlane.f32.xlu0 %v5596
        %v5607 = vpop.xlane.xlu0 %5606
        %5608 = vadd.xlane.f32.xlu0 %v5597
        %v5609 = vpop.xlane.xlu0 %5608
        %5610 = vadd.xlane.f32.xlu0 %v5598
        %v5611 = vpop.xlane.xlu0 %5610
        %5612 = vadd.xlane.f32.xlu0 %v5599
        %v5613 = vpop.xlane.xlu0 %5612
        %5614 = vadd.xlane.f32.xlu0 %v5600
        %v5615 = vpop.xlane.xlu0 %5614
        %5616 = vadd.xlane.f32.xlu0 %v5601
        %v5617 = vpop.xlane.xlu0 %5616
        %v5618 = vmul.f32 %v5603, 0.015625
        %v5619 = vmul.f32 %v5605, 0.015625
        %v5620 = vmul.f32 %v5607, 0.015625
        %v5621 = vmul.f32 %v5609, 0.015625
        %v5622 = vmul.f32 %v5611, 0.015625
        %v5623 = vmul.f32 %v5613, 0.015625
        %v5624 = vmul.f32 %v5615, 0.015625
        %v5625 = vmul.f32 %v5617, 0.015625
        %v5626 = vsub.f32 %v5586, %v5618
        %v5627 = vsub.f32 %v5587, %v5619
        %v5628 = vsub.f32 %v5588, %v5620
        %v5629 = vsub.f32 %v5589, %v5621
        %v5630 = vsub.f32 %v5590, %v5622
        %v5631 = vsub.f32 %v5591, %v5623
        %v5632 = vsub.f32 %v5592, %v5624
        %v5633 = vsub.f32 %v5593, %v5625
        %v5634 = vsel %vm233, %v5626, 0.0
        %v5635 = vsel %vm233, %v5627, 0.0
        %v5636 = vsel %vm233, %v5628, 0.0
        %v5637 = vsel %vm233, %v5629, 0.0
        %v5638 = vsel %vm233, %v5630, 0.0
        %v5639 = vsel %vm233, %v5631, 0.0
        %v5640 = vsel %vm233, %v5632, 0.0
        %v5641 = vsel %vm233, %v5633, 0.0
        %v5642 = vmul.f32 %v5634, %v5634
        %v5643 = vmul.f32 %v5635, %v5635
        %v5644 = vmul.f32 %v5636, %v5636
        %v5645 = vmul.f32 %v5637, %v5637
        %v5646 = vmul.f32 %v5638, %v5638
        %v5647 = vmul.f32 %v5639, %v5639
        %v5648 = vmul.f32 %v5640, %v5640
        %v5649 = vmul.f32 %v5641, %v5641
        %5650 = vadd.xlane.f32.xlu0 %v5642
        %v5651 = vpop.xlane.xlu0 %5650
        %5652 = vadd.xlane.f32.xlu0 %v5643
        %v5653 = vpop.xlane.xlu0 %5652
        %5654 = vadd.xlane.f32.xlu0 %v5644
        %v5655 = vpop.xlane.xlu0 %5654
        %5656 = vadd.xlane.f32.xlu0 %v5645
        %v5657 = vpop.xlane.xlu0 %5656
        %5658 = vadd.xlane.f32.xlu0 %v5646
        %v5659 = vpop.xlane.xlu0 %5658
        %5660 = vadd.xlane.f32.xlu0 %v5647
        %v5661 = vpop.xlane.xlu0 %5660
        %5662 = vadd.xlane.f32.xlu0 %v5648
        %v5663 = vpop.xlane.xlu0 %5662
        %5664 = vadd.xlane.f32.xlu0 %v5649
        %v5665 = vpop.xlane.xlu0 %5664
        %v5666 = vmul.f32 %v5651, 0.015625
        %v5667 = vmul.f32 %v5653, 0.015625
        %v5668 = vmul.f32 %v5655, 0.015625
        %v5669 = vmul.f32 %v5657, 0.015625
        %v5670 = vmul.f32 %v5659, 0.015625
        %v5671 = vmul.f32 %v5661, 0.015625
        %v5672 = vmul.f32 %v5663, 0.015625
        %v5673 = vmul.f32 %v5665, 0.015625
        %v5674 = vadd.f32 %v5666, 1e-05
        %v5675 = vadd.f32 %v5667, 1e-05
        %v5676 = vadd.f32 %v5668, 1e-05
        %v5677 = vadd.f32 %v5669, 1e-05
        %v5678 = vadd.f32 %v5670, 1e-05
        %v5679 = vadd.f32 %v5671, 1e-05
        %v5680 = vadd.f32 %v5672, 1e-05
        %v5681 = vadd.f32 %v5673, 1e-05
        %v5682 = vrsqrt.pop %v5674
        %v5683 = vrsqrt.pop %v5675
        %v5684 = vrsqrt.pop %v5676
        %v5685 = vrsqrt.pop %v5677
        %v5686 = vrsqrt.pop %v5678
        %v5687 = vrsqrt.pop %v5679
        %v5688 = vrsqrt.pop %v5680
        %v5689 = vrsqrt.pop %v5681
        %v5690 = vmul.f32 %v5626, %v5682
        %v5691 = vmul.f32 %v5627, %v5683
        %v5692 = vmul.f32 %v5628, %v5684
        %v5693 = vmul.f32 %v5629, %v5685
        %v5694 = vmul.f32 %v5630, %v5686
        %v5695 = vmul.f32 %v5631, %v5687
        %v5696 = vmul.f32 %v5632, %v5688
        %v5697 = vmul.f32 %v5633, %v5689
        %v5698 = vlaneseq
        %v5699 = vshrl.u32 %v5698, 7
        %v5700 = vsub.s32 1, %v5699
        %v5701 = vrot.slane %v5581, %v5700
        %v5702 = vmul.f32 %v5690, %v5701
        %v5703 = vmul.f32 %v5691, %v5701
        %v5704 = vmul.f32 %v5692, %v5701
        %v5705 = vmul.f32 %v5693, %v5701
        %v5706 = vmul.f32 %v5694, %v5701
        %v5707 = vmul.f32 %v5695, %v5701
        %v5708 = vmul.f32 %v5696, %v5701
        %v5709 = vmul.f32 %v5697, %v5701
        %v5710 = vlaneseq
        %v5711 = vshrl.u32 %v5710, 7
        %v5712 = vsub.s32 2, %v5711
        %v5713 = vrot.slane %v5581, %v5712
        %v5714 = vadd.f32 %v5702, %v5713
        %v5715 = vadd.f32 %v5703, %v5713
        %v5716 = vadd.f32 %v5704, %v5713
        %v5717 = vadd.f32 %v5705, %v5713
        %v5718 = vadd.f32 %v5706, %v5713
        %v5719 = vadd.f32 %v5707, %v5713
        %v5720 = vadd.f32 %v5708, %v5713
        %v5721 = vadd.f32 %v5709, %v5713
        %v5722 = vld [vmem:[#allocation3 + $0x8] sm:$0xff]
        %v5723 = vld [vmem:[#allocation3 + $0x10] sm:$0xff]
        %v5724 = vld [vmem:[#allocation3 + $0x18] sm:$0xff]
        %v5725 = vld [vmem:[#allocation3 + $0x20] sm:$0xff]
        %v5726 = vadd.f32 %v5714, %v5722
        %v5727 = vadd.f32 %v5715, %v5723
        %v5728 = vadd.f32 %v5716, %v5724
        %v5729 = vadd.f32 %v5717, %v5725
        %5730 = vst [vmem:[#allocation2 + $0x8] sm:$0xff] %v5726
        %5731 = vst [vmem:[#allocation2 + $0x10] sm:$0xff] %v5727
        %5732 = vst [vmem:[#allocation2 + $0x18] sm:$0xff] %v5728
        %5733 = vst [vmem:[#allocation2 + $0x20] sm:$0xff] %v5729
        %v5734 = vld [vmem:[#allocation3 + $0x30] sm:$0xff]
        %v5735 = vld [vmem:[#allocation3 + $0x38] sm:$0xff]
        %v5736 = vld [vmem:[#allocation3 + $0x40] sm:$0xff]
        %v5737 = vld [vmem:[#allocation3 + $0x48] sm:$0xff]
        %v5738 = vadd.f32 %v5718, %v5734
        %v5739 = vadd.f32 %v5719, %v5735
        %v5740 = vadd.f32 %v5720, %v5736
        %v5741 = vadd.f32 %v5721, %v5737
        %5742 = vst [vmem:[#allocation2 + $0x30] sm:$0xff] %v5738
        %5743 = vst [vmem:[#allocation2 + $0x38] sm:$0xff] %v5739
        %5744 = vst [vmem:[#allocation2 + $0x40] sm:$0xff] %v5740
        %5745 = vst [vmem:[#allocation2 + $0x48] sm:$0xff] %v5741
        %v5746 = vld [vmem:[#allocation2] sm:$0xff]
        %v5747 = vld [vmem:[#allocation2 + $0x8] sm:$0xff]
        %v5748 = vld [vmem:[#allocation2 + $0x10] sm:$0xff]
        %v5749 = vld [vmem:[#allocation2 + $0x18] sm:$0xff]
        %v5750 = vld [vmem:[#allocation2 + $0x20] sm:$0xff]
        %v5751 = vld [vmem:[#allocation2 + $0x28] sm:$0xff]
        %v5752 = vld [vmem:[#allocation2 + $0x30] sm:$0xff]
        %v5753 = vld [vmem:[#allocation2 + $0x38] sm:$0xff]
        %v5754 = vld [vmem:[#allocation2 + $0x40] sm:$0xff]
        %v5755 = vld [vmem:[#allocation2 + $0x48] sm:$0xff]
        %v5756 = vld [vmem:[#allocation2 + $0x50] sm:$0xff]
        %5757 = vst [vmem:[#allocation3] sm:$0xff] %v5746
        %5758 = vst [vmem:[#allocation3 + $0x8] sm:$0xff] %v5747
        %5759 = vst [vmem:[#allocation3 + $0x10] sm:$0xff] %v5748
        %5760 = vst [vmem:[#allocation3 + $0x18] sm:$0xff] %v5749
        %5761 = vst [vmem:[#allocation3 + $0x20] sm:$0xff] %v5750
        %5762 = vst [vmem:[#allocation3 + $0x28] sm:$0xff] %v5751
        %5763 = vst [vmem:[#allocation3 + $0x30] sm:$0xff] %v5752
        %5764 = vst [vmem:[#allocation3 + $0x38] sm:$0xff] %v5753
        %5765 = vst [vmem:[#allocation3 + $0x40] sm:$0xff] %v5754
        %5766 = vst [vmem:[#allocation3 + $0x48] sm:$0xff] %v5755
        %5767 = vst [vmem:[#allocation3 + $0x50] sm:$0xff] %v5756
        %v5768 = vld [vmem:[#allocation2 + $0x6] sm:$0xff]
        %v5769 = vld [vmem:[#allocation2 + $0xe] sm:$0xff]
        %v5770 = vld [vmem:[#allocation2 + $0x16] sm:$0xff]
        %v5771 = vld [vmem:[#allocation2 + $0x1e] sm:$0xff]
        %v5772 = vld [vmem:[#allocation2 + $0x26] sm:$0xff]
        %v5773 = vld [vmem:[#allocation2 + $0x2e] sm:$0xff]
        %v5774 = vld [vmem:[#allocation2 + $0x36] sm:$0xff]
        %v5775 = vld [vmem:[#allocation2 + $0x3e] sm:$0xff]
        %v5776 = vld [vmem:[#allocation2 + $0x46] sm:$0xff]
        %v5777 = vmax.f32 %v5768, 0.0
        %v5778 = vmax.f32 %v5769, 0.0
        %v5779 = vmax.f32 %v5770, 0.0
        %v5780 = vmax.f32 %v5771, 0.0
        %v5781 = vmax.f32 %v5772, 0.0
        %v5782 = vmax.f32 %v5773, 0.0
        %v5783 = vmax.f32 %v5774, 0.0
        %v5784 = vmax.f32 %v5775, 0.0
        %v5785 = vmax.f32 %v5776, 0.0
        %s5786 = scalar_lea.vmem [#allocation4], 1920
        %v5787 = vld [vmem:[%s5786] sm:$0xf]
        %v5788 = vld [vmem:[%s5786 + $0x4] sm:$0xf]
        %v5789 = vld [vmem:[%s5786 + $0x8] sm:$0xf]
        %v5790 = vld [vmem:[%s5786 + $0xc] sm:$0xf]
        %v5791 = vld [vmem:[%s5786 + $0x10] sm:$0xf]
        %v5792 = vld [vmem:[%s5786 + $0x14] sm:$0xf]
        %v5793 = vld [vmem:[%s5786 + $0x18] sm:$0xf]
        %v5794 = vld [vmem:[%s5786 + $0x1c] sm:$0xf]
        %v5795 = vld [vmem:[%s5786 + $0x20] sm:$0xf]
        %v5796 = vld [vmem:[%s5786 + $0x24] sm:$0xf]
        %v5797 = vld [vmem:[%s5786 + $0x28] sm:$0xf]
        %v5798 = vld [vmem:[%s5786 + $0x2c] sm:$0xf]
        %v5799 = vld [vmem:[%s5786 + $0x30] sm:$0xf]
        %v5800 = vld [vmem:[%s5786 + $0x34] sm:$0xf]
        %v5801 = vld [vmem:[%s5786 + $0x38] sm:$0xf]
        %v5802 = vld [vmem:[%s5786 + $0x3c] sm:$0xf]
        %v5803 = vpack.c.bf16 %v5778, %v5777
        %v5804 = vpack.c.bf16 %v5780, %v5779
        %v5805 = vpack.c.bf16 %v5782, %v5781
        %v5806 = vpack.c.bf16 %v5784, %v5783
        %v5807 = vpack.c.bf16 %v5785, %v5785
        %v5808 = vld [vmem:[#allocation2 + $0x7] sm:$0xff]
        %v5809 = vld [vmem:[#allocation2 + $0xf] sm:$0xff]
        %v5810 = vld [vmem:[#allocation2 + $0x17] sm:$0xff]
        %v5811 = vld [vmem:[#allocation2 + $0x1f] sm:$0xff]
        %v5812 = vld [vmem:[#allocation2 + $0x27] sm:$0xff]
        %v5813 = vld [vmem:[#allocation2 + $0x2f] sm:$0xff]
        %v5814 = vld [vmem:[#allocation2 + $0x37] sm:$0xff]
        %v5815 = vld [vmem:[#allocation2 + $0x3f] sm:$0xff]
        %v5816 = vld [vmem:[#allocation2 + $0x47] sm:$0xff]
        %v5817 = vmax.f32 %v5808, 0.0
        %v5818 = vmax.f32 %v5809, 0.0
        %v5819 = vmax.f32 %v5810, 0.0
        %v5820 = vmax.f32 %v5811, 0.0
        %v5821 = vmax.f32 %v5812, 0.0
        %v5822 = vmax.f32 %v5813, 0.0
        %v5823 = vmax.f32 %v5814, 0.0
        %v5824 = vmax.f32 %v5815, 0.0
        %v5825 = vmax.f32 %v5816, 0.0
        %s5826 = scalar_lea.vmem [#allocation4], 1984
        %v5827 = vld [vmem:[%s5826] sm:$0xf]
        %v5828 = vld [vmem:[%s5826 + $0x4] sm:$0xf]
        %v5829 = vld [vmem:[%s5826 + $0x8] sm:$0xf]
        %v5830 = vld [vmem:[%s5826 + $0xc] sm:$0xf]
        %v5831 = vld [vmem:[%s5826 + $0x10] sm:$0xf]
        %v5832 = vld [vmem:[%s5826 + $0x14] sm:$0xf]
        %v5833 = vld [vmem:[%s5826 + $0x18] sm:$0xf]
        %v5834 = vld [vmem:[%s5826 + $0x1c] sm:$0xf]
        %v5835 = vld [vmem:[%s5826 + $0x20] sm:$0xf]
        %v5836 = vld [vmem:[%s5826 + $0x24] sm:$0xf]
        %v5837 = vld [vmem:[%s5826 + $0x28] sm:$0xf]
        %v5838 = vld [vmem:[%s5826 + $0x2c] sm:$0xf]
        %v5839 = vld [vmem:[%s5826 + $0x30] sm:$0xf]
        %v5840 = vld [vmem:[%s5826 + $0x34] sm:$0xf]
        %v5841 = vld [vmem:[%s5826 + $0x38] sm:$0xf]
        %v5842 = vld [vmem:[%s5826 + $0x3c] sm:$0xf]
        %v5843 = vpack.c.bf16 %v5818, %v5817
        %v5844 = vpack.c.bf16 %v5820, %v5819
        %v5845 = vpack.c.bf16 %v5822, %v5821
        %v5846 = vpack.c.bf16 %v5824, %v5823
        %v5847 = vpack.c.bf16 %v5825, %v5825
        %v5864 = vunpack.c.l.b16 %v5827
        %v5865 = vunpack.c.l.b16 %v5828
        %v5866 = vunpack.c.l.b16 %v5829
        %v5867 = vunpack.c.l.b16 %v5830
        %v5868 = vunpack.c.l.b16 %v5831
        %v5869 = vunpack.c.l.b16 %v5832
        %v5870 = vunpack.c.l.b16 %v5833
        %v5871 = vunpack.c.l.b16 %v5834
        %v5872 = vunpack.c.l.b16 %v5835
        %v5873 = vunpack.c.l.b16 %v5836
        %v5874 = vunpack.c.l.b16 %v5837
        %v5875 = vunpack.c.l.b16 %v5838
        %v5876 = vunpack.c.l.b16 %v5839
        %v5877 = vunpack.c.l.b16 %v5840
        %v5878 = vunpack.c.l.b16 %v5841
        %v5879 = vunpack.c.l.b16 %v5842
        %v5880 = vpack.c.b16 %v5865, %v5864
        %v5881 = vpack.c.b16 %v5867, %v5866
        %v5882 = vpack.c.b16 %v5869, %v5868
        %v5883 = vpack.c.b16 %v5871, %v5870
        %v5884 = vpack.c.b16 %v5873, %v5872
        %v5885 = vpack.c.b16 %v5875, %v5874
        %v5886 = vpack.c.b16 %v5877, %v5876
        %v5887 = vpack.c.b16 %v5879, %v5878
        %5896 = vmatprep.subr.bf16.mxu0 0
        %5897 = vmatpush1.bf16.msra.mxu0 %v5880
        %5898 = vmatprep.subr.bf16.mxu0 0
        %5899 = vmatpush1.bf16.msra.mxu0 %v5881
        %5900 = vmatprep.subr.bf16.mxu0 0
        %5901 = vmatpush1.bf16.msra.mxu0 %v5882
        %5902 = vmatprep.subr.bf16.mxu0 0
        %5903 = vmatpush1.bf16.msra.mxu0 %v5883
        %5904 = vmatprep.subr.bf16.mxu0 0
        %5905 = vmatpush1.bf16.msra.mxu0 %v5884
        %5906 = vmatprep.subr.bf16.mxu0 0
        %5907 = vmatpush1.bf16.msra.mxu0 %v5885
        %5908 = vmatprep.subr.bf16.mxu0 0
        %5909 = vmatpush1.bf16.msra.mxu0 %v5886
        %5910 = vmatprep.subr.bf16.mxu0 0
        %5911 = vmatpush1.bf16.msra.mxu0 %v5887
        %5912 = vmatprep.subr.bf16.mxu0 0
        %5913 = vmatpush1.bf16.msra.mxu0 0
        %5914 = vmatprep.subr.bf16.mxu0 0
        %5915 = vmatpush1.bf16.msra.mxu0 0
        %5916 = vmatprep.subr.bf16.mxu0 0
        %5917 = vmatpush1.bf16.msra.mxu0 0
        %5918 = vmatprep.subr.bf16.mxu0 0
        %5919 = vmatpush1.bf16.msra.mxu0 0
        %5920 = vmatprep.subr.bf16.mxu0 0
        %5921 = vmatpush1.bf16.msra.mxu0 0
        %5922 = vmatprep.subr.bf16.mxu0 0
        %5923 = vmatpush1.bf16.msra.mxu0 0
        %5924 = vmatprep.subr.bf16.mxu0 0
        %5925 = vmatpush1.bf16.msra.mxu0 0
        %5926 = vmatprep.subr.bf16.mxu0 0
        %5927 = vmatpush1.bf16.msra.mxu0 0
        %5928 = vmatprep.mubr.bf16.mxu0 0
        %5929 = vmatmul.mubr.bf16.gmra.mrb[0].mxu0 %v5843
        %v5930 = vpop.f32.mrb[0].mxu0
        %v5931 = vadd.f32 0.0, %v5930
        %v5932 = vpop.f32.mrb[0].mxu0
        %v5933 = vpop.f32.mrb[0].mxu0
        %v5934 = vadd.f32 0.0, %v5933
        %v5935 = vpop.f32.mrb[0].mxu0
        %5936 = vmatprep.mubr.bf16.mxu0 0
        %5937 = vmatmul.mubr.bf16.gmra.mrb[0].mxu0 %v5844
        %v5938 = vpop.f32.mrb[0].mxu0
        %v5939 = vadd.f32 0.0, %v5938
        %v5940 = vpop.f32.mrb[0].mxu0
        %v5941 = vpop.f32.mrb[0].mxu0
        %v5942 = vadd.f32 0.0, %v5941
        %v5943 = vpop.f32.mrb[0].mxu0
        %5944 = vmatprep.mubr.bf16.mxu0 0
        %5945 = vmatmul.mubr.bf16.gmra.mrb[0].mxu0 %v5845
        %v5946 = vpop.f32.mrb[0].mxu0
        %v5947 = vpop.f32.mrb[0].mxu0
        %v5948 = vpop.f32.mrb[0].mxu0
        %v5949 = vadd.f32 0.0, %v5948
        %v5950 = vpop.f32.mrb[0].mxu0
        %5951 = vmatprep.mubr.bf16.mxu0 0
        %5952 = vmatmul.mubr.bf16.gmra.mrb[0].mxu0 %v5846
        %v5953 = vpop.f32.mrb[0].mxu0
        %v5954 = vadd.f32 0.0, %v5953
        %v5955 = vpop.f32.mrb[0].mxu0
        %v5956 = vpop.f32.mrb[0].mxu0
        %v5957 = vadd.f32 0.0, %v5956
        %v5958 = vpop.f32.mrb[0].mxu0
        %5959 = vmatprep.mubr.bf16.mxu0 0
        %5960 = vmatmul.mubr.bf16.gmra.mrb[0].mxu0 %v5847
        %v5961 = vpop.f32.mrb[0].mxu0
        %v5962 = vadd.f32 0.0, %v5961
        %v5963 = vpop.f32.mrb[0].mxu0
        %v5964 = vpop.f32.mrb[0].mxu0
        %v5965 = vpop.f32.mrb[0].mxu0
        %5966 = vdwg.mxu0
        %v5983 = vunpack.c.l.b16 %v5787
        %v5984 = vunpack.c.l.b16 %v5788
        %v5985 = vunpack.c.l.b16 %v5789
        %v5986 = vunpack.c.l.b16 %v5790
        %v5987 = vunpack.c.l.b16 %v5791
        %v5988 = vunpack.c.l.b16 %v5792
        %v5989 = vunpack.c.l.b16 %v5793
        %v5990 = vunpack.c.l.b16 %v5794
        %v5991 = vunpack.c.l.b16 %v5795
        %v5992 = vunpack.c.l.b16 %v5796
        %v5993 = vunpack.c.l.b16 %v5797
        %v5994 = vunpack.c.l.b16 %v5798
        %v5995 = vunpack.c.l.b16 %v5799
        %v5996 = vunpack.c.l.b16 %v5800
        %v5997 = vunpack.c.l.b16 %v5801
        %v5998 = vunpack.c.l.b16 %v5802
        %v5999 = vpack.c.b16 %v5984, %v5983
        %v6000 = vpack.c.b16 %v5986, %v5985
        %v6001 = vpack.c.b16 %v5988, %v5987
        %v6002 = vpack.c.b16 %v5990, %v5989
        %v6003 = vpack.c.b16 %v5992, %v5991
        %v6004 = vpack.c.b16 %v5994, %v5993
        %v6005 = vpack.c.b16 %v5996, %v5995
        %v6006 = vpack.c.b16 %v5998, %v5997
        %6015 = vmatprep.subr.bf16.mxu0 0
        %6016 = vmatpush1.bf16.msra.mxu0 %v5999
        %6017 = vmatprep.subr.bf16.mxu0 0
        %6018 = vmatpush1.bf16.msra.mxu0 %v6000
        %6019 = vmatprep.subr.bf16.mxu0 0
        %6020 = vmatpush1.bf16.msra.mxu0 %v6001
        %6021 = vmatprep.subr.bf16.mxu0 0
        %6022 = vmatpush1.bf16.msra.mxu0 %v6002
        %6023 = vmatprep.subr.bf16.mxu0 0
        %6024 = vmatpush1.bf16.msra.mxu0 %v6003
        %6025 = vmatprep.subr.bf16.mxu0 0
        %6026 = vmatpush1.bf16.msra.mxu0 %v6004
        %6027 = vmatprep.subr.bf16.mxu0 0
        %6028 = vmatpush1.bf16.msra.mxu0 %v6005
        %6029 = vmatprep.subr.bf16.mxu0 0
        %6030 = vmatpush1.bf16.msra.mxu0 %v6006
        %6031 = vmatprep.subr.bf16.mxu0 0
        %6032 = vmatpush1.bf16.msra.mxu0 0
        %6033 = vmatprep.subr.bf16.mxu0 0
        %6034 = vmatpush1.bf16.msra.mxu0 0
        %6035 = vmatprep.subr.bf16.mxu0 0
        %6036 = vmatpush1.bf16.msra.mxu0 0
        %6037 = vmatprep.subr.bf16.mxu0 0
        %6038 = vmatpush1.bf16.msra.mxu0 0
        %6039 = vmatprep.subr.bf16.mxu0 0
        %6040 = vmatpush1.bf16.msra.mxu0 0
        %6041 = vmatprep.subr.bf16.mxu0 0
        %6042 = vmatpush1.bf16.msra.mxu0 0
        %6043 = vmatprep.subr.bf16.mxu0 0
        %6044 = vmatpush1.bf16.msra.mxu0 0
        %6045 = vmatprep.subr.bf16.mxu0 0
        %6046 = vmatpush1.bf16.msra.mxu0 0
        %6047 = vmatprep.mubr.bf16.mxu0 0
        %6048 = vmatmul.mubr.bf16.gmra.mrb[0].mxu0 %v5803
        %v6049 = vpop.f32.mrb[0].mxu0
        %v6050 = vadd.f32 %v5931, %v6049
        %v6051 = vpop.f32.mrb[0].mxu0
        %v6052 = vpop.f32.mrb[0].mxu0
        %v6053 = vadd.f32 %v5934, %v6052
        %v6054 = vpop.f32.mrb[0].mxu0
        %6055 = vmatprep.mubr.bf16.mxu0 0
        %6056 = vmatmul.mubr.bf16.gmra.mrb[0].mxu0 %v5804
        %v6057 = vpop.f32.mrb[0].mxu0
        %v6058 = vadd.f32 %v5939, %v6057
        %v6059 = vpop.f32.mrb[0].mxu0
        %v6060 = vpop.f32.mrb[0].mxu0
        %v6061 = vadd.f32 %v5942, %v6060
        %v6062 = vpop.f32.mrb[0].mxu0
        %6063 = vmatprep.mubr.bf16.mxu0 0
        %6064 = vmatmul.mubr.bf16.gmra.mrb[0].mxu0 %v5805
        %v6065 = vpop.f32.mrb[0].mxu0
        %v6066 = vpop.f32.mrb[0].mxu0
        %v6067 = vpop.f32.mrb[0].mxu0
        %v6068 = vadd.f32 %v5949, %v6067
        %v6069 = vpop.f32.mrb[0].mxu0
        %6070 = vmatprep.mubr.bf16.mxu0 0
        %6071 = vmatmul.mubr.bf16.gmra.mrb[0].mxu0 %v5806
        %v6072 = vpop.f32.mrb[0].mxu0
        %v6073 = vadd.f32 %v5954, %v6072
        %v6074 = vpop.f32.mrb[0].mxu0
        %v6075 = vpop.f32.mrb[0].mxu0
        %v6076 = vadd.f32 %v5957, %v6075
        %v6077 = vpop.f32.mrb[0].mxu0
        %6078 = vmatprep.mubr.bf16.mxu0 0
        %6079 = vmatmul.mubr.bf16.gmra.mrb[0].mxu0 %v5807
        %v6080 = vpop.f32.mrb[0].mxu0
        %v6081 = vadd.f32 %v5962, %v6080
        %v6082 = vpop.f32.mrb[0].mxu0
        %v6083 = vpop.f32.mrb[0].mxu0
        %v6084 = vpop.f32.mrb[0].mxu0
        %6085 = vdwg.mxu0
        %v6086 = vld [vmem:[#allocation2 + $0x8] sm:$0xff]
        %v6087 = vld [vmem:[#allocation2 + $0x10] sm:$0xff]
        %v6088 = vld [vmem:[#allocation2 + $0x18] sm:$0xff]
        %v6089 = vld [vmem:[#allocation2 + $0x20] sm:$0xff]
        %v6090 = vld [vmem:[#allocation2 + $0x28] sm:$0xff]
        %v6091 = vld [vmem:[#allocation2 + $0x30] sm:$0xff]
        %v6092 = vld [vmem:[#allocation2 + $0x38] sm:$0xff]
        %v6093 = vld [vmem:[#allocation2 + $0x40] sm:$0xff]
        %v6094 = vld [vmem:[#allocation2 + $0x48] sm:$0xff]
        %v6095 = vmax.f32 %v6086, 0.0
        %v6096 = vmax.f32 %v6087, 0.0
        %v6097 = vmax.f32 %v6088, 0.0
        %v6098 = vmax.f32 %v6089, 0.0
        %v6099 = vmax.f32 %v6090, 0.0
        %v6100 = vmax.f32 %v6091, 0.0
        %v6101 = vmax.f32 %v6092, 0.0
        %v6102 = vmax.f32 %v6093, 0.0
        %v6103 = vmax.f32 %v6094, 0.0
        %s6104 = scalar_lea.vmem [#allocation4], 2048
        %v6105 = vld [vmem:[%s6104] sm:$0xf]
        %v6106 = vld [vmem:[%s6104 + $0x4] sm:$0xf]
        %v6107 = vld [vmem:[%s6104 + $0x8] sm:$0xf]
        %v6108 = vld [vmem:[%s6104 + $0xc] sm:$0xf]
        %v6109 = vld [vmem:[%s6104 + $0x10] sm:$0xf]
        %v6110 = vld [vmem:[%s6104 + $0x14] sm:$0xf]
        %v6111 = vld [vmem:[%s6104 + $0x18] sm:$0xf]
        %v6112 = vld [vmem:[%s6104 + $0x1c] sm:$0xf]
        %v6113 = vld [vmem:[%s6104 + $0x20] sm:$0xf]
        %v6114 = vld [vmem:[%s6104 + $0x24] sm:$0xf]
        %v6115 = vld [vmem:[%s6104 + $0x28] sm:$0xf]
        %v6116 = vld [vmem:[%s6104 + $0x2c] sm:$0xf]
        %v6117 = vld [vmem:[%s6104 + $0x30] sm:$0xf]
        %v6118 = vld [vmem:[%s6104 + $0x34] sm:$0xf]
        %v6119 = vld [vmem:[%s6104 + $0x38] sm:$0xf]
        %v6120 = vld [vmem:[%s6104 + $0x3c] sm:$0xf]
        %v6121 = vpack.c.bf16 %v6096, %v6095
        %v6122 = vpack.c.bf16 %v6098, %v6097
        %v6123 = vpack.c.bf16 %v6100, %v6099
        %v6124 = vpack.c.bf16 %v6102, %v6101
        %v6125 = vpack.c.bf16 %v6103, %v6103
        %v6142 = vunpack.c.l.b16 %v6105
        %v6143 = vunpack.c.l.b16 %v6106
        %v6144 = vunpack.c.l.b16 %v6107
        %v6145 = vunpack.c.l.b16 %v6108
        %v6146 = vunpack.c.l.b16 %v6109
        %v6147 = vunpack.c.l.b16 %v6110
        %v6148 = vunpack.c.l.b16 %v6111
        %v6149 = vunpack.c.l.b16 %v6112
        %v6150 = vunpack.c.l.b16 %v6113
        %v6151 = vunpack.c.l.b16 %v6114
        %v6152 = vunpack.c.l.b16 %v6115
        %v6153 = vunpack.c.l.b16 %v6116
        %v6154 = vunpack.c.l.b16 %v6117
        %v6155 = vunpack.c.l.b16 %v6118
        %v6156 = vunpack.c.l.b16 %v6119
        %v6157 = vunpack.c.l.b16 %v6120
        %v6158 = vpack.c.b16 %v6143, %v6142
        %v6159 = vpack.c.b16 %v6145, %v6144
        %v6160 = vpack.c.b16 %v6147, %v6146
        %v6161 = vpack.c.b16 %v6149, %v6148
        %v6162 = vpack.c.b16 %v6151, %v6150
        %v6163 = vpack.c.b16 %v6153, %v6152
        %v6164 = vpack.c.b16 %v6155, %v6154
        %v6165 = vpack.c.b16 %v6157, %v6156
        %6174 = vmatprep.subr.bf16.mxu0 0
        %6175 = vmatpush1.bf16.msra.mxu0 %v6158
        %6176 = vmatprep.subr.bf16.mxu0 0
        %6177 = vmatpush1.bf16.msra.mxu0 %v6159
        %6178 = vmatprep.subr.bf16.mxu0 0
        %6179 = vmatpush1.bf16.msra.mxu0 %v6160
        %6180 = vmatprep.subr.bf16.mxu0 0
        %6181 = vmatpush1.bf16.msra.mxu0 %v6161
        %6182 = vmatprep.subr.bf16.mxu0 0
        %6183 = vmatpush1.bf16.msra.mxu0 %v6162
        %6184 = vmatprep.subr.bf16.mxu0 0
        %6185 = vmatpush1.bf16.msra.mxu0 %v6163
        %6186 = vmatprep.subr.bf16.mxu0 0
        %6187 = vmatpush1.bf16.msra.mxu0 %v6164
        %6188 = vmatprep.subr.bf16.mxu0 0
        %6189 = vmatpush1.bf16.msra.mxu0 %v6165
        %6190 = vmatprep.subr.bf16.mxu0 0
        %6191 = vmatpush1.bf16.msra.mxu0 0
        %6192 = vmatprep.subr.bf16.mxu0 0
        %6193 = vmatpush1.bf16.msra.mxu0 0
        %6194 = vmatprep.subr.bf16.mxu0 0
        %6195 = vmatpush1.bf16.msra.mxu0 0
        %6196 = vmatprep.subr.bf16.mxu0 0
        %6197 = vmatpush1.bf16.msra.mxu0 0
        %6198 = vmatprep.subr.bf16.mxu0 0
        %6199 = vmatpush1.bf16.msra.mxu0 0
        %6200 = vmatprep.subr.bf16.mxu0 0
        %6201 = vmatpush1.bf16.msra.mxu0 0
        %6202 = vmatprep.subr.bf16.mxu0 0
        %6203 = vmatpush1.bf16.msra.mxu0 0
        %6204 = vmatprep.subr.bf16.mxu0 0
        %6205 = vmatpush1.bf16.msra.mxu0 0
        %6206 = vmatprep.mubr.bf16.mxu0 0
        %6207 = vmatmul.mubr.bf16.gmra.mrb[0].mxu0 %v6121
        %v6208 = vpop.f32.mrb[0].mxu0
        %v6209 = vadd.f32 0.0, %v6208
        %v6210 = vpop.f32.mrb[0].mxu0
        %v6211 = vpop.f32.mrb[0].mxu0
        %v6212 = vadd.f32 0.0, %v6211
        %v6213 = vpop.f32.mrb[0].mxu0
        %6214 = vmatprep.mubr.bf16.mxu0 0
        %6215 = vmatmul.mubr.bf16.gmra.mrb[0].mxu0 %v6122
        %v6216 = vpop.f32.mrb[0].mxu0
        %v6217 = vadd.f32 0.0, %v6216
        %v6218 = vpop.f32.mrb[0].mxu0
        %v6219 = vpop.f32.mrb[0].mxu0
        %v6220 = vadd.f32 0.0, %v6219
        %v6221 = vpop.f32.mrb[0].mxu0
        %6222 = vmatprep.mubr.bf16.mxu0 0
        %6223 = vmatmul.mubr.bf16.gmra.mrb[0].mxu0 %v6123
        %v6224 = vpop.f32.mrb[0].mxu0
        %v6225 = vpop.f32.mrb[0].mxu0
        %v6226 = vpop.f32.mrb[0].mxu0
        %v6227 = vadd.f32 0.0, %v6226
        %v6228 = vpop.f32.mrb[0].mxu0
        %6229 = vmatprep.mubr.bf16.mxu0 0
        %6230 = vmatmul.mubr.bf16.gmra.mrb[0].mxu0 %v6124
        %v6231 = vpop.f32.mrb[0].mxu0
        %v6232 = vadd.f32 0.0, %v6231
        %v6233 = vpop.f32.mrb[0].mxu0
        %v6234 = vpop.f32.mrb[0].mxu0
        %v6235 = vadd.f32 0.0, %v6234
        %v6236 = vpop.f32.mrb[0].mxu0
        %6237 = vmatprep.mubr.bf16.mxu0 0
        %6238 = vmatmul.mubr.bf16.gmra.mrb[0].mxu0 %v6125
        %v6239 = vpop.f32.mrb[0].mxu0
        %v6240 = vadd.f32 0.0, %v6239
        %v6241 = vpop.f32.mrb[0].mxu0
        %v6242 = vpop.f32.mrb[0].mxu0
        %v6243 = vpop.f32.mrb[0].mxu0
        %6244 = vdwg.mxu0
        %v6245 = vadd.f32 %v6050, %v6209
        %v6246 = vadd.f32 %v6053, %v6212
        %v6247 = vadd.f32 %v6058, %v6217
        %v6248 = vadd.f32 %v6061, %v6220
        %v6249 = vadd.f32 %v6068, %v6227
        %v6250 = vadd.f32 %v6073, %v6232
        %v6251 = vadd.f32 %v6076, %v6235
        %v6252 = vadd.f32 %v6081, %v6240
        %v6253 = vld [vmem:[#allocation2 + $0x9] sm:$0xff]
        %v6254 = vld [vmem:[#allocation2 + $0x11] sm:$0xff]
        %v6255 = vld [vmem:[#allocation2 + $0x19] sm:$0xff]
        %v6256 = vld [vmem:[#allocation2 + $0x21] sm:$0xff]
        %v6257 = vld [vmem:[#allocation2 + $0x29] sm:$0xff]
        %v6258 = vld [vmem:[#allocation2 + $0x31] sm:$0xff]
        %v6259 = vld [vmem:[#allocation2 + $0x39] sm:$0xff]
        %v6260 = vld [vmem:[#allocation2 + $0x41] sm:$0xff]
        %v6261 = vld [vmem:[#allocation2 + $0x49] sm:$0xff]
        %v6262 = vmax.f32 %v6253, 0.0
        %v6263 = vmax.f32 %v6254, 0.0
        %v6264 = vmax.f32 %v6255, 0.0
        %v6265 = vmax.f32 %v6256, 0.0
        %v6266 = vmax.f32 %v6257, 0.0
        %v6267 = vmax.f32 %v6258, 0.0
        %v6268 = vmax.f32 %v6259, 0.0
        %v6269 = vmax.f32 %v6260, 0.0
        %v6270 = vmax.f32 %v6261, 0.0
        %s6271 = scalar_lea.vmem [#allocation4], 2112
        %v6272 = vld [vmem:[%s6271] sm:$0xf]
        %v6273 = vld [vmem:[%s6271 + $0x4] sm:$0xf]
        %v6274 = vld [vmem:[%s6271 + $0x8] sm:$0xf]
        %v6275 = vld [vmem:[%s6271 + $0xc] sm:$0xf]
        %v6276 = vld [vmem:[%s6271 + $0x10] sm:$0xf]
        %v6277 = vld [vmem:[%s6271 + $0x14] sm:$0xf]
        %v6278 = vld [vmem:[%s6271 + $0x18] sm:$0xf]
        %v6279 = vld [vmem:[%s6271 + $0x1c] sm:$0xf]
        %v6280 = vld [vmem:[%s6271 + $0x20] sm:$0xf]
        %v6281 = vld [vmem:[%s6271 + $0x24] sm:$0xf]
        %v6282 = vld [vmem:[%s6271 + $0x28] sm:$0xf]
        %v6283 = vld [vmem:[%s6271 + $0x2c] sm:$0xf]
        %v6284 = vld [vmem:[%s6271 + $0x30] sm:$0xf]
        %v6285 = vld [vmem:[%s6271 + $0x34] sm:$0xf]
        %v6286 = vld [vmem:[%s6271 + $0x38] sm:$0xf]
        %v6287 = vld [vmem:[%s6271 + $0x3c] sm:$0xf]
        %v6288 = vpack.c.bf16 %v6263, %v6262
        %v6289 = vpack.c.bf16 %v6265, %v6264
        %v6290 = vpack.c.bf16 %v6267, %v6266
        %v6291 = vpack.c.bf16 %v6269, %v6268
        %v6292 = vpack.c.bf16 %v6270, %v6270
        %v6309 = vunpack.c.l.b16 %v6272
        %v6310 = vunpack.c.l.b16 %v6273
        %v6311 = vunpack.c.l.b16 %v6274
        %v6312 = vunpack.c.l.b16 %v6275
        %v6313 = vunpack.c.l.b16 %v6276
        %v6314 = vunpack.c.l.b16 %v6277
        %v6315 = vunpack.c.l.b16 %v6278
        %v6316 = vunpack.c.l.b16 %v6279
        %v6317 = vunpack.c.l.b16 %v6280
        %v6318 = vunpack.c.l.b16 %v6281
        %v6319 = vunpack.c.l.b16 %v6282
        %v6320 = vunpack.c.l.b16 %v6283
        %v6321 = vunpack.c.l.b16 %v6284
        %v6322 = vunpack.c.l.b16 %v6285
        %v6323 = vunpack.c.l.b16 %v6286
        %v6324 = vunpack.c.l.b16 %v6287
        %v6325 = vpack.c.b16 %v6310, %v6309
        %v6326 = vpack.c.b16 %v6312, %v6311
        %v6327 = vpack.c.b16 %v6314, %v6313
        %v6328 = vpack.c.b16 %v6316, %v6315
        %v6329 = vpack.c.b16 %v6318, %v6317
        %v6330 = vpack.c.b16 %v6320, %v6319
        %v6331 = vpack.c.b16 %v6322, %v6321
        %v6332 = vpack.c.b16 %v6324, %v6323
        %6341 = vmatprep.subr.bf16.mxu0 0
        %6342 = vmatpush1.bf16.msra.mxu0 %v6325
        %6343 = vmatprep.subr.bf16.mxu0 0
        %6344 = vmatpush1.bf16.msra.mxu0 %v6326
        %6345 = vmatprep.subr.bf16.mxu0 0
        %6346 = vmatpush1.bf16.msra.mxu0 %v6327
        %6347 = vmatprep.subr.bf16.mxu0 0
        %6348 = vmatpush1.bf16.msra.mxu0 %v6328
        %6349 = vmatprep.subr.bf16.mxu0 0
        %6350 = vmatpush1.bf16.msra.mxu0 %v6329
        %6351 = vmatprep.subr.bf16.mxu0 0
        %6352 = vmatpush1.bf16.msra.mxu0 %v6330
        %6353 = vmatprep.subr.bf16.mxu0 0
        %6354 = vmatpush1.bf16.msra.mxu0 %v6331
        %6355 = vmatprep.subr.bf16.mxu0 0
        %6356 = vmatpush1.bf16.msra.mxu0 %v6332
        %6357 = vmatprep.subr.bf16.mxu0 0
        %6358 = vmatpush1.bf16.msra.mxu0 0
        %6359 = vmatprep.subr.bf16.mxu0 0
        %6360 = vmatpush1.bf16.msra.mxu0 0
        %6361 = vmatprep.subr.bf16.mxu0 0
        %6362 = vmatpush1.bf16.msra.mxu0 0
        %6363 = vmatprep.subr.bf16.mxu0 0
        %6364 = vmatpush1.bf16.msra.mxu0 0
        %6365 = vmatprep.subr.bf16.mxu0 0
        %6366 = vmatpush1.bf16.msra.mxu0 0
        %6367 = vmatprep.subr.bf16.mxu0 0
        %6368 = vmatpush1.bf16.msra.mxu0 0
        %6369 = vmatprep.subr.bf16.mxu0 0
        %6370 = vmatpush1.bf16.msra.mxu0 0
        %6371 = vmatprep.subr.bf16.mxu0 0
        %6372 = vmatpush1.bf16.msra.mxu0 0
        %6373 = vmatprep.mubr.bf16.mxu0 0
        %6374 = vmatmul.mubr.bf16.gmra.mrb[0].mxu0 %v6288
        %v6375 = vpop.f32.mrb[0].mxu0
        %v6376 = vadd.f32 0.0, %v6375
        %v6377 = vpop.f32.mrb[0].mxu0
        %v6378 = vpop.f32.mrb[0].mxu0
        %v6379 = vadd.f32 0.0, %v6378
        %v6380 = vpop.f32.mrb[0].mxu0
        %6381 = vmatprep.mubr.bf16.mxu0 0
        %6382 = vmatmul.mubr.bf16.gmra.mrb[0].mxu0 %v6289
        %v6383 = vpop.f32.mrb[0].mxu0
        %v6384 = vadd.f32 0.0, %v6383
        %v6385 = vpop.f32.mrb[0].mxu0
        %v6386 = vpop.f32.mrb[0].mxu0
        %v6387 = vadd.f32 0.0, %v6386
        %v6388 = vpop.f32.mrb[0].mxu0
        %6389 = vmatprep.mubr.bf16.mxu0 0
        %6390 = vmatmul.mubr.bf16.gmra.mrb[0].mxu0 %v6290
        %v6391 = vpop.f32.mrb[0].mxu0
        %v6392 = vpop.f32.mrb[0].mxu0
        %v6393 = vpop.f32.mrb[0].mxu0
        %v6394 = vadd.f32 0.0, %v6393
        %v6395 = vpop.f32.mrb[0].mxu0
        %6396 = vmatprep.mubr.bf16.mxu0 0
        %6397 = vmatmul.mubr.bf16.gmra.mrb[0].mxu0 %v6291
        %v6398 = vpop.f32.mrb[0].mxu0
        %v6399 = vadd.f32 0.0, %v6398
        %v6400 = vpop.f32.mrb[0].mxu0
        %v6401 = vpop.f32.mrb[0].mxu0
        %v6402 = vadd.f32 0.0, %v6401
        %v6403 = vpop.f32.mrb[0].mxu0
        %6404 = vmatprep.mubr.bf16.mxu0 0
        %6405 = vmatmul.mubr.bf16.gmra.mrb[0].mxu0 %v6292
        %v6406 = vpop.f32.mrb[0].mxu0
        %v6407 = vadd.f32 0.0, %v6406
        %v6408 = vpop.f32.mrb[0].mxu0
        %v6409 = vpop.f32.mrb[0].mxu0
        %v6410 = vpop.f32.mrb[0].mxu0
        %6411 = vdwg.mxu0
        %v6412 = vadd.f32 %v6245, %v6376
        %v6413 = vadd.f32 %v6246, %v6379
        %v6414 = vadd.f32 %v6247, %v6384
        %v6415 = vadd.f32 %v6248, %v6387
        %v6416 = vadd.f32 %v6249, %v6394
        %v6417 = vadd.f32 %v6250, %v6399
        %v6418 = vadd.f32 %v6251, %v6402
        %v6419 = vadd.f32 %v6252, %v6407
        %v6420 = vld [vmem:[#allocation2 + $0xa] sm:$0xff]
        %v6421 = vld [vmem:[#allocation2 + $0x12] sm:$0xff]
        %v6422 = vld [vmem:[#allocation2 + $0x1a] sm:$0xff]
        %v6423 = vld [vmem:[#allocation2 + $0x22] sm:$0xff]
        %v6424 = vld [vmem:[#allocation2 + $0x2a] sm:$0xff]
        %v6425 = vld [vmem:[#allocation2 + $0x32] sm:$0xff]
        %v6426 = vld [vmem:[#allocation2 + $0x3a] sm:$0xff]
        %v6427 = vld [vmem:[#allocation2 + $0x42] sm:$0xff]
        %v6428 = vld [vmem:[#allocation2 + $0x4a] sm:$0xff]
        %v6429 = vmax.f32 %v6420, 0.0
        %v6430 = vmax.f32 %v6421, 0.0
        %v6431 = vmax.f32 %v6422, 0.0
        %v6432 = vmax.f32 %v6423, 0.0
        %v6433 = vmax.f32 %v6424, 0.0
        %v6434 = vmax.f32 %v6425, 0.0
        %v6435 = vmax.f32 %v6426, 0.0
        %v6436 = vmax.f32 %v6427, 0.0
        %v6437 = vmax.f32 %v6428, 0.0
        %s6438 = scalar_lea.vmem [#allocation4], 2176
        %v6439 = vld [vmem:[%s6438] sm:$0xf]
        %v6440 = vld [vmem:[%s6438 + $0x4] sm:$0xf]
        %v6441 = vld [vmem:[%s6438 + $0x8] sm:$0xf]
        %v6442 = vld [vmem:[%s6438 + $0xc] sm:$0xf]
        %v6443 = vld [vmem:[%s6438 + $0x10] sm:$0xf]
        %v6444 = vld [vmem:[%s6438 + $0x14] sm:$0xf]
        %v6445 = vld [vmem:[%s6438 + $0x18] sm:$0xf]
        %v6446 = vld [vmem:[%s6438 + $0x1c] sm:$0xf]
        %v6447 = vld [vmem:[%s6438 + $0x20] sm:$0xf]
        %v6448 = vld [vmem:[%s6438 + $0x24] sm:$0xf]
        %v6449 = vld [vmem:[%s6438 + $0x28] sm:$0xf]
        %v6450 = vld [vmem:[%s6438 + $0x2c] sm:$0xf]
        %v6451 = vld [vmem:[%s6438 + $0x30] sm:$0xf]
        %v6452 = vld [vmem:[%s6438 + $0x34] sm:$0xf]
        %v6453 = vld [vmem:[%s6438 + $0x38] sm:$0xf]
        %v6454 = vld [vmem:[%s6438 + $0x3c] sm:$0xf]
        %v6455 = vpack.c.bf16 %v6430, %v6429
        %v6456 = vpack.c.bf16 %v6432, %v6431
        %v6457 = vpack.c.bf16 %v6434, %v6433
        %v6458 = vpack.c.bf16 %v6436, %v6435
        %v6459 = vpack.c.bf16 %v6437, %v6437
        %v6476 = vunpack.c.l.b16 %v6439
        %v6477 = vunpack.c.l.b16 %v6440
        %v6478 = vunpack.c.l.b16 %v6441
        %v6479 = vunpack.c.l.b16 %v6442
        %v6480 = vunpack.c.l.b16 %v6443
        %v6481 = vunpack.c.l.b16 %v6444
        %v6482 = vunpack.c.l.b16 %v6445
        %v6483 = vunpack.c.l.b16 %v6446
        %v6484 = vunpack.c.l.b16 %v6447
        %v6485 = vunpack.c.l.b16 %v6448
        %v6486 = vunpack.c.l.b16 %v6449
        %v6487 = vunpack.c.l.b16 %v6450
        %v6488 = vunpack.c.l.b16 %v6451
        %v6489 = vunpack.c.l.b16 %v6452
        %v6490 = vunpack.c.l.b16 %v6453
        %v6491 = vunpack.c.l.b16 %v6454
        %v6492 = vpack.c.b16 %v6477, %v6476
        %v6493 = vpack.c.b16 %v6479, %v6478
        %v6494 = vpack.c.b16 %v6481, %v6480
        %v6495 = vpack.c.b16 %v6483, %v6482
        %v6496 = vpack.c.b16 %v6485, %v6484
        %v6497 = vpack.c.b16 %v6487, %v6486
        %v6498 = vpack.c.b16 %v6489, %v6488
        %v6499 = vpack.c.b16 %v6491, %v6490
        %6508 = vmatprep.subr.bf16.mxu0 0
        %6509 = vmatpush1.bf16.msra.mxu0 %v6492
        %6510 = vmatprep.subr.bf16.mxu0 0
        %6511 = vmatpush1.bf16.msra.mxu0 %v6493
        %6512 = vmatprep.subr.bf16.mxu0 0
        %6513 = vmatpush1.bf16.msra.mxu0 %v6494
        %6514 = vmatprep.subr.bf16.mxu0 0
        %6515 = vmatpush1.bf16.msra.mxu0 %v6495
        %6516 = vmatprep.subr.bf16.mxu0 0
        %6517 = vmatpush1.bf16.msra.mxu0 %v6496
        %6518 = vmatprep.subr.bf16.mxu0 0
        %6519 = vmatpush1.bf16.msra.mxu0 %v6497
        %6520 = vmatprep.subr.bf16.mxu0 0
        %6521 = vmatpush1.bf16.msra.mxu0 %v6498
        %6522 = vmatprep.subr.bf16.mxu0 0
        %6523 = vmatpush1.bf16.msra.mxu0 %v6499
        %6524 = vmatprep.subr.bf16.mxu0 0
        %6525 = vmatpush1.bf16.msra.mxu0 0
        %6526 = vmatprep.subr.bf16.mxu0 0
        %6527 = vmatpush1.bf16.msra.mxu0 0
        %6528 = vmatprep.subr.bf16.mxu0 0
        %6529 = vmatpush1.bf16.msra.mxu0 0
        %6530 = vmatprep.subr.bf16.mxu0 0
        %6531 = vmatpush1.bf16.msra.mxu0 0
        %6532 = vmatprep.subr.bf16.mxu0 0
        %6533 = vmatpush1.bf16.msra.mxu0 0
        %6534 = vmatprep.subr.bf16.mxu0 0
        %6535 = vmatpush1.bf16.msra.mxu0 0
        %6536 = vmatprep.subr.bf16.mxu0 0
        %6537 = vmatpush1.bf16.msra.mxu0 0
        %6538 = vmatprep.subr.bf16.mxu0 0
        %6539 = vmatpush1.bf16.msra.mxu0 0
        %6540 = vmatprep.mubr.bf16.mxu0 0
        %6541 = vmatmul.mubr.bf16.gmra.mrb[0].mxu0 %v6455
        %v6542 = vpop.f32.mrb[0].mxu0
        %v6543 = vadd.f32 0.0, %v6542
        %v6544 = vpop.f32.mrb[0].mxu0
        %v6545 = vpop.f32.mrb[0].mxu0
        %v6546 = vadd.f32 0.0, %v6545
        %v6547 = vpop.f32.mrb[0].mxu0
        %6548 = vmatprep.mubr.bf16.mxu0 0
        %6549 = vmatmul.mubr.bf16.gmra.mrb[0].mxu0 %v6456
        %v6550 = vpop.f32.mrb[0].mxu0
        %v6551 = vadd.f32 0.0, %v6550
        %v6552 = vpop.f32.mrb[0].mxu0
        %v6553 = vpop.f32.mrb[0].mxu0
        %v6554 = vadd.f32 0.0, %v6553
        %v6555 = vpop.f32.mrb[0].mxu0
        %6556 = vmatprep.mubr.bf16.mxu0 0
        %6557 = vmatmul.mubr.bf16.gmra.mrb[0].mxu0 %v6457
        %v6558 = vpop.f32.mrb[0].mxu0
        %v6559 = vpop.f32.mrb[0].mxu0
        %v6560 = vpop.f32.mrb[0].mxu0
        %v6561 = vadd.f32 0.0, %v6560
        %v6562 = vpop.f32.mrb[0].mxu0
        %6563 = vmatprep.mubr.bf16.mxu0 0
        %6564 = vmatmul.mubr.bf16.gmra.mrb[0].mxu0 %v6458
        %v6565 = vpop.f32.mrb[0].mxu0
        %v6566 = vadd.f32 0.0, %v6565
        %v6567 = vpop.f32.mrb[0].mxu0
        %v6568 = vpop.f32.mrb[0].mxu0
        %v6569 = vadd.f32 0.0, %v6568
        %v6570 = vpop.f32.mrb[0].mxu0
        %6571 = vmatprep.mubr.bf16.mxu0 0
        %6572 = vmatmul.mubr.bf16.gmra.mrb[0].mxu0 %v6459
        %v6573 = vpop.f32.mrb[0].mxu0
        %v6574 = vadd.f32 0.0, %v6573
        %v6575 = vpop.f32.mrb[0].mxu0
        %v6576 = vpop.f32.mrb[0].mxu0
        %v6577 = vpop.f32.mrb[0].mxu0
        %6578 = vdwg.mxu0
        %v6579 = vadd.f32 %v6412, %v6543
        %v6580 = vadd.f32 %v6413, %v6546
        %v6581 = vadd.f32 %v6414, %v6551
        %v6582 = vadd.f32 %v6415, %v6554
        %v6583 = vadd.f32 %v6416, %v6561
        %v6584 = vadd.f32 %v6417, %v6566
        %v6585 = vadd.f32 %v6418, %v6569
        %v6586 = vadd.f32 %v6419, %v6574
        %s6587 = scalar_lea.vmem [#allocation6], 48
        %v6588 = vld [vmem:[%s6587] sm:$0xff]
        %v6589 = vlaneseq
        %v6590 = vshrl.u32 %v6589, 7
        %v6591 = vsub.s32 0, %v6590
        %v6592 = vrot.slane %v6588, %v6591
        %v6593 = vadd.f32 %v6579, %v6592
        %v6594 = vadd.f32 %v6580, %v6592
        %v6595 = vadd.f32 %v6581, %v6592
        %v6596 = vadd.f32 %v6582, %v6592
        %v6597 = vadd.f32 %v6583, %v6592
        %v6598 = vadd.f32 %v6584, %v6592
        %v6599 = vadd.f32 %v6585, %v6592
        %v6600 = vadd.f32 %v6586, %v6592
        %v6601 = vsel %vm233, %v6593, 0.0
        %v6602 = vsel %vm233, %v6594, 0.0
        %v6603 = vsel %vm233, %v6595, 0.0
        %v6604 = vsel %vm233, %v6596, 0.0
        %v6605 = vsel %vm233, %v6597, 0.0
        %v6606 = vsel %vm233, %v6598, 0.0
        %v6607 = vsel %vm233, %v6599, 0.0
        %v6608 = vsel %vm233, %v6600, 0.0
        %6609 = vadd.xlane.f32.xlu0 %v6601
        %v6610 = vpop.xlane.xlu0 %6609
        %6611 = vadd.xlane.f32.xlu0 %v6602
        %v6612 = vpop.xlane.xlu0 %6611
        %6613 = vadd.xlane.f32.xlu0 %v6603
        %v6614 = vpop.xlane.xlu0 %6613
        %6615 = vadd.xlane.f32.xlu0 %v6604
        %v6616 = vpop.xlane.xlu0 %6615
        %6617 = vadd.xlane.f32.xlu0 %v6605
        %v6618 = vpop.xlane.xlu0 %6617
        %6619 = vadd.xlane.f32.xlu0 %v6606
        %v6620 = vpop.xlane.xlu0 %6619
        %6621 = vadd.xlane.f32.xlu0 %v6607
        %v6622 = vpop.xlane.xlu0 %6621
        %6623 = vadd.xlane.f32.xlu0 %v6608
        %v6624 = vpop.xlane.xlu0 %6623
        %v6625 = vmul.f32 %v6610, 0.015625
        %v6626 = vmul.f32 %v6612, 0.015625
        %v6627 = vmul.f32 %v6614, 0.015625
        %v6628 = vmul.f32 %v6616, 0.015625
        %v6629 = vmul.f32 %v6618, 0.015625
        %v6630 = vmul.f32 %v6620, 0.015625
        %v6631 = vmul.f32 %v6622, 0.015625
        %v6632 = vmul.f32 %v6624, 0.015625
        %v6633 = vsub.f32 %v6593, %v6625
        %v6634 = vsub.f32 %v6594, %v6626
        %v6635 = vsub.f32 %v6595, %v6627
        %v6636 = vsub.f32 %v6596, %v6628
        %v6637 = vsub.f32 %v6597, %v6629
        %v6638 = vsub.f32 %v6598, %v6630
        %v6639 = vsub.f32 %v6599, %v6631
        %v6640 = vsub.f32 %v6600, %v6632
        %v6641 = vsel %vm233, %v6633, 0.0
        %v6642 = vsel %vm233, %v6634, 0.0
        %v6643 = vsel %vm233, %v6635, 0.0
        %v6644 = vsel %vm233, %v6636, 0.0
        %v6645 = vsel %vm233, %v6637, 0.0
        %v6646 = vsel %vm233, %v6638, 0.0
        %v6647 = vsel %vm233, %v6639, 0.0
        %v6648 = vsel %vm233, %v6640, 0.0
        %v6649 = vmul.f32 %v6641, %v6641
        %v6650 = vmul.f32 %v6642, %v6642
        %v6651 = vmul.f32 %v6643, %v6643
        %v6652 = vmul.f32 %v6644, %v6644
        %v6653 = vmul.f32 %v6645, %v6645
        %v6654 = vmul.f32 %v6646, %v6646
        %v6655 = vmul.f32 %v6647, %v6647
        %v6656 = vmul.f32 %v6648, %v6648
        %6657 = vadd.xlane.f32.xlu0 %v6649
        %v6658 = vpop.xlane.xlu0 %6657
        %6659 = vadd.xlane.f32.xlu0 %v6650
        %v6660 = vpop.xlane.xlu0 %6659
        %6661 = vadd.xlane.f32.xlu0 %v6651
        %v6662 = vpop.xlane.xlu0 %6661
        %6663 = vadd.xlane.f32.xlu0 %v6652
        %v6664 = vpop.xlane.xlu0 %6663
        %6665 = vadd.xlane.f32.xlu0 %v6653
        %v6666 = vpop.xlane.xlu0 %6665
        %6667 = vadd.xlane.f32.xlu0 %v6654
        %v6668 = vpop.xlane.xlu0 %6667
        %6669 = vadd.xlane.f32.xlu0 %v6655
        %v6670 = vpop.xlane.xlu0 %6669
        %6671 = vadd.xlane.f32.xlu0 %v6656
        %v6672 = vpop.xlane.xlu0 %6671
        %v6673 = vmul.f32 %v6658, 0.015625
        %v6674 = vmul.f32 %v6660, 0.015625
        %v6675 = vmul.f32 %v6662, 0.015625
        %v6676 = vmul.f32 %v6664, 0.015625
        %v6677 = vmul.f32 %v6666, 0.015625
        %v6678 = vmul.f32 %v6668, 0.015625
        %v6679 = vmul.f32 %v6670, 0.015625
        %v6680 = vmul.f32 %v6672, 0.015625
        %v6681 = vadd.f32 %v6673, 1e-05
        %v6682 = vadd.f32 %v6674, 1e-05
        %v6683 = vadd.f32 %v6675, 1e-05
        %v6684 = vadd.f32 %v6676, 1e-05
        %v6685 = vadd.f32 %v6677, 1e-05
        %v6686 = vadd.f32 %v6678, 1e-05
        %v6687 = vadd.f32 %v6679, 1e-05
        %v6688 = vadd.f32 %v6680, 1e-05
        %v6689 = vrsqrt.pop %v6681
        %v6690 = vrsqrt.pop %v6682
        %v6691 = vrsqrt.pop %v6683
        %v6692 = vrsqrt.pop %v6684
        %v6693 = vrsqrt.pop %v6685
        %v6694 = vrsqrt.pop %v6686
        %v6695 = vrsqrt.pop %v6687
        %v6696 = vrsqrt.pop %v6688
        %v6697 = vmul.f32 %v6633, %v6689
        %v6698 = vmul.f32 %v6634, %v6690
        %v6699 = vmul.f32 %v6635, %v6691
        %v6700 = vmul.f32 %v6636, %v6692
        %v6701 = vmul.f32 %v6637, %v6693
        %v6702 = vmul.f32 %v6638, %v6694
        %v6703 = vmul.f32 %v6639, %v6695
        %v6704 = vmul.f32 %v6640, %v6696
        %v6705 = vlaneseq
        %v6706 = vshrl.u32 %v6705, 7
        %v6707 = vsub.s32 1, %v6706
        %v6708 = vrot.slane %v6588, %v6707
        %v6709 = vmul.f32 %v6697, %v6708
        %v6710 = vmul.f32 %v6698, %v6708
        %v6711 = vmul.f32 %v6699, %v6708
        %v6712 = vmul.f32 %v6700, %v6708
        %v6713 = vmul.f32 %v6701, %v6708
        %v6714 = vmul.f32 %v6702, %v6708
        %v6715 = vmul.f32 %v6703, %v6708
        %v6716 = vmul.f32 %v6704, %v6708
        %v6717 = vlaneseq
        %v6718 = vshrl.u32 %v6717, 7
        %v6719 = vsub.s32 2, %v6718
        %v6720 = vrot.slane %v6588, %v6719
        %v6721 = vadd.f32 %v6709, %v6720
        %v6722 = vadd.f32 %v6710, %v6720
        %v6723 = vadd.f32 %v6711, %v6720
        %v6724 = vadd.f32 %v6712, %v6720
        %v6725 = vadd.f32 %v6713, %v6720
        %v6726 = vadd.f32 %v6714, %v6720
        %v6727 = vadd.f32 %v6715, %v6720
        %v6728 = vadd.f32 %v6716, %v6720
        %6729 = vst [vmem:[#allocation2 + $0x8] sm:$0xff] %v6721
        %6730 = vst [vmem:[#allocation2 + $0x10] sm:$0xff] %v6722
        %6731 = vst [vmem:[#allocation2 + $0x18] sm:$0xff] %v6723
        %6732 = vst [vmem:[#allocation2 + $0x20] sm:$0xff] %v6724
        %6733 = vst [vmem:[#allocation2 + $0x30] sm:$0xff] %v6725
        %6734 = vst [vmem:[#allocation2 + $0x38] sm:$0xff] %v6726
        %6735 = vst [vmem:[#allocation2 + $0x40] sm:$0xff] %v6727
        %6736 = vst [vmem:[#allocation2 + $0x48] sm:$0xff] %v6728
        %v6737 = vld [vmem:[#allocation2 + $0x6] sm:$0xff]
        %v6738 = vld [vmem:[#allocation2 + $0xe] sm:$0xff]
        %v6739 = vld [vmem:[#allocation2 + $0x16] sm:$0xff]
        %v6740 = vld [vmem:[#allocation2 + $0x1e] sm:$0xff]
        %v6741 = vld [vmem:[#allocation2 + $0x26] sm:$0xff]
        %v6742 = vld [vmem:[#allocation2 + $0x2e] sm:$0xff]
        %v6743 = vld [vmem:[#allocation2 + $0x36] sm:$0xff]
        %v6744 = vld [vmem:[#allocation2 + $0x3e] sm:$0xff]
        %v6745 = vld [vmem:[#allocation2 + $0x46] sm:$0xff]
        %v6746 = vmax.f32 %v6737, 0.0
        %v6747 = vmax.f32 %v6738, 0.0
        %v6748 = vmax.f32 %v6739, 0.0
        %v6749 = vmax.f32 %v6740, 0.0
        %v6750 = vmax.f32 %v6741, 0.0
        %v6751 = vmax.f32 %v6742, 0.0
        %v6752 = vmax.f32 %v6743, 0.0
        %v6753 = vmax.f32 %v6744, 0.0
        %v6754 = vmax.f32 %v6745, 0.0
        %s6755 = scalar_lea.vmem [#allocation4], 2240
        %v6756 = vld [vmem:[%s6755] sm:$0xf]
        %v6757 = vld [vmem:[%s6755 + $0x4] sm:$0xf]
        %v6758 = vld [vmem:[%s6755 + $0x8] sm:$0xf]
        %v6759 = vld [vmem:[%s6755 + $0xc] sm:$0xf]
        %v6760 = vld [vmem:[%s6755 + $0x10] sm:$0xf]
        %v6761 = vld [vmem:[%s6755 + $0x14] sm:$0xf]
        %v6762 = vld [vmem:[%s6755 + $0x18] sm:$0xf]
        %v6763 = vld [vmem:[%s6755 + $0x1c] sm:$0xf]
        %v6764 = vld [vmem:[%s6755 + $0x20] sm:$0xf]
        %v6765 = vld [vmem:[%s6755 + $0x24] sm:$0xf]
        %v6766 = vld [vmem:[%s6755 + $0x28] sm:$0xf]
        %v6767 = vld [vmem:[%s6755 + $0x2c] sm:$0xf]
        %v6768 = vld [vmem:[%s6755 + $0x30] sm:$0xf]
        %v6769 = vld [vmem:[%s6755 + $0x34] sm:$0xf]
        %v6770 = vld [vmem:[%s6755 + $0x38] sm:$0xf]
        %v6771 = vld [vmem:[%s6755 + $0x3c] sm:$0xf]
        %v6772 = vpack.c.bf16 %v6747, %v6746
        %v6773 = vpack.c.bf16 %v6749, %v6748
        %v6774 = vpack.c.bf16 %v6751, %v6750
        %v6775 = vpack.c.bf16 %v6753, %v6752
        %v6776 = vpack.c.bf16 %v6754, %v6754
        %v6777 = vld [vmem:[#allocation2 + $0x7] sm:$0xff]
        %v6778 = vld [vmem:[#allocation2 + $0xf] sm:$0xff]
        %v6779 = vld [vmem:[#allocation2 + $0x17] sm:$0xff]
        %v6780 = vld [vmem:[#allocation2 + $0x1f] sm:$0xff]
        %v6781 = vld [vmem:[#allocation2 + $0x27] sm:$0xff]
        %v6782 = vld [vmem:[#allocation2 + $0x2f] sm:$0xff]
        %v6783 = vld [vmem:[#allocation2 + $0x37] sm:$0xff]
        %v6784 = vld [vmem:[#allocation2 + $0x3f] sm:$0xff]
        %v6785 = vld [vmem:[#allocation2 + $0x47] sm:$0xff]
        %v6786 = vmax.f32 %v6777, 0.0
        %v6787 = vmax.f32 %v6778, 0.0
        %v6788 = vmax.f32 %v6779, 0.0
        %v6789 = vmax.f32 %v6780, 0.0
        %v6790 = vmax.f32 %v6781, 0.0
        %v6791 = vmax.f32 %v6782, 0.0
        %v6792 = vmax.f32 %v6783, 0.0
        %v6793 = vmax.f32 %v6784, 0.0
        %v6794 = vmax.f32 %v6785, 0.0
        %s6795 = scalar_lea.vmem [#allocation4], 2304
        %v6796 = vld [vmem:[%s6795] sm:$0xf]
        %v6797 = vld [vmem:[%s6795 + $0x4] sm:$0xf]
        %v6798 = vld [vmem:[%s6795 + $0x8] sm:$0xf]
        %v6799 = vld [vmem:[%s6795 + $0xc] sm:$0xf]
        %v6800 = vld [vmem:[%s6795 + $0x10] sm:$0xf]
        %v6801 = vld [vmem:[%s6795 + $0x14] sm:$0xf]
        %v6802 = vld [vmem:[%s6795 + $0x18] sm:$0xf]
        %v6803 = vld [vmem:[%s6795 + $0x1c] sm:$0xf]
        %v6804 = vld [vmem:[%s6795 + $0x20] sm:$0xf]
        %v6805 = vld [vmem:[%s6795 + $0x24] sm:$0xf]
        %v6806 = vld [vmem:[%s6795 + $0x28] sm:$0xf]
        %v6807 = vld [vmem:[%s6795 + $0x2c] sm:$0xf]
        %v6808 = vld [vmem:[%s6795 + $0x30] sm:$0xf]
        %v6809 = vld [vmem:[%s6795 + $0x34] sm:$0xf]
        %v6810 = vld [vmem:[%s6795 + $0x38] sm:$0xf]
        %v6811 = vld [vmem:[%s6795 + $0x3c] sm:$0xf]
        %v6812 = vpack.c.bf16 %v6787, %v6786
        %v6813 = vpack.c.bf16 %v6789, %v6788
        %v6814 = vpack.c.bf16 %v6791, %v6790
        %v6815 = vpack.c.bf16 %v6793, %v6792
        %v6816 = vpack.c.bf16 %v6794, %v6794
        %v6833 = vunpack.c.l.b16 %v6796
        %v6834 = vunpack.c.l.b16 %v6797
        %v6835 = vunpack.c.l.b16 %v6798
        %v6836 = vunpack.c.l.b16 %v6799
        %v6837 = vunpack.c.l.b16 %v6800
        %v6838 = vunpack.c.l.b16 %v6801
        %v6839 = vunpack.c.l.b16 %v6802
        %v6840 = vunpack.c.l.b16 %v6803
        %v6841 = vunpack.c.l.b16 %v6804
        %v6842 = vunpack.c.l.b16 %v6805
        %v6843 = vunpack.c.l.b16 %v6806
        %v6844 = vunpack.c.l.b16 %v6807
        %v6845 = vunpack.c.l.b16 %v6808
        %v6846 = vunpack.c.l.b16 %v6809
        %v6847 = vunpack.c.l.b16 %v6810
        %v6848 = vunpack.c.l.b16 %v6811
        %v6849 = vpack.c.b16 %v6834, %v6833
        %v6850 = vpack.c.b16 %v6836, %v6835
        %v6851 = vpack.c.b16 %v6838, %v6837
        %v6852 = vpack.c.b16 %v6840, %v6839
        %v6853 = vpack.c.b16 %v6842, %v6841
        %v6854 = vpack.c.b16 %v6844, %v6843
        %v6855 = vpack.c.b16 %v6846, %v6845
        %v6856 = vpack.c.b16 %v6848, %v6847
        %6865 = vmatprep.subr.bf16.mxu0 0
        %6866 = vmatpush1.bf16.msra.mxu0 %v6849
        %6867 = vmatprep.subr.bf16.mxu0 0
        %6868 = vmatpush1.bf16.msra.mxu0 %v6850
        %6869 = vmatprep.subr.bf16.mxu0 0
        %6870 = vmatpush1.bf16.msra.mxu0 %v6851
        %6871 = vmatprep.subr.bf16.mxu0 0
        %6872 = vmatpush1.bf16.msra.mxu0 %v6852
        %6873 = vmatprep.subr.bf16.mxu0 0
        %6874 = vmatpush1.bf16.msra.mxu0 %v6853
        %6875 = vmatprep.subr.bf16.mxu0 0
        %6876 = vmatpush1.bf16.msra.mxu0 %v6854
        %6877 = vmatprep.subr.bf16.mxu0 0
        %6878 = vmatpush1.bf16.msra.mxu0 %v6855
        %6879 = vmatprep.subr.bf16.mxu0 0
        %6880 = vmatpush1.bf16.msra.mxu0 %v6856
        %6881 = vmatprep.subr.bf16.mxu0 0
        %6882 = vmatpush1.bf16.msra.mxu0 0
        %6883 = vmatprep.subr.bf16.mxu0 0
        %6884 = vmatpush1.bf16.msra.mxu0 0
        %6885 = vmatprep.subr.bf16.mxu0 0
        %6886 = vmatpush1.bf16.msra.mxu0 0
        %6887 = vmatprep.subr.bf16.mxu0 0
        %6888 = vmatpush1.bf16.msra.mxu0 0
        %6889 = vmatprep.subr.bf16.mxu0 0
        %6890 = vmatpush1.bf16.msra.mxu0 0
        %6891 = vmatprep.subr.bf16.mxu0 0
        %6892 = vmatpush1.bf16.msra.mxu0 0
        %6893 = vmatprep.subr.bf16.mxu0 0
        %6894 = vmatpush1.bf16.msra.mxu0 0
        %6895 = vmatprep.subr.bf16.mxu0 0
        %6896 = vmatpush1.bf16.msra.mxu0 0
        %6897 = vmatprep.mubr.bf16.mxu0 0
        %6898 = vmatmul.mubr.bf16.gmra.mrb[0].mxu0 %v6812
        %v6899 = vpop.f32.mrb[0].mxu0
        %v6900 = vadd.f32 0.0, %v6899
        %v6901 = vpop.f32.mrb[0].mxu0
        %v6902 = vpop.f32.mrb[0].mxu0
        %v6903 = vadd.f32 0.0, %v6902
        %v6904 = vpop.f32.mrb[0].mxu0
        %6905 = vmatprep.mubr.bf16.mxu0 0
        %6906 = vmatmul.mubr.bf16.gmra.mrb[0].mxu0 %v6813
        %v6907 = vpop.f32.mrb[0].mxu0
        %v6908 = vadd.f32 0.0, %v6907
        %v6909 = vpop.f32.mrb[0].mxu0
        %v6910 = vpop.f32.mrb[0].mxu0
        %v6911 = vadd.f32 0.0, %v6910
        %v6912 = vpop.f32.mrb[0].mxu0
        %6913 = vmatprep.mubr.bf16.mxu0 0
        %6914 = vmatmul.mubr.bf16.gmra.mrb[0].mxu0 %v6814
        %v6915 = vpop.f32.mrb[0].mxu0
        %v6916 = vpop.f32.mrb[0].mxu0
        %v6917 = vpop.f32.mrb[0].mxu0
        %v6918 = vadd.f32 0.0, %v6917
        %v6919 = vpop.f32.mrb[0].mxu0
        %6920 = vmatprep.mubr.bf16.mxu0 0
        %6921 = vmatmul.mubr.bf16.gmra.mrb[0].mxu0 %v6815
        %v6922 = vpop.f32.mrb[0].mxu0
        %v6923 = vadd.f32 0.0, %v6922
        %v6924 = vpop.f32.mrb[0].mxu0
        %v6925 = vpop.f32.mrb[0].mxu0
        %v6926 = vadd.f32 0.0, %v6925
        %v6927 = vpop.f32.mrb[0].mxu0
        %6928 = vmatprep.mubr.bf16.mxu0 0
        %6929 = vmatmul.mubr.bf16.gmra.mrb[0].mxu0 %v6816
        %v6930 = vpop.f32.mrb[0].mxu0
        %v6931 = vadd.f32 0.0, %v6930
        %v6932 = vpop.f32.mrb[0].mxu0
        %v6933 = vpop.f32.mrb[0].mxu0
        %v6934 = vpop.f32.mrb[0].mxu0
        %6935 = vdwg.mxu0
        %v6952 = vunpack.c.l.b16 %v6756
        %v6953 = vunpack.c.l.b16 %v6757
        %v6954 = vunpack.c.l.b16 %v6758
        %v6955 = vunpack.c.l.b16 %v6759
        %v6956 = vunpack.c.l.b16 %v6760
        %v6957 = vunpack.c.l.b16 %v6761
        %v6958 = vunpack.c.l.b16 %v6762
        %v6959 = vunpack.c.l.b16 %v6763
        %v6960 = vunpack.c.l.b16 %v6764
        %v6961 = vunpack.c.l.b16 %v6765
        %v6962 = vunpack.c.l.b16 %v6766
        %v6963 = vunpack.c.l.b16 %v6767
        %v6964 = vunpack.c.l.b16 %v6768
        %v6965 = vunpack.c.l.b16 %v6769
        %v6966 = vunpack.c.l.b16 %v6770
        %v6967 = vunpack.c.l.b16 %v6771
        %v6968 = vpack.c.b16 %v6953, %v6952
        %v6969 = vpack.c.b16 %v6955, %v6954
        %v6970 = vpack.c.b16 %v6957, %v6956
        %v6971 = vpack.c.b16 %v6959, %v6958
        %v6972 = vpack.c.b16 %v6961, %v6960
        %v6973 = vpack.c.b16 %v6963, %v6962
        %v6974 = vpack.c.b16 %v6965, %v6964
        %v6975 = vpack.c.b16 %v6967, %v6966
        %6984 = vmatprep.subr.bf16.mxu0 0
        %6985 = vmatpush1.bf16.msra.mxu0 %v6968
        %6986 = vmatprep.subr.bf16.mxu0 0
        %6987 = vmatpush1.bf16.msra.mxu0 %v6969
        %6988 = vmatprep.subr.bf16.mxu0 0
        %6989 = vmatpush1.bf16.msra.mxu0 %v6970
        %6990 = vmatprep.subr.bf16.mxu0 0
        %6991 = vmatpush1.bf16.msra.mxu0 %v6971
        %6992 = vmatprep.subr.bf16.mxu0 0
        %6993 = vmatpush1.bf16.msra.mxu0 %v6972
        %6994 = vmatprep.subr.bf16.mxu0 0
        %6995 = vmatpush1.bf16.msra.mxu0 %v6973
        %6996 = vmatprep.subr.bf16.mxu0 0
        %6997 = vmatpush1.bf16.msra.mxu0 %v6974
        %6998 = vmatprep.subr.bf16.mxu0 0
        %6999 = vmatpush1.bf16.msra.mxu0 %v6975
        %7000 = vmatprep.subr.bf16.mxu0 0
        %7001 = vmatpush1.bf16.msra.mxu0 0
        %7002 = vmatprep.subr.bf16.mxu0 0
        %7003 = vmatpush1.bf16.msra.mxu0 0
        %7004 = vmatprep.subr.bf16.mxu0 0
        %7005 = vmatpush1.bf16.msra.mxu0 0
        %7006 = vmatprep.subr.bf16.mxu0 0
        %7007 = vmatpush1.bf16.msra.mxu0 0
        %7008 = vmatprep.subr.bf16.mxu0 0
        %7009 = vmatpush1.bf16.msra.mxu0 0
        %7010 = vmatprep.subr.bf16.mxu0 0
        %7011 = vmatpush1.bf16.msra.mxu0 0
        %7012 = vmatprep.subr.bf16.mxu0 0
        %7013 = vmatpush1.bf16.msra.mxu0 0
        %7014 = vmatprep.subr.bf16.mxu0 0
        %7015 = vmatpush1.bf16.msra.mxu0 0
        %7016 = vmatprep.mubr.bf16.mxu0 0
        %7017 = vmatmul.mubr.bf16.gmra.mrb[0].mxu0 %v6772
        %v7018 = vpop.f32.mrb[0].mxu0
        %v7019 = vadd.f32 %v6900, %v7018
        %v7020 = vpop.f32.mrb[0].mxu0
        %v7021 = vpop.f32.mrb[0].mxu0
        %v7022 = vadd.f32 %v6903, %v7021
        %v7023 = vpop.f32.mrb[0].mxu0
        %7024 = vmatprep.mubr.bf16.mxu0 0
        %7025 = vmatmul.mubr.bf16.gmra.mrb[0].mxu0 %v6773
        %v7026 = vpop.f32.mrb[0].mxu0
        %v7027 = vadd.f32 %v6908, %v7026
        %v7028 = vpop.f32.mrb[0].mxu0
        %v7029 = vpop.f32.mrb[0].mxu0
        %v7030 = vadd.f32 %v6911, %v7029
        %v7031 = vpop.f32.mrb[0].mxu0
        %7032 = vmatprep.mubr.bf16.mxu0 0
        %7033 = vmatmul.mubr.bf16.gmra.mrb[0].mxu0 %v6774
        %v7034 = vpop.f32.mrb[0].mxu0
        %v7035 = vpop.f32.mrb[0].mxu0
        %v7036 = vpop.f32.mrb[0].mxu0
        %v7037 = vadd.f32 %v6918, %v7036
        %v7038 = vpop.f32.mrb[0].mxu0
        %7039 = vmatprep.mubr.bf16.mxu0 0
        %7040 = vmatmul.mubr.bf16.gmra.mrb[0].mxu0 %v6775
        %v7041 = vpop.f32.mrb[0].mxu0
        %v7042 = vadd.f32 %v6923, %v7041
        %v7043 = vpop.f32.mrb[0].mxu0
        %v7044 = vpop.f32.mrb[0].mxu0
        %v7045 = vadd.f32 %v6926, %v7044
        %v7046 = vpop.f32.mrb[0].mxu0
        %7047 = vmatprep.mubr.bf16.mxu0 0
        %7048 = vmatmul.mubr.bf16.gmra.mrb[0].mxu0 %v6776
        %v7049 = vpop.f32.mrb[0].mxu0
        %v7050 = vadd.f32 %v6931, %v7049
        %v7051 = vpop.f32.mrb[0].mxu0
        %v7052 = vpop.f32.mrb[0].mxu0
        %v7053 = vpop.f32.mrb[0].mxu0
        %7054 = vdwg.mxu0
        %v7055 = vld [vmem:[#allocation2 + $0x8] sm:$0xff]
        %v7056 = vld [vmem:[#allocation2 + $0x10] sm:$0xff]
        %v7057 = vld [vmem:[#allocation2 + $0x18] sm:$0xff]
        %v7058 = vld [vmem:[#allocation2 + $0x20] sm:$0xff]
        %v7059 = vld [vmem:[#allocation2 + $0x28] sm:$0xff]
        %v7060 = vld [vmem:[#allocation2 + $0x30] sm:$0xff]
        %v7061 = vld [vmem:[#allocation2 + $0x38] sm:$0xff]
        %v7062 = vld [vmem:[#allocation2 + $0x40] sm:$0xff]
        %v7063 = vld [vmem:[#allocation2 + $0x48] sm:$0xff]
        %v7064 = vmax.f32 %v7055, 0.0
        %v7065 = vmax.f32 %v7056, 0.0
        %v7066 = vmax.f32 %v7057, 0.0
        %v7067 = vmax.f32 %v7058, 0.0
        %v7068 = vmax.f32 %v7059, 0.0
        %v7069 = vmax.f32 %v7060, 0.0
        %v7070 = vmax.f32 %v7061, 0.0
        %v7071 = vmax.f32 %v7062, 0.0
        %v7072 = vmax.f32 %v7063, 0.0
        %s7073 = scalar_lea.vmem [#allocation4], 2368
        %v7074 = vld [vmem:[%s7073] sm:$0xf]
        %v7075 = vld [vmem:[%s7073 + $0x4] sm:$0xf]
        %v7076 = vld [vmem:[%s7073 + $0x8] sm:$0xf]
        %v7077 = vld [vmem:[%s7073 + $0xc] sm:$0xf]
        %v7078 = vld [vmem:[%s7073 + $0x10] sm:$0xf]
        %v7079 = vld [vmem:[%s7073 + $0x14] sm:$0xf]
        %v7080 = vld [vmem:[%s7073 + $0x18] sm:$0xf]
        %v7081 = vld [vmem:[%s7073 + $0x1c] sm:$0xf]
        %v7082 = vld [vmem:[%s7073 + $0x20] sm:$0xf]
        %v7083 = vld [vmem:[%s7073 + $0x24] sm:$0xf]
        %v7084 = vld [vmem:[%s7073 + $0x28] sm:$0xf]
        %v7085 = vld [vmem:[%s7073 + $0x2c] sm:$0xf]
        %v7086 = vld [vmem:[%s7073 + $0x30] sm:$0xf]
        %v7087 = vld [vmem:[%s7073 + $0x34] sm:$0xf]
        %v7088 = vld [vmem:[%s7073 + $0x38] sm:$0xf]
        %v7089 = vld [vmem:[%s7073 + $0x3c] sm:$0xf]
        %v7090 = vpack.c.bf16 %v7065, %v7064
        %v7091 = vpack.c.bf16 %v7067, %v7066
        %v7092 = vpack.c.bf16 %v7069, %v7068
        %v7093 = vpack.c.bf16 %v7071, %v7070
        %v7094 = vpack.c.bf16 %v7072, %v7072
        %v7111 = vunpack.c.l.b16 %v7074
        %v7112 = vunpack.c.l.b16 %v7075
        %v7113 = vunpack.c.l.b16 %v7076
        %v7114 = vunpack.c.l.b16 %v7077
        %v7115 = vunpack.c.l.b16 %v7078
        %v7116 = vunpack.c.l.b16 %v7079
        %v7117 = vunpack.c.l.b16 %v7080
        %v7118 = vunpack.c.l.b16 %v7081
        %v7119 = vunpack.c.l.b16 %v7082
        %v7120 = vunpack.c.l.b16 %v7083
        %v7121 = vunpack.c.l.b16 %v7084
        %v7122 = vunpack.c.l.b16 %v7085
        %v7123 = vunpack.c.l.b16 %v7086
        %v7124 = vunpack.c.l.b16 %v7087
        %v7125 = vunpack.c.l.b16 %v7088
        %v7126 = vunpack.c.l.b16 %v7089
        %v7127 = vpack.c.b16 %v7112, %v7111
        %v7128 = vpack.c.b16 %v7114, %v7113
        %v7129 = vpack.c.b16 %v7116, %v7115
        %v7130 = vpack.c.b16 %v7118, %v7117
        %v7131 = vpack.c.b16 %v7120, %v7119
        %v7132 = vpack.c.b16 %v7122, %v7121
        %v7133 = vpack.c.b16 %v7124, %v7123
        %v7134 = vpack.c.b16 %v7126, %v7125
        %7143 = vmatprep.subr.bf16.mxu0 0
        %7144 = vmatpush1.bf16.msra.mxu0 %v7127
        %7145 = vmatprep.subr.bf16.mxu0 0
        %7146 = vmatpush1.bf16.msra.mxu0 %v7128
        %7147 = vmatprep.subr.bf16.mxu0 0
        %7148 = vmatpush1.bf16.msra.mxu0 %v7129
        %7149 = vmatprep.subr.bf16.mxu0 0
        %7150 = vmatpush1.bf16.msra.mxu0 %v7130
        %7151 = vmatprep.subr.bf16.mxu0 0
        %7152 = vmatpush1.bf16.msra.mxu0 %v7131
        %7153 = vmatprep.subr.bf16.mxu0 0
        %7154 = vmatpush1.bf16.msra.mxu0 %v7132
        %7155 = vmatprep.subr.bf16.mxu0 0
        %7156 = vmatpush1.bf16.msra.mxu0 %v7133
        %7157 = vmatprep.subr.bf16.mxu0 0
        %7158 = vmatpush1.bf16.msra.mxu0 %v7134
        %7159 = vmatprep.subr.bf16.mxu0 0
        %7160 = vmatpush1.bf16.msra.mxu0 0
        %7161 = vmatprep.subr.bf16.mxu0 0
        %7162 = vmatpush1.bf16.msra.mxu0 0
        %7163 = vmatprep.subr.bf16.mxu0 0
        %7164 = vmatpush1.bf16.msra.mxu0 0
        %7165 = vmatprep.subr.bf16.mxu0 0
        %7166 = vmatpush1.bf16.msra.mxu0 0
        %7167 = vmatprep.subr.bf16.mxu0 0
        %7168 = vmatpush1.bf16.msra.mxu0 0
        %7169 = vmatprep.subr.bf16.mxu0 0
        %7170 = vmatpush1.bf16.msra.mxu0 0
        %7171 = vmatprep.subr.bf16.mxu0 0
        %7172 = vmatpush1.bf16.msra.mxu0 0
        %7173 = vmatprep.subr.bf16.mxu0 0
        %7174 = vmatpush1.bf16.msra.mxu0 0
        %7175 = vmatprep.mubr.bf16.mxu0 0
        %7176 = vmatmul.mubr.bf16.gmra.mrb[0].mxu0 %v7090
        %v7177 = vpop.f32.mrb[0].mxu0
        %v7178 = vadd.f32 0.0, %v7177
        %v7179 = vpop.f32.mrb[0].mxu0
        %v7180 = vpop.f32.mrb[0].mxu0
        %v7181 = vadd.f32 0.0, %v7180
        %v7182 = vpop.f32.mrb[0].mxu0
        %7183 = vmatprep.mubr.bf16.mxu0 0
        %7184 = vmatmul.mubr.bf16.gmra.mrb[0].mxu0 %v7091
        %v7185 = vpop.f32.mrb[0].mxu0
        %v7186 = vadd.f32 0.0, %v7185
        %v7187 = vpop.f32.mrb[0].mxu0
        %v7188 = vpop.f32.mrb[0].mxu0
        %v7189 = vadd.f32 0.0, %v7188
        %v7190 = vpop.f32.mrb[0].mxu0
        %7191 = vmatprep.mubr.bf16.mxu0 0
        %7192 = vmatmul.mubr.bf16.gmra.mrb[0].mxu0 %v7092
        %v7193 = vpop.f32.mrb[0].mxu0
        %v7194 = vpop.f32.mrb[0].mxu0
        %v7195 = vpop.f32.mrb[0].mxu0
        %v7196 = vadd.f32 0.0, %v7195
        %v7197 = vpop.f32.mrb[0].mxu0
        %7198 = vmatprep.mubr.bf16.mxu0 0
        %7199 = vmatmul.mubr.bf16.gmra.mrb[0].mxu0 %v7093
        %v7200 = vpop.f32.mrb[0].mxu0
        %v7201 = vadd.f32 0.0, %v7200
        %v7202 = vpop.f32.mrb[0].mxu0
        %v7203 = vpop.f32.mrb[0].mxu0
        %v7204 = vadd.f32 0.0, %v7203
        %v7205 = vpop.f32.mrb[0].mxu0
        %7206 = vmatprep.mubr.bf16.mxu0 0
        %7207 = vmatmul.mubr.bf16.gmra.mrb[0].mxu0 %v7094
        %v7208 = vpop.f32.mrb[0].mxu0
        %v7209 = vadd.f32 0.0, %v7208
        %v7210 = vpop.f32.mrb[0].mxu0
        %v7211 = vpop.f32.mrb[0].mxu0
        %v7212 = vpop.f32.mrb[0].mxu0
        %7213 = vdwg.mxu0
        %v7214 = vadd.f32 %v7019, %v7178
        %v7215 = vadd.f32 %v7022, %v7181
        %v7216 = vadd.f32 %v7027, %v7186
        %v7217 = vadd.f32 %v7030, %v7189
        %v7218 = vadd.f32 %v7037, %v7196
        %v7219 = vadd.f32 %v7042, %v7201
        %v7220 = vadd.f32 %v7045, %v7204
        %v7221 = vadd.f32 %v7050, %v7209
        %v7222 = vld [vmem:[#allocation2 + $0x9] sm:$0xff]
        %v7223 = vld [vmem:[#allocation2 + $0x11] sm:$0xff]
        %v7224 = vld [vmem:[#allocation2 + $0x19] sm:$0xff]
        %v7225 = vld [vmem:[#allocation2 + $0x21] sm:$0xff]
        %v7226 = vld [vmem:[#allocation2 + $0x29] sm:$0xff]
        %v7227 = vld [vmem:[#allocation2 + $0x31] sm:$0xff]
        %v7228 = vld [vmem:[#allocation2 + $0x39] sm:$0xff]
        %v7229 = vld [vmem:[#allocation2 + $0x41] sm:$0xff]
        %v7230 = vld [vmem:[#allocation2 + $0x49] sm:$0xff]
        %v7231 = vmax.f32 %v7222, 0.0
        %v7232 = vmax.f32 %v7223, 0.0
        %v7233 = vmax.f32 %v7224, 0.0
        %v7234 = vmax.f32 %v7225, 0.0
        %v7235 = vmax.f32 %v7226, 0.0
        %v7236 = vmax.f32 %v7227, 0.0
        %v7237 = vmax.f32 %v7228, 0.0
        %v7238 = vmax.f32 %v7229, 0.0
        %v7239 = vmax.f32 %v7230, 0.0
        %s7240 = scalar_lea.vmem [#allocation4], 2432
        %v7241 = vld [vmem:[%s7240] sm:$0xf]
        %v7242 = vld [vmem:[%s7240 + $0x4] sm:$0xf]
        %v7243 = vld [vmem:[%s7240 + $0x8] sm:$0xf]
        %v7244 = vld [vmem:[%s7240 + $0xc] sm:$0xf]
        %v7245 = vld [vmem:[%s7240 + $0x10] sm:$0xf]
        %v7246 = vld [vmem:[%s7240 + $0x14] sm:$0xf]
        %v7247 = vld [vmem:[%s7240 + $0x18] sm:$0xf]
        %v7248 = vld [vmem:[%s7240 + $0x1c] sm:$0xf]
        %v7249 = vld [vmem:[%s7240 + $0x20] sm:$0xf]
        %v7250 = vld [vmem:[%s7240 + $0x24] sm:$0xf]
        %v7251 = vld [vmem:[%s7240 + $0x28] sm:$0xf]
        %v7252 = vld [vmem:[%s7240 + $0x2c] sm:$0xf]
        %v7253 = vld [vmem:[%s7240 + $0x30] sm:$0xf]
        %v7254 = vld [vmem:[%s7240 + $0x34] sm:$0xf]
        %v7255 = vld [vmem:[%s7240 + $0x38] sm:$0xf]
        %v7256 = vld [vmem:[%s7240 + $0x3c] sm:$0xf]
        %v7257 = vpack.c.bf16 %v7232, %v7231
        %v7258 = vpack.c.bf16 %v7234, %v7233
        %v7259 = vpack.c.bf16 %v7236, %v7235
        %v7260 = vpack.c.bf16 %v7238, %v7237
        %v7261 = vpack.c.bf16 %v7239, %v7239
        %v7278 = vunpack.c.l.b16 %v7241
        %v7279 = vunpack.c.l.b16 %v7242
        %v7280 = vunpack.c.l.b16 %v7243
        %v7281 = vunpack.c.l.b16 %v7244
        %v7282 = vunpack.c.l.b16 %v7245
        %v7283 = vunpack.c.l.b16 %v7246
        %v7284 = vunpack.c.l.b16 %v7247
        %v7285 = vunpack.c.l.b16 %v7248
        %v7286 = vunpack.c.l.b16 %v7249
        %v7287 = vunpack.c.l.b16 %v7250
        %v7288 = vunpack.c.l.b16 %v7251
        %v7289 = vunpack.c.l.b16 %v7252
        %v7290 = vunpack.c.l.b16 %v7253
        %v7291 = vunpack.c.l.b16 %v7254
        %v7292 = vunpack.c.l.b16 %v7255
        %v7293 = vunpack.c.l.b16 %v7256
        %v7294 = vpack.c.b16 %v7279, %v7278
        %v7295 = vpack.c.b16 %v7281, %v7280
        %v7296 = vpack.c.b16 %v7283, %v7282
        %v7297 = vpack.c.b16 %v7285, %v7284
        %v7298 = vpack.c.b16 %v7287, %v7286
        %v7299 = vpack.c.b16 %v7289, %v7288
        %v7300 = vpack.c.b16 %v7291, %v7290
        %v7301 = vpack.c.b16 %v7293, %v7292
        %7310 = vmatprep.subr.bf16.mxu0 0
        %7311 = vmatpush1.bf16.msra.mxu0 %v7294
        %7312 = vmatprep.subr.bf16.mxu0 0
        %7313 = vmatpush1.bf16.msra.mxu0 %v7295
        %7314 = vmatprep.subr.bf16.mxu0 0
        %7315 = vmatpush1.bf16.msra.mxu0 %v7296
        %7316 = vmatprep.subr.bf16.mxu0 0
        %7317 = vmatpush1.bf16.msra.mxu0 %v7297
        %7318 = vmatprep.subr.bf16.mxu0 0
        %7319 = vmatpush1.bf16.msra.mxu0 %v7298
        %7320 = vmatprep.subr.bf16.mxu0 0
        %7321 = vmatpush1.bf16.msra.mxu0 %v7299
        %7322 = vmatprep.subr.bf16.mxu0 0
        %7323 = vmatpush1.bf16.msra.mxu0 %v7300
        %7324 = vmatprep.subr.bf16.mxu0 0
        %7325 = vmatpush1.bf16.msra.mxu0 %v7301
        %7326 = vmatprep.subr.bf16.mxu0 0
        %7327 = vmatpush1.bf16.msra.mxu0 0
        %7328 = vmatprep.subr.bf16.mxu0 0
        %7329 = vmatpush1.bf16.msra.mxu0 0
        %7330 = vmatprep.subr.bf16.mxu0 0
        %7331 = vmatpush1.bf16.msra.mxu0 0
        %7332 = vmatprep.subr.bf16.mxu0 0
        %7333 = vmatpush1.bf16.msra.mxu0 0
        %7334 = vmatprep.subr.bf16.mxu0 0
        %7335 = vmatpush1.bf16.msra.mxu0 0
        %7336 = vmatprep.subr.bf16.mxu0 0
        %7337 = vmatpush1.bf16.msra.mxu0 0
        %7338 = vmatprep.subr.bf16.mxu0 0
        %7339 = vmatpush1.bf16.msra.mxu0 0
        %7340 = vmatprep.subr.bf16.mxu0 0
        %7341 = vmatpush1.bf16.msra.mxu0 0
        %7342 = vmatprep.mubr.bf16.mxu0 0
        %7343 = vmatmul.mubr.bf16.gmra.mrb[0].mxu0 %v7257
        %v7344 = vpop.f32.mrb[0].mxu0
        %v7345 = vadd.f32 0.0, %v7344
        %v7346 = vpop.f32.mrb[0].mxu0
        %v7347 = vpop.f32.mrb[0].mxu0
        %v7348 = vadd.f32 0.0, %v7347
        %v7349 = vpop.f32.mrb[0].mxu0
        %7350 = vmatprep.mubr.bf16.mxu0 0
        %7351 = vmatmul.mubr.bf16.gmra.mrb[0].mxu0 %v7258
        %v7352 = vpop.f32.mrb[0].mxu0
        %v7353 = vadd.f32 0.0, %v7352
        %v7354 = vpop.f32.mrb[0].mxu0
        %v7355 = vpop.f32.mrb[0].mxu0
        %v7356 = vadd.f32 0.0, %v7355
        %v7357 = vpop.f32.mrb[0].mxu0
        %7358 = vmatprep.mubr.bf16.mxu0 0
        %7359 = vmatmul.mubr.bf16.gmra.mrb[0].mxu0 %v7259
        %v7360 = vpop.f32.mrb[0].mxu0
        %v7361 = vpop.f32.mrb[0].mxu0
        %v7362 = vpop.f32.mrb[0].mxu0
        %v7363 = vadd.f32 0.0, %v7362
        %v7364 = vpop.f32.mrb[0].mxu0
        %7365 = vmatprep.mubr.bf16.mxu0 0
        %7366 = vmatmul.mubr.bf16.gmra.mrb[0].mxu0 %v7260
        %v7367 = vpop.f32.mrb[0].mxu0
        %v7368 = vadd.f32 0.0, %v7367
        %v7369 = vpop.f32.mrb[0].mxu0
        %v7370 = vpop.f32.mrb[0].mxu0
        %v7371 = vadd.f32 0.0, %v7370
        %v7372 = vpop.f32.mrb[0].mxu0
        %7373 = vmatprep.mubr.bf16.mxu0 0
        %7374 = vmatmul.mubr.bf16.gmra.mrb[0].mxu0 %v7261
        %v7375 = vpop.f32.mrb[0].mxu0
        %v7376 = vadd.f32 0.0, %v7375
        %v7377 = vpop.f32.mrb[0].mxu0
        %v7378 = vpop.f32.mrb[0].mxu0
        %v7379 = vpop.f32.mrb[0].mxu0
        %7380 = vdwg.mxu0
        %v7381 = vadd.f32 %v7214, %v7345
        %v7382 = vadd.f32 %v7215, %v7348
        %v7383 = vadd.f32 %v7216, %v7353
        %v7384 = vadd.f32 %v7217, %v7356
        %v7385 = vadd.f32 %v7218, %v7363
        %v7386 = vadd.f32 %v7219, %v7368
        %v7387 = vadd.f32 %v7220, %v7371
        %v7388 = vadd.f32 %v7221, %v7376
        %v7389 = vld [vmem:[#allocation2 + $0xa] sm:$0xff]
        %v7390 = vld [vmem:[#allocation2 + $0x12] sm:$0xff]
        %v7391 = vld [vmem:[#allocation2 + $0x1a] sm:$0xff]
        %v7392 = vld [vmem:[#allocation2 + $0x22] sm:$0xff]
        %v7393 = vld [vmem:[#allocation2 + $0x2a] sm:$0xff]
        %v7394 = vld [vmem:[#allocation2 + $0x32] sm:$0xff]
        %v7395 = vld [vmem:[#allocation2 + $0x3a] sm:$0xff]
        %v7396 = vld [vmem:[#allocation2 + $0x42] sm:$0xff]
        %v7397 = vld [vmem:[#allocation2 + $0x4a] sm:$0xff]
        %v7398 = vmax.f32 %v7389, 0.0
        %v7399 = vmax.f32 %v7390, 0.0
        %v7400 = vmax.f32 %v7391, 0.0
        %v7401 = vmax.f32 %v7392, 0.0
        %v7402 = vmax.f32 %v7393, 0.0
        %v7403 = vmax.f32 %v7394, 0.0
        %v7404 = vmax.f32 %v7395, 0.0
        %v7405 = vmax.f32 %v7396, 0.0
        %v7406 = vmax.f32 %v7397, 0.0
        %s7407 = scalar_lea.vmem [#allocation4], 2496
        %v7408 = vld [vmem:[%s7407] sm:$0xf]
        %v7409 = vld [vmem:[%s7407 + $0x4] sm:$0xf]
        %v7410 = vld [vmem:[%s7407 + $0x8] sm:$0xf]
        %v7411 = vld [vmem:[%s7407 + $0xc] sm:$0xf]
        %v7412 = vld [vmem:[%s7407 + $0x10] sm:$0xf]
        %v7413 = vld [vmem:[%s7407 + $0x14] sm:$0xf]
        %v7414 = vld [vmem:[%s7407 + $0x18] sm:$0xf]
        %v7415 = vld [vmem:[%s7407 + $0x1c] sm:$0xf]
        %v7416 = vld [vmem:[%s7407 + $0x20] sm:$0xf]
        %v7417 = vld [vmem:[%s7407 + $0x24] sm:$0xf]
        %v7418 = vld [vmem:[%s7407 + $0x28] sm:$0xf]
        %v7419 = vld [vmem:[%s7407 + $0x2c] sm:$0xf]
        %v7420 = vld [vmem:[%s7407 + $0x30] sm:$0xf]
        %v7421 = vld [vmem:[%s7407 + $0x34] sm:$0xf]
        %v7422 = vld [vmem:[%s7407 + $0x38] sm:$0xf]
        %v7423 = vld [vmem:[%s7407 + $0x3c] sm:$0xf]
        %v7424 = vpack.c.bf16 %v7399, %v7398
        %v7425 = vpack.c.bf16 %v7401, %v7400
        %v7426 = vpack.c.bf16 %v7403, %v7402
        %v7427 = vpack.c.bf16 %v7405, %v7404
        %v7428 = vpack.c.bf16 %v7406, %v7406
        %v7445 = vunpack.c.l.b16 %v7408
        %v7446 = vunpack.c.l.b16 %v7409
        %v7447 = vunpack.c.l.b16 %v7410
        %v7448 = vunpack.c.l.b16 %v7411
        %v7449 = vunpack.c.l.b16 %v7412
        %v7450 = vunpack.c.l.b16 %v7413
        %v7451 = vunpack.c.l.b16 %v7414
        %v7452 = vunpack.c.l.b16 %v7415
        %v7453 = vunpack.c.l.b16 %v7416
        %v7454 = vunpack.c.l.b16 %v7417
        %v7455 = vunpack.c.l.b16 %v7418
        %v7456 = vunpack.c.l.b16 %v7419
        %v7457 = vunpack.c.l.b16 %v7420
        %v7458 = vunpack.c.l.b16 %v7421
        %v7459 = vunpack.c.l.b16 %v7422
        %v7460 = vunpack.c.l.b16 %v7423
        %v7461 = vpack.c.b16 %v7446, %v7445
        %v7462 = vpack.c.b16 %v7448, %v7447
        %v7463 = vpack.c.b16 %v7450, %v7449
        %v7464 = vpack.c.b16 %v7452, %v7451
        %v7465 = vpack.c.b16 %v7454, %v7453
        %v7466 = vpack.c.b16 %v7456, %v7455
        %v7467 = vpack.c.b16 %v7458, %v7457
        %v7468 = vpack.c.b16 %v7460, %v7459
        %7477 = vmatprep.subr.bf16.mxu0 0
        %7478 = vmatpush1.bf16.msra.mxu0 %v7461
        %7479 = vmatprep.subr.bf16.mxu0 0
        %7480 = vmatpush1.bf16.msra.mxu0 %v7462
        %7481 = vmatprep.subr.bf16.mxu0 0
        %7482 = vmatpush1.bf16.msra.mxu0 %v7463
        %7483 = vmatprep.subr.bf16.mxu0 0
        %7484 = vmatpush1.bf16.msra.mxu0 %v7464
        %7485 = vmatprep.subr.bf16.mxu0 0
        %7486 = vmatpush1.bf16.msra.mxu0 %v7465
        %7487 = vmatprep.subr.bf16.mxu0 0
        %7488 = vmatpush1.bf16.msra.mxu0 %v7466
        %7489 = vmatprep.subr.bf16.mxu0 0
        %7490 = vmatpush1.bf16.msra.mxu0 %v7467
        %7491 = vmatprep.subr.bf16.mxu0 0
        %7492 = vmatpush1.bf16.msra.mxu0 %v7468
        %7493 = vmatprep.subr.bf16.mxu0 0
        %7494 = vmatpush1.bf16.msra.mxu0 0
        %7495 = vmatprep.subr.bf16.mxu0 0
        %7496 = vmatpush1.bf16.msra.mxu0 0
        %7497 = vmatprep.subr.bf16.mxu0 0
        %7498 = vmatpush1.bf16.msra.mxu0 0
        %7499 = vmatprep.subr.bf16.mxu0 0
        %7500 = vmatpush1.bf16.msra.mxu0 0
        %7501 = vmatprep.subr.bf16.mxu0 0
        %7502 = vmatpush1.bf16.msra.mxu0 0
        %7503 = vmatprep.subr.bf16.mxu0 0
        %7504 = vmatpush1.bf16.msra.mxu0 0
        %7505 = vmatprep.subr.bf16.mxu0 0
        %7506 = vmatpush1.bf16.msra.mxu0 0
        %7507 = vmatprep.subr.bf16.mxu0 0
        %7508 = vmatpush1.bf16.msra.mxu0 0
        %7509 = vmatprep.mubr.bf16.mxu0 0
        %7510 = vmatmul.mubr.bf16.gmra.mrb[0].mxu0 %v7424
        %v7511 = vpop.f32.mrb[0].mxu0
        %v7512 = vadd.f32 0.0, %v7511
        %v7513 = vpop.f32.mrb[0].mxu0
        %v7514 = vpop.f32.mrb[0].mxu0
        %v7515 = vadd.f32 0.0, %v7514
        %v7516 = vpop.f32.mrb[0].mxu0
        %7517 = vmatprep.mubr.bf16.mxu0 0
        %7518 = vmatmul.mubr.bf16.gmra.mrb[0].mxu0 %v7425
        %v7519 = vpop.f32.mrb[0].mxu0
        %v7520 = vadd.f32 0.0, %v7519
        %v7521 = vpop.f32.mrb[0].mxu0
        %v7522 = vpop.f32.mrb[0].mxu0
        %v7523 = vadd.f32 0.0, %v7522
        %v7524 = vpop.f32.mrb[0].mxu0
        %7525 = vmatprep.mubr.bf16.mxu0 0
        %7526 = vmatmul.mubr.bf16.gmra.mrb[0].mxu0 %v7426
        %v7527 = vpop.f32.mrb[0].mxu0
        %v7528 = vpop.f32.mrb[0].mxu0
        %v7529 = vpop.f32.mrb[0].mxu0
        %v7530 = vadd.f32 0.0, %v7529
        %v7531 = vpop.f32.mrb[0].mxu0
        %7532 = vmatprep.mubr.bf16.mxu0 0
        %7533 = vmatmul.mubr.bf16.gmra.mrb[0].mxu0 %v7427
        %v7534 = vpop.f32.mrb[0].mxu0
        %v7535 = vadd.f32 0.0, %v7534
        %v7536 = vpop.f32.mrb[0].mxu0
        %v7537 = vpop.f32.mrb[0].mxu0
        %v7538 = vadd.f32 0.0, %v7537
        %v7539 = vpop.f32.mrb[0].mxu0
        %7540 = vmatprep.mubr.bf16.mxu0 0
        %7541 = vmatmul.mubr.bf16.gmra.mrb[0].mxu0 %v7428
        %v7542 = vpop.f32.mrb[0].mxu0
        %v7543 = vadd.f32 0.0, %v7542
        %v7544 = vpop.f32.mrb[0].mxu0
        %v7545 = vpop.f32.mrb[0].mxu0
        %v7546 = vpop.f32.mrb[0].mxu0
        %7547 = vdwg.mxu0
        %v7548 = vadd.f32 %v7381, %v7512
        %v7549 = vadd.f32 %v7382, %v7515
        %v7550 = vadd.f32 %v7383, %v7520
        %v7551 = vadd.f32 %v7384, %v7523
        %v7552 = vadd.f32 %v7385, %v7530
        %v7553 = vadd.f32 %v7386, %v7535
        %v7554 = vadd.f32 %v7387, %v7538
        %v7555 = vadd.f32 %v7388, %v7543
        %s7556 = scalar_lea.vmem [#allocation6], 56
        %v7557 = vld [vmem:[%s7556] sm:$0xff]
        %v7558 = vlaneseq
        %v7559 = vshrl.u32 %v7558, 7
        %v7560 = vsub.s32 0, %v7559
        %v7561 = vrot.slane %v7557, %v7560
        %v7562 = vadd.f32 %v7548, %v7561
        %v7563 = vadd.f32 %v7549, %v7561
        %v7564 = vadd.f32 %v7550, %v7561
        %v7565 = vadd.f32 %v7551, %v7561
        %v7566 = vadd.f32 %v7552, %v7561
        %v7567 = vadd.f32 %v7553, %v7561
        %v7568 = vadd.f32 %v7554, %v7561
        %v7569 = vadd.f32 %v7555, %v7561
        %v7570 = vsel %vm233, %v7562, 0.0
        %v7571 = vsel %vm233, %v7563, 0.0
        %v7572 = vsel %vm233, %v7564, 0.0
        %v7573 = vsel %vm233, %v7565, 0.0
        %v7574 = vsel %vm233, %v7566, 0.0
        %v7575 = vsel %vm233, %v7567, 0.0
        %v7576 = vsel %vm233, %v7568, 0.0
        %v7577 = vsel %vm233, %v7569, 0.0
        %7578 = vadd.xlane.f32.xlu0 %v7570
        %v7579 = vpop.xlane.xlu0 %7578
        %7580 = vadd.xlane.f32.xlu0 %v7571
        %v7581 = vpop.xlane.xlu0 %7580
        %7582 = vadd.xlane.f32.xlu0 %v7572
        %v7583 = vpop.xlane.xlu0 %7582
        %7584 = vadd.xlane.f32.xlu0 %v7573
        %v7585 = vpop.xlane.xlu0 %7584
        %7586 = vadd.xlane.f32.xlu0 %v7574
        %v7587 = vpop.xlane.xlu0 %7586
        %7588 = vadd.xlane.f32.xlu0 %v7575
        %v7589 = vpop.xlane.xlu0 %7588
        %7590 = vadd.xlane.f32.xlu0 %v7576
        %v7591 = vpop.xlane.xlu0 %7590
        %7592 = vadd.xlane.f32.xlu0 %v7577
        %v7593 = vpop.xlane.xlu0 %7592
        %v7594 = vmul.f32 %v7579, 0.015625
        %v7595 = vmul.f32 %v7581, 0.015625
        %v7596 = vmul.f32 %v7583, 0.015625
        %v7597 = vmul.f32 %v7585, 0.015625
        %v7598 = vmul.f32 %v7587, 0.015625
        %v7599 = vmul.f32 %v7589, 0.015625
        %v7600 = vmul.f32 %v7591, 0.015625
        %v7601 = vmul.f32 %v7593, 0.015625
        %v7602 = vsub.f32 %v7562, %v7594
        %v7603 = vsub.f32 %v7563, %v7595
        %v7604 = vsub.f32 %v7564, %v7596
        %v7605 = vsub.f32 %v7565, %v7597
        %v7606 = vsub.f32 %v7566, %v7598
        %v7607 = vsub.f32 %v7567, %v7599
        %v7608 = vsub.f32 %v7568, %v7600
        %v7609 = vsub.f32 %v7569, %v7601
        %v7610 = vsel %vm233, %v7602, 0.0
        %v7611 = vsel %vm233, %v7603, 0.0
        %v7612 = vsel %vm233, %v7604, 0.0
        %v7613 = vsel %vm233, %v7605, 0.0
        %v7614 = vsel %vm233, %v7606, 0.0
        %v7615 = vsel %vm233, %v7607, 0.0
        %v7616 = vsel %vm233, %v7608, 0.0
        %v7617 = vsel %vm233, %v7609, 0.0
        %v7618 = vmul.f32 %v7610, %v7610
        %v7619 = vmul.f32 %v7611, %v7611
        %v7620 = vmul.f32 %v7612, %v7612
        %v7621 = vmul.f32 %v7613, %v7613
        %v7622 = vmul.f32 %v7614, %v7614
        %v7623 = vmul.f32 %v7615, %v7615
        %v7624 = vmul.f32 %v7616, %v7616
        %v7625 = vmul.f32 %v7617, %v7617
        %7626 = vadd.xlane.f32.xlu0 %v7618
        %v7627 = vpop.xlane.xlu0 %7626
        %7628 = vadd.xlane.f32.xlu0 %v7619
        %v7629 = vpop.xlane.xlu0 %7628
        %7630 = vadd.xlane.f32.xlu0 %v7620
        %v7631 = vpop.xlane.xlu0 %7630
        %7632 = vadd.xlane.f32.xlu0 %v7621
        %v7633 = vpop.xlane.xlu0 %7632
        %7634 = vadd.xlane.f32.xlu0 %v7622
        %v7635 = vpop.xlane.xlu0 %7634
        %7636 = vadd.xlane.f32.xlu0 %v7623
        %v7637 = vpop.xlane.xlu0 %7636
        %7638 = vadd.xlane.f32.xlu0 %v7624
        %v7639 = vpop.xlane.xlu0 %7638
        %7640 = vadd.xlane.f32.xlu0 %v7625
        %v7641 = vpop.xlane.xlu0 %7640
        %v7642 = vmul.f32 %v7627, 0.015625
        %v7643 = vmul.f32 %v7629, 0.015625
        %v7644 = vmul.f32 %v7631, 0.015625
        %v7645 = vmul.f32 %v7633, 0.015625
        %v7646 = vmul.f32 %v7635, 0.015625
        %v7647 = vmul.f32 %v7637, 0.015625
        %v7648 = vmul.f32 %v7639, 0.015625
        %v7649 = vmul.f32 %v7641, 0.015625
        %v7650 = vadd.f32 %v7642, 1e-05
        %v7651 = vadd.f32 %v7643, 1e-05
        %v7652 = vadd.f32 %v7644, 1e-05
        %v7653 = vadd.f32 %v7645, 1e-05
        %v7654 = vadd.f32 %v7646, 1e-05
        %v7655 = vadd.f32 %v7647, 1e-05
        %v7656 = vadd.f32 %v7648, 1e-05
        %v7657 = vadd.f32 %v7649, 1e-05
        %v7658 = vrsqrt.pop %v7650
        %v7659 = vrsqrt.pop %v7651
        %v7660 = vrsqrt.pop %v7652
        %v7661 = vrsqrt.pop %v7653
        %v7662 = vrsqrt.pop %v7654
        %v7663 = vrsqrt.pop %v7655
        %v7664 = vrsqrt.pop %v7656
        %v7665 = vrsqrt.pop %v7657
        %v7666 = vmul.f32 %v7602, %v7658
        %v7667 = vmul.f32 %v7603, %v7659
        %v7668 = vmul.f32 %v7604, %v7660
        %v7669 = vmul.f32 %v7605, %v7661
        %v7670 = vmul.f32 %v7606, %v7662
        %v7671 = vmul.f32 %v7607, %v7663
        %v7672 = vmul.f32 %v7608, %v7664
        %v7673 = vmul.f32 %v7609, %v7665
        %v7674 = vlaneseq
        %v7675 = vshrl.u32 %v7674, 7
        %v7676 = vsub.s32 1, %v7675
        %v7677 = vrot.slane %v7557, %v7676
        %v7678 = vmul.f32 %v7666, %v7677
        %v7679 = vmul.f32 %v7667, %v7677
        %v7680 = vmul.f32 %v7668, %v7677
        %v7681 = vmul.f32 %v7669, %v7677
        %v7682 = vmul.f32 %v7670, %v7677
        %v7683 = vmul.f32 %v7671, %v7677
        %v7684 = vmul.f32 %v7672, %v7677
        %v7685 = vmul.f32 %v7673, %v7677
        %v7686 = vlaneseq
        %v7687 = vshrl.u32 %v7686, 7
        %v7688 = vsub.s32 2, %v7687
        %v7689 = vrot.slane %v7557, %v7688
        %v7690 = vadd.f32 %v7678, %v7689
        %v7691 = vadd.f32 %v7679, %v7689
        %v7692 = vadd.f32 %v7680, %v7689
        %v7693 = vadd.f32 %v7681, %v7689
        %v7694 = vadd.f32 %v7682, %v7689
        %v7695 = vadd.f32 %v7683, %v7689
        %v7696 = vadd.f32 %v7684, %v7689
        %v7697 = vadd.f32 %v7685, %v7689
        %v7698 = vld [vmem:[#allocation3 + $0x8] sm:$0xff]
        %v7699 = vld [vmem:[#allocation3 + $0x10] sm:$0xff]
        %v7700 = vld [vmem:[#allocation3 + $0x18] sm:$0xff]
        %v7701 = vld [vmem:[#allocation3 + $0x20] sm:$0xff]
        %v7702 = vadd.f32 %v7690, %v7698
        %v7703 = vadd.f32 %v7691, %v7699
        %v7704 = vadd.f32 %v7692, %v7700
        %v7705 = vadd.f32 %v7693, %v7701
        %7706 = vst [vmem:[#allocation2 + $0x8] sm:$0xff] %v7702
        %7707 = vst [vmem:[#allocation2 + $0x10] sm:$0xff] %v7703
        %7708 = vst [vmem:[#allocation2 + $0x18] sm:$0xff] %v7704
        %7709 = vst [vmem:[#allocation2 + $0x20] sm:$0xff] %v7705
        %v7710 = vld [vmem:[#allocation3 + $0x30] sm:$0xff]
        %v7711 = vld [vmem:[#allocation3 + $0x38] sm:$0xff]
        %v7712 = vld [vmem:[#allocation3 + $0x40] sm:$0xff]
        %v7713 = vld [vmem:[#allocation3 + $0x48] sm:$0xff]
        %v7714 = vadd.f32 %v7694, %v7710
        %v7715 = vadd.f32 %v7695, %v7711
        %v7716 = vadd.f32 %v7696, %v7712
        %v7717 = vadd.f32 %v7697, %v7713
        %7718 = vst [vmem:[#allocation2 + $0x30] sm:$0xff] %v7714
        %7719 = vst [vmem:[#allocation2 + $0x38] sm:$0xff] %v7715
        %7720 = vst [vmem:[#allocation2 + $0x40] sm:$0xff] %v7716
        %7721 = vst [vmem:[#allocation2 + $0x48] sm:$0xff] %v7717
        %v7722 = vld [vmem:[#allocation2 + $0x6] sm:$0xff]
        %v7723 = vld [vmem:[#allocation2 + $0xe] sm:$0xff]
        %v7724 = vld [vmem:[#allocation2 + $0x16] sm:$0xff]
        %v7725 = vld [vmem:[#allocation2 + $0x1e] sm:$0xff]
        %v7726 = vld [vmem:[#allocation2 + $0x26] sm:$0xff]
        %v7727 = vld [vmem:[#allocation2 + $0x2e] sm:$0xff]
        %v7728 = vld [vmem:[#allocation2 + $0x36] sm:$0xff]
        %v7729 = vld [vmem:[#allocation2 + $0x3e] sm:$0xff]
        %v7730 = vld [vmem:[#allocation2 + $0x46] sm:$0xff]
        %s7731 = scalar_lea.vmem [#allocation4], 2560
        %v7732 = vld [vmem:[%s7731] sm:$0xf]
        %v7733 = vld [vmem:[%s7731 + $0x4] sm:$0xf]
        %v7734 = vld [vmem:[%s7731 + $0x8] sm:$0xf]
        %v7735 = vld [vmem:[%s7731 + $0xc] sm:$0xf]
        %v7736 = vld [vmem:[%s7731 + $0x10] sm:$0xf]
        %v7737 = vld [vmem:[%s7731 + $0x14] sm:$0xf]
        %v7738 = vld [vmem:[%s7731 + $0x18] sm:$0xf]
        %v7739 = vld [vmem:[%s7731 + $0x1c] sm:$0xf]
        %v7740 = vld [vmem:[%s7731 + $0x20] sm:$0xf]
        %v7741 = vld [vmem:[%s7731 + $0x24] sm:$0xf]
        %v7742 = vld [vmem:[%s7731 + $0x28] sm:$0xf]
        %v7743 = vld [vmem:[%s7731 + $0x2c] sm:$0xf]
        %v7744 = vld [vmem:[%s7731 + $0x30] sm:$0xf]
        %v7745 = vld [vmem:[%s7731 + $0x34] sm:$0xf]
        %v7746 = vld [vmem:[%s7731 + $0x38] sm:$0xf]
        %v7747 = vld [vmem:[%s7731 + $0x3c] sm:$0xf]
        %v7748 = vpack.c.bf16 %v7723, %v7722
        %v7749 = vpack.c.bf16 %v7725, %v7724
        %v7750 = vpack.c.bf16 %v7727, %v7726
        %v7751 = vpack.c.bf16 %v7729, %v7728
        %v7752 = vpack.c.bf16 %v7730, %v7730
        %v7753 = vld [vmem:[#allocation2 + $0x7] sm:$0xff]
        %v7754 = vld [vmem:[#allocation2 + $0xf] sm:$0xff]
        %v7755 = vld [vmem:[#allocation2 + $0x17] sm:$0xff]
        %v7756 = vld [vmem:[#allocation2 + $0x1f] sm:$0xff]
        %v7757 = vld [vmem:[#allocation2 + $0x27] sm:$0xff]
        %v7758 = vld [vmem:[#allocation2 + $0x2f] sm:$0xff]
        %v7759 = vld [vmem:[#allocation2 + $0x37] sm:$0xff]
        %v7760 = vld [vmem:[#allocation2 + $0x3f] sm:$0xff]
        %v7761 = vld [vmem:[#allocation2 + $0x47] sm:$0xff]
        %s7762 = scalar_lea.vmem [#allocation4], 2624
        %v7763 = vld [vmem:[%s7762] sm:$0xf]
        %v7764 = vld [vmem:[%s7762 + $0x4] sm:$0xf]
        %v7765 = vld [vmem:[%s7762 + $0x8] sm:$0xf]
        %v7766 = vld [vmem:[%s7762 + $0xc] sm:$0xf]
        %v7767 = vld [vmem:[%s7762 + $0x10] sm:$0xf]
        %v7768 = vld [vmem:[%s7762 + $0x14] sm:$0xf]
        %v7769 = vld [vmem:[%s7762 + $0x18] sm:$0xf]
        %v7770 = vld [vmem:[%s7762 + $0x1c] sm:$0xf]
        %v7771 = vld [vmem:[%s7762 + $0x20] sm:$0xf]
        %v7772 = vld [vmem:[%s7762 + $0x24] sm:$0xf]
        %v7773 = vld [vmem:[%s7762 + $0x28] sm:$0xf]
        %v7774 = vld [vmem:[%s7762 + $0x2c] sm:$0xf]
        %v7775 = vld [vmem:[%s7762 + $0x30] sm:$0xf]
        %v7776 = vld [vmem:[%s7762 + $0x34] sm:$0xf]
        %v7777 = vld [vmem:[%s7762 + $0x38] sm:$0xf]
        %v7778 = vld [vmem:[%s7762 + $0x3c] sm:$0xf]
        %v7779 = vpack.c.bf16 %v7754, %v7753
        %v7780 = vpack.c.bf16 %v7756, %v7755
        %v7781 = vpack.c.bf16 %v7758, %v7757
        %v7782 = vpack.c.bf16 %v7760, %v7759
        %v7783 = vpack.c.bf16 %v7761, %v7761
        %v7800 = vunpack.c.l.b16 %v7763
        %v7801 = vunpack.c.l.b16 %v7764
        %v7802 = vunpack.c.l.b16 %v7765
        %v7803 = vunpack.c.l.b16 %v7766
        %v7804 = vunpack.c.l.b16 %v7767
        %v7805 = vunpack.c.l.b16 %v7768
        %v7806 = vunpack.c.l.b16 %v7769
        %v7807 = vunpack.c.l.b16 %v7770
        %v7808 = vunpack.c.l.b16 %v7771
        %v7809 = vunpack.c.l.b16 %v7772
        %v7810 = vunpack.c.l.b16 %v7773
        %v7811 = vunpack.c.l.b16 %v7774
        %v7812 = vunpack.c.l.b16 %v7775
        %v7813 = vunpack.c.l.b16 %v7776
        %v7814 = vunpack.c.l.b16 %v7777
        %v7815 = vunpack.c.l.b16 %v7778
        %v7816 = vpack.c.b16 %v7801, %v7800
        %v7817 = vpack.c.b16 %v7803, %v7802
        %v7818 = vpack.c.b16 %v7805, %v7804
        %v7819 = vpack.c.b16 %v7807, %v7806
        %v7820 = vpack.c.b16 %v7809, %v7808
        %v7821 = vpack.c.b16 %v7811, %v7810
        %v7822 = vpack.c.b16 %v7813, %v7812
        %v7823 = vpack.c.b16 %v7815, %v7814
        %7832 = vmatprep.subr.bf16.mxu0 0
        %7833 = vmatpush1.bf16.msra.mxu0 %v7816
        %7834 = vmatprep.subr.bf16.mxu0 0
        %7835 = vmatpush1.bf16.msra.mxu0 %v7817
        %7836 = vmatprep.subr.bf16.mxu0 0
        %7837 = vmatpush1.bf16.msra.mxu0 %v7818
        %7838 = vmatprep.subr.bf16.mxu0 0
        %7839 = vmatpush1.bf16.msra.mxu0 %v7819
        %7840 = vmatprep.subr.bf16.mxu0 0
        %7841 = vmatpush1.bf16.msra.mxu0 %v7820
        %7842 = vmatprep.subr.bf16.mxu0 0
        %7843 = vmatpush1.bf16.msra.mxu0 %v7821
        %7844 = vmatprep.subr.bf16.mxu0 0
        %7845 = vmatpush1.bf16.msra.mxu0 %v7822
        %7846 = vmatprep.subr.bf16.mxu0 0
        %7847 = vmatpush1.bf16.msra.mxu0 %v7823
        %7848 = vmatprep.subr.bf16.mxu0 0
        %7849 = vmatpush1.bf16.msra.mxu0 0
        %7850 = vmatprep.subr.bf16.mxu0 0
        %7851 = vmatpush1.bf16.msra.mxu0 0
        %7852 = vmatprep.subr.bf16.mxu0 0
        %7853 = vmatpush1.bf16.msra.mxu0 0
        %7854 = vmatprep.subr.bf16.mxu0 0
        %7855 = vmatpush1.bf16.msra.mxu0 0
        %7856 = vmatprep.subr.bf16.mxu0 0
        %7857 = vmatpush1.bf16.msra.mxu0 0
        %7858 = vmatprep.subr.bf16.mxu0 0
        %7859 = vmatpush1.bf16.msra.mxu0 0
        %7860 = vmatprep.subr.bf16.mxu0 0
        %7861 = vmatpush1.bf16.msra.mxu0 0
        %7862 = vmatprep.subr.bf16.mxu0 0
        %7863 = vmatpush1.bf16.msra.mxu0 0
        %7864 = vmatprep.mubr.bf16.mxu0 0
        %7865 = vmatmul.mubr.bf16.gmra.mrb[0].mxu0 %v7779
        %v7866 = vpop.f32.mrb[0].mxu0
        %v7867 = vadd.f32 0.0, %v7866
        %v7868 = vpop.f32.mrb[0].mxu0
        %v7869 = vpop.f32.mrb[0].mxu0
        %v7870 = vadd.f32 0.0, %v7869
        %v7871 = vpop.f32.mrb[0].mxu0
        %7872 = vmatprep.mubr.bf16.mxu0 0
        %7873 = vmatmul.mubr.bf16.gmra.mrb[0].mxu0 %v7780
        %v7874 = vpop.f32.mrb[0].mxu0
        %v7875 = vadd.f32 0.0, %v7874
        %v7876 = vpop.f32.mrb[0].mxu0
        %v7877 = vpop.f32.mrb[0].mxu0
        %v7878 = vadd.f32 0.0, %v7877
        %v7879 = vpop.f32.mrb[0].mxu0
        %7880 = vmatprep.mubr.bf16.mxu0 0
        %7881 = vmatmul.mubr.bf16.gmra.mrb[0].mxu0 %v7781
        %v7882 = vpop.f32.mrb[0].mxu0
        %v7883 = vpop.f32.mrb[0].mxu0
        %v7884 = vpop.f32.mrb[0].mxu0
        %v7885 = vadd.f32 0.0, %v7884
        %v7886 = vpop.f32.mrb[0].mxu0
        %7887 = vmatprep.mubr.bf16.mxu0 0
        %7888 = vmatmul.mubr.bf16.gmra.mrb[0].mxu0 %v7782
        %v7889 = vpop.f32.mrb[0].mxu0
        %v7890 = vadd.f32 0.0, %v7889
        %v7891 = vpop.f32.mrb[0].mxu0
        %v7892 = vpop.f32.mrb[0].mxu0
        %v7893 = vadd.f32 0.0, %v7892
        %v7894 = vpop.f32.mrb[0].mxu0
        %7895 = vmatprep.mubr.bf16.mxu0 0
        %7896 = vmatmul.mubr.bf16.gmra.mrb[0].mxu0 %v7783
        %v7897 = vpop.f32.mrb[0].mxu0
        %v7898 = vadd.f32 0.0, %v7897
        %v7899 = vpop.f32.mrb[0].mxu0
        %v7900 = vpop.f32.mrb[0].mxu0
        %v7901 = vpop.f32.mrb[0].mxu0
        %7902 = vdwg.mxu0
        %v7919 = vunpack.c.l.b16 %v7732
        %v7920 = vunpack.c.l.b16 %v7733
        %v7921 = vunpack.c.l.b16 %v7734
        %v7922 = vunpack.c.l.b16 %v7735
        %v7923 = vunpack.c.l.b16 %v7736
        %v7924 = vunpack.c.l.b16 %v7737
        %v7925 = vunpack.c.l.b16 %v7738
        %v7926 = vunpack.c.l.b16 %v7739
        %v7927 = vunpack.c.l.b16 %v7740
        %v7928 = vunpack.c.l.b16 %v7741
        %v7929 = vunpack.c.l.b16 %v7742
        %v7930 = vunpack.c.l.b16 %v7743
        %v7931 = vunpack.c.l.b16 %v7744
        %v7932 = vunpack.c.l.b16 %v7745
        %v7933 = vunpack.c.l.b16 %v7746
        %v7934 = vunpack.c.l.b16 %v7747
        %v7935 = vpack.c.b16 %v7920, %v7919
        %v7936 = vpack.c.b16 %v7922, %v7921
        %v7937 = vpack.c.b16 %v7924, %v7923
        %v7938 = vpack.c.b16 %v7926, %v7925
        %v7939 = vpack.c.b16 %v7928, %v7927
        %v7940 = vpack.c.b16 %v7930, %v7929
        %v7941 = vpack.c.b16 %v7932, %v7931
        %v7942 = vpack.c.b16 %v7934, %v7933
        %7951 = vmatprep.subr.bf16.mxu0 0
        %7952 = vmatpush1.bf16.msra.mxu0 %v7935
        %7953 = vmatprep.subr.bf16.mxu0 0
        %7954 = vmatpush1.bf16.msra.mxu0 %v7936
        %7955 = vmatprep.subr.bf16.mxu0 0
        %7956 = vmatpush1.bf16.msra.mxu0 %v7937
        %7957 = vmatprep.subr.bf16.mxu0 0
        %7958 = vmatpush1.bf16.msra.mxu0 %v7938
        %7959 = vmatprep.subr.bf16.mxu0 0
        %7960 = vmatpush1.bf16.msra.mxu0 %v7939
        %7961 = vmatprep.subr.bf16.mxu0 0
        %7962 = vmatpush1.bf16.msra.mxu0 %v7940
        %7963 = vmatprep.subr.bf16.mxu0 0
        %7964 = vmatpush1.bf16.msra.mxu0 %v7941
        %7965 = vmatprep.subr.bf16.mxu0 0
        %7966 = vmatpush1.bf16.msra.mxu0 %v7942
        %7967 = vmatprep.subr.bf16.mxu0 0
        %7968 = vmatpush1.bf16.msra.mxu0 0
        %7969 = vmatprep.subr.bf16.mxu0 0
        %7970 = vmatpush1.bf16.msra.mxu0 0
        %7971 = vmatprep.subr.bf16.mxu0 0
        %7972 = vmatpush1.bf16.msra.mxu0 0
        %7973 = vmatprep.subr.bf16.mxu0 0
        %7974 = vmatpush1.bf16.msra.mxu0 0
        %7975 = vmatprep.subr.bf16.mxu0 0
        %7976 = vmatpush1.bf16.msra.mxu0 0
        %7977 = vmatprep.subr.bf16.mxu0 0
        %7978 = vmatpush1.bf16.msra.mxu0 0
        %7979 = vmatprep.subr.bf16.mxu0 0
        %7980 = vmatpush1.bf16.msra.mxu0 0
        %7981 = vmatprep.subr.bf16.mxu0 0
        %7982 = vmatpush1.bf16.msra.mxu0 0
        %7983 = vmatprep.mubr.bf16.mxu0 0
        %7984 = vmatmul.mubr.bf16.gmra.mrb[0].mxu0 %v7748
        %v7985 = vpop.f32.mrb[0].mxu0
        %v7986 = vadd.f32 %v7867, %v7985
        %v7987 = vpop.f32.mrb[0].mxu0
        %v7988 = vpop.f32.mrb[0].mxu0
        %v7989 = vadd.f32 %v7870, %v7988
        %v7990 = vpop.f32.mrb[0].mxu0
        %7991 = vmatprep.mubr.bf16.mxu0 0
        %7992 = vmatmul.mubr.bf16.gmra.mrb[0].mxu0 %v7749
        %v7993 = vpop.f32.mrb[0].mxu0
        %v7994 = vadd.f32 %v7875, %v7993
        %v7995 = vpop.f32.mrb[0].mxu0
        %v7996 = vpop.f32.mrb[0].mxu0
        %v7997 = vadd.f32 %v7878, %v7996
        %v7998 = vpop.f32.mrb[0].mxu0
        %7999 = vmatprep.mubr.bf16.mxu0 0
        %8000 = vmatmul.mubr.bf16.gmra.mrb[0].mxu0 %v7750
        %v8001 = vpop.f32.mrb[0].mxu0
        %v8002 = vpop.f32.mrb[0].mxu0
        %v8003 = vpop.f32.mrb[0].mxu0
        %v8004 = vadd.f32 %v7885, %v8003
        %v8005 = vpop.f32.mrb[0].mxu0
        %8006 = vmatprep.mubr.bf16.mxu0 0
        %8007 = vmatmul.mubr.bf16.gmra.mrb[0].mxu0 %v7751
        %v8008 = vpop.f32.mrb[0].mxu0
        %v8009 = vadd.f32 %v7890, %v8008
        %v8010 = vpop.f32.mrb[0].mxu0
        %v8011 = vpop.f32.mrb[0].mxu0
        %v8012 = vadd.f32 %v7893, %v8011
        %v8013 = vpop.f32.mrb[0].mxu0
        %8014 = vmatprep.mubr.bf16.mxu0 0
        %8015 = vmatmul.mubr.bf16.gmra.mrb[0].mxu0 %v7752
        %v8016 = vpop.f32.mrb[0].mxu0
        %v8017 = vadd.f32 %v7898, %v8016
        %v8018 = vpop.f32.mrb[0].mxu0
        %v8019 = vpop.f32.mrb[0].mxu0
        %v8020 = vpop.f32.mrb[0].mxu0
        %8021 = vdwg.mxu0
        %v8022 = vld [vmem:[#allocation2 + $0x8] sm:$0xff]
        %v8023 = vld [vmem:[#allocation2 + $0x10] sm:$0xff]
        %v8024 = vld [vmem:[#allocation2 + $0x18] sm:$0xff]
        %v8025 = vld [vmem:[#allocation2 + $0x20] sm:$0xff]
        %v8026 = vld [vmem:[#allocation2 + $0x28] sm:$0xff]
        %v8027 = vld [vmem:[#allocation2 + $0x30] sm:$0xff]
        %v8028 = vld [vmem:[#allocation2 + $0x38] sm:$0xff]
        %v8029 = vld [vmem:[#allocation2 + $0x40] sm:$0xff]
        %v8030 = vld [vmem:[#allocation2 + $0x48] sm:$0xff]
        %s8031 = scalar_lea.vmem [#allocation4], 2688
        %v8032 = vld [vmem:[%s8031] sm:$0xf]
        %v8033 = vld [vmem:[%s8031 + $0x4] sm:$0xf]
        %v8034 = vld [vmem:[%s8031 + $0x8] sm:$0xf]
        %v8035 = vld [vmem:[%s8031 + $0xc] sm:$0xf]
        %v8036 = vld [vmem:[%s8031 + $0x10] sm:$0xf]
        %v8037 = vld [vmem:[%s8031 + $0x14] sm:$0xf]
        %v8038 = vld [vmem:[%s8031 + $0x18] sm:$0xf]
        %v8039 = vld [vmem:[%s8031 + $0x1c] sm:$0xf]
        %v8040 = vld [vmem:[%s8031 + $0x20] sm:$0xf]
        %v8041 = vld [vmem:[%s8031 + $0x24] sm:$0xf]
        %v8042 = vld [vmem:[%s8031 + $0x28] sm:$0xf]
        %v8043 = vld [vmem:[%s8031 + $0x2c] sm:$0xf]
        %v8044 = vld [vmem:[%s8031 + $0x30] sm:$0xf]
        %v8045 = vld [vmem:[%s8031 + $0x34] sm:$0xf]
        %v8046 = vld [vmem:[%s8031 + $0x38] sm:$0xf]
        %v8047 = vld [vmem:[%s8031 + $0x3c] sm:$0xf]
        %v8048 = vpack.c.bf16 %v8023, %v8022
        %v8049 = vpack.c.bf16 %v8025, %v8024
        %v8050 = vpack.c.bf16 %v8027, %v8026
        %v8051 = vpack.c.bf16 %v8029, %v8028
        %v8052 = vpack.c.bf16 %v8030, %v8030
        %v8069 = vunpack.c.l.b16 %v8032
        %v8070 = vunpack.c.l.b16 %v8033
        %v8071 = vunpack.c.l.b16 %v8034
        %v8072 = vunpack.c.l.b16 %v8035
        %v8073 = vunpack.c.l.b16 %v8036
        %v8074 = vunpack.c.l.b16 %v8037
        %v8075 = vunpack.c.l.b16 %v8038
        %v8076 = vunpack.c.l.b16 %v8039
        %v8077 = vunpack.c.l.b16 %v8040
        %v8078 = vunpack.c.l.b16 %v8041
        %v8079 = vunpack.c.l.b16 %v8042
        %v8080 = vunpack.c.l.b16 %v8043
        %v8081 = vunpack.c.l.b16 %v8044
        %v8082 = vunpack.c.l.b16 %v8045
        %v8083 = vunpack.c.l.b16 %v8046
        %v8084 = vunpack.c.l.b16 %v8047
        %v8085 = vpack.c.b16 %v8070, %v8069
        %v8086 = vpack.c.b16 %v8072, %v8071
        %v8087 = vpack.c.b16 %v8074, %v8073
        %v8088 = vpack.c.b16 %v8076, %v8075
        %v8089 = vpack.c.b16 %v8078, %v8077
        %v8090 = vpack.c.b16 %v8080, %v8079
        %v8091 = vpack.c.b16 %v8082, %v8081
        %v8092 = vpack.c.b16 %v8084, %v8083
        %8101 = vmatprep.subr.bf16.mxu0 0
        %8102 = vmatpush1.bf16.msra.mxu0 %v8085
        %8103 = vmatprep.subr.bf16.mxu0 0
        %8104 = vmatpush1.bf16.msra.mxu0 %v8086
        %8105 = vmatprep.subr.bf16.mxu0 0
        %8106 = vmatpush1.bf16.msra.mxu0 %v8087
        %8107 = vmatprep.subr.bf16.mxu0 0
        %8108 = vmatpush1.bf16.msra.mxu0 %v8088
        %8109 = vmatprep.subr.bf16.mxu0 0
        %8110 = vmatpush1.bf16.msra.mxu0 %v8089
        %8111 = vmatprep.subr.bf16.mxu0 0
        %8112 = vmatpush1.bf16.msra.mxu0 %v8090
        %8113 = vmatprep.subr.bf16.mxu0 0
        %8114 = vmatpush1.bf16.msra.mxu0 %v8091
        %8115 = vmatprep.subr.bf16.mxu0 0
        %8116 = vmatpush1.bf16.msra.mxu0 %v8092
        %8117 = vmatprep.subr.bf16.mxu0 0
        %8118 = vmatpush1.bf16.msra.mxu0 0
        %8119 = vmatprep.subr.bf16.mxu0 0
        %8120 = vmatpush1.bf16.msra.mxu0 0
        %8121 = vmatprep.subr.bf16.mxu0 0
        %8122 = vmatpush1.bf16.msra.mxu0 0
        %8123 = vmatprep.subr.bf16.mxu0 0
        %8124 = vmatpush1.bf16.msra.mxu0 0
        %8125 = vmatprep.subr.bf16.mxu0 0
        %8126 = vmatpush1.bf16.msra.mxu0 0
        %8127 = vmatprep.subr.bf16.mxu0 0
        %8128 = vmatpush1.bf16.msra.mxu0 0
        %8129 = vmatprep.subr.bf16.mxu0 0
        %8130 = vmatpush1.bf16.msra.mxu0 0
        %8131 = vmatprep.subr.bf16.mxu0 0
        %8132 = vmatpush1.bf16.msra.mxu0 0
        %8133 = vmatprep.mubr.bf16.mxu0 0
        %8134 = vmatmul.mubr.bf16.gmra.mrb[0].mxu0 %v8048
        %v8135 = vpop.f32.mrb[0].mxu0
        %v8136 = vadd.f32 0.0, %v8135
        %v8137 = vpop.f32.mrb[0].mxu0
        %v8138 = vpop.f32.mrb[0].mxu0
        %v8139 = vadd.f32 0.0, %v8138
        %v8140 = vpop.f32.mrb[0].mxu0
        %8141 = vmatprep.mubr.bf16.mxu0 0
        %8142 = vmatmul.mubr.bf16.gmra.mrb[0].mxu0 %v8049
        %v8143 = vpop.f32.mrb[0].mxu0
        %v8144 = vadd.f32 0.0, %v8143
        %v8145 = vpop.f32.mrb[0].mxu0
        %v8146 = vpop.f32.mrb[0].mxu0
        %v8147 = vadd.f32 0.0, %v8146
        %v8148 = vpop.f32.mrb[0].mxu0
        %8149 = vmatprep.mubr.bf16.mxu0 0
        %8150 = vmatmul.mubr.bf16.gmra.mrb[0].mxu0 %v8050
        %v8151 = vpop.f32.mrb[0].mxu0
        %v8152 = vpop.f32.mrb[0].mxu0
        %v8153 = vpop.f32.mrb[0].mxu0
        %v8154 = vadd.f32 0.0, %v8153
        %v8155 = vpop.f32.mrb[0].mxu0
        %8156 = vmatprep.mubr.bf16.mxu0 0
        %8157 = vmatmul.mubr.bf16.gmra.mrb[0].mxu0 %v8051
        %v8158 = vpop.f32.mrb[0].mxu0
        %v8159 = vadd.f32 0.0, %v8158
        %v8160 = vpop.f32.mrb[0].mxu0
        %v8161 = vpop.f32.mrb[0].mxu0
        %v8162 = vadd.f32 0.0, %v8161
        %v8163 = vpop.f32.mrb[0].mxu0
        %8164 = vmatprep.mubr.bf16.mxu0 0
        %8165 = vmatmul.mubr.bf16.gmra.mrb[0].mxu0 %v8052
        %v8166 = vpop.f32.mrb[0].mxu0
        %v8167 = vadd.f32 0.0, %v8166
        %v8168 = vpop.f32.mrb[0].mxu0
        %v8169 = vpop.f32.mrb[0].mxu0
        %v8170 = vpop.f32.mrb[0].mxu0
        %8171 = vdwg.mxu0
        %v8172 = vadd.f32 %v7986, %v8136
        %v8173 = vadd.f32 %v7989, %v8139
        %v8174 = vadd.f32 %v7994, %v8144
        %v8175 = vadd.f32 %v7997, %v8147
        %v8176 = vadd.f32 %v8004, %v8154
        %v8177 = vadd.f32 %v8009, %v8159
        %v8178 = vadd.f32 %v8012, %v8162
        %v8179 = vadd.f32 %v8017, %v8167
        %v8180 = vld [vmem:[#allocation2 + $0x9] sm:$0xff]
        %v8181 = vld [vmem:[#allocation2 + $0x11] sm:$0xff]
        %v8182 = vld [vmem:[#allocation2 + $0x19] sm:$0xff]
        %v8183 = vld [vmem:[#allocation2 + $0x21] sm:$0xff]
        %v8184 = vld [vmem:[#allocation2 + $0x29] sm:$0xff]
        %v8185 = vld [vmem:[#allocation2 + $0x31] sm:$0xff]
        %v8186 = vld [vmem:[#allocation2 + $0x39] sm:$0xff]
        %v8187 = vld [vmem:[#allocation2 + $0x41] sm:$0xff]
        %v8188 = vld [vmem:[#allocation2 + $0x49] sm:$0xff]
        %s8189 = scalar_lea.vmem [#allocation4], 2752
        %v8190 = vld [vmem:[%s8189] sm:$0xf]
        %v8191 = vld [vmem:[%s8189 + $0x4] sm:$0xf]
        %v8192 = vld [vmem:[%s8189 + $0x8] sm:$0xf]
        %v8193 = vld [vmem:[%s8189 + $0xc] sm:$0xf]
        %v8194 = vld [vmem:[%s8189 + $0x10] sm:$0xf]
        %v8195 = vld [vmem:[%s8189 + $0x14] sm:$0xf]
        %v8196 = vld [vmem:[%s8189 + $0x18] sm:$0xf]
        %v8197 = vld [vmem:[%s8189 + $0x1c] sm:$0xf]
        %v8198 = vld [vmem:[%s8189 + $0x20] sm:$0xf]
        %v8199 = vld [vmem:[%s8189 + $0x24] sm:$0xf]
        %v8200 = vld [vmem:[%s8189 + $0x28] sm:$0xf]
        %v8201 = vld [vmem:[%s8189 + $0x2c] sm:$0xf]
        %v8202 = vld [vmem:[%s8189 + $0x30] sm:$0xf]
        %v8203 = vld [vmem:[%s8189 + $0x34] sm:$0xf]
        %v8204 = vld [vmem:[%s8189 + $0x38] sm:$0xf]
        %v8205 = vld [vmem:[%s8189 + $0x3c] sm:$0xf]
        %v8206 = vpack.c.bf16 %v8181, %v8180
        %v8207 = vpack.c.bf16 %v8183, %v8182
        %v8208 = vpack.c.bf16 %v8185, %v8184
        %v8209 = vpack.c.bf16 %v8187, %v8186
        %v8210 = vpack.c.bf16 %v8188, %v8188
        %v8227 = vunpack.c.l.b16 %v8190
        %v8228 = vunpack.c.l.b16 %v8191
        %v8229 = vunpack.c.l.b16 %v8192
        %v8230 = vunpack.c.l.b16 %v8193
        %v8231 = vunpack.c.l.b16 %v8194
        %v8232 = vunpack.c.l.b16 %v8195
        %v8233 = vunpack.c.l.b16 %v8196
        %v8234 = vunpack.c.l.b16 %v8197
        %v8235 = vunpack.c.l.b16 %v8198
        %v8236 = vunpack.c.l.b16 %v8199
        %v8237 = vunpack.c.l.b16 %v8200
        %v8238 = vunpack.c.l.b16 %v8201
        %v8239 = vunpack.c.l.b16 %v8202
        %v8240 = vunpack.c.l.b16 %v8203
        %v8241 = vunpack.c.l.b16 %v8204
        %v8242 = vunpack.c.l.b16 %v8205
        %v8243 = vpack.c.b16 %v8228, %v8227
        %v8244 = vpack.c.b16 %v8230, %v8229
        %v8245 = vpack.c.b16 %v8232, %v8231
        %v8246 = vpack.c.b16 %v8234, %v8233
        %v8247 = vpack.c.b16 %v8236, %v8235
        %v8248 = vpack.c.b16 %v8238, %v8237
        %v8249 = vpack.c.b16 %v8240, %v8239
        %v8250 = vpack.c.b16 %v8242, %v8241
        %8259 = vmatprep.subr.bf16.mxu0 0
        %8260 = vmatpush1.bf16.msra.mxu0 %v8243
        %8261 = vmatprep.subr.bf16.mxu0 0
        %8262 = vmatpush1.bf16.msra.mxu0 %v8244
        %8263 = vmatprep.subr.bf16.mxu0 0
        %8264 = vmatpush1.bf16.msra.mxu0 %v8245
        %8265 = vmatprep.subr.bf16.mxu0 0
        %8266 = vmatpush1.bf16.msra.mxu0 %v8246
        %8267 = vmatprep.subr.bf16.mxu0 0
        %8268 = vmatpush1.bf16.msra.mxu0 %v8247
        %8269 = vmatprep.subr.bf16.mxu0 0
        %8270 = vmatpush1.bf16.msra.mxu0 %v8248
        %8271 = vmatprep.subr.bf16.mxu0 0
        %8272 = vmatpush1.bf16.msra.mxu0 %v8249
        %8273 = vmatprep.subr.bf16.mxu0 0
        %8274 = vmatpush1.bf16.msra.mxu0 %v8250
        %8275 = vmatprep.subr.bf16.mxu0 0
        %8276 = vmatpush1.bf16.msra.mxu0 0
        %8277 = vmatprep.subr.bf16.mxu0 0
        %8278 = vmatpush1.bf16.msra.mxu0 0
        %8279 = vmatprep.subr.bf16.mxu0 0
        %8280 = vmatpush1.bf16.msra.mxu0 0
        %8281 = vmatprep.subr.bf16.mxu0 0
        %8282 = vmatpush1.bf16.msra.mxu0 0
        %8283 = vmatprep.subr.bf16.mxu0 0
        %8284 = vmatpush1.bf16.msra.mxu0 0
        %8285 = vmatprep.subr.bf16.mxu0 0
        %8286 = vmatpush1.bf16.msra.mxu0 0
        %8287 = vmatprep.subr.bf16.mxu0 0
        %8288 = vmatpush1.bf16.msra.mxu0 0
        %8289 = vmatprep.subr.bf16.mxu0 0
        %8290 = vmatpush1.bf16.msra.mxu0 0
        %8291 = vmatprep.mubr.bf16.mxu0 0
        %8292 = vmatmul.mubr.bf16.gmra.mrb[0].mxu0 %v8206
        %v8293 = vpop.f32.mrb[0].mxu0
        %v8294 = vadd.f32 0.0, %v8293
        %v8295 = vpop.f32.mrb[0].mxu0
        %v8296 = vpop.f32.mrb[0].mxu0
        %v8297 = vadd.f32 0.0, %v8296
        %v8298 = vpop.f32.mrb[0].mxu0
        %8299 = vmatprep.mubr.bf16.mxu0 0
        %8300 = vmatmul.mubr.bf16.gmra.mrb[0].mxu0 %v8207
        %v8301 = vpop.f32.mrb[0].mxu0
        %v8302 = vadd.f32 0.0, %v8301
        %v8303 = vpop.f32.mrb[0].mxu0
        %v8304 = vpop.f32.mrb[0].mxu0
        %v8305 = vadd.f32 0.0, %v8304
        %v8306 = vpop.f32.mrb[0].mxu0
        %8307 = vmatprep.mubr.bf16.mxu0 0
        %8308 = vmatmul.mubr.bf16.gmra.mrb[0].mxu0 %v8208
        %v8309 = vpop.f32.mrb[0].mxu0
        %v8310 = vpop.f32.mrb[0].mxu0
        %v8311 = vpop.f32.mrb[0].mxu0
        %v8312 = vadd.f32 0.0, %v8311
        %v8313 = vpop.f32.mrb[0].mxu0
        %8314 = vmatprep.mubr.bf16.mxu0 0
        %8315 = vmatmul.mubr.bf16.gmra.mrb[0].mxu0 %v8209
        %v8316 = vpop.f32.mrb[0].mxu0
        %v8317 = vadd.f32 0.0, %v8316
        %v8318 = vpop.f32.mrb[0].mxu0
        %v8319 = vpop.f32.mrb[0].mxu0
        %v8320 = vadd.f32 0.0, %v8319
        %v8321 = vpop.f32.mrb[0].mxu0
        %8322 = vmatprep.mubr.bf16.mxu0 0
        %8323 = vmatmul.mubr.bf16.gmra.mrb[0].mxu0 %v8210
        %v8324 = vpop.f32.mrb[0].mxu0
        %v8325 = vadd.f32 0.0, %v8324
        %v8326 = vpop.f32.mrb[0].mxu0
        %v8327 = vpop.f32.mrb[0].mxu0
        %v8328 = vpop.f32.mrb[0].mxu0
        %8329 = vdwg.mxu0
        %v8330 = vadd.f32 %v8172, %v8294
        %v8331 = vadd.f32 %v8173, %v8297
        %v8332 = vadd.f32 %v8174, %v8302
        %v8333 = vadd.f32 %v8175, %v8305
        %v8334 = vadd.f32 %v8176, %v8312
        %v8335 = vadd.f32 %v8177, %v8317
        %v8336 = vadd.f32 %v8178, %v8320
        %v8337 = vadd.f32 %v8179, %v8325
        %v8338 = vld [vmem:[#allocation2 + $0xa] sm:$0xff]
        %v8339 = vld [vmem:[#allocation2 + $0x12] sm:$0xff]
        %v8340 = vld [vmem:[#allocation2 + $0x1a] sm:$0xff]
        %v8341 = vld [vmem:[#allocation2 + $0x22] sm:$0xff]
        %v8342 = vld [vmem:[#allocation2 + $0x2a] sm:$0xff]
        %v8343 = vld [vmem:[#allocation2 + $0x32] sm:$0xff]
        %v8344 = vld [vmem:[#allocation2 + $0x3a] sm:$0xff]
        %v8345 = vld [vmem:[#allocation2 + $0x42] sm:$0xff]
        %v8346 = vld [vmem:[#allocation2 + $0x4a] sm:$0xff]
        %s8347 = scalar_lea.vmem [#allocation4], 2816
        %v8348 = vld [vmem:[%s8347] sm:$0xf]
        %v8349 = vld [vmem:[%s8347 + $0x4] sm:$0xf]
        %v8350 = vld [vmem:[%s8347 + $0x8] sm:$0xf]
        %v8351 = vld [vmem:[%s8347 + $0xc] sm:$0xf]
        %v8352 = vld [vmem:[%s8347 + $0x10] sm:$0xf]
        %v8353 = vld [vmem:[%s8347 + $0x14] sm:$0xf]
        %v8354 = vld [vmem:[%s8347 + $0x18] sm:$0xf]
        %v8355 = vld [vmem:[%s8347 + $0x1c] sm:$0xf]
        %v8356 = vld [vmem:[%s8347 + $0x20] sm:$0xf]
        %v8357 = vld [vmem:[%s8347 + $0x24] sm:$0xf]
        %v8358 = vld [vmem:[%s8347 + $0x28] sm:$0xf]
        %v8359 = vld [vmem:[%s8347 + $0x2c] sm:$0xf]
        %v8360 = vld [vmem:[%s8347 + $0x30] sm:$0xf]
        %v8361 = vld [vmem:[%s8347 + $0x34] sm:$0xf]
        %v8362 = vld [vmem:[%s8347 + $0x38] sm:$0xf]
        %v8363 = vld [vmem:[%s8347 + $0x3c] sm:$0xf]
        %v8364 = vpack.c.bf16 %v8339, %v8338
        %v8365 = vpack.c.bf16 %v8341, %v8340
        %v8366 = vpack.c.bf16 %v8343, %v8342
        %v8367 = vpack.c.bf16 %v8345, %v8344
        %v8368 = vpack.c.bf16 %v8346, %v8346
        %v8385 = vunpack.c.l.b16 %v8348
        %v8386 = vunpack.c.l.b16 %v8349
        %v8387 = vunpack.c.l.b16 %v8350
        %v8388 = vunpack.c.l.b16 %v8351
        %v8389 = vunpack.c.l.b16 %v8352
        %v8390 = vunpack.c.l.b16 %v8353
        %v8391 = vunpack.c.l.b16 %v8354
        %v8392 = vunpack.c.l.b16 %v8355
        %v8393 = vunpack.c.l.b16 %v8356
        %v8394 = vunpack.c.l.b16 %v8357
        %v8395 = vunpack.c.l.b16 %v8358
        %v8396 = vunpack.c.l.b16 %v8359
        %v8397 = vunpack.c.l.b16 %v8360
        %v8398 = vunpack.c.l.b16 %v8361
        %v8399 = vunpack.c.l.b16 %v8362
        %v8400 = vunpack.c.l.b16 %v8363
        %v8401 = vpack.c.b16 %v8386, %v8385
        %v8402 = vpack.c.b16 %v8388, %v8387
        %v8403 = vpack.c.b16 %v8390, %v8389
        %v8404 = vpack.c.b16 %v8392, %v8391
        %v8405 = vpack.c.b16 %v8394, %v8393
        %v8406 = vpack.c.b16 %v8396, %v8395
        %v8407 = vpack.c.b16 %v8398, %v8397
        %v8408 = vpack.c.b16 %v8400, %v8399
        %8417 = vmatprep.subr.bf16.mxu0 0
        %8418 = vmatpush1.bf16.msra.mxu0 %v8401
        %8419 = vmatprep.subr.bf16.mxu0 0
        %8420 = vmatpush1.bf16.msra.mxu0 %v8402
        %8421 = vmatprep.subr.bf16.mxu0 0
        %8422 = vmatpush1.bf16.msra.mxu0 %v8403
        %8423 = vmatprep.subr.bf16.mxu0 0
        %8424 = vmatpush1.bf16.msra.mxu0 %v8404
        %8425 = vmatprep.subr.bf16.mxu0 0
        %8426 = vmatpush1.bf16.msra.mxu0 %v8405
        %8427 = vmatprep.subr.bf16.mxu0 0
        %8428 = vmatpush1.bf16.msra.mxu0 %v8406
        %8429 = vmatprep.subr.bf16.mxu0 0
        %8430 = vmatpush1.bf16.msra.mxu0 %v8407
        %8431 = vmatprep.subr.bf16.mxu0 0
        %8432 = vmatpush1.bf16.msra.mxu0 %v8408
        %8433 = vmatprep.subr.bf16.mxu0 0
        %8434 = vmatpush1.bf16.msra.mxu0 0
        %8435 = vmatprep.subr.bf16.mxu0 0
        %8436 = vmatpush1.bf16.msra.mxu0 0
        %8437 = vmatprep.subr.bf16.mxu0 0
        %8438 = vmatpush1.bf16.msra.mxu0 0
        %8439 = vmatprep.subr.bf16.mxu0 0
        %8440 = vmatpush1.bf16.msra.mxu0 0
        %8441 = vmatprep.subr.bf16.mxu0 0
        %8442 = vmatpush1.bf16.msra.mxu0 0
        %8443 = vmatprep.subr.bf16.mxu0 0
        %8444 = vmatpush1.bf16.msra.mxu0 0
        %8445 = vmatprep.subr.bf16.mxu0 0
        %8446 = vmatpush1.bf16.msra.mxu0 0
        %8447 = vmatprep.subr.bf16.mxu0 0
        %8448 = vmatpush1.bf16.msra.mxu0 0
        %8449 = vmatprep.mubr.bf16.mxu0 0
        %8450 = vmatmul.mubr.bf16.gmra.mrb[0].mxu0 %v8364
        %v8451 = vpop.f32.mrb[0].mxu0
        %v8452 = vadd.f32 0.0, %v8451
        %v8453 = vpop.f32.mrb[0].mxu0
        %v8454 = vpop.f32.mrb[0].mxu0
        %v8455 = vadd.f32 0.0, %v8454
        %v8456 = vpop.f32.mrb[0].mxu0
        %8457 = vmatprep.mubr.bf16.mxu0 0
        %8458 = vmatmul.mubr.bf16.gmra.mrb[0].mxu0 %v8365
        %v8459 = vpop.f32.mrb[0].mxu0
        %v8460 = vadd.f32 0.0, %v8459
        %v8461 = vpop.f32.mrb[0].mxu0
        %v8462 = vpop.f32.mrb[0].mxu0
        %v8463 = vadd.f32 0.0, %v8462
        %v8464 = vpop.f32.mrb[0].mxu0
        %8465 = vmatprep.mubr.bf16.mxu0 0
        %8466 = vmatmul.mubr.bf16.gmra.mrb[0].mxu0 %v8366
        %v8467 = vpop.f32.mrb[0].mxu0
        %v8468 = vpop.f32.mrb[0].mxu0
        %v8469 = vpop.f32.mrb[0].mxu0
        %v8470 = vadd.f32 0.0, %v8469
        %v8471 = vpop.f32.mrb[0].mxu0
        %8472 = vmatprep.mubr.bf16.mxu0 0
        %8473 = vmatmul.mubr.bf16.gmra.mrb[0].mxu0 %v8367
        %v8474 = vpop.f32.mrb[0].mxu0
        %v8475 = vadd.f32 0.0, %v8474
        %v8476 = vpop.f32.mrb[0].mxu0
        %v8477 = vpop.f32.mrb[0].mxu0
        %v8478 = vadd.f32 0.0, %v8477
        %v8479 = vpop.f32.mrb[0].mxu0
        %8480 = vmatprep.mubr.bf16.mxu0 0
        %8481 = vmatmul.mubr.bf16.gmra.mrb[0].mxu0 %v8368
        %v8482 = vpop.f32.mrb[0].mxu0
        %v8483 = vadd.f32 0.0, %v8482
        %v8484 = vpop.f32.mrb[0].mxu0
        %v8485 = vpop.f32.mrb[0].mxu0
        %v8486 = vpop.f32.mrb[0].mxu0
        %8487 = vdwg.mxu0
        %v8488 = vadd.f32 %v8330, %v8452
        %v8489 = vadd.f32 %v8331, %v8455
        %v8490 = vadd.f32 %v8332, %v8460
        %v8491 = vadd.f32 %v8333, %v8463
        %v8492 = vadd.f32 %v8334, %v8470
        %v8493 = vadd.f32 %v8335, %v8475
        %v8494 = vadd.f32 %v8336, %v8478
        %v8495 = vadd.f32 %v8337, %v8483
        %s8496 = scalar_lea.vmem [#allocation6], 64
        %v8497 = vld [vmem:[%s8496] sm:$0xff]
        %v8498 = vlaneseq
        %v8499 = vshrl.u32 %v8498, 7
        %v8500 = vsub.s32 0, %v8499
        %v8501 = vrot.slane %v8497, %v8500
        %v8502 = vadd.f32 %v8488, %v8501
        %v8503 = vadd.f32 %v8489, %v8501
        %v8504 = vadd.f32 %v8490, %v8501
        %v8505 = vadd.f32 %v8491, %v8501
        %v8506 = vadd.f32 %v8492, %v8501
        %v8507 = vadd.f32 %v8493, %v8501
        %v8508 = vadd.f32 %v8494, %v8501
        %v8509 = vadd.f32 %v8495, %v8501
        %8510 = vst [vmem:[#allocation2 + $0x8] sm:$0xff] %v8502
        %8511 = vst [vmem:[#allocation2 + $0x10] sm:$0xff] %v8503
        %8512 = vst [vmem:[#allocation2 + $0x18] sm:$0xff] %v8504
        %8513 = vst [vmem:[#allocation2 + $0x20] sm:$0xff] %v8505
        %8514 = vst [vmem:[#allocation2 + $0x30] sm:$0xff] %v8506
        %8515 = vst [vmem:[#allocation2 + $0x38] sm:$0xff] %v8507
        %8516 = vst [vmem:[#allocation2 + $0x40] sm:$0xff] %v8508
        %8517 = vst [vmem:[#allocation2 + $0x48] sm:$0xff] %v8509
        %v8518 = vld [vmem:[#allocation2 + $0x8] sm:$0xff]
        %v8519 = vld [vmem:[#allocation2 + $0x10] sm:$0xff]
        %v8520 = vld [vmem:[#allocation2 + $0x18] sm:$0xff]
        %v8521 = vld [vmem:[#allocation2 + $0x20] sm:$0xff]
        %8522 = vst [vmem:[%s207] sm:$0xff] %v8518
        %8523 = vst [vmem:[%s207 + $0x8] sm:$0xff] %v8519
        %8524 = vst [vmem:[%s207 + $0x10] sm:$0xff] %v8520
        %8525 = vst [vmem:[%s207 + $0x18] sm:$0xff] %v8521
        %v8526 = vld [vmem:[#allocation2 + $0x30] sm:$0xff]
        %v8527 = vld [vmem:[#allocation2 + $0x38] sm:$0xff]
        %v8528 = vld [vmem:[#allocation2 + $0x40] sm:$0xff]
        %v8529 = vld [vmem:[#allocation2 + $0x48] sm:$0xff]
        %s8530 = scalar_lea.vmem %s207, 32
        %8531 = vst [vmem:[%s8530] sm:$0xff] %v8526
        %8532 = vst [vmem:[%s8530 + $0x8] sm:$0xff] %v8527
        %8533 = vst [vmem:[%s8530 + $0x10] sm:$0xff] %v8528
        %8534 = vst [vmem:[%s8530 + $0x18] sm:$0xff] %v8529
        %s8535 = smul.u32 2, %s16
        %p8536 = scmp.lt.s32.totalorder %s8535, 3
        %s8537 = scalar_select %p8536, %s8535, 3
        %s8538 = smul.addr %s8537, 4
        %s8539 = smul.addr %s8538, 8
        %s8540 = scalar_lea.vmem %s3, %s8539
        // Predicated region
        $region41: #{convnet_forward.1} parent=31 // pred_check
          %p8541 = pneg %p102
        $region42: #{convnet_forward.1} parent=31 // pred_check_branch
          %8543 = sbr.rel (%p8541) target = $region44
        $region43: #{convnet_forward.1} parent=31 // pred_region
          %s8544 = smul.u32 2, %s16
        $region44: #{convnet_forward.1} parent=31 // pred_fallthru
          _
      $region32: #{convnet_forward.1} parent=5 // pred_fallthru
        _
      %p8545 = scmp.le.s32.totalorder 2, %s11
      // Predicated region
      $region45: #{convnet_forward.1} parent=5 // pred_check
        %p8546 = pneg %p8545
      $region46: #{convnet_forward.1} parent=5 // pred_check_branch
        %8548 = sbr.rel (%p8546) target = $region48
      $region47: #{convnet_forward.1} parent=5 // pred_region
        %s8549 = ssub.s32 %s11, 2
        // Predicated region
        $region49: #{convnet_forward.1} parent=47 // pred_check
          %p8550 = pneg %p108
        $region50: #{convnet_forward.1} parent=47 // pred_check_branch
          %8552 = sbr.rel (%p8550) target = $region52
        $region51: #{convnet_forward.1} parent=47 // pred_region
          %s8553 = smul.u32 2, %s17
          %p8554 = scmp.lt.s32.totalorder %s8553, 3
          %s8555 = scalar_select %p8554, %s8553, 3
          %s8556 = smul.addr %s8555, 4
          %s8557 = smul.addr %s8556, 8
          %s8558 = scalar_lea.vmem %s3, %s8557
        $region52: #{convnet_forward.1} parent=47 // pred_fallthru
          _
      $region48: #{convnet_forward.1} parent=5 // pred_fallthru
        _
    $region6: #{convnet_forward.1} parent=1 // loop_footer
      %s15 = sadd.s32 1, %s11
    $region7: #{convnet_forward.1} parent=1 // loop_footer_branch
      %10 = sbr.rel target = $region3
    $region8: #{convnet_forward.1} parent=1 // loop_exit
      _
    %8559 = vsyncpa [#allocation5], 1
    %s8560 = scalar_lea.sflag [#allocation5], 1
    %8561 = vsyncpa %s8560, 1
    %8562 = vsyncpa [#allocation7], 1

</llo_original>
